<compile_context>
chip_gen: v7x
topology: tpu7x:2x2x1
jax: 0.10.0
libtpu: 0.0.40
codegen_flags: <defaults>
</compile_context>

<pallas_src>
import jax
import jax.numpy as jnp
from jax.experimental import pallas as pl
from jax.experimental.pallas import tpu as pltpu

H0 = W0 = 28                 # input spatial size (1 channel)
K = 5                        # conv kernel size
C1, C2 = 10, 20              # conv output channels
H1 = W1 = 24                 # conv1 output spatial
P1H, P1W = 12, 12            # pooled1 spatial
H2 = W2 = 8                  # conv2 output spatial
P2H, P2W = 4, 4              # pooled2 spatial
FC_IN, FC_HID, FC_OUT = 320, 50, 10
CPAD = 128                   # lane padding for every activation slab
BT_MAX = 128                 # max batch tile (rows per grid step)
NEG = -1e9                   # pad bias for fake logit columns


# ------------------------------ fused kernel -------------------------------

def _make_kernel(bt):
    f32 = jnp.float32
    bf16 = jnp.bfloat16

    def kernel(x_ref, cb1_ref, cbias1_ref, cb2_ref, cbias2_ref,
               w1f_ref, fb1_ref, w2f_ref, fb2_ref,
               o_ref, acc_ref, p1_ref, flat_ref):
        # ---- conv1 (5x5, 1->10): 5 merged-parity band matmuls, N = 256 -----
        for dy in range(K):
            lhs = x_ref[pl.ds(dy * bt, H1 * bt), :]                # (24*bt, 28) bf16
            d = jnp.dot(lhs, cb1_ref[dy], preferred_element_type=f32)
            if dy == 0:
                acc_ref[...] = d + cbias1_ref[...]
            else:
                acc_ref[...] += d

        # ---- 2x2 max-pool + ReLU (x-pool = lane-half max, y-pool = row max) ----
        for py in range(P1H):
            top = acc_ref[pl.ds((2 * py) * bt, bt), :]
            bot = acc_ref[pl.ds((2 * py + 1) * bt, bt), :]
            m = jnp.maximum(top, bot)
            pooled = jnp.maximum(jnp.maximum(m[:, :CPAD], m[:, CPAD:]), 0.0)
            p1_ref[pl.ds(py * bt, bt), :] = pooled.astype(bf16)

        # ---- conv2 (5x5, 10->20), reusing the first 8*bt rows of acc_ref ----
        # TODO(synk): nn.Dropout2d after conv2 is identity in eval mode (not applied).
        for dy in range(K):
            lhs = p1_ref[pl.ds(dy * bt, H2 * bt), :]               # (8*bt, 128) bf16
            d = jnp.dot(lhs, cb2_ref[dy], preferred_element_type=f32)
            if dy == 0:
                acc_ref[pl.ds(0, H2 * bt), :] = d + cbias2_ref[...]
            else:
                acc_ref[pl.ds(0, H2 * bt), :] += d

        # ---- pool2 + ReLU, packed into a (bt, 512) lane-dense slab ----------
        for h in range(P2H):
            top = acc_ref[pl.ds((2 * h) * bt, bt), :]
            bot = acc_ref[pl.ds((2 * h + 1) * bt, bt), :]
            m = jnp.maximum(top, bot)
            pooled = jnp.maximum(jnp.maximum(m[:, :CPAD], m[:, CPAD:]), 0.0)
            flat_ref[:, pl.ds(h * CPAD, CPAD)] = pooled.astype(bf16)

        # ---- FC head: fc1 + ReLU + fc2 + log_softmax (all 128-lane dense) ---
        hidden = jnp.dot(flat_ref[...], w1f_ref[...], preferred_element_type=f32)
        hidden = jnp.maximum(hidden + fb1_ref[...], 0.0)
        # TODO(synk): F.dropout(x, training=...) is identity in eval mode (not applied).
        logits = jnp.dot(hidden.astype(bf16), w2f_ref[...],
                         preferred_element_type=f32) + fb2_ref[...]
        mx = jnp.max(logits, axis=1, keepdims=True)
        s = logits - mx
        lse = jnp.log(jnp.sum(jnp.exp(s), axis=1, keepdims=True))
        o_ref[...] = s - lse

    return kernel


# --------------------------- weight repacking -------------------------------

def _pack_params(params):
    """Rearrange torch-layout weights into lane-padded, parity-merged bands."""
    bf16 = jnp.bfloat16
    w1 = params["conv1_w"]                          # (5,5,1,10)  (kh,kw,ci,co)
    b1 = params["conv1_b"].reshape(C1)
    w2 = params["conv2_w"]                          # (5,5,10,20)
    b2 = params["conv2_b"].reshape(C2)

    # conv1 bands: cb1[dy, ix, p*128 + co*12 + px] = w1[dy, ix-(2*px+p), 0, co]
    ix = jnp.arange(W0)[None, :, None, None]
    dx = jnp.arange(K)[None, None, :, None]
    px = jnp.arange(P1W)[None, None, None, :]
    pr = jnp.arange(2)[:, None, None, None]
    sel1 = (ix == 2 * px + pr + dx).astype(jnp.float32)        # (2,28,5,12)
    cb1 = jnp.einsum("adc,pidq->paicq", w1[:, :, 0, :], sel1)  # (2,5,28,10,12)
    cb1 = cb1.transpose(1, 2, 0, 3, 4).reshape(K, W0, 2, C1 * P1W)
    cb1 = jnp.pad(cb1, ((0, 0), (0, 0), (0, 0), (0, CPAD - C1 * P1W)))
    cb1 = cb1.reshape(K, W0, 2 * CPAD).astype(bf16)
    brow1 = jnp.pad(jnp.repeat(b1, P1W), (0, CPAD - C1 * P1W))
    cbias1 = jnp.concatenate([brow1, brow1])[None, :]          # (1, 256) f32

    # conv2 bands: cb2[dy, ci*12+jx, p*128 + co*4 + px2] = w2[dy, jx-(2*px2+p), ci, co]
    jx = jnp.arange(P1W)[None, :, None, None]
    dx2 = jnp.arange(K)[None, None, :, None]
    px2 = jnp.arange(P2W)[None, None, None, :]
    pr2 = jnp.arange(2)[:, None, None, None]
    sel2 = (jx == 2 * px2 + pr2 + dx2).astype(jnp.float32)     # (2,12,5,4)
    cb2 = jnp.einsum("adio,pjdq->paijoq", w2, sel2)            # (2,5,10,12,20,4)
    cb2 = cb2.transpose(1, 2, 3, 0, 4, 5).reshape(K, C1 * P1W, 2, C2 * P2W)
    cb2 = jnp.pad(cb2, ((0, 0), (0, CPAD - C1 * P1W), (0, 0), (0, CPAD - C2 * P2W)))
    cb2 = cb2.reshape(K, CPAD, 2 * CPAD).astype(bf16)
    brow2 = jnp.pad(jnp.repeat(b2, P2W), (0, CPAD - C2 * P2W))
    cbias2 = jnp.concatenate([brow2, brow2])[None, :]          # (1, 256) f32

    # fc1: torch flatten order c*16 + h*4 + w, regrouped per pooled row h,
    # padded 80->128 (rows per h-block) and 50->128 (cols) -> (512, 128).
    w1f = params["fc1_w"].reshape(C2, P2H, P2W, FC_HID)
    w1f = w1f.transpose(1, 0, 2, 3).reshape(P2H, C2 * P2W, FC_HID)
    w1f = jnp.pad(w1f, ((0, 0), (0, CPAD - C2 * P2W), (0, CPAD - FC_HID)))
    w1f = w1f.reshape(P2H * CPAD, CPAD).astype(bf16)
    fb1 = jnp.pad(params["fc1_b"], ((0, 0), (0, CPAD - FC_HID)))   # (1, 128)

    # fc2: padded to (128, 128); padded bias columns get -1e9 so the padded
    # logits vanish from the log-softmax normalization.
    w2f = jnp.pad(params["fc2_w"],
                  ((0, CPAD - FC_HID), (0, CPAD - FC_OUT))).astype(bf16)
    fb2 = jnp.pad(params["fc2_b"], ((0, 0), (0, CPAD - FC_OUT)),
                  constant_values=NEG)                              # (1, 128)

    return dict(cb1=cb1, cbias1=cbias1, cb2=cb2, cbias2=cbias2,
                w1f=w1f, fb1=fb1, w2f=w2f, fb2=fb2)


# ------------------------------- forward ------------------------------------

def _batch_tile(n):
    # Multiple of 16 (clean bf16 sublane tiling); aim for >=2 grid steps when
    # the batch allows it (v7x has 2 TensorCores); capped for VMEM headroom.
    return min(BT_MAX, 16 * max(1, -(-n // 32)))


def net_forward(params, x_nchw):
    pk = _pack_params(params)
    n = x_nchw.shape[0]
    bt = _batch_tile(n)
    t = -(-n // bt)
    npad = t * bt

    x = x_nchw[:, 0, :, :]                                    # (N, 28, 28)
    if npad != n:
        x = jnp.pad(x, ((0, npad - n), (0, 0), (0, 0)))
    # per-tile layout: rows = iy*bt + b_local, cols = ix
    x2d = (x.reshape(t, bt, H0, W0).transpose(0, 2, 1, 3)
            .reshape(t * H0 * bt, W0).astype(jnp.bfloat16))

    out = pl.pallas_call(
        _make_kernel(bt),
        grid=(t,),
        in_specs=[
            pl.BlockSpec((H0 * bt, W0), lambda i: (i, 0)),
            pl.BlockSpec(pk["cb1"].shape, lambda i: (0, 0, 0)),
            pl.BlockSpec(pk["cbias1"].shape, lambda i: (0, 0)),
            pl.BlockSpec(pk["cb2"].shape, lambda i: (0, 0, 0)),
            pl.BlockSpec(pk["cbias2"].shape, lambda i: (0, 0)),
            pl.BlockSpec(pk["w1f"].shape, lambda i: (0, 0)),
            pl.BlockSpec(pk["fb1"].shape, lambda i: (0, 0)),
            pl.BlockSpec(pk["w2f"].shape, lambda i: (0, 0)),
            pl.BlockSpec(pk["fb2"].shape, lambda i: (0, 0)),
        ],
        out_specs=pl.BlockSpec((bt, CPAD), lambda i: (i, 0)),
        out_shape=jax.ShapeDtypeStruct((npad, CPAD), jnp.float32),
        scratch_shapes=[
            pltpu.VMEM((H1 * bt, 2 * CPAD), jnp.float32),    # conv acc (reused)
            pltpu.VMEM((P1H * bt, CPAD), jnp.bfloat16),      # pooled conv1
            pltpu.VMEM((bt, P2H * CPAD), jnp.bfloat16),      # pooled conv2 (flat)
        ],
        compiler_params=pltpu.CompilerParams(
            dimension_semantics=("parallel",),
            vmem_limit_bytes=32 * 1024 * 1024),
    )(x2d, pk["cb1"], pk["cbias1"], pk["cb2"], pk["cbias2"],
      pk["w1f"], pk["fb1"], pk["w2f"], pk["fb2"])
    return out[:n, :FC_OUT]


# ----------------------- params + pure-JAX reference ------------------------

def init_params(key):
    ks = jax.random.split(key, 8)

    def u(k, shape, fan_in):
        bound = 1.0 / jnp.sqrt(jnp.float32(fan_in))
        return jax.random.uniform(k, shape, jnp.float32, -bound, bound)

    # Conv weights stored (kh, kw, c_in, c_out) == torch (c_out, c_in, kh, kw) permuted.
    # FC weights stored (in, out) == torch weight.T.
    return {
        "conv1_w": u(ks[0], (5, 5, 1, 10), 25),
        "conv1_b": u(ks[1], (1, 10), 25),
        "conv2_w": u(ks[2], (5, 5, 10, 20), 250),
        "conv2_b": u(ks[3], (1, 20), 250),
        "fc1_w":   u(ks[4], (320, 50), 320),
        "fc1_b":   u(ks[5], (1, 50), 320),
        "fc2_w":   u(ks[6], (50, 10), 50),
        "fc2_b":   u(ks[7], (1, 10), 50),
    }


def net_reference(params, x_nchw):
    """Plain-XLA f32 reference of the PyTorch module (eval mode)."""
    dn = ("NCHW", "HWIO", "NCHW")
    hp = jax.lax.Precision.HIGHEST

    def pool_relu(y):
        m = jnp.maximum(jnp.maximum(y[:, :, 0::2, 0::2], y[:, :, 0::2, 1::2]),
                        jnp.maximum(y[:, :, 1::2, 0::2], y[:, :, 1::2, 1::2]))
        return jnp.maximum(m, 0.0)

    y = jax.lax.conv_general_dilated(x_nchw, params["conv1_w"], (1, 1), "VALID",
                                     dimension_numbers=dn, precision=hp)
    y = pool_relu(y + params["conv1_b"].reshape(1, C1, 1, 1))
    y = jax.lax.conv_general_dilated(y, params["conv2_w"], (1, 1), "VALID",
                                     dimension_numbers=dn, precision=hp)
    y = pool_relu(y + params["conv2_b"].reshape(1, C2, 1, 1))
    y = y.reshape(y.shape[0], FC_IN)
    h = jnp.maximum(jnp.dot(y, params["fc1_w"], precision=hp) + params["fc1_b"], 0.0)
    z = jnp.dot(h, params["fc2_w"], precision=hp) + params["fc2_b"]
    return jax.nn.log_softmax(z, axis=1)


if __name__ == "__main__":
    key = jax.random.PRNGKey(0)
    pkey, xkey = jax.random.split(key)
    params = init_params(pkey)

    fwd = jax.jit(net_forward)
    ref_fn = jax.jit(net_reference)

    for batch in (2, 256):   # small tile (bt=16, t=1) and full tile (bt=128, t=2)
        x = jax.random.normal(jax.random.fold_in(xkey, batch),
                              (batch, 1, 28, 28), dtype=jnp.float32)
        out = jax.block_until_ready(fwd(params, x))
        assert out.shape == (batch, FC_OUT)
        assert bool(jnp.all(jnp.isfinite(out)))
        assert bool(jnp.allclose(jnp.exp(out).sum(axis=1), 1.0, atol=1e-4))

        ref = jax.block_until_ready(ref_fn(params, x))
        max_err = float(jnp.max(jnp.abs(out - ref)))
        assert bool(jnp.allclose(out, ref, atol=2e-2, rtol=2e-2)), max_err

    print("KERNEL_OK")
</pallas_src>

<mosaic_0001>
module attributes {stable_mosaic.version = 11 : i64} {
  func.func @kernel(%arg0: i32, %arg1: memref<448x28xbf16, #tpu.memory_space<vmem>>, %arg2: memref<5x28x256xbf16, #tpu.memory_space<vmem>>, %arg3: memref<1x256xf32, #tpu.memory_space<vmem>>, %arg4: memref<5x128x256xbf16, #tpu.memory_space<vmem>>, %arg5: memref<1x256xf32, #tpu.memory_space<vmem>>, %arg6: memref<512x128xbf16, #tpu.memory_space<vmem>>, %arg7: memref<1x128xf32, #tpu.memory_space<vmem>>, %arg8: memref<128x128xbf16, #tpu.memory_space<vmem>>, %arg9: memref<1x128xf32, #tpu.memory_space<vmem>>, %arg10: memref<16x128xf32, #tpu.memory_space<vmem>>, %arg11: memref<384x256xf32, #tpu.memory_space<vmem>>, %arg12: memref<192x128xbf16, #tpu.memory_space<vmem>>, %arg13: memref<16x512xbf16, #tpu.memory_space<vmem>>) attributes {dimension_semantics = [#tpu.dimension_semantics<parallel>], iteration_bounds = array<i64: 1>, scalar_prefetch = 0 : i64, scratch_operands = 3 : i64, tpu.core_type = #tpu.core_type<tc>, window_params = [{transform_indices = @transform_0, window_bounds = array<i64: 448, 28>}, {pipeline_mode = #tpu.pipeline_mode<synchronous>, transform_indices = @transform_1, window_bounds = array<i64: 5, 28, 256>}, {pipeline_mode = #tpu.pipeline_mode<synchronous>, transform_indices = @transform_2, window_bounds = array<i64: 1, 256>}, {pipeline_mode = #tpu.pipeline_mode<synchronous>, transform_indices = @transform_3, window_bounds = array<i64: 5, 128, 256>}, {pipeline_mode = #tpu.pipeline_mode<synchronous>, transform_indices = @transform_4, window_bounds = array<i64: 1, 256>}, {pipeline_mode = #tpu.pipeline_mode<synchronous>, transform_indices = @transform_5, window_bounds = array<i64: 512, 128>}, {pipeline_mode = #tpu.pipeline_mode<synchronous>, transform_indices = @transform_6, window_bounds = array<i64: 1, 128>}, {pipeline_mode = #tpu.pipeline_mode<synchronous>, transform_indices = @transform_7, window_bounds = array<i64: 128, 128>}, {pipeline_mode = #tpu.pipeline_mode<synchronous>, transform_indices = @transform_8, window_bounds = array<i64: 1, 128>}, {transform_indices = @transform_9, window_bounds = array<i64: 16, 128>}]} {
    %c0 = arith.constant 0 : index
    %c0_0 = arith.constant 0 : index
    %0 = vector.load %arg1[%c0, %c0_0] : memref<448x28xbf16, #tpu.memory_space<vmem>>, vector<384x28xbf16>
    %c0_1 = arith.constant 0 : index
    %c0_2 = arith.constant 0 : index
    %c0_3 = arith.constant 0 : index
    %1 = vector.load %arg2[%c0_1, %c0_2, %c0_3] : memref<5x28x256xbf16, #tpu.memory_space<vmem>>, vector<1x28x256xbf16>
    %2 = vector.shape_cast %1 : vector<1x28x256xbf16> to vector<28x256xbf16>
    %cst = arith.constant dense<0.000000e+00> : vector<384x256xf32>
    %3 = tpu.matmul %0, %2, %cst {dimension_numbers = #tpu.dot_dimension_numbers<[1], [0], [0], [1], [0, 0, 1, 1], [], []>} : vector<384x28xbf16>, vector<28x256xbf16>, vector<384x256xf32> -> vector<384x256xf32>
    %c0_4 = arith.constant 0 : index
    %c0_5 = arith.constant 0 : index
    %4 = vector.load %arg3[%c0_4, %c0_5] : memref<1x256xf32, #tpu.memory_space<vmem>>, vector<1x256xf32>
    %5 = vector.broadcast %4 : vector<1x256xf32> to vector<384x256xf32>
    %6 = arith.addf %3, %5 : vector<384x256xf32>
    %c0_6 = arith.constant 0 : index
    %c0_7 = arith.constant 0 : index
    %7 = vector.load %arg11[%c0_6, %c0_7] : memref<384x256xf32, #tpu.memory_space<vmem>>, vector<384x256xf32>
    tpu.vector_store %arg11[%c0_6, %c0_7], %6 {strides = array<i32>} : memref<384x256xf32, #tpu.memory_space<vmem>>, vector<384x256xf32>,
    %c16 = arith.constant 16 : index
    %c0_8 = arith.constant 0 : index
    %8 = vector.load %arg1[%c16, %c0_8] : memref<448x28xbf16, #tpu.memory_space<vmem>>, vector<384x28xbf16>
    %c1 = arith.constant 1 : index
    %c0_9 = arith.constant 0 : index
    %c0_10 = arith.constant 0 : index
    %9 = vector.load %arg2[%c1, %c0_9, %c0_10] : memref<5x28x256xbf16, #tpu.memory_space<vmem>>, vector<1x28x256xbf16>
    %10 = vector.shape_cast %9 : vector<1x28x256xbf16> to vector<28x256xbf16>
    %cst_11 = arith.constant dense<0.000000e+00> : vector<384x256xf32>
    %11 = tpu.matmul %8, %10, %cst_11 {dimension_numbers = #tpu.dot_dimension_numbers<[1], [0], [0], [1], [0, 0, 1, 1], [], []>} : vector<384x28xbf16>, vector<28x256xbf16>, vector<384x256xf32> -> vector<384x256xf32>
    %c0_12 = arith.constant 0 : index
    %c0_13 = arith.constant 0 : index
    %12 = vector.load %arg11[%c0_12, %c0_13] : memref<384x256xf32, #tpu.memory_space<vmem>>, vector<384x256xf32>
    %13 = arith.addf %12, %11 : vector<384x256xf32>
    %c0_14 = arith.constant 0 : index
    %c0_15 = arith.constant 0 : index
    %14 = vector.load %arg11[%c0_14, %c0_15] : memref<384x256xf32, #tpu.memory_space<vmem>>, vector<384x256xf32>
    tpu.vector_store %arg11[%c0_14, %c0_15], %13 {strides = array<i32>} : memref<384x256xf32, #tpu.memory_space<vmem>>, vector<384x256xf32>,
    %c32 = arith.constant 32 : index
    %c0_16 = arith.constant 0 : index
    %15 = vector.load %arg1[%c32, %c0_16] : memref<448x28xbf16, #tpu.memory_space<vmem>>, vector<384x28xbf16>
    %c2 = arith.constant 2 : index
    %c0_17 = arith.constant 0 : index
    %c0_18 = arith.constant 0 : index
    %16 = vector.load %arg2[%c2, %c0_17, %c0_18] : memref<5x28x256xbf16, #tpu.memory_space<vmem>>, vector<1x28x256xbf16>
    %17 = vector.shape_cast %16 : vector<1x28x256xbf16> to vector<28x256xbf16>
    %cst_19 = arith.constant dense<0.000000e+00> : vector<384x256xf32>
    %18 = tpu.matmul %15, %17, %cst_19 {dimension_numbers = #tpu.dot_dimension_numbers<[1], [0], [0], [1], [0, 0, 1, 1], [], []>} : vector<384x28xbf16>, vector<28x256xbf16>, vector<384x256xf32> -> vector<384x256xf32>
    %c0_20 = arith.constant 0 : index
    %c0_21 = arith.constant 0 : index
    %19 = vector.load %arg11[%c0_20, %c0_21] : memref<384x256xf32, #tpu.memory_space<vmem>>, vector<384x256xf32>
    %20 = arith.addf %19, %18 : vector<384x256xf32>
    %c0_22 = arith.constant 0 : index
    %c0_23 = arith.constant 0 : index
    %21 = vector.load %arg11[%c0_22, %c0_23] : memref<384x256xf32, #tpu.memory_space<vmem>>, vector<384x256xf32>
    tpu.vector_store %arg11[%c0_22, %c0_23], %20 {strides = array<i32>} : memref<384x256xf32, #tpu.memory_space<vmem>>, vector<384x256xf32>,
    %c48 = arith.constant 48 : index
    %c0_24 = arith.constant 0 : index
    %22 = vector.load %arg1[%c48, %c0_24] : memref<448x28xbf16, #tpu.memory_space<vmem>>, vector<384x28xbf16>
    %c3 = arith.constant 3 : index
    %c0_25 = arith.constant 0 : index
    %c0_26 = arith.constant 0 : index
    %23 = vector.load %arg2[%c3, %c0_25, %c0_26] : memref<5x28x256xbf16, #tpu.memory_space<vmem>>, vector<1x28x256xbf16>
    %24 = vector.shape_cast %23 : vector<1x28x256xbf16> to vector<28x256xbf16>
    %cst_27 = arith.constant dense<0.000000e+00> : vector<384x256xf32>
    %25 = tpu.matmul %22, %24, %cst_27 {dimension_numbers = #tpu.dot_dimension_numbers<[1], [0], [0], [1], [0, 0, 1, 1], [], []>} : vector<384x28xbf16>, vector<28x256xbf16>, vector<384x256xf32> -> vector<384x256xf32>
    %c0_28 = arith.constant 0 : index
    %c0_29 = arith.constant 0 : index
    %26 = vector.load %arg11[%c0_28, %c0_29] : memref<384x256xf32, #tpu.memory_space<vmem>>, vector<384x256xf32>
    %27 = arith.addf %26, %25 : vector<384x256xf32>
    %c0_30 = arith.constant 0 : index
    %c0_31 = arith.constant 0 : index
    %28 = vector.load %arg11[%c0_30, %c0_31] : memref<384x256xf32, #tpu.memory_space<vmem>>, vector<384x256xf32>
    tpu.vector_store %arg11[%c0_30, %c0_31], %27 {strides = array<i32>} : memref<384x256xf32, #tpu.memory_space<vmem>>, vector<384x256xf32>,
    %c64 = arith.constant 64 : index
    %c0_32 = arith.constant 0 : index
    %29 = vector.load %arg1[%c64, %c0_32] : memref<448x28xbf16, #tpu.memory_space<vmem>>, vector<384x28xbf16>
    %c4 = arith.constant 4 : index
    %c0_33 = arith.constant 0 : index
    %c0_34 = arith.constant 0 : index
    %30 = vector.load %arg2[%c4, %c0_33, %c0_34] : memref<5x28x256xbf16, #tpu.memory_space<vmem>>, vector<1x28x256xbf16>
    %31 = vector.shape_cast %30 : vector<1x28x256xbf16> to vector<28x256xbf16>
    %cst_35 = arith.constant dense<0.000000e+00> : vector<384x256xf32>
    %32 = tpu.matmul %29, %31, %cst_35 {dimension_numbers = #tpu.dot_dimension_numbers<[1], [0], [0], [1], [0, 0, 1, 1], [], []>} : vector<384x28xbf16>, vector<28x256xbf16>, vector<384x256xf32> -> vector<384x256xf32>
    %c0_36 = arith.constant 0 : index
    %c0_37 = arith.constant 0 : index
    %33 = vector.load %arg11[%c0_36, %c0_37] : memref<384x256xf32, #tpu.memory_space<vmem>>, vector<384x256xf32>
    %34 = arith.addf %33, %32 : vector<384x256xf32>
    %c0_38 = arith.constant 0 : index
    %c0_39 = arith.constant 0 : index
    %35 = vector.load %arg11[%c0_38, %c0_39] : memref<384x256xf32, #tpu.memory_space<vmem>>, vector<384x256xf32>
    tpu.vector_store %arg11[%c0_38, %c0_39], %34 {strides = array<i32>} : memref<384x256xf32, #tpu.memory_space<vmem>>, vector<384x256xf32>,
    %c0_40 = arith.constant 0 : index
    %c0_41 = arith.constant 0 : index
    %36 = vector.load %arg11[%c0_40, %c0_41] : memref<384x256xf32, #tpu.memory_space<vmem>>, vector<16x256xf32>
    %c16_42 = arith.constant 16 : index
    %c0_43 = arith.constant 0 : index
    %37 = vector.load %arg11[%c16_42, %c0_43] : memref<384x256xf32, #tpu.memory_space<vmem>>, vector<16x256xf32>
    %38 = arith.maximumf %36, %37 : vector<16x256xf32>
    %39 = vector.extract_strided_slice %38 {offsets = [0, 0], sizes = [16, 128], strides = [1, 1]} : vector<16x256xf32> to vector<16x128xf32>
    %40 = vector.extract_strided_slice %38 {offsets = [0, 128], sizes = [16, 128], strides = [1, 1]} : vector<16x256xf32> to vector<16x128xf32>
    %41 = arith.maximumf %39, %40 : vector<16x128xf32>
    %cst_44 = arith.constant 0.000000e+00 : f32
    %42 = vector.broadcast %cst_44 : f32 to vector<16x128xf32>
    %43 = arith.maximumf %41, %42 : vector<16x128xf32>
    %44 = arith.truncf %43 : vector<16x128xf32> to vector<16x128xbf16>
    %c0_45 = arith.constant 0 : index
    %c0_46 = arith.constant 0 : index
    %45 = vector.load %arg12[%c0_45, %c0_46] : memref<192x128xbf16, #tpu.memory_space<vmem>>, vector<16x128xbf16>
    tpu.vector_store %arg12[%c0_45, %c0_46], %44 {strides = array<i32>} : memref<192x128xbf16, #tpu.memory_space<vmem>>, vector<16x128xbf16>,
    %c32_47 = arith.constant 32 : index
    %c0_48 = arith.constant 0 : index
    %46 = vector.load %arg11[%c32_47, %c0_48] : memref<384x256xf32, #tpu.memory_space<vmem>>, vector<16x256xf32>
    %c48_49 = arith.constant 48 : index
    %c0_50 = arith.constant 0 : index
    %47 = vector.load %arg11[%c48_49, %c0_50] : memref<384x256xf32, #tpu.memory_space<vmem>>, vector<16x256xf32>
    %48 = arith.maximumf %46, %47 : vector<16x256xf32>
    %49 = vector.extract_strided_slice %48 {offsets = [0, 0], sizes = [16, 128], strides = [1, 1]} : vector<16x256xf32> to vector<16x128xf32>
    %50 = vector.extract_strided_slice %48 {offsets = [0, 128], sizes = [16, 128], strides = [1, 1]} : vector<16x256xf32> to vector<16x128xf32>
    %51 = arith.maximumf %49, %50 : vector<16x128xf32>
    %cst_51 = arith.constant 0.000000e+00 : f32
    %52 = vector.broadcast %cst_51 : f32 to vector<16x128xf32>
    %53 = arith.maximumf %51, %52 : vector<16x128xf32>
    %54 = arith.truncf %53 : vector<16x128xf32> to vector<16x128xbf16>
    %c16_52 = arith.constant 16 : index
    %c0_53 = arith.constant 0 : index
    %55 = vector.load %arg12[%c16_52, %c0_53] : memref<192x128xbf16, #tpu.memory_space<vmem>>, vector<16x128xbf16>
    tpu.vector_store %arg12[%c16_52, %c0_53], %54 {strides = array<i32>} : memref<192x128xbf16, #tpu.memory_space<vmem>>, vector<16x128xbf16>,
    %c64_54 = arith.constant 64 : index
    %c0_55 = arith.constant 0 : index
    %56 = vector.load %arg11[%c64_54, %c0_55] : memref<384x256xf32, #tpu.memory_space<vmem>>, vector<16x256xf32>
    %c80 = arith.constant 80 : index
    %c0_56 = arith.constant 0 : index
    %57 = vector.load %arg11[%c80, %c0_56] : memref<384x256xf32, #tpu.memory_space<vmem>>, vector<16x256xf32>
    %58 = arith.maximumf %56, %57 : vector<16x256xf32>
    %59 = vector.extract_strided_slice %58 {offsets = [0, 0], sizes = [16, 128], strides = [1, 1]} : vector<16x256xf32> to vector<16x128xf32>
    %60 = vector.extract_strided_slice %58 {offsets = [0, 128], sizes = [16, 128], strides = [1, 1]} : vector<16x256xf32> to vector<16x128xf32>
    %61 = arith.maximumf %59, %60 : vector<16x128xf32>
    %cst_57 = arith.constant 0.000000e+00 : f32
    %62 = vector.broadcast %cst_57 : f32 to vector<16x128xf32>
    %63 = arith.maximumf %61, %62 : vector<16x128xf32>
    %64 = arith.truncf %63 : vector<16x128xf32> to vector<16x128xbf16>
    %c32_58 = arith.constant 32 : index
    %c0_59 = arith.constant 0 : index
    %65 = vector.load %arg12[%c32_58, %c0_59] : memref<192x128xbf16, #tpu.memory_space<vmem>>, vector<16x128xbf16>
    tpu.vector_store %arg12[%c32_58, %c0_59], %64 {strides = array<i32>} : memref<192x128xbf16, #tpu.memory_space<vmem>>, vector<16x128xbf16>,
    %c96 = arith.constant 96 : index
    %c0_60 = arith.constant 0 : index
    %66 = vector.load %arg11[%c96, %c0_60] : memref<384x256xf32, #tpu.memory_space<vmem>>, vector<16x256xf32>
    %c112 = arith.constant 112 : index
    %c0_61 = arith.constant 0 : index
    %67 = vector.load %arg11[%c112, %c0_61] : memref<384x256xf32, #tpu.memory_space<vmem>>, vector<16x256xf32>
    %68 = arith.maximumf %66, %67 : vector<16x256xf32>
    %69 = vector.extract_strided_slice %68 {offsets = [0, 0], sizes = [16, 128], strides = [1, 1]} : vector<16x256xf32> to vector<16x128xf32>
    %70 = vector.extract_strided_slice %68 {offsets = [0, 128], sizes = [16, 128], strides = [1, 1]} : vector<16x256xf32> to vector<16x128xf32>
    %71 = arith.maximumf %69, %70 : vector<16x128xf32>
    %cst_62 = arith.constant 0.000000e+00 : f32
    %72 = vector.broadcast %cst_62 : f32 to vector<16x128xf32>
    %73 = arith.maximumf %71, %72 : vector<16x128xf32>
    %74 = arith.truncf %73 : vector<16x128xf32> to vector<16x128xbf16>
    %c48_63 = arith.constant 48 : index
    %c0_64 = arith.constant 0 : index
    %75 = vector.load %arg12[%c48_63, %c0_64] : memref<192x128xbf16, #tpu.memory_space<vmem>>, vector<16x128xbf16>
    tpu.vector_store %arg12[%c48_63, %c0_64], %74 {strides = array<i32>} : memref<192x128xbf16, #tpu.memory_space<vmem>>, vector<16x128xbf16>,
    %c128 = arith.constant 128 : index
    %c0_65 = arith.constant 0 : index
    %76 = vector.load %arg11[%c128, %c0_65] : memref<384x256xf32, #tpu.memory_space<vmem>>, vector<16x256xf32>
    %c144 = arith.constant 144 : index
    %c0_66 = arith.constant 0 : index
    %77 = vector.load %arg11[%c144, %c0_66] : memref<384x256xf32, #tpu.memory_space<vmem>>, vector<16x256xf32>
    %78 = arith.maximumf %76, %77 : vector<16x256xf32>
    %79 = vector.extract_strided_slice %78 {offsets = [0, 0], sizes = [16, 128], strides = [1, 1]} : vector<16x256xf32> to vector<16x128xf32>
    %80 = vector.extract_strided_slice %78 {offsets = [0, 128], sizes = [16, 128], strides = [1, 1]} : vector<16x256xf32> to vector<16x128xf32>
    %81 = arith.maximumf %79, %80 : vector<16x128xf32>
    %cst_67 = arith.constant 0.000000e+00 : f32
    %82 = vector.broadcast %cst_67 : f32 to vector<16x128xf32>
    %83 = arith.maximumf %81, %82 : vector<16x128xf32>
    %84 = arith.truncf %83 : vector<16x128xf32> to vector<16x128xbf16>
    %c64_68 = arith.constant 64 : index
    %c0_69 = arith.constant 0 : index
    %85 = vector.load %arg12[%c64_68, %c0_69] : memref<192x128xbf16, #tpu.memory_space<vmem>>, vector<16x128xbf16>
    tpu.vector_store %arg12[%c64_68, %c0_69], %84 {strides = array<i32>} : memref<192x128xbf16, #tpu.memory_space<vmem>>, vector<16x128xbf16>,
    %c160 = arith.constant 160 : index
    %c0_70 = arith.constant 0 : index
    %86 = vector.load %arg11[%c160, %c0_70] : memref<384x256xf32, #tpu.memory_space<vmem>>, vector<16x256xf32>
    %c176 = arith.constant 176 : index
    %c0_71 = arith.constant 0 : index
    %87 = vector.load %arg11[%c176, %c0_71] : memref<384x256xf32, #tpu.memory_space<vmem>>, vector<16x256xf32>
    %88 = arith.maximumf %86, %87 : vector<16x256xf32>
    %89 = vector.extract_strided_slice %88 {offsets = [0, 0], sizes = [16, 128], strides = [1, 1]} : vector<16x256xf32> to vector<16x128xf32>
    %90 = vector.extract_strided_slice %88 {offsets = [0, 128], sizes = [16, 128], strides = [1, 1]} : vector<16x256xf32> to vector<16x128xf32>
    %91 = arith.maximumf %89, %90 : vector<16x128xf32>
    %cst_72 = arith.constant 0.000000e+00 : f32
    %92 = vector.broadcast %cst_72 : f32 to vector<16x128xf32>
    %93 = arith.maximumf %91, %92 : vector<16x128xf32>
    %94 = arith.truncf %93 : vector<16x128xf32> to vector<16x128xbf16>
    %c80_73 = arith.constant 80 : index
    %c0_74 = arith.constant 0 : index
    %95 = vector.load %arg12[%c80_73, %c0_74] : memref<192x128xbf16, #tpu.memory_space<vmem>>, vector<16x128xbf16>
    tpu.vector_store %arg12[%c80_73, %c0_74], %94 {strides = array<i32>} : memref<192x128xbf16, #tpu.memory_space<vmem>>, vector<16x128xbf16>,
    %c192 = arith.constant 192 : index
    %c0_75 = arith.constant 0 : index
    %96 = vector.load %arg11[%c192, %c0_75] : memref<384x256xf32, #tpu.memory_space<vmem>>, vector<16x256xf32>
    %c208 = arith.constant 208 : index
    %c0_76 = arith.constant 0 : index
    %97 = vector.load %arg11[%c208, %c0_76] : memref<384x256xf32, #tpu.memory_space<vmem>>, vector<16x256xf32>
    %98 = arith.maximumf %96, %97 : vector<16x256xf32>
    %99 = vector.extract_strided_slice %98 {offsets = [0, 0], sizes = [16, 128], strides = [1, 1]} : vector<16x256xf32> to vector<16x128xf32>
    %100 = vector.extract_strided_slice %98 {offsets = [0, 128], sizes = [16, 128], strides = [1, 1]} : vector<16x256xf32> to vector<16x128xf32>
    %101 = arith.maximumf %99, %100 : vector<16x128xf32>
    %cst_77 = arith.constant 0.000000e+00 : f32
    %102 = vector.broadcast %cst_77 : f32 to vector<16x128xf32>
    %103 = arith.maximumf %101, %102 : vector<16x128xf32>
    %104 = arith.truncf %103 : vector<16x128xf32> to vector<16x128xbf16>
    %c96_78 = arith.constant 96 : index
    %c0_79 = arith.constant 0 : index
    %105 = vector.load %arg12[%c96_78, %c0_79] : memref<192x128xbf16, #tpu.memory_space<vmem>>, vector<16x128xbf16>
    tpu.vector_store %arg12[%c96_78, %c0_79], %104 {strides = array<i32>} : memref<192x128xbf16, #tpu.memory_space<vmem>>, vector<16x128xbf16>,
    %c224 = arith.constant 224 : index
    %c0_80 = arith.constant 0 : index
    %106 = vector.load %arg11[%c224, %c0_80] : memref<384x256xf32, #tpu.memory_space<vmem>>, vector<16x256xf32>
    %c240 = arith.constant 240 : index
    %c0_81 = arith.constant 0 : index
    %107 = vector.load %arg11[%c240, %c0_81] : memref<384x256xf32, #tpu.memory_space<vmem>>, vector<16x256xf32>
    %108 = arith.maximumf %106, %107 : vector<16x256xf32>
    %109 = vector.extract_strided_slice %108 {offsets = [0, 0], sizes = [16, 128], strides = [1, 1]} : vector<16x256xf32> to vector<16x128xf32>
    %110 = vector.extract_strided_slice %108 {offsets = [0, 128], sizes = [16, 128], strides = [1, 1]} : vector<16x256xf32> to vector<16x128xf32>
    %111 = arith.maximumf %109, %110 : vector<16x128xf32>
    %cst_82 = arith.constant 0.000000e+00 : f32
    %112 = vector.broadcast %cst_82 : f32 to vector<16x128xf32>
    %113 = arith.maximumf %111, %112 : vector<16x128xf32>
    %114 = arith.truncf %113 : vector<16x128xf32> to vector<16x128xbf16>
    %c112_83 = arith.constant 112 : index
    %c0_84 = arith.constant 0 : index
    %115 = vector.load %arg12[%c112_83, %c0_84] : memref<192x128xbf16, #tpu.memory_space<vmem>>, vector<16x128xbf16>
    tpu.vector_store %arg12[%c112_83, %c0_84], %114 {strides = array<i32>} : memref<192x128xbf16, #tpu.memory_space<vmem>>, vector<16x128xbf16>,
    %c256 = arith.constant 256 : index
    %c0_85 = arith.constant 0 : index
    %116 = vector.load %arg11[%c256, %c0_85] : memref<384x256xf32, #tpu.memory_space<vmem>>, vector<16x256xf32>
    %c272 = arith.constant 272 : index
    %c0_86 = arith.constant 0 : index
    %117 = vector.load %arg11[%c272, %c0_86] : memref<384x256xf32, #tpu.memory_space<vmem>>, vector<16x256xf32>
    %118 = arith.maximumf %116, %117 : vector<16x256xf32>
    %119 = vector.extract_strided_slice %118 {offsets = [0, 0], sizes = [16, 128], strides = [1, 1]} : vector<16x256xf32> to vector<16x128xf32>
    %120 = vector.extract_strided_slice %118 {offsets = [0, 128], sizes = [16, 128], strides = [1, 1]} : vector<16x256xf32> to vector<16x128xf32>
    %121 = arith.maximumf %119, %120 : vector<16x128xf32>
    %cst_87 = arith.constant 0.000000e+00 : f32
    %122 = vector.broadcast %cst_87 : f32 to vector<16x128xf32>
    %123 = arith.maximumf %121, %122 : vector<16x128xf32>
    %124 = arith.truncf %123 : vector<16x128xf32> to vector<16x128xbf16>
    %c128_88 = arith.constant 128 : index
    %c0_89 = arith.constant 0 : index
    %125 = vector.load %arg12[%c128_88, %c0_89] : memref<192x128xbf16, #tpu.memory_space<vmem>>, vector<16x128xbf16>
    tpu.vector_store %arg12[%c128_88, %c0_89], %124 {strides = array<i32>} : memref<192x128xbf16, #tpu.memory_space<vmem>>, vector<16x128xbf16>,
    %c288 = arith.constant 288 : index
    %c0_90 = arith.constant 0 : index
    %126 = vector.load %arg11[%c288, %c0_90] : memref<384x256xf32, #tpu.memory_space<vmem>>, vector<16x256xf32>
    %c304 = arith.constant 304 : index
    %c0_91 = arith.constant 0 : index
    %127 = vector.load %arg11[%c304, %c0_91] : memref<384x256xf32, #tpu.memory_space<vmem>>, vector<16x256xf32>
    %128 = arith.maximumf %126, %127 : vector<16x256xf32>
    %129 = vector.extract_strided_slice %128 {offsets = [0, 0], sizes = [16, 128], strides = [1, 1]} : vector<16x256xf32> to vector<16x128xf32>
    %130 = vector.extract_strided_slice %128 {offsets = [0, 128], sizes = [16, 128], strides = [1, 1]} : vector<16x256xf32> to vector<16x128xf32>
    %131 = arith.maximumf %129, %130 : vector<16x128xf32>
    %cst_92 = arith.constant 0.000000e+00 : f32
    %132 = vector.broadcast %cst_92 : f32 to vector<16x128xf32>
    %133 = arith.maximumf %131, %132 : vector<16x128xf32>
    %134 = arith.truncf %133 : vector<16x128xf32> to vector<16x128xbf16>
    %c144_93 = arith.constant 144 : index
    %c0_94 = arith.constant 0 : index
    %135 = vector.load %arg12[%c144_93, %c0_94] : memref<192x128xbf16, #tpu.memory_space<vmem>>, vector<16x128xbf16>
    tpu.vector_store %arg12[%c144_93, %c0_94], %134 {strides = array<i32>} : memref<192x128xbf16, #tpu.memory_space<vmem>>, vector<16x128xbf16>,
    %c320 = arith.constant 320 : index
    %c0_95 = arith.constant 0 : index
    %136 = vector.load %arg11[%c320, %c0_95] : memref<384x256xf32, #tpu.memory_space<vmem>>, vector<16x256xf32>
    %c336 = arith.constant 336 : index
    %c0_96 = arith.constant 0 : index
    %137 = vector.load %arg11[%c336, %c0_96] : memref<384x256xf32, #tpu.memory_space<vmem>>, vector<16x256xf32>
    %138 = arith.maximumf %136, %137 : vector<16x256xf32>
    %139 = vector.extract_strided_slice %138 {offsets = [0, 0], sizes = [16, 128], strides = [1, 1]} : vector<16x256xf32> to vector<16x128xf32>
    %140 = vector.extract_strided_slice %138 {offsets = [0, 128], sizes = [16, 128], strides = [1, 1]} : vector<16x256xf32> to vector<16x128xf32>
    %141 = arith.maximumf %139, %140 : vector<16x128xf32>
    %cst_97 = arith.constant 0.000000e+00 : f32
    %142 = vector.broadcast %cst_97 : f32 to vector<16x128xf32>
    %143 = arith.maximumf %141, %142 : vector<16x128xf32>
    %144 = arith.truncf %143 : vector<16x128xf32> to vector<16x128xbf16>
    %c160_98 = arith.constant 160 : index
    %c0_99 = arith.constant 0 : index
    %145 = vector.load %arg12[%c160_98, %c0_99] : memref<192x128xbf16, #tpu.memory_space<vmem>>, vector<16x128xbf16>
    tpu.vector_store %arg12[%c160_98, %c0_99], %144 {strides = array<i32>} : memref<192x128xbf16, #tpu.memory_space<vmem>>, vector<16x128xbf16>,
    %c352 = arith.constant 352 : index
    %c0_100 = arith.constant 0 : index
    %146 = vector.load %arg11[%c352, %c0_100] : memref<384x256xf32, #tpu.memory_space<vmem>>, vector<16x256xf32>
    %c368 = arith.constant 368 : index
    %c0_101 = arith.constant 0 : index
    %147 = vector.load %arg11[%c368, %c0_101] : memref<384x256xf32, #tpu.memory_space<vmem>>, vector<16x256xf32>
    %148 = arith.maximumf %146, %147 : vector<16x256xf32>
    %149 = vector.extract_strided_slice %148 {offsets = [0, 0], sizes = [16, 128], strides = [1, 1]} : vector<16x256xf32> to vector<16x128xf32>
    %150 = vector.extract_strided_slice %148 {offsets = [0, 128], sizes = [16, 128], strides = [1, 1]} : vector<16x256xf32> to vector<16x128xf32>
    %151 = arith.maximumf %149, %150 : vector<16x128xf32>
    %cst_102 = arith.constant 0.000000e+00 : f32
    %152 = vector.broadcast %cst_102 : f32 to vector<16x128xf32>
    %153 = arith.maximumf %151, %152 : vector<16x128xf32>
    %154 = arith.truncf %153 : vector<16x128xf32> to vector<16x128xbf16>
    %c176_103 = arith.constant 176 : index
    %c0_104 = arith.constant 0 : index
    %155 = vector.load %arg12[%c176_103, %c0_104] : memref<192x128xbf16, #tpu.memory_space<vmem>>, vector<16x128xbf16>
    tpu.vector_store %arg12[%c176_103, %c0_104], %154 {strides = array<i32>} : memref<192x128xbf16, #tpu.memory_space<vmem>>, vector<16x128xbf16>,
    %c0_105 = arith.constant 0 : index
    %c0_106 = arith.constant 0 : index
    %156 = vector.load %arg12[%c0_105, %c0_106] : memref<192x128xbf16, #tpu.memory_space<vmem>>, vector<128x128xbf16>
    %c0_107 = arith.constant 0 : index
    %c0_108 = arith.constant 0 : index
    %c0_109 = arith.constant 0 : index
    %157 = vector.load %arg4[%c0_107, %c0_108, %c0_109] : memref<5x128x256xbf16, #tpu.memory_space<vmem>>, vector<1x128x256xbf16>
    %158 = vector.shape_cast %157 : vector<1x128x256xbf16> to vector<128x256xbf16>
    %cst_110 = arith.constant dense<0.000000e+00> : vector<128x256xf32>
    %159 = tpu.matmul %156, %158, %cst_110 {dimension_numbers = #tpu.dot_dimension_numbers<[1], [0], [0], [1], [0, 0, 1, 1], [], []>} : vector<128x128xbf16>, vector<128x256xbf16>, vector<128x256xf32> -> vector<128x256xf32>
    %c0_111 = arith.constant 0 : index
    %c0_112 = arith.constant 0 : index
    %160 = vector.load %arg5[%c0_111, %c0_112] : memref<1x256xf32, #tpu.memory_space<vmem>>, vector<1x256xf32>
    %161 = vector.broadcast %160 : vector<1x256xf32> to vector<128x256xf32>
    %162 = arith.addf %159, %161 : vector<128x256xf32>
    %c0_113 = arith.constant 0 : index
    %c0_114 = arith.constant 0 : index
    %163 = vector.load %arg11[%c0_113, %c0_114] : memref<384x256xf32, #tpu.memory_space<vmem>>, vector<128x256xf32>
    tpu.vector_store %arg11[%c0_113, %c0_114], %162 {strides = array<i32>} : memref<384x256xf32, #tpu.memory_space<vmem>>, vector<128x256xf32>,
    %c16_115 = arith.constant 16 : index
    %c0_116 = arith.constant 0 : index
    %164 = vector.load %arg12[%c16_115, %c0_116] : memref<192x128xbf16, #tpu.memory_space<vmem>>, vector<128x128xbf16>
    %c1_117 = arith.constant 1 : index
    %c0_118 = arith.constant 0 : index
    %c0_119 = arith.constant 0 : index
    %165 = vector.load %arg4[%c1_117, %c0_118, %c0_119] : memref<5x128x256xbf16, #tpu.memory_space<vmem>>, vector<1x128x256xbf16>
    %166 = vector.shape_cast %165 : vector<1x128x256xbf16> to vector<128x256xbf16>
    %cst_120 = arith.constant dense<0.000000e+00> : vector<128x256xf32>
    %167 = tpu.matmul %164, %166, %cst_120 {dimension_numbers = #tpu.dot_dimension_numbers<[1], [0], [0], [1], [0, 0, 1, 1], [], []>} : vector<128x128xbf16>, vector<128x256xbf16>, vector<128x256xf32> -> vector<128x256xf32>
    %c0_121 = arith.constant 0 : index
    %c0_122 = arith.constant 0 : index
    %168 = vector.load %arg11[%c0_121, %c0_122] : memref<384x256xf32, #tpu.memory_space<vmem>>, vector<128x256xf32>
    %169 = arith.addf %168, %167 : vector<128x256xf32>
    %c0_123 = arith.constant 0 : index
    %c0_124 = arith.constant 0 : index
    %170 = vector.load %arg11[%c0_123, %c0_124] : memref<384x256xf32, #tpu.memory_space<vmem>>, vector<128x256xf32>
    tpu.vector_store %arg11[%c0_123, %c0_124], %169 {strides = array<i32>} : memref<384x256xf32, #tpu.memory_space<vmem>>, vector<128x256xf32>,
    %c32_125 = arith.constant 32 : index
    %c0_126 = arith.constant 0 : index
    %171 = vector.load %arg12[%c32_125, %c0_126] : memref<192x128xbf16, #tpu.memory_space<vmem>>, vector<128x128xbf16>
    %c2_127 = arith.constant 2 : index
    %c0_128 = arith.constant 0 : index
    %c0_129 = arith.constant 0 : index
    %172 = vector.load %arg4[%c2_127, %c0_128, %c0_129] : memref<5x128x256xbf16, #tpu.memory_space<vmem>>, vector<1x128x256xbf16>
    %173 = vector.shape_cast %172 : vector<1x128x256xbf16> to vector<128x256xbf16>
    %cst_130 = arith.constant dense<0.000000e+00> : vector<128x256xf32>
    %174 = tpu.matmul %171, %173, %cst_130 {dimension_numbers = #tpu.dot_dimension_numbers<[1], [0], [0], [1], [0, 0, 1, 1], [], []>} : vector<128x128xbf16>, vector<128x256xbf16>, vector<128x256xf32> -> vector<128x256xf32>
    %c0_131 = arith.constant 0 : index
    %c0_132 = arith.constant 0 : index
    %175 = vector.load %arg11[%c0_131, %c0_132] : memref<384x256xf32, #tpu.memory_space<vmem>>, vector<128x256xf32>
    %176 = arith.addf %175, %174 : vector<128x256xf32>
    %c0_133 = arith.constant 0 : index
    %c0_134 = arith.constant 0 : index
    %177 = vector.load %arg11[%c0_133, %c0_134] : memref<384x256xf32, #tpu.memory_space<vmem>>, vector<128x256xf32>
    tpu.vector_store %arg11[%c0_133, %c0_134], %176 {strides = array<i32>} : memref<384x256xf32, #tpu.memory_space<vmem>>, vector<128x256xf32>,
    %c48_135 = arith.constant 48 : index
    %c0_136 = arith.constant 0 : index
    %178 = vector.load %arg12[%c48_135, %c0_136] : memref<192x128xbf16, #tpu.memory_space<vmem>>, vector<128x128xbf16>
    %c3_137 = arith.constant 3 : index
    %c0_138 = arith.constant 0 : index
    %c0_139 = arith.constant 0 : index
    %179 = vector.load %arg4[%c3_137, %c0_138, %c0_139] : memref<5x128x256xbf16, #tpu.memory_space<vmem>>, vector<1x128x256xbf16>
    %180 = vector.shape_cast %179 : vector<1x128x256xbf16> to vector<128x256xbf16>
    %cst_140 = arith.constant dense<0.000000e+00> : vector<128x256xf32>
    %181 = tpu.matmul %178, %180, %cst_140 {dimension_numbers = #tpu.dot_dimension_numbers<[1], [0], [0], [1], [0, 0, 1, 1], [], []>} : vector<128x128xbf16>, vector<128x256xbf16>, vector<128x256xf32> -> vector<128x256xf32>
    %c0_141 = arith.constant 0 : index
    %c0_142 = arith.constant 0 : index
    %182 = vector.load %arg11[%c0_141, %c0_142] : memref<384x256xf32, #tpu.memory_space<vmem>>, vector<128x256xf32>
    %183 = arith.addf %182, %181 : vector<128x256xf32>
    %c0_143 = arith.constant 0 : index
    %c0_144 = arith.constant 0 : index
    %184 = vector.load %arg11[%c0_143, %c0_144] : memref<384x256xf32, #tpu.memory_space<vmem>>, vector<128x256xf32>
    tpu.vector_store %arg11[%c0_143, %c0_144], %183 {strides = array<i32>} : memref<384x256xf32, #tpu.memory_space<vmem>>, vector<128x256xf32>,
    %c64_145 = arith.constant 64 : index
    %c0_146 = arith.constant 0 : index
    %185 = vector.load %arg12[%c64_145, %c0_146] : memref<192x128xbf16, #tpu.memory_space<vmem>>, vector<128x128xbf16>
    %c4_147 = arith.constant 4 : index
    %c0_148 = arith.constant 0 : index
    %c0_149 = arith.constant 0 : index
    %186 = vector.load %arg4[%c4_147, %c0_148, %c0_149] : memref<5x128x256xbf16, #tpu.memory_space<vmem>>, vector<1x128x256xbf16>
    %187 = vector.shape_cast %186 : vector<1x128x256xbf16> to vector<128x256xbf16>
    %cst_150 = arith.constant dense<0.000000e+00> : vector<128x256xf32>
    %188 = tpu.matmul %185, %187, %cst_150 {dimension_numbers = #tpu.dot_dimension_numbers<[1], [0], [0], [1], [0, 0, 1, 1], [], []>} : vector<128x128xbf16>, vector<128x256xbf16>, vector<128x256xf32> -> vector<128x256xf32>
    %c0_151 = arith.constant 0 : index
    %c0_152 = arith.constant 0 : index
    %189 = vector.load %arg11[%c0_151, %c0_152] : memref<384x256xf32, #tpu.memory_space<vmem>>, vector<128x256xf32>
    %190 = arith.addf %189, %188 : vector<128x256xf32>
    %c0_153 = arith.constant 0 : index
    %c0_154 = arith.constant 0 : index
    %191 = vector.load %arg11[%c0_153, %c0_154] : memref<384x256xf32, #tpu.memory_space<vmem>>, vector<128x256xf32>
    tpu.vector_store %arg11[%c0_153, %c0_154], %190 {strides = array<i32>} : memref<384x256xf32, #tpu.memory_space<vmem>>, vector<128x256xf32>,
    %c0_155 = arith.constant 0 : index
    %c0_156 = arith.constant 0 : index
    %192 = vector.load %arg11[%c0_155, %c0_156] : memref<384x256xf32, #tpu.memory_space<vmem>>, vector<16x256xf32>
    %c16_157 = arith.constant 16 : index
    %c0_158 = arith.constant 0 : index
    %193 = vector.load %arg11[%c16_157, %c0_158] : memref<384x256xf32, #tpu.memory_space<vmem>>, vector<16x256xf32>
    %194 = arith.maximumf %192, %193 : vector<16x256xf32>
    %195 = vector.extract_strided_slice %194 {offsets = [0, 0], sizes = [16, 128], strides = [1, 1]} : vector<16x256xf32> to vector<16x128xf32>
    %196 = vector.extract_strided_slice %194 {offsets = [0, 128], sizes = [16, 128], strides = [1, 1]} : vector<16x256xf32> to vector<16x128xf32>
    %197 = arith.maximumf %195, %196 : vector<16x128xf32>
    %cst_159 = arith.constant 0.000000e+00 : f32
    %198 = vector.broadcast %cst_159 : f32 to vector<16x128xf32>
    %199 = arith.maximumf %197, %198 : vector<16x128xf32>
    %200 = arith.truncf %199 : vector<16x128xf32> to vector<16x128xbf16>
    %c0_160 = arith.constant 0 : index
    %c0_161 = arith.constant 0 : index
    %201 = vector.load %arg13[%c0_160, %c0_161] : memref<16x512xbf16, #tpu.memory_space<vmem>>, vector<16x128xbf16>
    tpu.vector_store %arg13[%c0_160, %c0_161], %200 {strides = array<i32>} : memref<16x512xbf16, #tpu.memory_space<vmem>>, vector<16x128xbf16>,
    %c32_162 = arith.constant 32 : index
    %c0_163 = arith.constant 0 : index
    %202 = vector.load %arg11[%c32_162, %c0_163] : memref<384x256xf32, #tpu.memory_space<vmem>>, vector<16x256xf32>
    %c48_164 = arith.constant 48 : index
    %c0_165 = arith.constant 0 : index
    %203 = vector.load %arg11[%c48_164, %c0_165] : memref<384x256xf32, #tpu.memory_space<vmem>>, vector<16x256xf32>
    %204 = arith.maximumf %202, %203 : vector<16x256xf32>
    %205 = vector.extract_strided_slice %204 {offsets = [0, 0], sizes = [16, 128], strides = [1, 1]} : vector<16x256xf32> to vector<16x128xf32>
    %206 = vector.extract_strided_slice %204 {offsets = [0, 128], sizes = [16, 128], strides = [1, 1]} : vector<16x256xf32> to vector<16x128xf32>
    %207 = arith.maximumf %205, %206 : vector<16x128xf32>
    %cst_166 = arith.constant 0.000000e+00 : f32
    %208 = vector.broadcast %cst_166 : f32 to vector<16x128xf32>
    %209 = arith.maximumf %207, %208 : vector<16x128xf32>
    %210 = arith.truncf %209 : vector<16x128xf32> to vector<16x128xbf16>
    %c0_167 = arith.constant 0 : index
    %c128_168 = arith.constant 128 : index
    %211 = vector.load %arg13[%c0_167, %c128_168] : memref<16x512xbf16, #tpu.memory_space<vmem>>, vector<16x128xbf16>
    tpu.vector_store %arg13[%c0_167, %c128_168], %210 {strides = array<i32>} : memref<16x512xbf16, #tpu.memory_space<vmem>>, vector<16x128xbf16>,
    %c64_169 = arith.constant 64 : index
    %c0_170 = arith.constant 0 : index
    %212 = vector.load %arg11[%c64_169, %c0_170] : memref<384x256xf32, #tpu.memory_space<vmem>>, vector<16x256xf32>
    %c80_171 = arith.constant 80 : index
    %c0_172 = arith.constant 0 : index
    %213 = vector.load %arg11[%c80_171, %c0_172] : memref<384x256xf32, #tpu.memory_space<vmem>>, vector<16x256xf32>
    %214 = arith.maximumf %212, %213 : vector<16x256xf32>
    %215 = vector.extract_strided_slice %214 {offsets = [0, 0], sizes = [16, 128], strides = [1, 1]} : vector<16x256xf32> to vector<16x128xf32>
    %216 = vector.extract_strided_slice %214 {offsets = [0, 128], sizes = [16, 128], strides = [1, 1]} : vector<16x256xf32> to vector<16x128xf32>
    %217 = arith.maximumf %215, %216 : vector<16x128xf32>
    %cst_173 = arith.constant 0.000000e+00 : f32
    %218 = vector.broadcast %cst_173 : f32 to vector<16x128xf32>
    %219 = arith.maximumf %217, %218 : vector<16x128xf32>
    %220 = arith.truncf %219 : vector<16x128xf32> to vector<16x128xbf16>
    %c0_174 = arith.constant 0 : index
    %c256_175 = arith.constant 256 : index
    %221 = vector.load %arg13[%c0_174, %c256_175] : memref<16x512xbf16, #tpu.memory_space<vmem>>, vector<16x128xbf16>
    tpu.vector_store %arg13[%c0_174, %c256_175], %220 {strides = array<i32>} : memref<16x512xbf16, #tpu.memory_space<vmem>>, vector<16x128xbf16>,
    %c96_176 = arith.constant 96 : index
    %c0_177 = arith.constant 0 : index
    %222 = vector.load %arg11[%c96_176, %c0_177] : memref<384x256xf32, #tpu.memory_space<vmem>>, vector<16x256xf32>
    %c112_178 = arith.constant 112 : index
    %c0_179 = arith.constant 0 : index
    %223 = vector.load %arg11[%c112_178, %c0_179] : memref<384x256xf32, #tpu.memory_space<vmem>>, vector<16x256xf32>
    %224 = arith.maximumf %222, %223 : vector<16x256xf32>
    %225 = vector.extract_strided_slice %224 {offsets = [0, 0], sizes = [16, 128], strides = [1, 1]} : vector<16x256xf32> to vector<16x128xf32>
    %226 = vector.extract_strided_slice %224 {offsets = [0, 128], sizes = [16, 128], strides = [1, 1]} : vector<16x256xf32> to vector<16x128xf32>
    %227 = arith.maximumf %225, %226 : vector<16x128xf32>
    %cst_180 = arith.constant 0.000000e+00 : f32
    %228 = vector.broadcast %cst_180 : f32 to vector<16x128xf32>
    %229 = arith.maximumf %227, %228 : vector<16x128xf32>
    %230 = arith.truncf %229 : vector<16x128xf32> to vector<16x128xbf16>
    %c0_181 = arith.constant 0 : index
    %c384 = arith.constant 384 : index
    %231 = vector.load %arg13[%c0_181, %c384] : memref<16x512xbf16, #tpu.memory_space<vmem>>, vector<16x128xbf16>
    tpu.vector_store %arg13[%c0_181, %c384], %230 {strides = array<i32>} : memref<16x512xbf16, #tpu.memory_space<vmem>>, vector<16x128xbf16>,
    %c0_182 = arith.constant 0 : index
    %c0_183 = arith.constant 0 : index
    %232 = vector.load %arg13[%c0_182, %c0_183] : memref<16x512xbf16, #tpu.memory_space<vmem>>, vector<16x512xbf16>
    %c0_184 = arith.constant 0 : index
    %c0_185 = arith.constant 0 : index
    %233 = vector.load %arg6[%c0_184, %c0_185] : memref<512x128xbf16, #tpu.memory_space<vmem>>, vector<512x128xbf16>
    %cst_186 = arith.constant dense<0.000000e+00> : vector<16x128xf32>
    %234 = tpu.matmul %232, %233, %cst_186 {dimension_numbers = #tpu.dot_dimension_numbers<[1], [0], [0], [1], [0, 0, 1, 1], [], []>} : vector<16x512xbf16>, vector<512x128xbf16>, vector<16x128xf32> -> vector<16x128xf32>
    %c0_187 = arith.constant 0 : index
    %c0_188 = arith.constant 0 : index
    %235 = vector.load %arg7[%c0_187, %c0_188] : memref<1x128xf32, #tpu.memory_space<vmem>>, vector<1x128xf32>
    %236 = vector.broadcast %235 : vector<1x128xf32> to vector<16x128xf32>
    %237 = arith.addf %234, %236 : vector<16x128xf32>
    %cst_189 = arith.constant 0.000000e+00 : f32
    %238 = vector.broadcast %cst_189 : f32 to vector<16x128xf32>
    %239 = arith.maximumf %237, %238 : vector<16x128xf32>
    %240 = arith.truncf %239 : vector<16x128xf32> to vector<16x128xbf16>
    %c0_190 = arith.constant 0 : index
    %c0_191 = arith.constant 0 : index
    %241 = vector.load %arg8[%c0_190, %c0_191] : memref<128x128xbf16, #tpu.memory_space<vmem>>, vector<128x128xbf16>
    %cst_192 = arith.constant dense<0.000000e+00> : vector<16x128xf32>
    %242 = tpu.matmul %240, %241, %cst_192 {dimension_numbers = #tpu.dot_dimension_numbers<[1], [0], [0], [1], [0, 0, 1, 1], [], []>} : vector<16x128xbf16>, vector<128x128xbf16>, vector<16x128xf32> -> vector<16x128xf32>
    %c0_193 = arith.constant 0 : index
    %c0_194 = arith.constant 0 : index
    %243 = vector.load %arg9[%c0_193, %c0_194] : memref<1x128xf32, #tpu.memory_space<vmem>>, vector<1x128xf32>
    %244 = vector.broadcast %243 : vector<1x128xf32> to vector<16x128xf32>
    %245 = arith.addf %242, %244 : vector<16x128xf32>
    %cst_195 = arith.constant dense<0xFF800000> : vector<16xf32>
    %246 = vector.multi_reduction <maximumf>, %245, %cst_195 [1] : vector<16x128xf32> to vector<16xf32>
    %247 = vector.shape_cast %246 : vector<16xf32> to vector<16x1xf32>
    %248 = vector.broadcast %247 : vector<16x1xf32> to vector<16x128xf32>
    %249 = arith.subf %245, %248 : vector<16x128xf32>
    %250 = math.exp %249 : vector<16x128xf32>
    %cst_196 = arith.constant dense<0.000000e+00> : vector<16xf32>
    %251 = vector.multi_reduction <add>, %250, %cst_196 [1] : vector<16x128xf32> to vector<16xf32>
    %252 = vector.shape_cast %251 : vector<16xf32> to vector<16x1xf32>
    %253 = math.log %252 : vector<16x1xf32>
    %254 = vector.broadcast %253 : vector<16x1xf32> to vector<16x128xf32>
    %255 = arith.subf %249, %254 : vector<16x128xf32>
    %c0_197 = arith.constant 0 : index
    %c0_198 = arith.constant 0 : index
    %256 = vector.load %arg10[%c0_197, %c0_198] : memref<16x128xf32, #tpu.memory_space<vmem>>, vector<16x128xf32>
    tpu.vector_store %arg10[%c0_197, %c0_198], %255 {strides = array<i32>} : memref<16x128xf32, #tpu.memory_space<vmem>>, vector<16x128xf32>,
    return
  }
  func.func @transform_0(%arg0: i32) -> (i32, i32) {
    %c0_i32 = arith.constant 0 : i32
    %c0_i32_0 = arith.constant 0 : i32
    return %arg0, %c0_i32 : i32, i32
  }
  func.func @transform_1(%arg0: i32) -> (i32, i32, i32) {
    %c0_i32 = arith.constant 0 : i32
    %c0_i32_0 = arith.constant 0 : i32
    %c0_i32_1 = arith.constant 0 : i32
    %c0_i32_2 = arith.constant 0 : i32
    return %c0_i32, %c0_i32_0, %c0_i32_1 : i32, i32, i32
  }
  func.func @transform_2(%arg0: i32) -> (i32, i32) {
    %c0_i32 = arith.constant 0 : i32
    %c0_i32_0 = arith.constant 0 : i32
    %c0_i32_1 = arith.constant 0 : i32
    return %c0_i32, %c0_i32_0 : i32, i32
  }
  func.func @transform_3(%arg0: i32) -> (i32, i32, i32) {
    %c0_i32 = arith.constant 0 : i32
    %c0_i32_0 = arith.constant 0 : i32
    %c0_i32_1 = arith.constant 0 : i32
    %c0_i32_2 = arith.constant 0 : i32
    return %c0_i32, %c0_i32_0, %c0_i32_1 : i32, i32, i32
  }
  func.func @transform_4(%arg0: i32) -> (i32, i32) {
    %c0_i32 = arith.constant 0 : i32
    %c0_i32_0 = arith.constant 0 : i32
    %c0_i32_1 = arith.constant 0 : i32
    return %c0_i32, %c0_i32_0 : i32, i32
  }
  func.func @transform_5(%arg0: i32) -> (i32, i32) {
    %c0_i32 = arith.constant 0 : i32
    %c0_i32_0 = arith.constant 0 : i32
    %c0_i32_1 = arith.constant 0 : i32
    return %c0_i32, %c0_i32_0 : i32, i32
  }
  func.func @transform_6(%arg0: i32) -> (i32, i32) {
    %c0_i32 = arith.constant 0 : i32
    %c0_i32_0 = arith.constant 0 : i32
    %c0_i32_1 = arith.constant 0 : i32
    return %c0_i32, %c0_i32_0 : i32, i32
  }
  func.func @transform_7(%arg0: i32) -> (i32, i32) {
    %c0_i32 = arith.constant 0 : i32
    %c0_i32_0 = arith.constant 0 : i32
    %c0_i32_1 = arith.constant 0 : i32
    return %c0_i32, %c0_i32_0 : i32, i32
  }
  func.func @transform_8(%arg0: i32) -> (i32, i32) {
    %c0_i32 = arith.constant 0 : i32
    %c0_i32_0 = arith.constant 0 : i32
    %c0_i32_1 = arith.constant 0 : i32
    return %c0_i32, %c0_i32_0 : i32, i32
  }
  func.func @transform_9(%arg0: i32) -> (i32, i32) {
    %c0_i32 = arith.constant 0 : i32
    %c0_i32_0 = arith.constant 0 : i32
    return %arg0, %c0_i32 : i32, i32
  }
}

</mosaic_0001>

<llo_original>
// kernel: net_forward.1
$region0: #{net_forward.1}
  #allocation0 [shape = 'u32[]', space=smem, size = 0x4, offset = 0x4, fixed_abs, tag = 'smem constant byte address 0x4 - core index']
  #allocation1 [shape = 'u32[144,128]{1,0:T(1,128)}', space=vmem, size = 0x12000, scoped, tag = 'internal scratch']
  #allocation2 [shape = 'f32[384,256]{1,0:T(8,128)}', space=vmem, size = 0x60000, scoped, tag = 'scratch operand']
  #allocation3 [shape = 'bf16[192,128]{1,0:T(16,128)(2,1)}', space=vmem, size = 0xc000, scoped, tag = 'scratch operand']
  #allocation4 [shape = 'bf16[16,512]{1,0:T(16,128)(2,1)}', space=vmem, size = 0x4000, scoped, tag = 'scratch operand']
  %s0 = inlined_call_operand.vmem [shape: bf16[448,28], index: 0, kind: input, shape index: {}]
  %s1 = inlined_call_operand.vmem [shape: bf16[5,28,256], index: 1, kind: input, shape index: {}]
  %s2 = inlined_call_operand.vmem [shape: f32[1,256], index: 2, kind: input, shape index: {}]
  %s3 = inlined_call_operand.vmem [shape: bf16[5,128,256], index: 3, kind: input, shape index: {}]
  %s4 = inlined_call_operand.vmem [shape: f32[1,256], index: 4, kind: input, shape index: {}]
  %s5 = inlined_call_operand.vmem [shape: bf16[512,128], index: 5, kind: input, shape index: {}]
  %s6 = inlined_call_operand.vmem [shape: f32[1,128], index: 6, kind: input, shape index: {}]
  %s7 = inlined_call_operand.vmem [shape: bf16[128,128], index: 7, kind: input, shape index: {}]
  %s8 = inlined_call_operand.vmem [shape: f32[1,128], index: 8, kind: input, shape index: {}]
  %s9 = inlined_call_operand.vmem [shape: f32[16,128], index: 9, kind: output, shape index: {}]
  %s10 = sld [smem:[#allocation0]]
  $region46: #{net_forward.1} parent=0
    _
  %s12 = ssub.s32 1, %s10
  %s13 = scalar_select 0, %s12, %s10
  // Predicated region
  $region2: #{net_forward.1} parent=0 // pred_check
    _
  $region3: #{net_forward.1} parent=0 // pred_check_branch
    %15 = sbr.rel (0) target = $region5
  $region4: #{net_forward.1} parent=0 // pred_region
    _
  $region5: #{net_forward.1} parent=0 // pred_fallthru
    _
  // Predicated region
  $region6: #{net_forward.1} parent=0 // pred_check
    _
  $region7: #{net_forward.1} parent=0 // pred_check_branch
    %17 = sbr.rel (0) target = $region9
  $region8: #{net_forward.1} parent=0 // pred_region
    _
  $region9: #{net_forward.1} parent=0 // pred_fallthru
    _
  // Predicated region
  $region10: #{net_forward.1} parent=0 // pred_check
    _
  $region11: #{net_forward.1} parent=0 // pred_check_branch
    %19 = sbr.rel (0) target = $region13
  $region12: #{net_forward.1} parent=0 // pred_region
    _
  $region13: #{net_forward.1} parent=0 // pred_fallthru
    _
  // Predicated region
  $region14: #{net_forward.1} parent=0 // pred_check
    _
  $region15: #{net_forward.1} parent=0 // pred_check_branch
    %21 = sbr.rel (0) target = $region17
  $region16: #{net_forward.1} parent=0 // pred_region
    _
  $region17: #{net_forward.1} parent=0 // pred_fallthru
    _
  // Predicated region
  $region18: #{net_forward.1} parent=0 // pred_check
    _
  $region19: #{net_forward.1} parent=0 // pred_check_branch
    %23 = sbr.rel (0) target = $region21
  $region20: #{net_forward.1} parent=0 // pred_region
    _
  $region21: #{net_forward.1} parent=0 // pred_fallthru
    _
  // Predicated region
  $region22: #{net_forward.1} parent=0 // pred_check
    _
  $region23: #{net_forward.1} parent=0 // pred_check_branch
    %25 = sbr.rel (0) target = $region25
  $region24: #{net_forward.1} parent=0 // pred_region
    _
  $region25: #{net_forward.1} parent=0 // pred_fallthru
    _
  // Predicated region
  $region26: #{net_forward.1} parent=0 // pred_check
    _
  $region27: #{net_forward.1} parent=0 // pred_check_branch
    %27 = sbr.rel (0) target = $region29
  $region28: #{net_forward.1} parent=0 // pred_region
    _
  $region29: #{net_forward.1} parent=0 // pred_fallthru
    _
  // Predicated region
  $region30: #{net_forward.1} parent=0 // pred_check
    _
  $region31: #{net_forward.1} parent=0 // pred_check_branch
    %29 = sbr.rel (0) target = $region33
  $region32: #{net_forward.1} parent=0 // pred_region
    _
  $region33: #{net_forward.1} parent=0 // pred_fallthru
    _
  // Predicated region
  $region34: #{net_forward.1} parent=0 // pred_check
    _
  $region35: #{net_forward.1} parent=0 // pred_check_branch
    %31 = sbr.rel (0) target = $region37
  $region36: #{net_forward.1} parent=0 // pred_region
    _
  $region37: #{net_forward.1} parent=0 // pred_fallthru
    _
  %v33 = vld [vmem:[%s0] sm:$0xf]
  %v34 = vld [vmem:[%s0 + $0x4] sm:$0xf]
  %v35 = vld [vmem:[%s0 + $0x8] sm:$0xf]
  %v36 = vld [vmem:[%s0 + $0xc] sm:$0xf]
  %v37 = vld [vmem:[%s0 + $0x10] sm:$0xf]
  %v38 = vld [vmem:[%s0 + $0x14] sm:$0xf]
  %v39 = vld [vmem:[%s0 + $0x18] sm:$0xf]
  %v40 = vld [vmem:[%s0 + $0x1c] sm:$0xf]
  %v41 = vld [vmem:[%s0 + $0x20] sm:$0xf]
  %v42 = vld [vmem:[%s0 + $0x24] sm:$0xf]
  %v43 = vld [vmem:[%s0 + $0x28] sm:$0xf]
  %v44 = vld [vmem:[%s0 + $0x2c] sm:$0xf]
  %v45 = vld [vmem:[%s0 + $0x30] sm:$0xf]
  %v46 = vld [vmem:[%s0 + $0x34] sm:$0xf]
  %v47 = vld [vmem:[%s0 + $0x38] sm:$0xf]
  %v48 = vld [vmem:[%s0 + $0x3c] sm:$0xf]
  %v49 = vld [vmem:[%s0 + $0x40] sm:$0xf]
  %v50 = vld [vmem:[%s0 + $0x44] sm:$0xf]
  %v51 = vld [vmem:[%s0 + $0x48] sm:$0xf]
  %v52 = vld [vmem:[%s0 + $0x4c] sm:$0xf]
  %v53 = vld [vmem:[%s0 + $0x50] sm:$0xf]
  %v54 = vld [vmem:[%s0 + $0x54] sm:$0xf]
  %v55 = vld [vmem:[%s0 + $0x58] sm:$0xf]
  %v56 = vld [vmem:[%s0 + $0x5c] sm:$0xf]
  %v57 = vld [vmem:[%s0 + $0x60] sm:$0xf]
  %v58 = vld [vmem:[%s0 + $0x64] sm:$0xf]
  %v59 = vld [vmem:[%s0 + $0x68] sm:$0xf]
  %v60 = vld [vmem:[%s0 + $0x6c] sm:$0xf]
  %v61 = vld [vmem:[%s0 + $0x70] sm:$0xf]
  %v62 = vld [vmem:[%s0 + $0x74] sm:$0xf]
  %v63 = vld [vmem:[%s0 + $0x78] sm:$0xf]
  %v64 = vld [vmem:[%s0 + $0x7c] sm:$0xf]
  %v65 = vld [vmem:[%s0 + $0x80] sm:$0xf]
  %v66 = vld [vmem:[%s0 + $0x84] sm:$0xf]
  %v67 = vld [vmem:[%s0 + $0x88] sm:$0xf]
  %v68 = vld [vmem:[%s0 + $0x8c] sm:$0xf]
  %v69 = vld [vmem:[%s0 + $0x90] sm:$0xf]
  %v70 = vld [vmem:[%s0 + $0x94] sm:$0xf]
  %v71 = vld [vmem:[%s0 + $0x98] sm:$0xf]
  %v72 = vld [vmem:[%s0 + $0x9c] sm:$0xf]
  %v73 = vld [vmem:[%s0 + $0xa0] sm:$0xf]
  %v74 = vld [vmem:[%s0 + $0xa4] sm:$0xf]
  %v75 = vld [vmem:[%s0 + $0xa8] sm:$0xf]
  %v76 = vld [vmem:[%s0 + $0xac] sm:$0xf]
  %v77 = vld [vmem:[%s0 + $0xb0] sm:$0xf]
  %v78 = vld [vmem:[%s0 + $0xb4] sm:$0xf]
  %v79 = vld [vmem:[%s0 + $0xb8] sm:$0xf]
  %v80 = vld [vmem:[%s0 + $0xbc] sm:$0xf]
  %v81 = vld [vmem:[%s1] sm:$0xff]
  %v82 = vld [vmem:[%s1 + $0x8] sm:$0xff]
  %v83 = vld [vmem:[%s1 + $0x10] sm:$0xff]
  %v84 = vld [vmem:[%s1 + $0x18] sm:$0x33]
  %v85 = vld [vmem:[%s2] sm:$0x3]
  %v87 = vlaneseq
  %v88 = vshrl.u32 %v87, 7
  %v89 = vsub.s32 0, %v88
  %v90 = vrot.slane %v85, %v89
  %v91 = vlaneseq
  %v92 = vshrl.u32 %v91, 7
  %v93 = vsub.s32 1, %v92
  %v94 = vrot.slane %v85, %v93
  %v145 = vunpack.c.l.b16 %v33
  %v146 = vunpack.c.l.b16 %v34
  %v147 = vunpack.c.l.b16 %v35
  %v148 = vunpack.c.l.b16 %v36
  %v149 = vunpack.c.l.b16 %v37
  %v150 = vunpack.c.l.b16 %v38
  %v151 = vunpack.c.l.b16 %v39
  %v152 = vunpack.c.l.b16 %v40
  %v153 = vunpack.c.l.b16 %v41
  %v154 = vunpack.c.l.b16 %v42
  %v155 = vunpack.c.l.b16 %v43
  %v156 = vunpack.c.l.b16 %v44
  %v157 = vunpack.c.l.b16 %v45
  %v158 = vunpack.c.l.b16 %v46
  %v159 = vunpack.c.l.b16 %v47
  %v160 = vunpack.c.l.b16 %v48
  %v161 = vunpack.c.l.b16 %v49
  %v162 = vunpack.c.l.b16 %v50
  %v163 = vunpack.c.l.b16 %v51
  %v164 = vunpack.c.l.b16 %v52
  %v165 = vunpack.c.l.b16 %v53
  %v166 = vunpack.c.l.b16 %v54
  %v167 = vunpack.c.l.b16 %v55
  %v168 = vunpack.c.l.b16 %v56
  %v169 = vunpack.c.l.b16 %v57
  %v170 = vunpack.c.l.b16 %v58
  %v171 = vunpack.c.l.b16 %v59
  %v172 = vunpack.c.l.b16 %v60
  %v173 = vunpack.c.l.b16 %v61
  %v174 = vunpack.c.l.b16 %v62
  %v175 = vunpack.c.l.b16 %v63
  %v176 = vunpack.c.l.b16 %v64
  %v177 = vunpack.c.l.b16 %v65
  %v178 = vunpack.c.l.b16 %v66
  %v179 = vunpack.c.l.b16 %v67
  %v180 = vunpack.c.l.b16 %v68
  %v181 = vunpack.c.l.b16 %v69
  %v182 = vunpack.c.l.b16 %v70
  %v183 = vunpack.c.l.b16 %v71
  %v184 = vunpack.c.l.b16 %v72
  %v185 = vunpack.c.l.b16 %v73
  %v186 = vunpack.c.l.b16 %v74
  %v187 = vunpack.c.l.b16 %v75
  %v188 = vunpack.c.l.b16 %v76
  %v189 = vunpack.c.l.b16 %v77
  %v190 = vunpack.c.l.b16 %v78
  %v191 = vunpack.c.l.b16 %v79
  %v192 = vunpack.c.l.b16 %v80
  %v193 = vpack.c.b16 %v146, %v145
  %v194 = vpack.c.b16 %v148, %v147
  %v195 = vpack.c.b16 %v150, %v149
  %v196 = vpack.c.b16 %v152, %v151
  %v197 = vpack.c.b16 %v154, %v153
  %v198 = vpack.c.b16 %v156, %v155
  %v199 = vpack.c.b16 %v158, %v157
  %v200 = vpack.c.b16 %v160, %v159
  %v201 = vpack.c.b16 %v162, %v161
  %v202 = vpack.c.b16 %v164, %v163
  %v203 = vpack.c.b16 %v166, %v165
  %v204 = vpack.c.b16 %v168, %v167
  %v205 = vpack.c.b16 %v170, %v169
  %v206 = vpack.c.b16 %v172, %v171
  %v207 = vpack.c.b16 %v174, %v173
  %v208 = vpack.c.b16 %v176, %v175
  %v209 = vpack.c.b16 %v178, %v177
  %v210 = vpack.c.b16 %v180, %v179
  %v211 = vpack.c.b16 %v182, %v181
  %v212 = vpack.c.b16 %v184, %v183
  %v213 = vpack.c.b16 %v186, %v185
  %v214 = vpack.c.b16 %v188, %v187
  %v215 = vpack.c.b16 %v190, %v189
  %v216 = vpack.c.b16 %v192, %v191
  %v221 = vunpack.c.l.b16 %v81
  %v222 = vunpack.c.h.b16 %v81
  %v223 = vunpack.c.l.b16 %v82
  %v224 = vunpack.c.h.b16 %v82
  %v225 = vunpack.c.l.b16 %v83
  %v226 = vunpack.c.h.b16 %v83
  %v227 = vunpack.c.l.b16 %v84
  %v228 = vunpack.c.h.b16 %v84
  %v229 = vpack.c.b16 %v223, %v221
  %v230 = vpack.c.b16 %v224, %v222
  %v231 = vpack.c.b16 %v227, %v225
  %v232 = vpack.c.b16 %v228, %v226
  %vm235 = vcmask 228352
  %v237 = vsel %vm235, %v193, 0
  %v240 = vsel %vm235, %v194, 0
  %v243 = vsel %vm235, %v195, 0
  %v246 = vsel %vm235, %v196, 0
  %v249 = vsel %vm235, %v197, 0
  %v252 = vsel %vm235, %v198, 0
  %v255 = vsel %vm235, %v199, 0
  %v258 = vsel %vm235, %v200, 0
  %v261 = vsel %vm235, %v201, 0
  %v264 = vsel %vm235, %v202, 0
  %v267 = vsel %vm235, %v203, 0
  %v270 = vsel %vm235, %v204, 0
  %v273 = vsel %vm235, %v205, 0
  %v276 = vsel %vm235, %v206, 0
  %v279 = vsel %vm235, %v207, 0
  %v282 = vsel %vm235, %v208, 0
  %v285 = vsel %vm235, %v209, 0
  %v288 = vsel %vm235, %v210, 0
  %v291 = vsel %vm235, %v211, 0
  %v294 = vsel %vm235, %v212, 0
  %v297 = vsel %vm235, %v213, 0
  %v300 = vsel %vm235, %v214, 0
  %v303 = vsel %vm235, %v215, 0
  %v306 = vsel %vm235, %v216, 0
  %vm308 = vcmask 1045504
  %v310 = vsel %vm308, %v231, 0
  %v313 = vsel %vm308, %v232, 0
  %315 = vmatprep.subr.bf16.mxu0 %v230
  %316 = vmatpush1.bf16.msra.mxu0 %v229
  %317 = vmatprep.subr.bf16.mxu0 %v313
  %318 = vmatpush1.bf16.msra.mxu0 %v310
  %319 = vmatprep.subr.bf16.mxu0 0
  %320 = vmatpush1.bf16.msra.mxu0 0
  %321 = vmatprep.subr.bf16.mxu0 0
  %322 = vmatpush1.bf16.msra.mxu0 0
  %323 = vmatprep.subr.bf16.mxu0 0
  %324 = vmatpush1.bf16.msra.mxu0 0
  %325 = vmatprep.subr.bf16.mxu0 0
  %326 = vmatpush1.bf16.msra.mxu0 0
  %327 = vmatprep.subr.bf16.mxu0 0
  %328 = vmatpush1.bf16.msra.mxu0 0
  %329 = vmatprep.subr.bf16.mxu0 0
  %330 = vmatpush1.bf16.msra.mxu0 0
  %331 = vmatprep.subr.bf16.mxu0 0
  %332 = vmatpush1.bf16.msra.mxu0 0
  %333 = vmatprep.subr.bf16.mxu0 0
  %334 = vmatpush1.bf16.msra.mxu0 0
  %335 = vmatprep.subr.bf16.mxu0 0
  %336 = vmatpush1.bf16.msra.mxu0 0
  %337 = vmatprep.subr.bf16.mxu0 0
  %338 = vmatpush1.bf16.msra.mxu0 0
  %339 = vmatprep.subr.bf16.mxu0 0
  %340 = vmatpush1.bf16.msra.mxu0 0
  %341 = vmatprep.subr.bf16.mxu0 0
  %342 = vmatpush1.bf16.msra.mxu0 0
  %343 = vmatprep.subr.bf16.mxu0 0
  %344 = vmatpush1.bf16.msra.mxu0 0
  %345 = vmatprep.subr.bf16.mxu0 0
  %346 = vmatpush1.bf16.msra.mxu0 0
  %347 = vmatprep.mubr.bf16.mxu0 0
  %348 = vmatmul.mubr.bf16.gmra.mrb[0].mxu0 %v237
  %v349 = vpop.f32.mrb[0].mxu0
  %v350 = vadd.f32 %v90, %v349
  %v351 = vpop.f32.mrb[0].mxu0
  %v352 = vadd.f32 %v94, %v351
  %v353 = vpop.f32.mrb[0].mxu0
  %v354 = vadd.f32 %v90, %v353
  %v355 = vpop.f32.mrb[0].mxu0
  %v356 = vadd.f32 %v94, %v355
  %357 = vmatprep.mubr.bf16.mxu0 0
  %358 = vmatmul.mubr.bf16.gmra.mrb[0].mxu0 %v240
  %v359 = vpop.f32.mrb[0].mxu0
  %v360 = vadd.f32 %v90, %v359
  %v361 = vpop.f32.mrb[0].mxu0
  %v362 = vadd.f32 %v94, %v361
  %v363 = vpop.f32.mrb[0].mxu0
  %v364 = vadd.f32 %v90, %v363
  %v365 = vpop.f32.mrb[0].mxu0
  %v366 = vadd.f32 %v94, %v365
  %367 = vmatprep.mubr.bf16.mxu0 0
  %368 = vmatmul.mubr.bf16.gmra.mrb[0].mxu0 %v243
  %v369 = vpop.f32.mrb[0].mxu0
  %v370 = vadd.f32 %v90, %v369
  %v371 = vpop.f32.mrb[0].mxu0
  %v372 = vadd.f32 %v94, %v371
  %v373 = vpop.f32.mrb[0].mxu0
  %v374 = vadd.f32 %v90, %v373
  %v375 = vpop.f32.mrb[0].mxu0
  %v376 = vadd.f32 %v94, %v375
  %377 = vmatprep.mubr.bf16.mxu0 0
  %378 = vmatmul.mubr.bf16.gmra.mrb[0].mxu0 %v246
  %v379 = vpop.f32.mrb[0].mxu0
  %v380 = vadd.f32 %v90, %v379
  %v381 = vpop.f32.mrb[0].mxu0
  %v382 = vadd.f32 %v94, %v381
  %v383 = vpop.f32.mrb[0].mxu0
  %v384 = vadd.f32 %v90, %v383
  %v385 = vpop.f32.mrb[0].mxu0
  %v386 = vadd.f32 %v94, %v385
  %387 = vmatprep.mubr.bf16.mxu0 0
  %388 = vmatmul.mubr.bf16.gmra.mrb[0].mxu0 %v249
  %v389 = vpop.f32.mrb[0].mxu0
  %v390 = vadd.f32 %v90, %v389
  %v391 = vpop.f32.mrb[0].mxu0
  %v392 = vadd.f32 %v94, %v391
  %v393 = vpop.f32.mrb[0].mxu0
  %v394 = vadd.f32 %v90, %v393
  %v395 = vpop.f32.mrb[0].mxu0
  %v396 = vadd.f32 %v94, %v395
  %397 = vmatprep.mubr.bf16.mxu0 0
  %398 = vmatmul.mubr.bf16.gmra.mrb[0].mxu0 %v252
  %v399 = vpop.f32.mrb[0].mxu0
  %v400 = vadd.f32 %v90, %v399
  %v401 = vpop.f32.mrb[0].mxu0
  %v402 = vadd.f32 %v94, %v401
  %v403 = vpop.f32.mrb[0].mxu0
  %v404 = vadd.f32 %v90, %v403
  %v405 = vpop.f32.mrb[0].mxu0
  %v406 = vadd.f32 %v94, %v405
  %407 = vmatprep.mubr.bf16.mxu0 0
  %408 = vmatmul.mubr.bf16.gmra.mrb[0].mxu0 %v255
  %v409 = vpop.f32.mrb[0].mxu0
  %v410 = vadd.f32 %v90, %v409
  %v411 = vpop.f32.mrb[0].mxu0
  %v412 = vadd.f32 %v94, %v411
  %v413 = vpop.f32.mrb[0].mxu0
  %v414 = vadd.f32 %v90, %v413
  %v415 = vpop.f32.mrb[0].mxu0
  %v416 = vadd.f32 %v94, %v415
  %417 = vmatprep.mubr.bf16.mxu0 0
  %418 = vmatmul.mubr.bf16.gmra.mrb[0].mxu0 %v258
  %v419 = vpop.f32.mrb[0].mxu0
  %v420 = vadd.f32 %v90, %v419
  %v421 = vpop.f32.mrb[0].mxu0
  %v422 = vadd.f32 %v94, %v421
  %v423 = vpop.f32.mrb[0].mxu0
  %v424 = vadd.f32 %v90, %v423
  %v425 = vpop.f32.mrb[0].mxu0
  %v426 = vadd.f32 %v94, %v425
  %427 = vmatprep.mubr.bf16.mxu0 0
  %428 = vmatmul.mubr.bf16.gmra.mrb[0].mxu0 %v261
  %v429 = vpop.f32.mrb[0].mxu0
  %v430 = vadd.f32 %v90, %v429
  %v431 = vpop.f32.mrb[0].mxu0
  %v432 = vadd.f32 %v94, %v431
  %v433 = vpop.f32.mrb[0].mxu0
  %v434 = vadd.f32 %v90, %v433
  %v435 = vpop.f32.mrb[0].mxu0
  %v436 = vadd.f32 %v94, %v435
  %437 = vmatprep.mubr.bf16.mxu0 0
  %438 = vmatmul.mubr.bf16.gmra.mrb[0].mxu0 %v264
  %v439 = vpop.f32.mrb[0].mxu0
  %v440 = vadd.f32 %v90, %v439
  %v441 = vpop.f32.mrb[0].mxu0
  %v442 = vadd.f32 %v94, %v441
  %v443 = vpop.f32.mrb[0].mxu0
  %v444 = vadd.f32 %v90, %v443
  %v445 = vpop.f32.mrb[0].mxu0
  %v446 = vadd.f32 %v94, %v445
  %447 = vmatprep.mubr.bf16.mxu0 0
  %448 = vmatmul.mubr.bf16.gmra.mrb[0].mxu0 %v267
  %v449 = vpop.f32.mrb[0].mxu0
  %v450 = vadd.f32 %v90, %v449
  %v451 = vpop.f32.mrb[0].mxu0
  %v452 = vadd.f32 %v94, %v451
  %v453 = vpop.f32.mrb[0].mxu0
  %v454 = vadd.f32 %v90, %v453
  %v455 = vpop.f32.mrb[0].mxu0
  %v456 = vadd.f32 %v94, %v455
  %457 = vmatprep.mubr.bf16.mxu0 0
  %458 = vmatmul.mubr.bf16.gmra.mrb[0].mxu0 %v270
  %v459 = vpop.f32.mrb[0].mxu0
  %v460 = vadd.f32 %v90, %v459
  %v461 = vpop.f32.mrb[0].mxu0
  %v462 = vadd.f32 %v94, %v461
  %v463 = vpop.f32.mrb[0].mxu0
  %v464 = vadd.f32 %v90, %v463
  %v465 = vpop.f32.mrb[0].mxu0
  %v466 = vadd.f32 %v94, %v465
  %467 = vmatprep.mubr.bf16.mxu0 0
  %468 = vmatmul.mubr.bf16.gmra.mrb[0].mxu0 %v273
  %v469 = vpop.f32.mrb[0].mxu0
  %v470 = vadd.f32 %v90, %v469
  %v471 = vpop.f32.mrb[0].mxu0
  %v472 = vadd.f32 %v94, %v471
  %v473 = vpop.f32.mrb[0].mxu0
  %v474 = vadd.f32 %v90, %v473
  %v475 = vpop.f32.mrb[0].mxu0
  %v476 = vadd.f32 %v94, %v475
  %477 = vmatprep.mubr.bf16.mxu0 0
  %478 = vmatmul.mubr.bf16.gmra.mrb[0].mxu0 %v276
  %v479 = vpop.f32.mrb[0].mxu0
  %v480 = vadd.f32 %v90, %v479
  %v481 = vpop.f32.mrb[0].mxu0
  %v482 = vadd.f32 %v94, %v481
  %v483 = vpop.f32.mrb[0].mxu0
  %v484 = vadd.f32 %v90, %v483
  %v485 = vpop.f32.mrb[0].mxu0
  %v486 = vadd.f32 %v94, %v485
  %487 = vmatprep.mubr.bf16.mxu0 0
  %488 = vmatmul.mubr.bf16.gmra.mrb[0].mxu0 %v279
  %v489 = vpop.f32.mrb[0].mxu0
  %v490 = vadd.f32 %v90, %v489
  %v491 = vpop.f32.mrb[0].mxu0
  %v492 = vadd.f32 %v94, %v491
  %v493 = vpop.f32.mrb[0].mxu0
  %v494 = vadd.f32 %v90, %v493
  %v495 = vpop.f32.mrb[0].mxu0
  %v496 = vadd.f32 %v94, %v495
  %497 = vmatprep.mubr.bf16.mxu0 0
  %498 = vmatmul.mubr.bf16.gmra.mrb[0].mxu0 %v282
  %v499 = vpop.f32.mrb[0].mxu0
  %v500 = vadd.f32 %v90, %v499
  %v501 = vpop.f32.mrb[0].mxu0
  %v502 = vadd.f32 %v94, %v501
  %v503 = vpop.f32.mrb[0].mxu0
  %v504 = vadd.f32 %v90, %v503
  %v505 = vpop.f32.mrb[0].mxu0
  %v506 = vadd.f32 %v94, %v505
  %507 = vmatprep.mubr.bf16.mxu0 0
  %508 = vmatmul.mubr.bf16.gmra.mrb[0].mxu0 %v285
  %v509 = vpop.f32.mrb[0].mxu0
  %v510 = vadd.f32 %v90, %v509
  %v511 = vpop.f32.mrb[0].mxu0
  %v512 = vadd.f32 %v94, %v511
  %v513 = vpop.f32.mrb[0].mxu0
  %v514 = vadd.f32 %v90, %v513
  %v515 = vpop.f32.mrb[0].mxu0
  %v516 = vadd.f32 %v94, %v515
  %517 = vmatprep.mubr.bf16.mxu0 0
  %518 = vmatmul.mubr.bf16.gmra.mrb[0].mxu0 %v288
  %v519 = vpop.f32.mrb[0].mxu0
  %v520 = vadd.f32 %v90, %v519
  %v521 = vpop.f32.mrb[0].mxu0
  %v522 = vadd.f32 %v94, %v521
  %v523 = vpop.f32.mrb[0].mxu0
  %v524 = vadd.f32 %v90, %v523
  %v525 = vpop.f32.mrb[0].mxu0
  %v526 = vadd.f32 %v94, %v525
  %527 = vmatprep.mubr.bf16.mxu0 0
  %528 = vmatmul.mubr.bf16.gmra.mrb[0].mxu0 %v291
  %v529 = vpop.f32.mrb[0].mxu0
  %v530 = vadd.f32 %v90, %v529
  %v531 = vpop.f32.mrb[0].mxu0
  %v532 = vadd.f32 %v94, %v531
  %v533 = vpop.f32.mrb[0].mxu0
  %v534 = vadd.f32 %v90, %v533
  %v535 = vpop.f32.mrb[0].mxu0
  %v536 = vadd.f32 %v94, %v535
  %537 = vmatprep.mubr.bf16.mxu0 0
  %538 = vmatmul.mubr.bf16.gmra.mrb[0].mxu0 %v294
  %v539 = vpop.f32.mrb[0].mxu0
  %v540 = vadd.f32 %v90, %v539
  %v541 = vpop.f32.mrb[0].mxu0
  %v542 = vadd.f32 %v94, %v541
  %v543 = vpop.f32.mrb[0].mxu0
  %v544 = vadd.f32 %v90, %v543
  %v545 = vpop.f32.mrb[0].mxu0
  %v546 = vadd.f32 %v94, %v545
  %547 = vmatprep.mubr.bf16.mxu0 0
  %548 = vmatmul.mubr.bf16.gmra.mrb[0].mxu0 %v297
  %v549 = vpop.f32.mrb[0].mxu0
  %v550 = vadd.f32 %v90, %v549
  %v551 = vpop.f32.mrb[0].mxu0
  %v552 = vadd.f32 %v94, %v551
  %v553 = vpop.f32.mrb[0].mxu0
  %v554 = vadd.f32 %v90, %v553
  %v555 = vpop.f32.mrb[0].mxu0
  %v556 = vadd.f32 %v94, %v555
  %557 = vmatprep.mubr.bf16.mxu0 0
  %558 = vmatmul.mubr.bf16.gmra.mrb[0].mxu0 %v300
  %v559 = vpop.f32.mrb[0].mxu0
  %v560 = vadd.f32 %v90, %v559
  %v561 = vpop.f32.mrb[0].mxu0
  %v562 = vadd.f32 %v94, %v561
  %v563 = vpop.f32.mrb[0].mxu0
  %v564 = vadd.f32 %v90, %v563
  %v565 = vpop.f32.mrb[0].mxu0
  %v566 = vadd.f32 %v94, %v565
  %567 = vmatprep.mubr.bf16.mxu0 0
  %568 = vmatmul.mubr.bf16.gmra.mrb[0].mxu0 %v303
  %v569 = vpop.f32.mrb[0].mxu0
  %v570 = vadd.f32 %v90, %v569
  %v571 = vpop.f32.mrb[0].mxu0
  %v572 = vadd.f32 %v94, %v571
  %v573 = vpop.f32.mrb[0].mxu0
  %v574 = vadd.f32 %v90, %v573
  %v575 = vpop.f32.mrb[0].mxu0
  %v576 = vadd.f32 %v94, %v575
  %577 = vmatprep.mubr.bf16.mxu0 0
  %578 = vmatmul.mubr.bf16.gmra.mrb[0].mxu0 %v306
  %v579 = vpop.f32.mrb[0].mxu0
  %v580 = vadd.f32 %v90, %v579
  %v581 = vpop.f32.mrb[0].mxu0
  %v582 = vadd.f32 %v94, %v581
  %v583 = vpop.f32.mrb[0].mxu0
  %v584 = vadd.f32 %v90, %v583
  %v585 = vpop.f32.mrb[0].mxu0
  %v586 = vadd.f32 %v94, %v585
  %587 = vdwg.mxu0
  %588 = vst [vmem:[#allocation2] sm:$0xff] %v350
  %589 = vst [vmem:[#allocation2 + $0x8] sm:$0xff] %v352
  %590 = vst [vmem:[#allocation2 + $0x10] sm:$0xff] %v354
  %591 = vst [vmem:[#allocation2 + $0x18] sm:$0xff] %v356
  %592 = vst [vmem:[#allocation2 + $0x20] sm:$0xff] %v360
  %593 = vst [vmem:[#allocation2 + $0x28] sm:$0xff] %v362
  %594 = vst [vmem:[#allocation2 + $0x30] sm:$0xff] %v364
  %595 = vst [vmem:[#allocation2 + $0x38] sm:$0xff] %v366
  %596 = vst [vmem:[#allocation2 + $0x40] sm:$0xff] %v370
  %597 = vst [vmem:[#allocation2 + $0x48] sm:$0xff] %v372
  %598 = vst [vmem:[#allocation2 + $0x50] sm:$0xff] %v374
  %599 = vst [vmem:[#allocation2 + $0x58] sm:$0xff] %v376
  %600 = vst [vmem:[#allocation2 + $0x60] sm:$0xff] %v380
  %601 = vst [vmem:[#allocation2 + $0x68] sm:$0xff] %v382
  %602 = vst [vmem:[#allocation2 + $0x70] sm:$0xff] %v384
  %603 = vst [vmem:[#allocation2 + $0x78] sm:$0xff] %v386
  %604 = vst [vmem:[#allocation2 + $0x80] sm:$0xff] %v390
  %605 = vst [vmem:[#allocation2 + $0x88] sm:$0xff] %v392
  %606 = vst [vmem:[#allocation2 + $0x90] sm:$0xff] %v394
  %607 = vst [vmem:[#allocation2 + $0x98] sm:$0xff] %v396
  %608 = vst [vmem:[#allocation2 + $0xa0] sm:$0xff] %v400
  %609 = vst [vmem:[#allocation2 + $0xa8] sm:$0xff] %v402
  %610 = vst [vmem:[#allocation2 + $0xb0] sm:$0xff] %v404
  %611 = vst [vmem:[#allocation2 + $0xb8] sm:$0xff] %v406
  %612 = vst [vmem:[#allocation2 + $0xc0] sm:$0xff] %v410
  %613 = vst [vmem:[#allocation2 + $0xc8] sm:$0xff] %v412
  %614 = vst [vmem:[#allocation2 + $0xd0] sm:$0xff] %v414
  %615 = vst [vmem:[#allocation2 + $0xd8] sm:$0xff] %v416
  %616 = vst [vmem:[#allocation2 + $0xe0] sm:$0xff] %v420
  %617 = vst [vmem:[#allocation2 + $0xe8] sm:$0xff] %v422
  %618 = vst [vmem:[#allocation2 + $0xf0] sm:$0xff] %v424
  %619 = vst [vmem:[#allocation2 + $0xf8] sm:$0xff] %v426
  %620 = vst [vmem:[#allocation2 + $0x100] sm:$0xff] %v430
  %621 = vst [vmem:[#allocation2 + $0x108] sm:$0xff] %v432
  %622 = vst [vmem:[#allocation2 + $0x110] sm:$0xff] %v434
  %623 = vst [vmem:[#allocation2 + $0x118] sm:$0xff] %v436
  %624 = vst [vmem:[#allocation2 + $0x120] sm:$0xff] %v440
  %625 = vst [vmem:[#allocation2 + $0x128] sm:$0xff] %v442
  %626 = vst [vmem:[#allocation2 + $0x130] sm:$0xff] %v444
  %627 = vst [vmem:[#allocation2 + $0x138] sm:$0xff] %v446
  %628 = vst [vmem:[#allocation2 + $0x140] sm:$0xff] %v450
  %629 = vst [vmem:[#allocation2 + $0x148] sm:$0xff] %v452
  %630 = vst [vmem:[#allocation2 + $0x150] sm:$0xff] %v454
  %631 = vst [vmem:[#allocation2 + $0x158] sm:$0xff] %v456
  %632 = vst [vmem:[#allocation2 + $0x160] sm:$0xff] %v460
  %633 = vst [vmem:[#allocation2 + $0x168] sm:$0xff] %v462
  %634 = vst [vmem:[#allocation2 + $0x170] sm:$0xff] %v464
  %635 = vst [vmem:[#allocation2 + $0x178] sm:$0xff] %v466
  %636 = vst [vmem:[#allocation2 + $0x180] sm:$0xff] %v470
  %637 = vst [vmem:[#allocation2 + $0x188] sm:$0xff] %v472
  %638 = vst [vmem:[#allocation2 + $0x190] sm:$0xff] %v474
  %639 = vst [vmem:[#allocation2 + $0x198] sm:$0xff] %v476
  %640 = vst [vmem:[#allocation2 + $0x1a0] sm:$0xff] %v480
  %641 = vst [vmem:[#allocation2 + $0x1a8] sm:$0xff] %v482
  %642 = vst [vmem:[#allocation2 + $0x1b0] sm:$0xff] %v484
  %643 = vst [vmem:[#allocation2 + $0x1b8] sm:$0xff] %v486
  %644 = vst [vmem:[#allocation2 + $0x1c0] sm:$0xff] %v490
  %645 = vst [vmem:[#allocation2 + $0x1c8] sm:$0xff] %v492
  %646 = vst [vmem:[#allocation2 + $0x1d0] sm:$0xff] %v494
  %647 = vst [vmem:[#allocation2 + $0x1d8] sm:$0xff] %v496
  %648 = vst [vmem:[#allocation2 + $0x1e0] sm:$0xff] %v500
  %649 = vst [vmem:[#allocation2 + $0x1e8] sm:$0xff] %v502
  %650 = vst [vmem:[#allocation2 + $0x1f0] sm:$0xff] %v504
  %651 = vst [vmem:[#allocation2 + $0x1f8] sm:$0xff] %v506
  %652 = vst [vmem:[#allocation2 + $0x200] sm:$0xff] %v510
  %653 = vst [vmem:[#allocation2 + $0x208] sm:$0xff] %v512
  %654 = vst [vmem:[#allocation2 + $0x210] sm:$0xff] %v514
  %655 = vst [vmem:[#allocation2 + $0x218] sm:$0xff] %v516
  %656 = vst [vmem:[#allocation2 + $0x220] sm:$0xff] %v520
  %657 = vst [vmem:[#allocation2 + $0x228] sm:$0xff] %v522
  %658 = vst [vmem:[#allocation2 + $0x230] sm:$0xff] %v524
  %659 = vst [vmem:[#allocation2 + $0x238] sm:$0xff] %v526
  %660 = vst [vmem:[#allocation2 + $0x240] sm:$0xff] %v530
  %661 = vst [vmem:[#allocation2 + $0x248] sm:$0xff] %v532
  %662 = vst [vmem:[#allocation2 + $0x250] sm:$0xff] %v534
  %663 = vst [vmem:[#allocation2 + $0x258] sm:$0xff] %v536
  %664 = vst [vmem:[#allocation2 + $0x260] sm:$0xff] %v540
  %665 = vst [vmem:[#allocation2 + $0x268] sm:$0xff] %v542
  %666 = vst [vmem:[#allocation2 + $0x270] sm:$0xff] %v544
  %667 = vst [vmem:[#allocation2 + $0x278] sm:$0xff] %v546
  %668 = vst [vmem:[#allocation2 + $0x280] sm:$0xff] %v550
  %669 = vst [vmem:[#allocation2 + $0x288] sm:$0xff] %v552
  %670 = vst [vmem:[#allocation2 + $0x290] sm:$0xff] %v554
  %671 = vst [vmem:[#allocation2 + $0x298] sm:$0xff] %v556
  %672 = vst [vmem:[#allocation2 + $0x2a0] sm:$0xff] %v560
  %673 = vst [vmem:[#allocation2 + $0x2a8] sm:$0xff] %v562
  %674 = vst [vmem:[#allocation2 + $0x2b0] sm:$0xff] %v564
  %675 = vst [vmem:[#allocation2 + $0x2b8] sm:$0xff] %v566
  %676 = vst [vmem:[#allocation2 + $0x2c0] sm:$0xff] %v570
  %677 = vst [vmem:[#allocation2 + $0x2c8] sm:$0xff] %v572
  %678 = vst [vmem:[#allocation2 + $0x2d0] sm:$0xff] %v574
  %679 = vst [vmem:[#allocation2 + $0x2d8] sm:$0xff] %v576
  %680 = vst [vmem:[#allocation2 + $0x2e0] sm:$0xff] %v580
  %681 = vst [vmem:[#allocation2 + $0x2e8] sm:$0xff] %v582
  %682 = vst [vmem:[#allocation2 + $0x2f0] sm:$0xff] %v584
  %683 = vst [vmem:[#allocation2 + $0x2f8] sm:$0xff] %v586
  %v684 = vld [vmem:[%s0 + $0x8] sm:$0xf]
  %v685 = vld [vmem:[%s0 + $0xc] sm:$0xf]
  %v686 = vld [vmem:[%s0 + $0x10] sm:$0xf]
  %v687 = vld [vmem:[%s0 + $0x14] sm:$0xf]
  %v688 = vld [vmem:[%s0 + $0x18] sm:$0xf]
  %v689 = vld [vmem:[%s0 + $0x1c] sm:$0xf]
  %v690 = vld [vmem:[%s0 + $0x20] sm:$0xf]
  %v691 = vld [vmem:[%s0 + $0x24] sm:$0xf]
  %v692 = vld [vmem:[%s0 + $0x28] sm:$0xf]
  %v693 = vld [vmem:[%s0 + $0x2c] sm:$0xf]
  %v694 = vld [vmem:[%s0 + $0x30] sm:$0xf]
  %v695 = vld [vmem:[%s0 + $0x34] sm:$0xf]
  %v696 = vld [vmem:[%s0 + $0x38] sm:$0xf]
  %v697 = vld [vmem:[%s0 + $0x3c] sm:$0xf]
  %v698 = vld [vmem:[%s0 + $0x40] sm:$0xf]
  %v699 = vld [vmem:[%s0 + $0x44] sm:$0xf]
  %v700 = vld [vmem:[%s0 + $0x48] sm:$0xf]
  %v701 = vld [vmem:[%s0 + $0x4c] sm:$0xf]
  %v702 = vld [vmem:[%s0 + $0x50] sm:$0xf]
  %v703 = vld [vmem:[%s0 + $0x54] sm:$0xf]
  %v704 = vld [vmem:[%s0 + $0x58] sm:$0xf]
  %v705 = vld [vmem:[%s0 + $0x5c] sm:$0xf]
  %v706 = vld [vmem:[%s0 + $0x60] sm:$0xf]
  %v707 = vld [vmem:[%s0 + $0x64] sm:$0xf]
  %v708 = vld [vmem:[%s0 + $0x68] sm:$0xf]
  %v709 = vld [vmem:[%s0 + $0x6c] sm:$0xf]
  %v710 = vld [vmem:[%s0 + $0x70] sm:$0xf]
  %v711 = vld [vmem:[%s0 + $0x74] sm:$0xf]
  %v712 = vld [vmem:[%s0 + $0x78] sm:$0xf]
  %v713 = vld [vmem:[%s0 + $0x7c] sm:$0xf]
  %v714 = vld [vmem:[%s0 + $0x80] sm:$0xf]
  %v715 = vld [vmem:[%s0 + $0x84] sm:$0xf]
  %v716 = vld [vmem:[%s0 + $0x88] sm:$0xf]
  %v717 = vld [vmem:[%s0 + $0x8c] sm:$0xf]
  %v718 = vld [vmem:[%s0 + $0x90] sm:$0xf]
  %v719 = vld [vmem:[%s0 + $0x94] sm:$0xf]
  %v720 = vld [vmem:[%s0 + $0x98] sm:$0xf]
  %v721 = vld [vmem:[%s0 + $0x9c] sm:$0xf]
  %v722 = vld [vmem:[%s0 + $0xa0] sm:$0xf]
  %v723 = vld [vmem:[%s0 + $0xa4] sm:$0xf]
  %v724 = vld [vmem:[%s0 + $0xa8] sm:$0xf]
  %v725 = vld [vmem:[%s0 + $0xac] sm:$0xf]
  %v726 = vld [vmem:[%s0 + $0xb0] sm:$0xf]
  %v727 = vld [vmem:[%s0 + $0xb4] sm:$0xf]
  %v728 = vld [vmem:[%s0 + $0xb8] sm:$0xf]
  %v729 = vld [vmem:[%s0 + $0xbc] sm:$0xf]
  %v730 = vld [vmem:[%s0 + $0xc0] sm:$0xf]
  %v731 = vld [vmem:[%s0 + $0xc4] sm:$0xf]
  %s732 = scalar_lea.vmem %s1, 32
  %v733 = vld [vmem:[%s732] sm:$0xff]
  %v734 = vld [vmem:[%s732 + $0x8] sm:$0xff]
  %v735 = vld [vmem:[%s732 + $0x10] sm:$0xff]
  %v736 = vld [vmem:[%s732 + $0x18] sm:$0x33]
  %v785 = vunpack.c.l.b16 %v684
  %v786 = vunpack.c.l.b16 %v685
  %v787 = vunpack.c.l.b16 %v686
  %v788 = vunpack.c.l.b16 %v687
  %v789 = vunpack.c.l.b16 %v688
  %v790 = vunpack.c.l.b16 %v689
  %v791 = vunpack.c.l.b16 %v690
  %v792 = vunpack.c.l.b16 %v691
  %v793 = vunpack.c.l.b16 %v692
  %v794 = vunpack.c.l.b16 %v693
  %v795 = vunpack.c.l.b16 %v694
  %v796 = vunpack.c.l.b16 %v695
  %v797 = vunpack.c.l.b16 %v696
  %v798 = vunpack.c.l.b16 %v697
  %v799 = vunpack.c.l.b16 %v698
  %v800 = vunpack.c.l.b16 %v699
  %v801 = vunpack.c.l.b16 %v700
  %v802 = vunpack.c.l.b16 %v701
  %v803 = vunpack.c.l.b16 %v702
  %v804 = vunpack.c.l.b16 %v703
  %v805 = vunpack.c.l.b16 %v704
  %v806 = vunpack.c.l.b16 %v705
  %v807 = vunpack.c.l.b16 %v706
  %v808 = vunpack.c.l.b16 %v707
  %v809 = vunpack.c.l.b16 %v708
  %v810 = vunpack.c.l.b16 %v709
  %v811 = vunpack.c.l.b16 %v710
  %v812 = vunpack.c.l.b16 %v711
  %v813 = vunpack.c.l.b16 %v712
  %v814 = vunpack.c.l.b16 %v713
  %v815 = vunpack.c.l.b16 %v714
  %v816 = vunpack.c.l.b16 %v715
  %v817 = vunpack.c.l.b16 %v716
  %v818 = vunpack.c.l.b16 %v717
  %v819 = vunpack.c.l.b16 %v718
  %v820 = vunpack.c.l.b16 %v719
  %v821 = vunpack.c.l.b16 %v720
  %v822 = vunpack.c.l.b16 %v721
  %v823 = vunpack.c.l.b16 %v722
  %v824 = vunpack.c.l.b16 %v723
  %v825 = vunpack.c.l.b16 %v724
  %v826 = vunpack.c.l.b16 %v725
  %v827 = vunpack.c.l.b16 %v726
  %v828 = vunpack.c.l.b16 %v727
  %v829 = vunpack.c.l.b16 %v728
  %v830 = vunpack.c.l.b16 %v729
  %v831 = vunpack.c.l.b16 %v730
  %v832 = vunpack.c.l.b16 %v731
  %v833 = vpack.c.b16 %v786, %v785
  %v834 = vpack.c.b16 %v788, %v787
  %v835 = vpack.c.b16 %v790, %v789
  %v836 = vpack.c.b16 %v792, %v791
  %v837 = vpack.c.b16 %v794, %v793
  %v838 = vpack.c.b16 %v796, %v795
  %v839 = vpack.c.b16 %v798, %v797
  %v840 = vpack.c.b16 %v800, %v799
  %v841 = vpack.c.b16 %v802, %v801
  %v842 = vpack.c.b16 %v804, %v803
  %v843 = vpack.c.b16 %v806, %v805
  %v844 = vpack.c.b16 %v808, %v807
  %v845 = vpack.c.b16 %v810, %v809
  %v846 = vpack.c.b16 %v812, %v811
  %v847 = vpack.c.b16 %v814, %v813
  %v848 = vpack.c.b16 %v816, %v815
  %v849 = vpack.c.b16 %v818, %v817
  %v850 = vpack.c.b16 %v820, %v819
  %v851 = vpack.c.b16 %v822, %v821
  %v852 = vpack.c.b16 %v824, %v823
  %v853 = vpack.c.b16 %v826, %v825
  %v854 = vpack.c.b16 %v828, %v827
  %v855 = vpack.c.b16 %v830, %v829
  %v856 = vpack.c.b16 %v832, %v831
  %v861 = vunpack.c.l.b16 %v733
  %v862 = vunpack.c.h.b16 %v733
  %v863 = vunpack.c.l.b16 %v734
  %v864 = vunpack.c.h.b16 %v734
  %v865 = vunpack.c.l.b16 %v735
  %v866 = vunpack.c.h.b16 %v735
  %v867 = vunpack.c.l.b16 %v736
  %v868 = vunpack.c.h.b16 %v736
  %v869 = vpack.c.b16 %v863, %v861
  %v870 = vpack.c.b16 %v864, %v862
  %v871 = vpack.c.b16 %v867, %v865
  %v872 = vpack.c.b16 %v868, %v866
  %v876 = vsel %vm235, %v833, 0
  %v879 = vsel %vm235, %v834, 0
  %v882 = vsel %vm235, %v835, 0
  %v885 = vsel %vm235, %v836, 0
  %v888 = vsel %vm235, %v837, 0
  %v891 = vsel %vm235, %v838, 0
  %v894 = vsel %vm235, %v839, 0
  %v897 = vsel %vm235, %v840, 0
  %v900 = vsel %vm235, %v841, 0
  %v903 = vsel %vm235, %v842, 0
  %v906 = vsel %vm235, %v843, 0
  %v909 = vsel %vm235, %v844, 0
  %v912 = vsel %vm235, %v845, 0
  %v915 = vsel %vm235, %v846, 0
  %v918 = vsel %vm235, %v847, 0
  %v921 = vsel %vm235, %v848, 0
  %v924 = vsel %vm235, %v849, 0
  %v927 = vsel %vm235, %v850, 0
  %v930 = vsel %vm235, %v851, 0
  %v933 = vsel %vm235, %v852, 0
  %v936 = vsel %vm235, %v853, 0
  %v939 = vsel %vm235, %v854, 0
  %v942 = vsel %vm235, %v855, 0
  %v945 = vsel %vm235, %v856, 0
  %v948 = vsel %vm308, %v871, 0
  %v951 = vsel %vm308, %v872, 0
  %953 = vmatprep.subr.bf16.mxu0 %v870
  %954 = vmatpush1.bf16.msra.mxu0 %v869
  %955 = vmatprep.subr.bf16.mxu0 %v951
  %956 = vmatpush1.bf16.msra.mxu0 %v948
  %957 = vmatprep.subr.bf16.mxu0 0
  %958 = vmatpush1.bf16.msra.mxu0 0
  %959 = vmatprep.subr.bf16.mxu0 0
  %960 = vmatpush1.bf16.msra.mxu0 0
  %961 = vmatprep.subr.bf16.mxu0 0
  %962 = vmatpush1.bf16.msra.mxu0 0
  %963 = vmatprep.subr.bf16.mxu0 0
  %964 = vmatpush1.bf16.msra.mxu0 0
  %965 = vmatprep.subr.bf16.mxu0 0
  %966 = vmatpush1.bf16.msra.mxu0 0
  %967 = vmatprep.subr.bf16.mxu0 0
  %968 = vmatpush1.bf16.msra.mxu0 0
  %969 = vmatprep.subr.bf16.mxu0 0
  %970 = vmatpush1.bf16.msra.mxu0 0
  %971 = vmatprep.subr.bf16.mxu0 0
  %972 = vmatpush1.bf16.msra.mxu0 0
  %973 = vmatprep.subr.bf16.mxu0 0
  %974 = vmatpush1.bf16.msra.mxu0 0
  %975 = vmatprep.subr.bf16.mxu0 0
  %976 = vmatpush1.bf16.msra.mxu0 0
  %977 = vmatprep.subr.bf16.mxu0 0
  %978 = vmatpush1.bf16.msra.mxu0 0
  %979 = vmatprep.subr.bf16.mxu0 0
  %980 = vmatpush1.bf16.msra.mxu0 0
  %981 = vmatprep.subr.bf16.mxu0 0
  %982 = vmatpush1.bf16.msra.mxu0 0
  %983 = vmatprep.subr.bf16.mxu0 0
  %984 = vmatpush1.bf16.msra.mxu0 0
  %985 = vmatprep.mubr.bf16.mxu0 0
  %986 = vmatmul.mubr.bf16.gmra.mrb[0].mxu0 %v876
  %v987 = vpop.f32.mrb[0].mxu0
  %v988 = vadd.f32 0.0, %v987
  %v989 = vpop.f32.mrb[0].mxu0
  %v990 = vadd.f32 0.0, %v989
  %v991 = vpop.f32.mrb[0].mxu0
  %v992 = vadd.f32 0.0, %v991
  %v993 = vpop.f32.mrb[0].mxu0
  %v994 = vadd.f32 0.0, %v993
  %995 = vmatprep.mubr.bf16.mxu0 0
  %996 = vmatmul.mubr.bf16.gmra.mrb[0].mxu0 %v879
  %v997 = vpop.f32.mrb[0].mxu0
  %v998 = vadd.f32 0.0, %v997
  %v999 = vpop.f32.mrb[0].mxu0
  %v1000 = vadd.f32 0.0, %v999
  %v1001 = vpop.f32.mrb[0].mxu0
  %v1002 = vadd.f32 0.0, %v1001
  %v1003 = vpop.f32.mrb[0].mxu0
  %v1004 = vadd.f32 0.0, %v1003
  %1005 = vmatprep.mubr.bf16.mxu0 0
  %1006 = vmatmul.mubr.bf16.gmra.mrb[0].mxu0 %v882
  %v1007 = vpop.f32.mrb[0].mxu0
  %v1008 = vadd.f32 0.0, %v1007
  %v1009 = vpop.f32.mrb[0].mxu0
  %v1010 = vadd.f32 0.0, %v1009
  %v1011 = vpop.f32.mrb[0].mxu0
  %v1012 = vadd.f32 0.0, %v1011
  %v1013 = vpop.f32.mrb[0].mxu0
  %v1014 = vadd.f32 0.0, %v1013
  %1015 = vmatprep.mubr.bf16.mxu0 0
  %1016 = vmatmul.mubr.bf16.gmra.mrb[0].mxu0 %v885
  %v1017 = vpop.f32.mrb[0].mxu0
  %v1018 = vadd.f32 0.0, %v1017
  %v1019 = vpop.f32.mrb[0].mxu0
  %v1020 = vadd.f32 0.0, %v1019
  %v1021 = vpop.f32.mrb[0].mxu0
  %v1022 = vadd.f32 0.0, %v1021
  %v1023 = vpop.f32.mrb[0].mxu0
  %v1024 = vadd.f32 0.0, %v1023
  %1025 = vmatprep.mubr.bf16.mxu0 0
  %1026 = vmatmul.mubr.bf16.gmra.mrb[0].mxu0 %v888
  %v1027 = vpop.f32.mrb[0].mxu0
  %v1028 = vadd.f32 0.0, %v1027
  %v1029 = vpop.f32.mrb[0].mxu0
  %v1030 = vadd.f32 0.0, %v1029
  %v1031 = vpop.f32.mrb[0].mxu0
  %v1032 = vadd.f32 0.0, %v1031
  %v1033 = vpop.f32.mrb[0].mxu0
  %v1034 = vadd.f32 0.0, %v1033
  %1035 = vmatprep.mubr.bf16.mxu0 0
  %1036 = vmatmul.mubr.bf16.gmra.mrb[0].mxu0 %v891
  %v1037 = vpop.f32.mrb[0].mxu0
  %v1038 = vadd.f32 0.0, %v1037
  %v1039 = vpop.f32.mrb[0].mxu0
  %v1040 = vadd.f32 0.0, %v1039
  %v1041 = vpop.f32.mrb[0].mxu0
  %v1042 = vadd.f32 0.0, %v1041
  %v1043 = vpop.f32.mrb[0].mxu0
  %v1044 = vadd.f32 0.0, %v1043
  %1045 = vmatprep.mubr.bf16.mxu0 0
  %1046 = vmatmul.mubr.bf16.gmra.mrb[0].mxu0 %v894
  %v1047 = vpop.f32.mrb[0].mxu0
  %v1048 = vadd.f32 0.0, %v1047
  %v1049 = vpop.f32.mrb[0].mxu0
  %v1050 = vadd.f32 0.0, %v1049
  %v1051 = vpop.f32.mrb[0].mxu0
  %v1052 = vadd.f32 0.0, %v1051
  %v1053 = vpop.f32.mrb[0].mxu0
  %v1054 = vadd.f32 0.0, %v1053
  %1055 = vmatprep.mubr.bf16.mxu0 0
  %1056 = vmatmul.mubr.bf16.gmra.mrb[0].mxu0 %v897
  %v1057 = vpop.f32.mrb[0].mxu0
  %v1058 = vadd.f32 0.0, %v1057
  %v1059 = vpop.f32.mrb[0].mxu0
  %v1060 = vadd.f32 0.0, %v1059
  %v1061 = vpop.f32.mrb[0].mxu0
  %v1062 = vadd.f32 0.0, %v1061
  %v1063 = vpop.f32.mrb[0].mxu0
  %v1064 = vadd.f32 0.0, %v1063
  %1065 = vmatprep.mubr.bf16.mxu0 0
  %1066 = vmatmul.mubr.bf16.gmra.mrb[0].mxu0 %v900
  %v1067 = vpop.f32.mrb[0].mxu0
  %v1068 = vadd.f32 0.0, %v1067
  %v1069 = vpop.f32.mrb[0].mxu0
  %v1070 = vadd.f32 0.0, %v1069
  %v1071 = vpop.f32.mrb[0].mxu0
  %v1072 = vadd.f32 0.0, %v1071
  %v1073 = vpop.f32.mrb[0].mxu0
  %v1074 = vadd.f32 0.0, %v1073
  %1075 = vmatprep.mubr.bf16.mxu0 0
  %1076 = vmatmul.mubr.bf16.gmra.mrb[0].mxu0 %v903
  %v1077 = vpop.f32.mrb[0].mxu0
  %v1078 = vadd.f32 0.0, %v1077
  %v1079 = vpop.f32.mrb[0].mxu0
  %v1080 = vadd.f32 0.0, %v1079
  %v1081 = vpop.f32.mrb[0].mxu0
  %v1082 = vadd.f32 0.0, %v1081
  %v1083 = vpop.f32.mrb[0].mxu0
  %v1084 = vadd.f32 0.0, %v1083
  %1085 = vmatprep.mubr.bf16.mxu0 0
  %1086 = vmatmul.mubr.bf16.gmra.mrb[0].mxu0 %v906
  %v1087 = vpop.f32.mrb[0].mxu0
  %v1088 = vadd.f32 0.0, %v1087
  %v1089 = vpop.f32.mrb[0].mxu0
  %v1090 = vadd.f32 0.0, %v1089
  %v1091 = vpop.f32.mrb[0].mxu0
  %v1092 = vadd.f32 0.0, %v1091
  %v1093 = vpop.f32.mrb[0].mxu0
  %v1094 = vadd.f32 0.0, %v1093
  %1095 = vmatprep.mubr.bf16.mxu0 0
  %1096 = vmatmul.mubr.bf16.gmra.mrb[0].mxu0 %v909
  %v1097 = vpop.f32.mrb[0].mxu0
  %v1098 = vadd.f32 0.0, %v1097
  %v1099 = vpop.f32.mrb[0].mxu0
  %v1100 = vadd.f32 0.0, %v1099
  %v1101 = vpop.f32.mrb[0].mxu0
  %v1102 = vadd.f32 0.0, %v1101
  %v1103 = vpop.f32.mrb[0].mxu0
  %v1104 = vadd.f32 0.0, %v1103
  %1105 = vmatprep.mubr.bf16.mxu0 0
  %1106 = vmatmul.mubr.bf16.gmra.mrb[0].mxu0 %v912
  %v1107 = vpop.f32.mrb[0].mxu0
  %v1108 = vadd.f32 0.0, %v1107
  %v1109 = vpop.f32.mrb[0].mxu0
  %v1110 = vadd.f32 0.0, %v1109
  %v1111 = vpop.f32.mrb[0].mxu0
  %v1112 = vadd.f32 0.0, %v1111
  %v1113 = vpop.f32.mrb[0].mxu0
  %v1114 = vadd.f32 0.0, %v1113
  %1115 = vmatprep.mubr.bf16.mxu0 0
  %1116 = vmatmul.mubr.bf16.gmra.mrb[0].mxu0 %v915
  %v1117 = vpop.f32.mrb[0].mxu0
  %v1118 = vadd.f32 0.0, %v1117
  %v1119 = vpop.f32.mrb[0].mxu0
  %v1120 = vadd.f32 0.0, %v1119
  %v1121 = vpop.f32.mrb[0].mxu0
  %v1122 = vadd.f32 0.0, %v1121
  %v1123 = vpop.f32.mrb[0].mxu0
  %v1124 = vadd.f32 0.0, %v1123
  %1125 = vmatprep.mubr.bf16.mxu0 0
  %1126 = vmatmul.mubr.bf16.gmra.mrb[0].mxu0 %v918
  %v1127 = vpop.f32.mrb[0].mxu0
  %v1128 = vadd.f32 0.0, %v1127
  %v1129 = vpop.f32.mrb[0].mxu0
  %v1130 = vadd.f32 0.0, %v1129
  %v1131 = vpop.f32.mrb[0].mxu0
  %v1132 = vadd.f32 0.0, %v1131
  %v1133 = vpop.f32.mrb[0].mxu0
  %v1134 = vadd.f32 0.0, %v1133
  %1135 = vmatprep.mubr.bf16.mxu0 0
  %1136 = vmatmul.mubr.bf16.gmra.mrb[0].mxu0 %v921
  %v1137 = vpop.f32.mrb[0].mxu0
  %v1138 = vadd.f32 0.0, %v1137
  %v1139 = vpop.f32.mrb[0].mxu0
  %v1140 = vadd.f32 0.0, %v1139
  %v1141 = vpop.f32.mrb[0].mxu0
  %v1142 = vadd.f32 0.0, %v1141
  %v1143 = vpop.f32.mrb[0].mxu0
  %v1144 = vadd.f32 0.0, %v1143
  %1145 = vmatprep.mubr.bf16.mxu0 0
  %1146 = vmatmul.mubr.bf16.gmra.mrb[0].mxu0 %v924
  %v1147 = vpop.f32.mrb[0].mxu0
  %v1148 = vadd.f32 0.0, %v1147
  %v1149 = vpop.f32.mrb[0].mxu0
  %v1150 = vadd.f32 0.0, %v1149
  %v1151 = vpop.f32.mrb[0].mxu0
  %v1152 = vadd.f32 0.0, %v1151
  %v1153 = vpop.f32.mrb[0].mxu0
  %v1154 = vadd.f32 0.0, %v1153
  %1155 = vmatprep.mubr.bf16.mxu0 0
  %1156 = vmatmul.mubr.bf16.gmra.mrb[0].mxu0 %v927
  %v1157 = vpop.f32.mrb[0].mxu0
  %v1158 = vadd.f32 0.0, %v1157
  %v1159 = vpop.f32.mrb[0].mxu0
  %v1160 = vadd.f32 0.0, %v1159
  %v1161 = vpop.f32.mrb[0].mxu0
  %v1162 = vadd.f32 0.0, %v1161
  %v1163 = vpop.f32.mrb[0].mxu0
  %v1164 = vadd.f32 0.0, %v1163
  %1165 = vmatprep.mubr.bf16.mxu0 0
  %1166 = vmatmul.mubr.bf16.gmra.mrb[0].mxu0 %v930
  %v1167 = vpop.f32.mrb[0].mxu0
  %v1168 = vadd.f32 0.0, %v1167
  %v1169 = vpop.f32.mrb[0].mxu0
  %v1170 = vadd.f32 0.0, %v1169
  %v1171 = vpop.f32.mrb[0].mxu0
  %v1172 = vadd.f32 0.0, %v1171
  %v1173 = vpop.f32.mrb[0].mxu0
  %v1174 = vadd.f32 0.0, %v1173
  %1175 = vmatprep.mubr.bf16.mxu0 0
  %1176 = vmatmul.mubr.bf16.gmra.mrb[0].mxu0 %v933
  %v1177 = vpop.f32.mrb[0].mxu0
  %v1178 = vadd.f32 0.0, %v1177
  %v1179 = vpop.f32.mrb[0].mxu0
  %v1180 = vadd.f32 0.0, %v1179
  %v1181 = vpop.f32.mrb[0].mxu0
  %v1182 = vadd.f32 0.0, %v1181
  %v1183 = vpop.f32.mrb[0].mxu0
  %v1184 = vadd.f32 0.0, %v1183
  %1185 = vmatprep.mubr.bf16.mxu0 0
  %1186 = vmatmul.mubr.bf16.gmra.mrb[0].mxu0 %v936
  %v1187 = vpop.f32.mrb[0].mxu0
  %v1188 = vadd.f32 0.0, %v1187
  %v1189 = vpop.f32.mrb[0].mxu0
  %v1190 = vadd.f32 0.0, %v1189
  %v1191 = vpop.f32.mrb[0].mxu0
  %v1192 = vadd.f32 0.0, %v1191
  %v1193 = vpop.f32.mrb[0].mxu0
  %v1194 = vadd.f32 0.0, %v1193
  %1195 = vmatprep.mubr.bf16.mxu0 0
  %1196 = vmatmul.mubr.bf16.gmra.mrb[0].mxu0 %v939
  %v1197 = vpop.f32.mrb[0].mxu0
  %v1198 = vadd.f32 0.0, %v1197
  %v1199 = vpop.f32.mrb[0].mxu0
  %v1200 = vadd.f32 0.0, %v1199
  %v1201 = vpop.f32.mrb[0].mxu0
  %v1202 = vadd.f32 0.0, %v1201
  %v1203 = vpop.f32.mrb[0].mxu0
  %v1204 = vadd.f32 0.0, %v1203
  %1205 = vmatprep.mubr.bf16.mxu0 0
  %1206 = vmatmul.mubr.bf16.gmra.mrb[0].mxu0 %v942
  %v1207 = vpop.f32.mrb[0].mxu0
  %v1208 = vadd.f32 0.0, %v1207
  %v1209 = vpop.f32.mrb[0].mxu0
  %v1210 = vadd.f32 0.0, %v1209
  %v1211 = vpop.f32.mrb[0].mxu0
  %v1212 = vadd.f32 0.0, %v1211
  %v1213 = vpop.f32.mrb[0].mxu0
  %v1214 = vadd.f32 0.0, %v1213
  %1215 = vmatprep.mubr.bf16.mxu0 0
  %1216 = vmatmul.mubr.bf16.gmra.mrb[0].mxu0 %v945
  %v1217 = vpop.f32.mrb[0].mxu0
  %v1218 = vadd.f32 0.0, %v1217
  %v1219 = vpop.f32.mrb[0].mxu0
  %v1220 = vadd.f32 0.0, %v1219
  %v1221 = vpop.f32.mrb[0].mxu0
  %v1222 = vadd.f32 0.0, %v1221
  %v1223 = vpop.f32.mrb[0].mxu0
  %v1224 = vadd.f32 0.0, %v1223
  %1225 = vdwg.mxu0
  %v1226 = vld [vmem:[#allocation2] sm:$0xff]
  %v1227 = vld [vmem:[#allocation2 + $0x8] sm:$0xff]
  %v1228 = vld [vmem:[#allocation2 + $0x10] sm:$0xff]
  %v1229 = vld [vmem:[#allocation2 + $0x18] sm:$0xff]
  %v1230 = vld [vmem:[#allocation2 + $0x20] sm:$0xff]
  %v1231 = vld [vmem:[#allocation2 + $0x28] sm:$0xff]
  %v1232 = vld [vmem:[#allocation2 + $0x30] sm:$0xff]
  %v1233 = vld [vmem:[#allocation2 + $0x38] sm:$0xff]
  %v1234 = vld [vmem:[#allocation2 + $0x40] sm:$0xff]
  %v1235 = vld [vmem:[#allocation2 + $0x48] sm:$0xff]
  %v1236 = vld [vmem:[#allocation2 + $0x50] sm:$0xff]
  %v1237 = vld [vmem:[#allocation2 + $0x58] sm:$0xff]
  %v1238 = vld [vmem:[#allocation2 + $0x60] sm:$0xff]
  %v1239 = vld [vmem:[#allocation2 + $0x68] sm:$0xff]
  %v1240 = vld [vmem:[#allocation2 + $0x70] sm:$0xff]
  %v1241 = vld [vmem:[#allocation2 + $0x78] sm:$0xff]
  %v1242 = vld [vmem:[#allocation2 + $0x80] sm:$0xff]
  %v1243 = vld [vmem:[#allocation2 + $0x88] sm:$0xff]
  %v1244 = vld [vmem:[#allocation2 + $0x90] sm:$0xff]
  %v1245 = vld [vmem:[#allocation2 + $0x98] sm:$0xff]
  %v1246 = vld [vmem:[#allocation2 + $0xa0] sm:$0xff]
  %v1247 = vld [vmem:[#allocation2 + $0xa8] sm:$0xff]
  %v1248 = vld [vmem:[#allocation2 + $0xb0] sm:$0xff]
  %v1249 = vld [vmem:[#allocation2 + $0xb8] sm:$0xff]
  %v1250 = vld [vmem:[#allocation2 + $0xc0] sm:$0xff]
  %v1251 = vld [vmem:[#allocation2 + $0xc8] sm:$0xff]
  %v1252 = vld [vmem:[#allocation2 + $0xd0] sm:$0xff]
  %v1253 = vld [vmem:[#allocation2 + $0xd8] sm:$0xff]
  %v1254 = vld [vmem:[#allocation2 + $0xe0] sm:$0xff]
  %v1255 = vld [vmem:[#allocation2 + $0xe8] sm:$0xff]
  %v1256 = vld [vmem:[#allocation2 + $0xf0] sm:$0xff]
  %v1257 = vld [vmem:[#allocation2 + $0xf8] sm:$0xff]
  %v1258 = vld [vmem:[#allocation2 + $0x100] sm:$0xff]
  %v1259 = vld [vmem:[#allocation2 + $0x108] sm:$0xff]
  %v1260 = vld [vmem:[#allocation2 + $0x110] sm:$0xff]
  %v1261 = vld [vmem:[#allocation2 + $0x118] sm:$0xff]
  %v1262 = vld [vmem:[#allocation2 + $0x120] sm:$0xff]
  %v1263 = vld [vmem:[#allocation2 + $0x128] sm:$0xff]
  %v1264 = vld [vmem:[#allocation2 + $0x130] sm:$0xff]
  %v1265 = vld [vmem:[#allocation2 + $0x138] sm:$0xff]
  %v1266 = vld [vmem:[#allocation2 + $0x140] sm:$0xff]
  %v1267 = vld [vmem:[#allocation2 + $0x148] sm:$0xff]
  %v1268 = vld [vmem:[#allocation2 + $0x150] sm:$0xff]
  %v1269 = vld [vmem:[#allocation2 + $0x158] sm:$0xff]
  %v1270 = vld [vmem:[#allocation2 + $0x160] sm:$0xff]
  %v1271 = vld [vmem:[#allocation2 + $0x168] sm:$0xff]
  %v1272 = vld [vmem:[#allocation2 + $0x170] sm:$0xff]
  %v1273 = vld [vmem:[#allocation2 + $0x178] sm:$0xff]
  %v1274 = vld [vmem:[#allocation2 + $0x180] sm:$0xff]
  %v1275 = vld [vmem:[#allocation2 + $0x188] sm:$0xff]
  %v1276 = vld [vmem:[#allocation2 + $0x190] sm:$0xff]
  %v1277 = vld [vmem:[#allocation2 + $0x198] sm:$0xff]
  %v1278 = vld [vmem:[#allocation2 + $0x1a0] sm:$0xff]
  %v1279 = vld [vmem:[#allocation2 + $0x1a8] sm:$0xff]
  %v1280 = vld [vmem:[#allocation2 + $0x1b0] sm:$0xff]
  %v1281 = vld [vmem:[#allocation2 + $0x1b8] sm:$0xff]
  %v1282 = vld [vmem:[#allocation2 + $0x1c0] sm:$0xff]
  %v1283 = vld [vmem:[#allocation2 + $0x1c8] sm:$0xff]
  %v1284 = vld [vmem:[#allocation2 + $0x1d0] sm:$0xff]
  %v1285 = vld [vmem:[#allocation2 + $0x1d8] sm:$0xff]
  %v1286 = vld [vmem:[#allocation2 + $0x1e0] sm:$0xff]
  %v1287 = vld [vmem:[#allocation2 + $0x1e8] sm:$0xff]
  %v1288 = vld [vmem:[#allocation2 + $0x1f0] sm:$0xff]
  %v1289 = vld [vmem:[#allocation2 + $0x1f8] sm:$0xff]
  %v1290 = vld [vmem:[#allocation2 + $0x200] sm:$0xff]
  %v1291 = vld [vmem:[#allocation2 + $0x208] sm:$0xff]
  %v1292 = vld [vmem:[#allocation2 + $0x210] sm:$0xff]
  %v1293 = vld [vmem:[#allocation2 + $0x218] sm:$0xff]
  %v1294 = vld [vmem:[#allocation2 + $0x220] sm:$0xff]
  %v1295 = vld [vmem:[#allocation2 + $0x228] sm:$0xff]
  %v1296 = vld [vmem:[#allocation2 + $0x230] sm:$0xff]
  %v1297 = vld [vmem:[#allocation2 + $0x238] sm:$0xff]
  %v1298 = vld [vmem:[#allocation2 + $0x240] sm:$0xff]
  %v1299 = vld [vmem:[#allocation2 + $0x248] sm:$0xff]
  %v1300 = vld [vmem:[#allocation2 + $0x250] sm:$0xff]
  %v1301 = vld [vmem:[#allocation2 + $0x258] sm:$0xff]
  %v1302 = vld [vmem:[#allocation2 + $0x260] sm:$0xff]
  %v1303 = vld [vmem:[#allocation2 + $0x268] sm:$0xff]
  %v1304 = vld [vmem:[#allocation2 + $0x270] sm:$0xff]
  %v1305 = vld [vmem:[#allocation2 + $0x278] sm:$0xff]
  %v1306 = vld [vmem:[#allocation2 + $0x280] sm:$0xff]
  %v1307 = vld [vmem:[#allocation2 + $0x288] sm:$0xff]
  %v1308 = vld [vmem:[#allocation2 + $0x290] sm:$0xff]
  %v1309 = vld [vmem:[#allocation2 + $0x298] sm:$0xff]
  %v1310 = vld [vmem:[#allocation2 + $0x2a0] sm:$0xff]
  %v1311 = vld [vmem:[#allocation2 + $0x2a8] sm:$0xff]
  %v1312 = vld [vmem:[#allocation2 + $0x2b0] sm:$0xff]
  %v1313 = vld [vmem:[#allocation2 + $0x2b8] sm:$0xff]
  %v1314 = vld [vmem:[#allocation2 + $0x2c0] sm:$0xff]
  %v1315 = vld [vmem:[#allocation2 + $0x2c8] sm:$0xff]
  %v1316 = vld [vmem:[#allocation2 + $0x2d0] sm:$0xff]
  %v1317 = vld [vmem:[#allocation2 + $0x2d8] sm:$0xff]
  %v1318 = vld [vmem:[#allocation2 + $0x2e0] sm:$0xff]
  %v1319 = vld [vmem:[#allocation2 + $0x2e8] sm:$0xff]
  %v1320 = vld [vmem:[#allocation2 + $0x2f0] sm:$0xff]
  %v1321 = vld [vmem:[#allocation2 + $0x2f8] sm:$0xff]
  %v1322 = vadd.f32 %v1226, %v988
  %v1323 = vadd.f32 %v1227, %v990
  %v1324 = vadd.f32 %v1228, %v992
  %v1325 = vadd.f32 %v1229, %v994
  %v1326 = vadd.f32 %v1230, %v998
  %v1327 = vadd.f32 %v1231, %v1000
  %v1328 = vadd.f32 %v1232, %v1002
  %v1329 = vadd.f32 %v1233, %v1004
  %v1330 = vadd.f32 %v1234, %v1008
  %v1331 = vadd.f32 %v1235, %v1010
  %v1332 = vadd.f32 %v1236, %v1012
  %v1333 = vadd.f32 %v1237, %v1014
  %v1334 = vadd.f32 %v1238, %v1018
  %v1335 = vadd.f32 %v1239, %v1020
  %v1336 = vadd.f32 %v1240, %v1022
  %v1337 = vadd.f32 %v1241, %v1024
  %v1338 = vadd.f32 %v1242, %v1028
  %v1339 = vadd.f32 %v1243, %v1030
  %v1340 = vadd.f32 %v1244, %v1032
  %v1341 = vadd.f32 %v1245, %v1034
  %v1342 = vadd.f32 %v1246, %v1038
  %v1343 = vadd.f32 %v1247, %v1040
  %v1344 = vadd.f32 %v1248, %v1042
  %v1345 = vadd.f32 %v1249, %v1044
  %v1346 = vadd.f32 %v1250, %v1048
  %v1347 = vadd.f32 %v1251, %v1050
  %v1348 = vadd.f32 %v1252, %v1052
  %v1349 = vadd.f32 %v1253, %v1054
  %v1350 = vadd.f32 %v1254, %v1058
  %v1351 = vadd.f32 %v1255, %v1060
  %v1352 = vadd.f32 %v1256, %v1062
  %v1353 = vadd.f32 %v1257, %v1064
  %v1354 = vadd.f32 %v1258, %v1068
  %v1355 = vadd.f32 %v1259, %v1070
  %v1356 = vadd.f32 %v1260, %v1072
  %v1357 = vadd.f32 %v1261, %v1074
  %v1358 = vadd.f32 %v1262, %v1078
  %v1359 = vadd.f32 %v1263, %v1080
  %v1360 = vadd.f32 %v1264, %v1082
  %v1361 = vadd.f32 %v1265, %v1084
  %v1362 = vadd.f32 %v1266, %v1088
  %v1363 = vadd.f32 %v1267, %v1090
  %v1364 = vadd.f32 %v1268, %v1092
  %v1365 = vadd.f32 %v1269, %v1094
  %v1366 = vadd.f32 %v1270, %v1098
  %v1367 = vadd.f32 %v1271, %v1100
  %v1368 = vadd.f32 %v1272, %v1102
  %v1369 = vadd.f32 %v1273, %v1104
  %v1370 = vadd.f32 %v1274, %v1108
  %v1371 = vadd.f32 %v1275, %v1110
  %v1372 = vadd.f32 %v1276, %v1112
  %v1373 = vadd.f32 %v1277, %v1114
  %v1374 = vadd.f32 %v1278, %v1118
  %v1375 = vadd.f32 %v1279, %v1120
  %v1376 = vadd.f32 %v1280, %v1122
  %v1377 = vadd.f32 %v1281, %v1124
  %v1378 = vadd.f32 %v1282, %v1128
  %v1379 = vadd.f32 %v1283, %v1130
  %v1380 = vadd.f32 %v1284, %v1132
  %v1381 = vadd.f32 %v1285, %v1134
  %v1382 = vadd.f32 %v1286, %v1138
  %v1383 = vadd.f32 %v1287, %v1140
  %v1384 = vadd.f32 %v1288, %v1142
  %v1385 = vadd.f32 %v1289, %v1144
  %v1386 = vadd.f32 %v1290, %v1148
  %v1387 = vadd.f32 %v1291, %v1150
  %v1388 = vadd.f32 %v1292, %v1152
  %v1389 = vadd.f32 %v1293, %v1154
  %v1390 = vadd.f32 %v1294, %v1158
  %v1391 = vadd.f32 %v1295, %v1160
  %v1392 = vadd.f32 %v1296, %v1162
  %v1393 = vadd.f32 %v1297, %v1164
  %v1394 = vadd.f32 %v1298, %v1168
  %v1395 = vadd.f32 %v1299, %v1170
  %v1396 = vadd.f32 %v1300, %v1172
  %v1397 = vadd.f32 %v1301, %v1174
  %v1398 = vadd.f32 %v1302, %v1178
  %v1399 = vadd.f32 %v1303, %v1180
  %v1400 = vadd.f32 %v1304, %v1182
  %v1401 = vadd.f32 %v1305, %v1184
  %v1402 = vadd.f32 %v1306, %v1188
  %v1403 = vadd.f32 %v1307, %v1190
  %v1404 = vadd.f32 %v1308, %v1192
  %v1405 = vadd.f32 %v1309, %v1194
  %v1406 = vadd.f32 %v1310, %v1198
  %v1407 = vadd.f32 %v1311, %v1200
  %v1408 = vadd.f32 %v1312, %v1202
  %v1409 = vadd.f32 %v1313, %v1204
  %v1410 = vadd.f32 %v1314, %v1208
  %v1411 = vadd.f32 %v1315, %v1210
  %v1412 = vadd.f32 %v1316, %v1212
  %v1413 = vadd.f32 %v1317, %v1214
  %v1414 = vadd.f32 %v1318, %v1218
  %v1415 = vadd.f32 %v1319, %v1220
  %v1416 = vadd.f32 %v1320, %v1222
  %v1417 = vadd.f32 %v1321, %v1224
  %1418 = vst [vmem:[#allocation2] sm:$0xff] %v1322
  %1419 = vst [vmem:[#allocation2 + $0x8] sm:$0xff] %v1323
  %1420 = vst [vmem:[#allocation2 + $0x10] sm:$0xff] %v1324
  %1421 = vst [vmem:[#allocation2 + $0x18] sm:$0xff] %v1325
  %1422 = vst [vmem:[#allocation2 + $0x20] sm:$0xff] %v1326
  %1423 = vst [vmem:[#allocation2 + $0x28] sm:$0xff] %v1327
  %1424 = vst [vmem:[#allocation2 + $0x30] sm:$0xff] %v1328
  %1425 = vst [vmem:[#allocation2 + $0x38] sm:$0xff] %v1329
  %1426 = vst [vmem:[#allocation2 + $0x40] sm:$0xff] %v1330
  %1427 = vst [vmem:[#allocation2 + $0x48] sm:$0xff] %v1331
  %1428 = vst [vmem:[#allocation2 + $0x50] sm:$0xff] %v1332
  %1429 = vst [vmem:[#allocation2 + $0x58] sm:$0xff] %v1333
  %1430 = vst [vmem:[#allocation2 + $0x60] sm:$0xff] %v1334
  %1431 = vst [vmem:[#allocation2 + $0x68] sm:$0xff] %v1335
  %1432 = vst [vmem:[#allocation2 + $0x70] sm:$0xff] %v1336
  %1433 = vst [vmem:[#allocation2 + $0x78] sm:$0xff] %v1337
  %1434 = vst [vmem:[#allocation2 + $0x80] sm:$0xff] %v1338
  %1435 = vst [vmem:[#allocation2 + $0x88] sm:$0xff] %v1339
  %1436 = vst [vmem:[#allocation2 + $0x90] sm:$0xff] %v1340
  %1437 = vst [vmem:[#allocation2 + $0x98] sm:$0xff] %v1341
  %1438 = vst [vmem:[#allocation2 + $0xa0] sm:$0xff] %v1342
  %1439 = vst [vmem:[#allocation2 + $0xa8] sm:$0xff] %v1343
  %1440 = vst [vmem:[#allocation2 + $0xb0] sm:$0xff] %v1344
  %1441 = vst [vmem:[#allocation2 + $0xb8] sm:$0xff] %v1345
  %1442 = vst [vmem:[#allocation2 + $0xc0] sm:$0xff] %v1346
  %1443 = vst [vmem:[#allocation2 + $0xc8] sm:$0xff] %v1347
  %1444 = vst [vmem:[#allocation2 + $0xd0] sm:$0xff] %v1348
  %1445 = vst [vmem:[#allocation2 + $0xd8] sm:$0xff] %v1349
  %1446 = vst [vmem:[#allocation2 + $0xe0] sm:$0xff] %v1350
  %1447 = vst [vmem:[#allocation2 + $0xe8] sm:$0xff] %v1351
  %1448 = vst [vmem:[#allocation2 + $0xf0] sm:$0xff] %v1352
  %1449 = vst [vmem:[#allocation2 + $0xf8] sm:$0xff] %v1353
  %1450 = vst [vmem:[#allocation2 + $0x100] sm:$0xff] %v1354
  %1451 = vst [vmem:[#allocation2 + $0x108] sm:$0xff] %v1355
  %1452 = vst [vmem:[#allocation2 + $0x110] sm:$0xff] %v1356
  %1453 = vst [vmem:[#allocation2 + $0x118] sm:$0xff] %v1357
  %1454 = vst [vmem:[#allocation2 + $0x120] sm:$0xff] %v1358
  %1455 = vst [vmem:[#allocation2 + $0x128] sm:$0xff] %v1359
  %1456 = vst [vmem:[#allocation2 + $0x130] sm:$0xff] %v1360
  %1457 = vst [vmem:[#allocation2 + $0x138] sm:$0xff] %v1361
  %1458 = vst [vmem:[#allocation2 + $0x140] sm:$0xff] %v1362
  %1459 = vst [vmem:[#allocation2 + $0x148] sm:$0xff] %v1363
  %1460 = vst [vmem:[#allocation2 + $0x150] sm:$0xff] %v1364
  %1461 = vst [vmem:[#allocation2 + $0x158] sm:$0xff] %v1365
  %1462 = vst [vmem:[#allocation2 + $0x160] sm:$0xff] %v1366
  %1463 = vst [vmem:[#allocation2 + $0x168] sm:$0xff] %v1367
  %1464 = vst [vmem:[#allocation2 + $0x170] sm:$0xff] %v1368
  %1465 = vst [vmem:[#allocation2 + $0x178] sm:$0xff] %v1369
  %1466 = vst [vmem:[#allocation2 + $0x180] sm:$0xff] %v1370
  %1467 = vst [vmem:[#allocation2 + $0x188] sm:$0xff] %v1371
  %1468 = vst [vmem:[#allocation2 + $0x190] sm:$0xff] %v1372
  %1469 = vst [vmem:[#allocation2 + $0x198] sm:$0xff] %v1373
  %1470 = vst [vmem:[#allocation2 + $0x1a0] sm:$0xff] %v1374
  %1471 = vst [vmem:[#allocation2 + $0x1a8] sm:$0xff] %v1375
  %1472 = vst [vmem:[#allocation2 + $0x1b0] sm:$0xff] %v1376
  %1473 = vst [vmem:[#allocation2 + $0x1b8] sm:$0xff] %v1377
  %1474 = vst [vmem:[#allocation2 + $0x1c0] sm:$0xff] %v1378
  %1475 = vst [vmem:[#allocation2 + $0x1c8] sm:$0xff] %v1379
  %1476 = vst [vmem:[#allocation2 + $0x1d0] sm:$0xff] %v1380
  %1477 = vst [vmem:[#allocation2 + $0x1d8] sm:$0xff] %v1381
  %1478 = vst [vmem:[#allocation2 + $0x1e0] sm:$0xff] %v1382
  %1479 = vst [vmem:[#allocation2 + $0x1e8] sm:$0xff] %v1383
  %1480 = vst [vmem:[#allocation2 + $0x1f0] sm:$0xff] %v1384
  %1481 = vst [vmem:[#allocation2 + $0x1f8] sm:$0xff] %v1385
  %1482 = vst [vmem:[#allocation2 + $0x200] sm:$0xff] %v1386
  %1483 = vst [vmem:[#allocation2 + $0x208] sm:$0xff] %v1387
  %1484 = vst [vmem:[#allocation2 + $0x210] sm:$0xff] %v1388
  %1485 = vst [vmem:[#allocation2 + $0x218] sm:$0xff] %v1389
  %1486 = vst [vmem:[#allocation2 + $0x220] sm:$0xff] %v1390
  %1487 = vst [vmem:[#allocation2 + $0x228] sm:$0xff] %v1391
  %1488 = vst [vmem:[#allocation2 + $0x230] sm:$0xff] %v1392
  %1489 = vst [vmem:[#allocation2 + $0x238] sm:$0xff] %v1393
  %1490 = vst [vmem:[#allocation2 + $0x240] sm:$0xff] %v1394
  %1491 = vst [vmem:[#allocation2 + $0x248] sm:$0xff] %v1395
  %1492 = vst [vmem:[#allocation2 + $0x250] sm:$0xff] %v1396
  %1493 = vst [vmem:[#allocation2 + $0x258] sm:$0xff] %v1397
  %1494 = vst [vmem:[#allocation2 + $0x260] sm:$0xff] %v1398
  %1495 = vst [vmem:[#allocation2 + $0x268] sm:$0xff] %v1399
  %1496 = vst [vmem:[#allocation2 + $0x270] sm:$0xff] %v1400
  %1497 = vst [vmem:[#allocation2 + $0x278] sm:$0xff] %v1401
  %1498 = vst [vmem:[#allocation2 + $0x280] sm:$0xff] %v1402
  %1499 = vst [vmem:[#allocation2 + $0x288] sm:$0xff] %v1403
  %1500 = vst [vmem:[#allocation2 + $0x290] sm:$0xff] %v1404
  %1501 = vst [vmem:[#allocation2 + $0x298] sm:$0xff] %v1405
  %1502 = vst [vmem:[#allocation2 + $0x2a0] sm:$0xff] %v1406
  %1503 = vst [vmem:[#allocation2 + $0x2a8] sm:$0xff] %v1407
  %1504 = vst [vmem:[#allocation2 + $0x2b0] sm:$0xff] %v1408
  %1505 = vst [vmem:[#allocation2 + $0x2b8] sm:$0xff] %v1409
  %1506 = vst [vmem:[#allocation2 + $0x2c0] sm:$0xff] %v1410
  %1507 = vst [vmem:[#allocation2 + $0x2c8] sm:$0xff] %v1411
  %1508 = vst [vmem:[#allocation2 + $0x2d0] sm:$0xff] %v1412
  %1509 = vst [vmem:[#allocation2 + $0x2d8] sm:$0xff] %v1413
  %1510 = vst [vmem:[#allocation2 + $0x2e0] sm:$0xff] %v1414
  %1511 = vst [vmem:[#allocation2 + $0x2e8] sm:$0xff] %v1415
  %1512 = vst [vmem:[#allocation2 + $0x2f0] sm:$0xff] %v1416
  %1513 = vst [vmem:[#allocation2 + $0x2f8] sm:$0xff] %v1417
  %v1514 = vld [vmem:[%s0 + $0x10] sm:$0xf]
  %v1515 = vld [vmem:[%s0 + $0x14] sm:$0xf]
  %v1516 = vld [vmem:[%s0 + $0x18] sm:$0xf]
  %v1517 = vld [vmem:[%s0 + $0x1c] sm:$0xf]
  %v1518 = vld [vmem:[%s0 + $0x20] sm:$0xf]
  %v1519 = vld [vmem:[%s0 + $0x24] sm:$0xf]
  %v1520 = vld [vmem:[%s0 + $0x28] sm:$0xf]
  %v1521 = vld [vmem:[%s0 + $0x2c] sm:$0xf]
  %v1522 = vld [vmem:[%s0 + $0x30] sm:$0xf]
  %v1523 = vld [vmem:[%s0 + $0x34] sm:$0xf]
  %v1524 = vld [vmem:[%s0 + $0x38] sm:$0xf]
  %v1525 = vld [vmem:[%s0 + $0x3c] sm:$0xf]
  %v1526 = vld [vmem:[%s0 + $0x40] sm:$0xf]
  %v1527 = vld [vmem:[%s0 + $0x44] sm:$0xf]
  %v1528 = vld [vmem:[%s0 + $0x48] sm:$0xf]
  %v1529 = vld [vmem:[%s0 + $0x4c] sm:$0xf]
  %v1530 = vld [vmem:[%s0 + $0x50] sm:$0xf]
  %v1531 = vld [vmem:[%s0 + $0x54] sm:$0xf]
  %v1532 = vld [vmem:[%s0 + $0x58] sm:$0xf]
  %v1533 = vld [vmem:[%s0 + $0x5c] sm:$0xf]
  %v1534 = vld [vmem:[%s0 + $0x60] sm:$0xf]
  %v1535 = vld [vmem:[%s0 + $0x64] sm:$0xf]
  %v1536 = vld [vmem:[%s0 + $0x68] sm:$0xf]
  %v1537 = vld [vmem:[%s0 + $0x6c] sm:$0xf]
  %v1538 = vld [vmem:[%s0 + $0x70] sm:$0xf]
  %v1539 = vld [vmem:[%s0 + $0x74] sm:$0xf]
  %v1540 = vld [vmem:[%s0 + $0x78] sm:$0xf]
  %v1541 = vld [vmem:[%s0 + $0x7c] sm:$0xf]
  %v1542 = vld [vmem:[%s0 + $0x80] sm:$0xf]
  %v1543 = vld [vmem:[%s0 + $0x84] sm:$0xf]
  %v1544 = vld [vmem:[%s0 + $0x88] sm:$0xf]
  %v1545 = vld [vmem:[%s0 + $0x8c] sm:$0xf]
  %v1546 = vld [vmem:[%s0 + $0x90] sm:$0xf]
  %v1547 = vld [vmem:[%s0 + $0x94] sm:$0xf]
  %v1548 = vld [vmem:[%s0 + $0x98] sm:$0xf]
  %v1549 = vld [vmem:[%s0 + $0x9c] sm:$0xf]
  %v1550 = vld [vmem:[%s0 + $0xa0] sm:$0xf]
  %v1551 = vld [vmem:[%s0 + $0xa4] sm:$0xf]
  %v1552 = vld [vmem:[%s0 + $0xa8] sm:$0xf]
  %v1553 = vld [vmem:[%s0 + $0xac] sm:$0xf]
  %v1554 = vld [vmem:[%s0 + $0xb0] sm:$0xf]
  %v1555 = vld [vmem:[%s0 + $0xb4] sm:$0xf]
  %v1556 = vld [vmem:[%s0 + $0xb8] sm:$0xf]
  %v1557 = vld [vmem:[%s0 + $0xbc] sm:$0xf]
  %v1558 = vld [vmem:[%s0 + $0xc0] sm:$0xf]
  %v1559 = vld [vmem:[%s0 + $0xc4] sm:$0xf]
  %v1560 = vld [vmem:[%s0 + $0xc8] sm:$0xf]
  %v1561 = vld [vmem:[%s0 + $0xcc] sm:$0xf]
  %s1562 = scalar_lea.vmem %s1, 64
  %v1563 = vld [vmem:[%s1562] sm:$0xff]
  %v1564 = vld [vmem:[%s1562 + $0x8] sm:$0xff]
  %v1565 = vld [vmem:[%s1562 + $0x10] sm:$0xff]
  %v1566 = vld [vmem:[%s1562 + $0x18] sm:$0x33]
  %v1615 = vunpack.c.l.b16 %v1514
  %v1616 = vunpack.c.l.b16 %v1515
  %v1617 = vunpack.c.l.b16 %v1516
  %v1618 = vunpack.c.l.b16 %v1517
  %v1619 = vunpack.c.l.b16 %v1518
  %v1620 = vunpack.c.l.b16 %v1519
  %v1621 = vunpack.c.l.b16 %v1520
  %v1622 = vunpack.c.l.b16 %v1521
  %v1623 = vunpack.c.l.b16 %v1522
  %v1624 = vunpack.c.l.b16 %v1523
  %v1625 = vunpack.c.l.b16 %v1524
  %v1626 = vunpack.c.l.b16 %v1525
  %v1627 = vunpack.c.l.b16 %v1526
  %v1628 = vunpack.c.l.b16 %v1527
  %v1629 = vunpack.c.l.b16 %v1528
  %v1630 = vunpack.c.l.b16 %v1529
  %v1631 = vunpack.c.l.b16 %v1530
  %v1632 = vunpack.c.l.b16 %v1531
  %v1633 = vunpack.c.l.b16 %v1532
  %v1634 = vunpack.c.l.b16 %v1533
  %v1635 = vunpack.c.l.b16 %v1534
  %v1636 = vunpack.c.l.b16 %v1535
  %v1637 = vunpack.c.l.b16 %v1536
  %v1638 = vunpack.c.l.b16 %v1537
  %v1639 = vunpack.c.l.b16 %v1538
  %v1640 = vunpack.c.l.b16 %v1539
  %v1641 = vunpack.c.l.b16 %v1540
  %v1642 = vunpack.c.l.b16 %v1541
  %v1643 = vunpack.c.l.b16 %v1542
  %v1644 = vunpack.c.l.b16 %v1543
  %v1645 = vunpack.c.l.b16 %v1544
  %v1646 = vunpack.c.l.b16 %v1545
  %v1647 = vunpack.c.l.b16 %v1546
  %v1648 = vunpack.c.l.b16 %v1547
  %v1649 = vunpack.c.l.b16 %v1548
  %v1650 = vunpack.c.l.b16 %v1549
  %v1651 = vunpack.c.l.b16 %v1550
  %v1652 = vunpack.c.l.b16 %v1551
  %v1653 = vunpack.c.l.b16 %v1552
  %v1654 = vunpack.c.l.b16 %v1553
  %v1655 = vunpack.c.l.b16 %v1554
  %v1656 = vunpack.c.l.b16 %v1555
  %v1657 = vunpack.c.l.b16 %v1556
  %v1658 = vunpack.c.l.b16 %v1557
  %v1659 = vunpack.c.l.b16 %v1558
  %v1660 = vunpack.c.l.b16 %v1559
  %v1661 = vunpack.c.l.b16 %v1560
  %v1662 = vunpack.c.l.b16 %v1561
  %v1663 = vpack.c.b16 %v1616, %v1615
  %v1664 = vpack.c.b16 %v1618, %v1617
  %v1665 = vpack.c.b16 %v1620, %v1619
  %v1666 = vpack.c.b16 %v1622, %v1621
  %v1667 = vpack.c.b16 %v1624, %v1623
  %v1668 = vpack.c.b16 %v1626, %v1625
  %v1669 = vpack.c.b16 %v1628, %v1627
  %v1670 = vpack.c.b16 %v1630, %v1629
  %v1671 = vpack.c.b16 %v1632, %v1631
  %v1672 = vpack.c.b16 %v1634, %v1633
  %v1673 = vpack.c.b16 %v1636, %v1635
  %v1674 = vpack.c.b16 %v1638, %v1637
  %v1675 = vpack.c.b16 %v1640, %v1639
  %v1676 = vpack.c.b16 %v1642, %v1641
  %v1677 = vpack.c.b16 %v1644, %v1643
  %v1678 = vpack.c.b16 %v1646, %v1645
  %v1679 = vpack.c.b16 %v1648, %v1647
  %v1680 = vpack.c.b16 %v1650, %v1649
  %v1681 = vpack.c.b16 %v1652, %v1651
  %v1682 = vpack.c.b16 %v1654, %v1653
  %v1683 = vpack.c.b16 %v1656, %v1655
  %v1684 = vpack.c.b16 %v1658, %v1657
  %v1685 = vpack.c.b16 %v1660, %v1659
  %v1686 = vpack.c.b16 %v1662, %v1661
  %v1691 = vunpack.c.l.b16 %v1563
  %v1692 = vunpack.c.h.b16 %v1563
  %v1693 = vunpack.c.l.b16 %v1564
  %v1694 = vunpack.c.h.b16 %v1564
  %v1695 = vunpack.c.l.b16 %v1565
  %v1696 = vunpack.c.h.b16 %v1565
  %v1697 = vunpack.c.l.b16 %v1566
  %v1698 = vunpack.c.h.b16 %v1566
  %v1699 = vpack.c.b16 %v1693, %v1691
  %v1700 = vpack.c.b16 %v1694, %v1692
  %v1701 = vpack.c.b16 %v1697, %v1695
  %v1702 = vpack.c.b16 %v1698, %v1696
  %v1706 = vsel %vm235, %v1663, 0
  %v1709 = vsel %vm235, %v1664, 0
  %v1712 = vsel %vm235, %v1665, 0
  %v1715 = vsel %vm235, %v1666, 0
  %v1718 = vsel %vm235, %v1667, 0
  %v1721 = vsel %vm235, %v1668, 0
  %v1724 = vsel %vm235, %v1669, 0
  %v1727 = vsel %vm235, %v1670, 0
  %v1730 = vsel %vm235, %v1671, 0
  %v1733 = vsel %vm235, %v1672, 0
  %v1736 = vsel %vm235, %v1673, 0
  %v1739 = vsel %vm235, %v1674, 0
  %v1742 = vsel %vm235, %v1675, 0
  %v1745 = vsel %vm235, %v1676, 0
  %v1748 = vsel %vm235, %v1677, 0
  %v1751 = vsel %vm235, %v1678, 0
  %v1754 = vsel %vm235, %v1679, 0
  %v1757 = vsel %vm235, %v1680, 0
  %v1760 = vsel %vm235, %v1681, 0
  %v1763 = vsel %vm235, %v1682, 0
  %v1766 = vsel %vm235, %v1683, 0
  %v1769 = vsel %vm235, %v1684, 0
  %v1772 = vsel %vm235, %v1685, 0
  %v1775 = vsel %vm235, %v1686, 0
  %v1778 = vsel %vm308, %v1701, 0
  %v1781 = vsel %vm308, %v1702, 0
  %1783 = vmatprep.subr.bf16.mxu0 %v1700
  %1784 = vmatpush1.bf16.msra.mxu0 %v1699
  %1785 = vmatprep.subr.bf16.mxu0 %v1781
  %1786 = vmatpush1.bf16.msra.mxu0 %v1778
  %1787 = vmatprep.subr.bf16.mxu0 0
  %1788 = vmatpush1.bf16.msra.mxu0 0
  %1789 = vmatprep.subr.bf16.mxu0 0
  %1790 = vmatpush1.bf16.msra.mxu0 0
  %1791 = vmatprep.subr.bf16.mxu0 0
  %1792 = vmatpush1.bf16.msra.mxu0 0
  %1793 = vmatprep.subr.bf16.mxu0 0
  %1794 = vmatpush1.bf16.msra.mxu0 0
  %1795 = vmatprep.subr.bf16.mxu0 0
  %1796 = vmatpush1.bf16.msra.mxu0 0
  %1797 = vmatprep.subr.bf16.mxu0 0
  %1798 = vmatpush1.bf16.msra.mxu0 0
  %1799 = vmatprep.subr.bf16.mxu0 0
  %1800 = vmatpush1.bf16.msra.mxu0 0
  %1801 = vmatprep.subr.bf16.mxu0 0
  %1802 = vmatpush1.bf16.msra.mxu0 0
  %1803 = vmatprep.subr.bf16.mxu0 0
  %1804 = vmatpush1.bf16.msra.mxu0 0
  %1805 = vmatprep.subr.bf16.mxu0 0
  %1806 = vmatpush1.bf16.msra.mxu0 0
  %1807 = vmatprep.subr.bf16.mxu0 0
  %1808 = vmatpush1.bf16.msra.mxu0 0
  %1809 = vmatprep.subr.bf16.mxu0 0
  %1810 = vmatpush1.bf16.msra.mxu0 0
  %1811 = vmatprep.subr.bf16.mxu0 0
  %1812 = vmatpush1.bf16.msra.mxu0 0
  %1813 = vmatprep.subr.bf16.mxu0 0
  %1814 = vmatpush1.bf16.msra.mxu0 0
  %1815 = vmatprep.mubr.bf16.mxu0 0
  %1816 = vmatmul.mubr.bf16.gmra.mrb[0].mxu0 %v1706
  %v1817 = vpop.f32.mrb[0].mxu0
  %v1818 = vadd.f32 0.0, %v1817
  %v1819 = vpop.f32.mrb[0].mxu0
  %v1820 = vadd.f32 0.0, %v1819
  %v1821 = vpop.f32.mrb[0].mxu0
  %v1822 = vadd.f32 0.0, %v1821
  %v1823 = vpop.f32.mrb[0].mxu0
  %v1824 = vadd.f32 0.0, %v1823
  %1825 = vmatprep.mubr.bf16.mxu0 0
  %1826 = vmatmul.mubr.bf16.gmra.mrb[0].mxu0 %v1709
  %v1827 = vpop.f32.mrb[0].mxu0
  %v1828 = vadd.f32 0.0, %v1827
  %v1829 = vpop.f32.mrb[0].mxu0
  %v1830 = vadd.f32 0.0, %v1829
  %v1831 = vpop.f32.mrb[0].mxu0
  %v1832 = vadd.f32 0.0, %v1831
  %v1833 = vpop.f32.mrb[0].mxu0
  %v1834 = vadd.f32 0.0, %v1833
  %1835 = vmatprep.mubr.bf16.mxu0 0
  %1836 = vmatmul.mubr.bf16.gmra.mrb[0].mxu0 %v1712
  %v1837 = vpop.f32.mrb[0].mxu0
  %v1838 = vadd.f32 0.0, %v1837
  %v1839 = vpop.f32.mrb[0].mxu0
  %v1840 = vadd.f32 0.0, %v1839
  %v1841 = vpop.f32.mrb[0].mxu0
  %v1842 = vadd.f32 0.0, %v1841
  %v1843 = vpop.f32.mrb[0].mxu0
  %v1844 = vadd.f32 0.0, %v1843
  %1845 = vmatprep.mubr.bf16.mxu0 0
  %1846 = vmatmul.mubr.bf16.gmra.mrb[0].mxu0 %v1715
  %v1847 = vpop.f32.mrb[0].mxu0
  %v1848 = vadd.f32 0.0, %v1847
  %v1849 = vpop.f32.mrb[0].mxu0
  %v1850 = vadd.f32 0.0, %v1849
  %v1851 = vpop.f32.mrb[0].mxu0
  %v1852 = vadd.f32 0.0, %v1851
  %v1853 = vpop.f32.mrb[0].mxu0
  %v1854 = vadd.f32 0.0, %v1853
  %1855 = vmatprep.mubr.bf16.mxu0 0
  %1856 = vmatmul.mubr.bf16.gmra.mrb[0].mxu0 %v1718
  %v1857 = vpop.f32.mrb[0].mxu0
  %v1858 = vadd.f32 0.0, %v1857
  %v1859 = vpop.f32.mrb[0].mxu0
  %v1860 = vadd.f32 0.0, %v1859
  %v1861 = vpop.f32.mrb[0].mxu0
  %v1862 = vadd.f32 0.0, %v1861
  %v1863 = vpop.f32.mrb[0].mxu0
  %v1864 = vadd.f32 0.0, %v1863
  %1865 = vmatprep.mubr.bf16.mxu0 0
  %1866 = vmatmul.mubr.bf16.gmra.mrb[0].mxu0 %v1721
  %v1867 = vpop.f32.mrb[0].mxu0
  %v1868 = vadd.f32 0.0, %v1867
  %v1869 = vpop.f32.mrb[0].mxu0
  %v1870 = vadd.f32 0.0, %v1869
  %v1871 = vpop.f32.mrb[0].mxu0
  %v1872 = vadd.f32 0.0, %v1871
  %v1873 = vpop.f32.mrb[0].mxu0
  %v1874 = vadd.f32 0.0, %v1873
  %1875 = vmatprep.mubr.bf16.mxu0 0
  %1876 = vmatmul.mubr.bf16.gmra.mrb[0].mxu0 %v1724
  %v1877 = vpop.f32.mrb[0].mxu0
  %v1878 = vadd.f32 0.0, %v1877
  %v1879 = vpop.f32.mrb[0].mxu0
  %v1880 = vadd.f32 0.0, %v1879
  %v1881 = vpop.f32.mrb[0].mxu0
  %v1882 = vadd.f32 0.0, %v1881
  %v1883 = vpop.f32.mrb[0].mxu0
  %v1884 = vadd.f32 0.0, %v1883
  %1885 = vmatprep.mubr.bf16.mxu0 0
  %1886 = vmatmul.mubr.bf16.gmra.mrb[0].mxu0 %v1727
  %v1887 = vpop.f32.mrb[0].mxu0
  %v1888 = vadd.f32 0.0, %v1887
  %v1889 = vpop.f32.mrb[0].mxu0
  %v1890 = vadd.f32 0.0, %v1889
  %v1891 = vpop.f32.mrb[0].mxu0
  %v1892 = vadd.f32 0.0, %v1891
  %v1893 = vpop.f32.mrb[0].mxu0
  %v1894 = vadd.f32 0.0, %v1893
  %1895 = vmatprep.mubr.bf16.mxu0 0
  %1896 = vmatmul.mubr.bf16.gmra.mrb[0].mxu0 %v1730
  %v1897 = vpop.f32.mrb[0].mxu0
  %v1898 = vadd.f32 0.0, %v1897
  %v1899 = vpop.f32.mrb[0].mxu0
  %v1900 = vadd.f32 0.0, %v1899
  %v1901 = vpop.f32.mrb[0].mxu0
  %v1902 = vadd.f32 0.0, %v1901
  %v1903 = vpop.f32.mrb[0].mxu0
  %v1904 = vadd.f32 0.0, %v1903
  %1905 = vmatprep.mubr.bf16.mxu0 0
  %1906 = vmatmul.mubr.bf16.gmra.mrb[0].mxu0 %v1733
  %v1907 = vpop.f32.mrb[0].mxu0
  %v1908 = vadd.f32 0.0, %v1907
  %v1909 = vpop.f32.mrb[0].mxu0
  %v1910 = vadd.f32 0.0, %v1909
  %v1911 = vpop.f32.mrb[0].mxu0
  %v1912 = vadd.f32 0.0, %v1911
  %v1913 = vpop.f32.mrb[0].mxu0
  %v1914 = vadd.f32 0.0, %v1913
  %1915 = vmatprep.mubr.bf16.mxu0 0
  %1916 = vmatmul.mubr.bf16.gmra.mrb[0].mxu0 %v1736
  %v1917 = vpop.f32.mrb[0].mxu0
  %v1918 = vadd.f32 0.0, %v1917
  %v1919 = vpop.f32.mrb[0].mxu0
  %v1920 = vadd.f32 0.0, %v1919
  %v1921 = vpop.f32.mrb[0].mxu0
  %v1922 = vadd.f32 0.0, %v1921
  %v1923 = vpop.f32.mrb[0].mxu0
  %v1924 = vadd.f32 0.0, %v1923
  %1925 = vmatprep.mubr.bf16.mxu0 0
  %1926 = vmatmul.mubr.bf16.gmra.mrb[0].mxu0 %v1739
  %v1927 = vpop.f32.mrb[0].mxu0
  %v1928 = vadd.f32 0.0, %v1927
  %v1929 = vpop.f32.mrb[0].mxu0
  %v1930 = vadd.f32 0.0, %v1929
  %v1931 = vpop.f32.mrb[0].mxu0
  %v1932 = vadd.f32 0.0, %v1931
  %v1933 = vpop.f32.mrb[0].mxu0
  %v1934 = vadd.f32 0.0, %v1933
  %1935 = vmatprep.mubr.bf16.mxu0 0
  %1936 = vmatmul.mubr.bf16.gmra.mrb[0].mxu0 %v1742
  %v1937 = vpop.f32.mrb[0].mxu0
  %v1938 = vadd.f32 0.0, %v1937
  %v1939 = vpop.f32.mrb[0].mxu0
  %v1940 = vadd.f32 0.0, %v1939
  %v1941 = vpop.f32.mrb[0].mxu0
  %v1942 = vadd.f32 0.0, %v1941
  %v1943 = vpop.f32.mrb[0].mxu0
  %v1944 = vadd.f32 0.0, %v1943
  %1945 = vmatprep.mubr.bf16.mxu0 0
  %1946 = vmatmul.mubr.bf16.gmra.mrb[0].mxu0 %v1745
  %v1947 = vpop.f32.mrb[0].mxu0
  %v1948 = vadd.f32 0.0, %v1947
  %v1949 = vpop.f32.mrb[0].mxu0
  %v1950 = vadd.f32 0.0, %v1949
  %v1951 = vpop.f32.mrb[0].mxu0
  %v1952 = vadd.f32 0.0, %v1951
  %v1953 = vpop.f32.mrb[0].mxu0
  %v1954 = vadd.f32 0.0, %v1953
  %1955 = vmatprep.mubr.bf16.mxu0 0
  %1956 = vmatmul.mubr.bf16.gmra.mrb[0].mxu0 %v1748
  %v1957 = vpop.f32.mrb[0].mxu0
  %v1958 = vadd.f32 0.0, %v1957
  %v1959 = vpop.f32.mrb[0].mxu0
  %v1960 = vadd.f32 0.0, %v1959
  %v1961 = vpop.f32.mrb[0].mxu0
  %v1962 = vadd.f32 0.0, %v1961
  %v1963 = vpop.f32.mrb[0].mxu0
  %v1964 = vadd.f32 0.0, %v1963
  %1965 = vmatprep.mubr.bf16.mxu0 0
  %1966 = vmatmul.mubr.bf16.gmra.mrb[0].mxu0 %v1751
  %v1967 = vpop.f32.mrb[0].mxu0
  %v1968 = vadd.f32 0.0, %v1967
  %v1969 = vpop.f32.mrb[0].mxu0
  %v1970 = vadd.f32 0.0, %v1969
  %v1971 = vpop.f32.mrb[0].mxu0
  %v1972 = vadd.f32 0.0, %v1971
  %v1973 = vpop.f32.mrb[0].mxu0
  %v1974 = vadd.f32 0.0, %v1973
  %1975 = vmatprep.mubr.bf16.mxu0 0
  %1976 = vmatmul.mubr.bf16.gmra.mrb[0].mxu0 %v1754
  %v1977 = vpop.f32.mrb[0].mxu0
  %v1978 = vadd.f32 0.0, %v1977
  %v1979 = vpop.f32.mrb[0].mxu0
  %v1980 = vadd.f32 0.0, %v1979
  %v1981 = vpop.f32.mrb[0].mxu0
  %v1982 = vadd.f32 0.0, %v1981
  %v1983 = vpop.f32.mrb[0].mxu0
  %v1984 = vadd.f32 0.0, %v1983
  %1985 = vmatprep.mubr.bf16.mxu0 0
  %1986 = vmatmul.mubr.bf16.gmra.mrb[0].mxu0 %v1757
  %v1987 = vpop.f32.mrb[0].mxu0
  %v1988 = vadd.f32 0.0, %v1987
  %v1989 = vpop.f32.mrb[0].mxu0
  %v1990 = vadd.f32 0.0, %v1989
  %v1991 = vpop.f32.mrb[0].mxu0
  %v1992 = vadd.f32 0.0, %v1991
  %v1993 = vpop.f32.mrb[0].mxu0
  %v1994 = vadd.f32 0.0, %v1993
  %1995 = vmatprep.mubr.bf16.mxu0 0
  %1996 = vmatmul.mubr.bf16.gmra.mrb[0].mxu0 %v1760
  %v1997 = vpop.f32.mrb[0].mxu0
  %v1998 = vadd.f32 0.0, %v1997
  %v1999 = vpop.f32.mrb[0].mxu0
  %v2000 = vadd.f32 0.0, %v1999
  %v2001 = vpop.f32.mrb[0].mxu0
  %v2002 = vadd.f32 0.0, %v2001
  %v2003 = vpop.f32.mrb[0].mxu0
  %v2004 = vadd.f32 0.0, %v2003
  %2005 = vmatprep.mubr.bf16.mxu0 0
  %2006 = vmatmul.mubr.bf16.gmra.mrb[0].mxu0 %v1763
  %v2007 = vpop.f32.mrb[0].mxu0
  %v2008 = vadd.f32 0.0, %v2007
  %v2009 = vpop.f32.mrb[0].mxu0
  %v2010 = vadd.f32 0.0, %v2009
  %v2011 = vpop.f32.mrb[0].mxu0
  %v2012 = vadd.f32 0.0, %v2011
  %v2013 = vpop.f32.mrb[0].mxu0
  %v2014 = vadd.f32 0.0, %v2013
  %2015 = vmatprep.mubr.bf16.mxu0 0
  %2016 = vmatmul.mubr.bf16.gmra.mrb[0].mxu0 %v1766
  %v2017 = vpop.f32.mrb[0].mxu0
  %v2018 = vadd.f32 0.0, %v2017
  %v2019 = vpop.f32.mrb[0].mxu0
  %v2020 = vadd.f32 0.0, %v2019
  %v2021 = vpop.f32.mrb[0].mxu0
  %v2022 = vadd.f32 0.0, %v2021
  %v2023 = vpop.f32.mrb[0].mxu0
  %v2024 = vadd.f32 0.0, %v2023
  %2025 = vmatprep.mubr.bf16.mxu0 0
  %2026 = vmatmul.mubr.bf16.gmra.mrb[0].mxu0 %v1769
  %v2027 = vpop.f32.mrb[0].mxu0
  %v2028 = vadd.f32 0.0, %v2027
  %v2029 = vpop.f32.mrb[0].mxu0
  %v2030 = vadd.f32 0.0, %v2029
  %v2031 = vpop.f32.mrb[0].mxu0
  %v2032 = vadd.f32 0.0, %v2031
  %v2033 = vpop.f32.mrb[0].mxu0
  %v2034 = vadd.f32 0.0, %v2033
  %2035 = vmatprep.mubr.bf16.mxu0 0
  %2036 = vmatmul.mubr.bf16.gmra.mrb[0].mxu0 %v1772
  %v2037 = vpop.f32.mrb[0].mxu0
  %v2038 = vadd.f32 0.0, %v2037
  %v2039 = vpop.f32.mrb[0].mxu0
  %v2040 = vadd.f32 0.0, %v2039
  %v2041 = vpop.f32.mrb[0].mxu0
  %v2042 = vadd.f32 0.0, %v2041
  %v2043 = vpop.f32.mrb[0].mxu0
  %v2044 = vadd.f32 0.0, %v2043
  %2045 = vmatprep.mubr.bf16.mxu0 0
  %2046 = vmatmul.mubr.bf16.gmra.mrb[0].mxu0 %v1775
  %v2047 = vpop.f32.mrb[0].mxu0
  %v2048 = vadd.f32 0.0, %v2047
  %v2049 = vpop.f32.mrb[0].mxu0
  %v2050 = vadd.f32 0.0, %v2049
  %v2051 = vpop.f32.mrb[0].mxu0
  %v2052 = vadd.f32 0.0, %v2051
  %v2053 = vpop.f32.mrb[0].mxu0
  %v2054 = vadd.f32 0.0, %v2053
  %2055 = vdwg.mxu0
  %v2056 = vld [vmem:[#allocation2] sm:$0xff]
  %v2057 = vld [vmem:[#allocation2 + $0x8] sm:$0xff]
  %v2058 = vld [vmem:[#allocation2 + $0x10] sm:$0xff]
  %v2059 = vld [vmem:[#allocation2 + $0x18] sm:$0xff]
  %v2060 = vld [vmem:[#allocation2 + $0x20] sm:$0xff]
  %v2061 = vld [vmem:[#allocation2 + $0x28] sm:$0xff]
  %v2062 = vld [vmem:[#allocation2 + $0x30] sm:$0xff]
  %v2063 = vld [vmem:[#allocation2 + $0x38] sm:$0xff]
  %v2064 = vld [vmem:[#allocation2 + $0x40] sm:$0xff]
  %v2065 = vld [vmem:[#allocation2 + $0x48] sm:$0xff]
  %v2066 = vld [vmem:[#allocation2 + $0x50] sm:$0xff]
  %v2067 = vld [vmem:[#allocation2 + $0x58] sm:$0xff]
  %v2068 = vld [vmem:[#allocation2 + $0x60] sm:$0xff]
  %v2069 = vld [vmem:[#allocation2 + $0x68] sm:$0xff]
  %v2070 = vld [vmem:[#allocation2 + $0x70] sm:$0xff]
  %v2071 = vld [vmem:[#allocation2 + $0x78] sm:$0xff]
  %v2072 = vld [vmem:[#allocation2 + $0x80] sm:$0xff]
  %v2073 = vld [vmem:[#allocation2 + $0x88] sm:$0xff]
  %v2074 = vld [vmem:[#allocation2 + $0x90] sm:$0xff]
  %v2075 = vld [vmem:[#allocation2 + $0x98] sm:$0xff]
  %v2076 = vld [vmem:[#allocation2 + $0xa0] sm:$0xff]
  %v2077 = vld [vmem:[#allocation2 + $0xa8] sm:$0xff]
  %v2078 = vld [vmem:[#allocation2 + $0xb0] sm:$0xff]
  %v2079 = vld [vmem:[#allocation2 + $0xb8] sm:$0xff]
  %v2080 = vld [vmem:[#allocation2 + $0xc0] sm:$0xff]
  %v2081 = vld [vmem:[#allocation2 + $0xc8] sm:$0xff]
  %v2082 = vld [vmem:[#allocation2 + $0xd0] sm:$0xff]
  %v2083 = vld [vmem:[#allocation2 + $0xd8] sm:$0xff]
  %v2084 = vld [vmem:[#allocation2 + $0xe0] sm:$0xff]
  %v2085 = vld [vmem:[#allocation2 + $0xe8] sm:$0xff]
  %v2086 = vld [vmem:[#allocation2 + $0xf0] sm:$0xff]
  %v2087 = vld [vmem:[#allocation2 + $0xf8] sm:$0xff]
  %v2088 = vld [vmem:[#allocation2 + $0x100] sm:$0xff]
  %v2089 = vld [vmem:[#allocation2 + $0x108] sm:$0xff]
  %v2090 = vld [vmem:[#allocation2 + $0x110] sm:$0xff]
  %v2091 = vld [vmem:[#allocation2 + $0x118] sm:$0xff]
  %v2092 = vld [vmem:[#allocation2 + $0x120] sm:$0xff]
  %v2093 = vld [vmem:[#allocation2 + $0x128] sm:$0xff]
  %v2094 = vld [vmem:[#allocation2 + $0x130] sm:$0xff]
  %v2095 = vld [vmem:[#allocation2 + $0x138] sm:$0xff]
  %v2096 = vld [vmem:[#allocation2 + $0x140] sm:$0xff]
  %v2097 = vld [vmem:[#allocation2 + $0x148] sm:$0xff]
  %v2098 = vld [vmem:[#allocation2 + $0x150] sm:$0xff]
  %v2099 = vld [vmem:[#allocation2 + $0x158] sm:$0xff]
  %v2100 = vld [vmem:[#allocation2 + $0x160] sm:$0xff]
  %v2101 = vld [vmem:[#allocation2 + $0x168] sm:$0xff]
  %v2102 = vld [vmem:[#allocation2 + $0x170] sm:$0xff]
  %v2103 = vld [vmem:[#allocation2 + $0x178] sm:$0xff]
  %v2104 = vld [vmem:[#allocation2 + $0x180] sm:$0xff]
  %v2105 = vld [vmem:[#allocation2 + $0x188] sm:$0xff]
  %v2106 = vld [vmem:[#allocation2 + $0x190] sm:$0xff]
  %v2107 = vld [vmem:[#allocation2 + $0x198] sm:$0xff]
  %v2108 = vld [vmem:[#allocation2 + $0x1a0] sm:$0xff]
  %v2109 = vld [vmem:[#allocation2 + $0x1a8] sm:$0xff]
  %v2110 = vld [vmem:[#allocation2 + $0x1b0] sm:$0xff]
  %v2111 = vld [vmem:[#allocation2 + $0x1b8] sm:$0xff]
  %v2112 = vld [vmem:[#allocation2 + $0x1c0] sm:$0xff]
  %v2113 = vld [vmem:[#allocation2 + $0x1c8] sm:$0xff]
  %v2114 = vld [vmem:[#allocation2 + $0x1d0] sm:$0xff]
  %v2115 = vld [vmem:[#allocation2 + $0x1d8] sm:$0xff]
  %v2116 = vld [vmem:[#allocation2 + $0x1e0] sm:$0xff]
  %v2117 = vld [vmem:[#allocation2 + $0x1e8] sm:$0xff]
  %v2118 = vld [vmem:[#allocation2 + $0x1f0] sm:$0xff]
  %v2119 = vld [vmem:[#allocation2 + $0x1f8] sm:$0xff]
  %v2120 = vld [vmem:[#allocation2 + $0x200] sm:$0xff]
  %v2121 = vld [vmem:[#allocation2 + $0x208] sm:$0xff]
  %v2122 = vld [vmem:[#allocation2 + $0x210] sm:$0xff]
  %v2123 = vld [vmem:[#allocation2 + $0x218] sm:$0xff]
  %v2124 = vld [vmem:[#allocation2 + $0x220] sm:$0xff]
  %v2125 = vld [vmem:[#allocation2 + $0x228] sm:$0xff]
  %v2126 = vld [vmem:[#allocation2 + $0x230] sm:$0xff]
  %v2127 = vld [vmem:[#allocation2 + $0x238] sm:$0xff]
  %v2128 = vld [vmem:[#allocation2 + $0x240] sm:$0xff]
  %v2129 = vld [vmem:[#allocation2 + $0x248] sm:$0xff]
  %v2130 = vld [vmem:[#allocation2 + $0x250] sm:$0xff]
  %v2131 = vld [vmem:[#allocation2 + $0x258] sm:$0xff]
  %v2132 = vld [vmem:[#allocation2 + $0x260] sm:$0xff]
  %v2133 = vld [vmem:[#allocation2 + $0x268] sm:$0xff]
  %v2134 = vld [vmem:[#allocation2 + $0x270] sm:$0xff]
  %v2135 = vld [vmem:[#allocation2 + $0x278] sm:$0xff]
  %v2136 = vld [vmem:[#allocation2 + $0x280] sm:$0xff]
  %v2137 = vld [vmem:[#allocation2 + $0x288] sm:$0xff]
  %v2138 = vld [vmem:[#allocation2 + $0x290] sm:$0xff]
  %v2139 = vld [vmem:[#allocation2 + $0x298] sm:$0xff]
  %v2140 = vld [vmem:[#allocation2 + $0x2a0] sm:$0xff]
  %v2141 = vld [vmem:[#allocation2 + $0x2a8] sm:$0xff]
  %v2142 = vld [vmem:[#allocation2 + $0x2b0] sm:$0xff]
  %v2143 = vld [vmem:[#allocation2 + $0x2b8] sm:$0xff]
  %v2144 = vld [vmem:[#allocation2 + $0x2c0] sm:$0xff]
  %v2145 = vld [vmem:[#allocation2 + $0x2c8] sm:$0xff]
  %v2146 = vld [vmem:[#allocation2 + $0x2d0] sm:$0xff]
  %v2147 = vld [vmem:[#allocation2 + $0x2d8] sm:$0xff]
  %v2148 = vld [vmem:[#allocation2 + $0x2e0] sm:$0xff]
  %v2149 = vld [vmem:[#allocation2 + $0x2e8] sm:$0xff]
  %v2150 = vld [vmem:[#allocation2 + $0x2f0] sm:$0xff]
  %v2151 = vld [vmem:[#allocation2 + $0x2f8] sm:$0xff]
  %v2152 = vadd.f32 %v2056, %v1818
  %v2153 = vadd.f32 %v2057, %v1820
  %v2154 = vadd.f32 %v2058, %v1822
  %v2155 = vadd.f32 %v2059, %v1824
  %v2156 = vadd.f32 %v2060, %v1828
  %v2157 = vadd.f32 %v2061, %v1830
  %v2158 = vadd.f32 %v2062, %v1832
  %v2159 = vadd.f32 %v2063, %v1834
  %v2160 = vadd.f32 %v2064, %v1838
  %v2161 = vadd.f32 %v2065, %v1840
  %v2162 = vadd.f32 %v2066, %v1842
  %v2163 = vadd.f32 %v2067, %v1844
  %v2164 = vadd.f32 %v2068, %v1848
  %v2165 = vadd.f32 %v2069, %v1850
  %v2166 = vadd.f32 %v2070, %v1852
  %v2167 = vadd.f32 %v2071, %v1854
  %v2168 = vadd.f32 %v2072, %v1858
  %v2169 = vadd.f32 %v2073, %v1860
  %v2170 = vadd.f32 %v2074, %v1862
  %v2171 = vadd.f32 %v2075, %v1864
  %v2172 = vadd.f32 %v2076, %v1868
  %v2173 = vadd.f32 %v2077, %v1870
  %v2174 = vadd.f32 %v2078, %v1872
  %v2175 = vadd.f32 %v2079, %v1874
  %v2176 = vadd.f32 %v2080, %v1878
  %v2177 = vadd.f32 %v2081, %v1880
  %v2178 = vadd.f32 %v2082, %v1882
  %v2179 = vadd.f32 %v2083, %v1884
  %v2180 = vadd.f32 %v2084, %v1888
  %v2181 = vadd.f32 %v2085, %v1890
  %v2182 = vadd.f32 %v2086, %v1892
  %v2183 = vadd.f32 %v2087, %v1894
  %v2184 = vadd.f32 %v2088, %v1898
  %v2185 = vadd.f32 %v2089, %v1900
  %v2186 = vadd.f32 %v2090, %v1902
  %v2187 = vadd.f32 %v2091, %v1904
  %v2188 = vadd.f32 %v2092, %v1908
  %v2189 = vadd.f32 %v2093, %v1910
  %v2190 = vadd.f32 %v2094, %v1912
  %v2191 = vadd.f32 %v2095, %v1914
  %v2192 = vadd.f32 %v2096, %v1918
  %v2193 = vadd.f32 %v2097, %v1920
  %v2194 = vadd.f32 %v2098, %v1922
  %v2195 = vadd.f32 %v2099, %v1924
  %v2196 = vadd.f32 %v2100, %v1928
  %v2197 = vadd.f32 %v2101, %v1930
  %v2198 = vadd.f32 %v2102, %v1932
  %v2199 = vadd.f32 %v2103, %v1934
  %v2200 = vadd.f32 %v2104, %v1938
  %v2201 = vadd.f32 %v2105, %v1940
  %v2202 = vadd.f32 %v2106, %v1942
  %v2203 = vadd.f32 %v2107, %v1944
  %v2204 = vadd.f32 %v2108, %v1948
  %v2205 = vadd.f32 %v2109, %v1950
  %v2206 = vadd.f32 %v2110, %v1952
  %v2207 = vadd.f32 %v2111, %v1954
  %v2208 = vadd.f32 %v2112, %v1958
  %v2209 = vadd.f32 %v2113, %v1960
  %v2210 = vadd.f32 %v2114, %v1962
  %v2211 = vadd.f32 %v2115, %v1964
  %v2212 = vadd.f32 %v2116, %v1968
  %v2213 = vadd.f32 %v2117, %v1970
  %v2214 = vadd.f32 %v2118, %v1972
  %v2215 = vadd.f32 %v2119, %v1974
  %v2216 = vadd.f32 %v2120, %v1978
  %v2217 = vadd.f32 %v2121, %v1980
  %v2218 = vadd.f32 %v2122, %v1982
  %v2219 = vadd.f32 %v2123, %v1984
  %v2220 = vadd.f32 %v2124, %v1988
  %v2221 = vadd.f32 %v2125, %v1990
  %v2222 = vadd.f32 %v2126, %v1992
  %v2223 = vadd.f32 %v2127, %v1994
  %v2224 = vadd.f32 %v2128, %v1998
  %v2225 = vadd.f32 %v2129, %v2000
  %v2226 = vadd.f32 %v2130, %v2002
  %v2227 = vadd.f32 %v2131, %v2004
  %v2228 = vadd.f32 %v2132, %v2008
  %v2229 = vadd.f32 %v2133, %v2010
  %v2230 = vadd.f32 %v2134, %v2012
  %v2231 = vadd.f32 %v2135, %v2014
  %v2232 = vadd.f32 %v2136, %v2018
  %v2233 = vadd.f32 %v2137, %v2020
  %v2234 = vadd.f32 %v2138, %v2022
  %v2235 = vadd.f32 %v2139, %v2024
  %v2236 = vadd.f32 %v2140, %v2028
  %v2237 = vadd.f32 %v2141, %v2030
  %v2238 = vadd.f32 %v2142, %v2032
  %v2239 = vadd.f32 %v2143, %v2034
  %v2240 = vadd.f32 %v2144, %v2038
  %v2241 = vadd.f32 %v2145, %v2040
  %v2242 = vadd.f32 %v2146, %v2042
  %v2243 = vadd.f32 %v2147, %v2044
  %v2244 = vadd.f32 %v2148, %v2048
  %v2245 = vadd.f32 %v2149, %v2050
  %v2246 = vadd.f32 %v2150, %v2052
  %v2247 = vadd.f32 %v2151, %v2054
  %2248 = vst [vmem:[#allocation2] sm:$0xff] %v2152
  %2249 = vst [vmem:[#allocation2 + $0x8] sm:$0xff] %v2153
  %2250 = vst [vmem:[#allocation2 + $0x10] sm:$0xff] %v2154
  %2251 = vst [vmem:[#allocation2 + $0x18] sm:$0xff] %v2155
  %2252 = vst [vmem:[#allocation2 + $0x20] sm:$0xff] %v2156
  %2253 = vst [vmem:[#allocation2 + $0x28] sm:$0xff] %v2157
  %2254 = vst [vmem:[#allocation2 + $0x30] sm:$0xff] %v2158
  %2255 = vst [vmem:[#allocation2 + $0x38] sm:$0xff] %v2159
  %2256 = vst [vmem:[#allocation2 + $0x40] sm:$0xff] %v2160
  %2257 = vst [vmem:[#allocation2 + $0x48] sm:$0xff] %v2161
  %2258 = vst [vmem:[#allocation2 + $0x50] sm:$0xff] %v2162
  %2259 = vst [vmem:[#allocation2 + $0x58] sm:$0xff] %v2163
  %2260 = vst [vmem:[#allocation2 + $0x60] sm:$0xff] %v2164
  %2261 = vst [vmem:[#allocation2 + $0x68] sm:$0xff] %v2165
  %2262 = vst [vmem:[#allocation2 + $0x70] sm:$0xff] %v2166
  %2263 = vst [vmem:[#allocation2 + $0x78] sm:$0xff] %v2167
  %2264 = vst [vmem:[#allocation2 + $0x80] sm:$0xff] %v2168
  %2265 = vst [vmem:[#allocation2 + $0x88] sm:$0xff] %v2169
  %2266 = vst [vmem:[#allocation2 + $0x90] sm:$0xff] %v2170
  %2267 = vst [vmem:[#allocation2 + $0x98] sm:$0xff] %v2171
  %2268 = vst [vmem:[#allocation2 + $0xa0] sm:$0xff] %v2172
  %2269 = vst [vmem:[#allocation2 + $0xa8] sm:$0xff] %v2173
  %2270 = vst [vmem:[#allocation2 + $0xb0] sm:$0xff] %v2174
  %2271 = vst [vmem:[#allocation2 + $0xb8] sm:$0xff] %v2175
  %2272 = vst [vmem:[#allocation2 + $0xc0] sm:$0xff] %v2176
  %2273 = vst [vmem:[#allocation2 + $0xc8] sm:$0xff] %v2177
  %2274 = vst [vmem:[#allocation2 + $0xd0] sm:$0xff] %v2178
  %2275 = vst [vmem:[#allocation2 + $0xd8] sm:$0xff] %v2179
  %2276 = vst [vmem:[#allocation2 + $0xe0] sm:$0xff] %v2180
  %2277 = vst [vmem:[#allocation2 + $0xe8] sm:$0xff] %v2181
  %2278 = vst [vmem:[#allocation2 + $0xf0] sm:$0xff] %v2182
  %2279 = vst [vmem:[#allocation2 + $0xf8] sm:$0xff] %v2183
  %2280 = vst [vmem:[#allocation2 + $0x100] sm:$0xff] %v2184
  %2281 = vst [vmem:[#allocation2 + $0x108] sm:$0xff] %v2185
  %2282 = vst [vmem:[#allocation2 + $0x110] sm:$0xff] %v2186
  %2283 = vst [vmem:[#allocation2 + $0x118] sm:$0xff] %v2187
  %2284 = vst [vmem:[#allocation2 + $0x120] sm:$0xff] %v2188
  %2285 = vst [vmem:[#allocation2 + $0x128] sm:$0xff] %v2189
  %2286 = vst [vmem:[#allocation2 + $0x130] sm:$0xff] %v2190
  %2287 = vst [vmem:[#allocation2 + $0x138] sm:$0xff] %v2191
  %2288 = vst [vmem:[#allocation2 + $0x140] sm:$0xff] %v2192
  %2289 = vst [vmem:[#allocation2 + $0x148] sm:$0xff] %v2193
  %2290 = vst [vmem:[#allocation2 + $0x150] sm:$0xff] %v2194
  %2291 = vst [vmem:[#allocation2 + $0x158] sm:$0xff] %v2195
  %2292 = vst [vmem:[#allocation2 + $0x160] sm:$0xff] %v2196
  %2293 = vst [vmem:[#allocation2 + $0x168] sm:$0xff] %v2197
  %2294 = vst [vmem:[#allocation2 + $0x170] sm:$0xff] %v2198
  %2295 = vst [vmem:[#allocation2 + $0x178] sm:$0xff] %v2199
  %2296 = vst [vmem:[#allocation2 + $0x180] sm:$0xff] %v2200
  %2297 = vst [vmem:[#allocation2 + $0x188] sm:$0xff] %v2201
  %2298 = vst [vmem:[#allocation2 + $0x190] sm:$0xff] %v2202
  %2299 = vst [vmem:[#allocation2 + $0x198] sm:$0xff] %v2203
  %2300 = vst [vmem:[#allocation2 + $0x1a0] sm:$0xff] %v2204
  %2301 = vst [vmem:[#allocation2 + $0x1a8] sm:$0xff] %v2205
  %2302 = vst [vmem:[#allocation2 + $0x1b0] sm:$0xff] %v2206
  %2303 = vst [vmem:[#allocation2 + $0x1b8] sm:$0xff] %v2207
  %2304 = vst [vmem:[#allocation2 + $0x1c0] sm:$0xff] %v2208
  %2305 = vst [vmem:[#allocation2 + $0x1c8] sm:$0xff] %v2209
  %2306 = vst [vmem:[#allocation2 + $0x1d0] sm:$0xff] %v2210
  %2307 = vst [vmem:[#allocation2 + $0x1d8] sm:$0xff] %v2211
  %2308 = vst [vmem:[#allocation2 + $0x1e0] sm:$0xff] %v2212
  %2309 = vst [vmem:[#allocation2 + $0x1e8] sm:$0xff] %v2213
  %2310 = vst [vmem:[#allocation2 + $0x1f0] sm:$0xff] %v2214
  %2311 = vst [vmem:[#allocation2 + $0x1f8] sm:$0xff] %v2215
  %2312 = vst [vmem:[#allocation2 + $0x200] sm:$0xff] %v2216
  %2313 = vst [vmem:[#allocation2 + $0x208] sm:$0xff] %v2217
  %2314 = vst [vmem:[#allocation2 + $0x210] sm:$0xff] %v2218
  %2315 = vst [vmem:[#allocation2 + $0x218] sm:$0xff] %v2219
  %2316 = vst [vmem:[#allocation2 + $0x220] sm:$0xff] %v2220
  %2317 = vst [vmem:[#allocation2 + $0x228] sm:$0xff] %v2221
  %2318 = vst [vmem:[#allocation2 + $0x230] sm:$0xff] %v2222
  %2319 = vst [vmem:[#allocation2 + $0x238] sm:$0xff] %v2223
  %2320 = vst [vmem:[#allocation2 + $0x240] sm:$0xff] %v2224
  %2321 = vst [vmem:[#allocation2 + $0x248] sm:$0xff] %v2225
  %2322 = vst [vmem:[#allocation2 + $0x250] sm:$0xff] %v2226
  %2323 = vst [vmem:[#allocation2 + $0x258] sm:$0xff] %v2227
  %2324 = vst [vmem:[#allocation2 + $0x260] sm:$0xff] %v2228
  %2325 = vst [vmem:[#allocation2 + $0x268] sm:$0xff] %v2229
  %2326 = vst [vmem:[#allocation2 + $0x270] sm:$0xff] %v2230
  %2327 = vst [vmem:[#allocation2 + $0x278] sm:$0xff] %v2231
  %2328 = vst [vmem:[#allocation2 + $0x280] sm:$0xff] %v2232
  %2329 = vst [vmem:[#allocation2 + $0x288] sm:$0xff] %v2233
  %2330 = vst [vmem:[#allocation2 + $0x290] sm:$0xff] %v2234
  %2331 = vst [vmem:[#allocation2 + $0x298] sm:$0xff] %v2235
  %2332 = vst [vmem:[#allocation2 + $0x2a0] sm:$0xff] %v2236
  %2333 = vst [vmem:[#allocation2 + $0x2a8] sm:$0xff] %v2237
  %2334 = vst [vmem:[#allocation2 + $0x2b0] sm:$0xff] %v2238
  %2335 = vst [vmem:[#allocation2 + $0x2b8] sm:$0xff] %v2239
  %2336 = vst [vmem:[#allocation2 + $0x2c0] sm:$0xff] %v2240
  %2337 = vst [vmem:[#allocation2 + $0x2c8] sm:$0xff] %v2241
  %2338 = vst [vmem:[#allocation2 + $0x2d0] sm:$0xff] %v2242
  %2339 = vst [vmem:[#allocation2 + $0x2d8] sm:$0xff] %v2243
  %2340 = vst [vmem:[#allocation2 + $0x2e0] sm:$0xff] %v2244
  %2341 = vst [vmem:[#allocation2 + $0x2e8] sm:$0xff] %v2245
  %2342 = vst [vmem:[#allocation2 + $0x2f0] sm:$0xff] %v2246
  %2343 = vst [vmem:[#allocation2 + $0x2f8] sm:$0xff] %v2247
  %v2344 = vld [vmem:[%s0 + $0x18] sm:$0xf]
  %v2345 = vld [vmem:[%s0 + $0x1c] sm:$0xf]
  %v2346 = vld [vmem:[%s0 + $0x20] sm:$0xf]
  %v2347 = vld [vmem:[%s0 + $0x24] sm:$0xf]
  %v2348 = vld [vmem:[%s0 + $0x28] sm:$0xf]
  %v2349 = vld [vmem:[%s0 + $0x2c] sm:$0xf]
  %v2350 = vld [vmem:[%s0 + $0x30] sm:$0xf]
  %v2351 = vld [vmem:[%s0 + $0x34] sm:$0xf]
  %v2352 = vld [vmem:[%s0 + $0x38] sm:$0xf]
  %v2353 = vld [vmem:[%s0 + $0x3c] sm:$0xf]
  %v2354 = vld [vmem:[%s0 + $0x40] sm:$0xf]
  %v2355 = vld [vmem:[%s0 + $0x44] sm:$0xf]
  %v2356 = vld [vmem:[%s0 + $0x48] sm:$0xf]
  %v2357 = vld [vmem:[%s0 + $0x4c] sm:$0xf]
  %v2358 = vld [vmem:[%s0 + $0x50] sm:$0xf]
  %v2359 = vld [vmem:[%s0 + $0x54] sm:$0xf]
  %v2360 = vld [vmem:[%s0 + $0x58] sm:$0xf]
  %v2361 = vld [vmem:[%s0 + $0x5c] sm:$0xf]
  %v2362 = vld [vmem:[%s0 + $0x60] sm:$0xf]
  %v2363 = vld [vmem:[%s0 + $0x64] sm:$0xf]
  %v2364 = vld [vmem:[%s0 + $0x68] sm:$0xf]
  %v2365 = vld [vmem:[%s0 + $0x6c] sm:$0xf]
  %v2366 = vld [vmem:[%s0 + $0x70] sm:$0xf]
  %v2367 = vld [vmem:[%s0 + $0x74] sm:$0xf]
  %v2368 = vld [vmem:[%s0 + $0x78] sm:$0xf]
  %v2369 = vld [vmem:[%s0 + $0x7c] sm:$0xf]
  %v2370 = vld [vmem:[%s0 + $0x80] sm:$0xf]
  %v2371 = vld [vmem:[%s0 + $0x84] sm:$0xf]
  %v2372 = vld [vmem:[%s0 + $0x88] sm:$0xf]
  %v2373 = vld [vmem:[%s0 + $0x8c] sm:$0xf]
  %v2374 = vld [vmem:[%s0 + $0x90] sm:$0xf]
  %v2375 = vld [vmem:[%s0 + $0x94] sm:$0xf]
  %v2376 = vld [vmem:[%s0 + $0x98] sm:$0xf]
  %v2377 = vld [vmem:[%s0 + $0x9c] sm:$0xf]
  %v2378 = vld [vmem:[%s0 + $0xa0] sm:$0xf]
  %v2379 = vld [vmem:[%s0 + $0xa4] sm:$0xf]
  %v2380 = vld [vmem:[%s0 + $0xa8] sm:$0xf]
  %v2381 = vld [vmem:[%s0 + $0xac] sm:$0xf]
  %v2382 = vld [vmem:[%s0 + $0xb0] sm:$0xf]
  %v2383 = vld [vmem:[%s0 + $0xb4] sm:$0xf]
  %v2384 = vld [vmem:[%s0 + $0xb8] sm:$0xf]
  %v2385 = vld [vmem:[%s0 + $0xbc] sm:$0xf]
  %v2386 = vld [vmem:[%s0 + $0xc0] sm:$0xf]
  %v2387 = vld [vmem:[%s0 + $0xc4] sm:$0xf]
  %v2388 = vld [vmem:[%s0 + $0xc8] sm:$0xf]
  %v2389 = vld [vmem:[%s0 + $0xcc] sm:$0xf]
  %v2390 = vld [vmem:[%s0 + $0xd0] sm:$0xf]
  %v2391 = vld [vmem:[%s0 + $0xd4] sm:$0xf]
  %s2392 = scalar_lea.vmem %s1, 96
  %v2393 = vld [vmem:[%s2392] sm:$0xff]
  %v2394 = vld [vmem:[%s2392 + $0x8] sm:$0xff]
  %v2395 = vld [vmem:[%s2392 + $0x10] sm:$0xff]
  %v2396 = vld [vmem:[%s2392 + $0x18] sm:$0x33]
  %v2445 = vunpack.c.l.b16 %v2344
  %v2446 = vunpack.c.l.b16 %v2345
  %v2447 = vunpack.c.l.b16 %v2346
  %v2448 = vunpack.c.l.b16 %v2347
  %v2449 = vunpack.c.l.b16 %v2348
  %v2450 = vunpack.c.l.b16 %v2349
  %v2451 = vunpack.c.l.b16 %v2350
  %v2452 = vunpack.c.l.b16 %v2351
  %v2453 = vunpack.c.l.b16 %v2352
  %v2454 = vunpack.c.l.b16 %v2353
  %v2455 = vunpack.c.l.b16 %v2354
  %v2456 = vunpack.c.l.b16 %v2355
  %v2457 = vunpack.c.l.b16 %v2356
  %v2458 = vunpack.c.l.b16 %v2357
  %v2459 = vunpack.c.l.b16 %v2358
  %v2460 = vunpack.c.l.b16 %v2359
  %v2461 = vunpack.c.l.b16 %v2360
  %v2462 = vunpack.c.l.b16 %v2361
  %v2463 = vunpack.c.l.b16 %v2362
  %v2464 = vunpack.c.l.b16 %v2363
  %v2465 = vunpack.c.l.b16 %v2364
  %v2466 = vunpack.c.l.b16 %v2365
  %v2467 = vunpack.c.l.b16 %v2366
  %v2468 = vunpack.c.l.b16 %v2367
  %v2469 = vunpack.c.l.b16 %v2368
  %v2470 = vunpack.c.l.b16 %v2369
  %v2471 = vunpack.c.l.b16 %v2370
  %v2472 = vunpack.c.l.b16 %v2371
  %v2473 = vunpack.c.l.b16 %v2372
  %v2474 = vunpack.c.l.b16 %v2373
  %v2475 = vunpack.c.l.b16 %v2374
  %v2476 = vunpack.c.l.b16 %v2375
  %v2477 = vunpack.c.l.b16 %v2376
  %v2478 = vunpack.c.l.b16 %v2377
  %v2479 = vunpack.c.l.b16 %v2378
  %v2480 = vunpack.c.l.b16 %v2379
  %v2481 = vunpack.c.l.b16 %v2380
  %v2482 = vunpack.c.l.b16 %v2381
  %v2483 = vunpack.c.l.b16 %v2382
  %v2484 = vunpack.c.l.b16 %v2383
  %v2485 = vunpack.c.l.b16 %v2384
  %v2486 = vunpack.c.l.b16 %v2385
  %v2487 = vunpack.c.l.b16 %v2386
  %v2488 = vunpack.c.l.b16 %v2387
  %v2489 = vunpack.c.l.b16 %v2388
  %v2490 = vunpack.c.l.b16 %v2389
  %v2491 = vunpack.c.l.b16 %v2390
  %v2492 = vunpack.c.l.b16 %v2391
  %v2493 = vpack.c.b16 %v2446, %v2445
  %v2494 = vpack.c.b16 %v2448, %v2447
  %v2495 = vpack.c.b16 %v2450, %v2449
  %v2496 = vpack.c.b16 %v2452, %v2451
  %v2497 = vpack.c.b16 %v2454, %v2453
  %v2498 = vpack.c.b16 %v2456, %v2455
  %v2499 = vpack.c.b16 %v2458, %v2457
  %v2500 = vpack.c.b16 %v2460, %v2459
  %v2501 = vpack.c.b16 %v2462, %v2461
  %v2502 = vpack.c.b16 %v2464, %v2463
  %v2503 = vpack.c.b16 %v2466, %v2465
  %v2504 = vpack.c.b16 %v2468, %v2467
  %v2505 = vpack.c.b16 %v2470, %v2469
  %v2506 = vpack.c.b16 %v2472, %v2471
  %v2507 = vpack.c.b16 %v2474, %v2473
  %v2508 = vpack.c.b16 %v2476, %v2475
  %v2509 = vpack.c.b16 %v2478, %v2477
  %v2510 = vpack.c.b16 %v2480, %v2479
  %v2511 = vpack.c.b16 %v2482, %v2481
  %v2512 = vpack.c.b16 %v2484, %v2483
  %v2513 = vpack.c.b16 %v2486, %v2485
  %v2514 = vpack.c.b16 %v2488, %v2487
  %v2515 = vpack.c.b16 %v2490, %v2489
  %v2516 = vpack.c.b16 %v2492, %v2491
  %v2521 = vunpack.c.l.b16 %v2393
  %v2522 = vunpack.c.h.b16 %v2393
  %v2523 = vunpack.c.l.b16 %v2394
  %v2524 = vunpack.c.h.b16 %v2394
  %v2525 = vunpack.c.l.b16 %v2395
  %v2526 = vunpack.c.h.b16 %v2395
  %v2527 = vunpack.c.l.b16 %v2396
  %v2528 = vunpack.c.h.b16 %v2396
  %v2529 = vpack.c.b16 %v2523, %v2521
  %v2530 = vpack.c.b16 %v2524, %v2522
  %v2531 = vpack.c.b16 %v2527, %v2525
  %v2532 = vpack.c.b16 %v2528, %v2526
  %v2536 = vsel %vm235, %v2493, 0
  %v2539 = vsel %vm235, %v2494, 0
  %v2542 = vsel %vm235, %v2495, 0
  %v2545 = vsel %vm235, %v2496, 0
  %v2548 = vsel %vm235, %v2497, 0
  %v2551 = vsel %vm235, %v2498, 0
  %v2554 = vsel %vm235, %v2499, 0
  %v2557 = vsel %vm235, %v2500, 0
  %v2560 = vsel %vm235, %v2501, 0
  %v2563 = vsel %vm235, %v2502, 0
  %v2566 = vsel %vm235, %v2503, 0
  %v2569 = vsel %vm235, %v2504, 0
  %v2572 = vsel %vm235, %v2505, 0
  %v2575 = vsel %vm235, %v2506, 0
  %v2578 = vsel %vm235, %v2507, 0
  %v2581 = vsel %vm235, %v2508, 0
  %v2584 = vsel %vm235, %v2509, 0
  %v2587 = vsel %vm235, %v2510, 0
  %v2590 = vsel %vm235, %v2511, 0
  %v2593 = vsel %vm235, %v2512, 0
  %v2596 = vsel %vm235, %v2513, 0
  %v2599 = vsel %vm235, %v2514, 0
  %v2602 = vsel %vm235, %v2515, 0
  %v2605 = vsel %vm235, %v2516, 0
  %v2608 = vsel %vm308, %v2531, 0
  %v2611 = vsel %vm308, %v2532, 0
  %2613 = vmatprep.subr.bf16.mxu0 %v2530
  %2614 = vmatpush1.bf16.msra.mxu0 %v2529
  %2615 = vmatprep.subr.bf16.mxu0 %v2611
  %2616 = vmatpush1.bf16.msra.mxu0 %v2608
  %2617 = vmatprep.subr.bf16.mxu0 0
  %2618 = vmatpush1.bf16.msra.mxu0 0
  %2619 = vmatprep.subr.bf16.mxu0 0
  %2620 = vmatpush1.bf16.msra.mxu0 0
  %2621 = vmatprep.subr.bf16.mxu0 0
  %2622 = vmatpush1.bf16.msra.mxu0 0
  %2623 = vmatprep.subr.bf16.mxu0 0
  %2624 = vmatpush1.bf16.msra.mxu0 0
  %2625 = vmatprep.subr.bf16.mxu0 0
  %2626 = vmatpush1.bf16.msra.mxu0 0
  %2627 = vmatprep.subr.bf16.mxu0 0
  %2628 = vmatpush1.bf16.msra.mxu0 0
  %2629 = vmatprep.subr.bf16.mxu0 0
  %2630 = vmatpush1.bf16.msra.mxu0 0
  %2631 = vmatprep.subr.bf16.mxu0 0
  %2632 = vmatpush1.bf16.msra.mxu0 0
  %2633 = vmatprep.subr.bf16.mxu0 0
  %2634 = vmatpush1.bf16.msra.mxu0 0
  %2635 = vmatprep.subr.bf16.mxu0 0
  %2636 = vmatpush1.bf16.msra.mxu0 0
  %2637 = vmatprep.subr.bf16.mxu0 0
  %2638 = vmatpush1.bf16.msra.mxu0 0
  %2639 = vmatprep.subr.bf16.mxu0 0
  %2640 = vmatpush1.bf16.msra.mxu0 0
  %2641 = vmatprep.subr.bf16.mxu0 0
  %2642 = vmatpush1.bf16.msra.mxu0 0
  %2643 = vmatprep.subr.bf16.mxu0 0
  %2644 = vmatpush1.bf16.msra.mxu0 0
  %2645 = vmatprep.mubr.bf16.mxu0 0
  %2646 = vmatmul.mubr.bf16.gmra.mrb[0].mxu0 %v2536
  %v2647 = vpop.f32.mrb[0].mxu0
  %v2648 = vadd.f32 0.0, %v2647
  %v2649 = vpop.f32.mrb[0].mxu0
  %v2650 = vadd.f32 0.0, %v2649
  %v2651 = vpop.f32.mrb[0].mxu0
  %v2652 = vadd.f32 0.0, %v2651
  %v2653 = vpop.f32.mrb[0].mxu0
  %v2654 = vadd.f32 0.0, %v2653
  %2655 = vmatprep.mubr.bf16.mxu0 0
  %2656 = vmatmul.mubr.bf16.gmra.mrb[0].mxu0 %v2539
  %v2657 = vpop.f32.mrb[0].mxu0
  %v2658 = vadd.f32 0.0, %v2657
  %v2659 = vpop.f32.mrb[0].mxu0
  %v2660 = vadd.f32 0.0, %v2659
  %v2661 = vpop.f32.mrb[0].mxu0
  %v2662 = vadd.f32 0.0, %v2661
  %v2663 = vpop.f32.mrb[0].mxu0
  %v2664 = vadd.f32 0.0, %v2663
  %2665 = vmatprep.mubr.bf16.mxu0 0
  %2666 = vmatmul.mubr.bf16.gmra.mrb[0].mxu0 %v2542
  %v2667 = vpop.f32.mrb[0].mxu0
  %v2668 = vadd.f32 0.0, %v2667
  %v2669 = vpop.f32.mrb[0].mxu0
  %v2670 = vadd.f32 0.0, %v2669
  %v2671 = vpop.f32.mrb[0].mxu0
  %v2672 = vadd.f32 0.0, %v2671
  %v2673 = vpop.f32.mrb[0].mxu0
  %v2674 = vadd.f32 0.0, %v2673
  %2675 = vmatprep.mubr.bf16.mxu0 0
  %2676 = vmatmul.mubr.bf16.gmra.mrb[0].mxu0 %v2545
  %v2677 = vpop.f32.mrb[0].mxu0
  %v2678 = vadd.f32 0.0, %v2677
  %v2679 = vpop.f32.mrb[0].mxu0
  %v2680 = vadd.f32 0.0, %v2679
  %v2681 = vpop.f32.mrb[0].mxu0
  %v2682 = vadd.f32 0.0, %v2681
  %v2683 = vpop.f32.mrb[0].mxu0
  %v2684 = vadd.f32 0.0, %v2683
  %2685 = vmatprep.mubr.bf16.mxu0 0
  %2686 = vmatmul.mubr.bf16.gmra.mrb[0].mxu0 %v2548
  %v2687 = vpop.f32.mrb[0].mxu0
  %v2688 = vadd.f32 0.0, %v2687
  %v2689 = vpop.f32.mrb[0].mxu0
  %v2690 = vadd.f32 0.0, %v2689
  %v2691 = vpop.f32.mrb[0].mxu0
  %v2692 = vadd.f32 0.0, %v2691
  %v2693 = vpop.f32.mrb[0].mxu0
  %v2694 = vadd.f32 0.0, %v2693
  %2695 = vmatprep.mubr.bf16.mxu0 0
  %2696 = vmatmul.mubr.bf16.gmra.mrb[0].mxu0 %v2551
  %v2697 = vpop.f32.mrb[0].mxu0
  %v2698 = vadd.f32 0.0, %v2697
  %v2699 = vpop.f32.mrb[0].mxu0
  %v2700 = vadd.f32 0.0, %v2699
  %v2701 = vpop.f32.mrb[0].mxu0
  %v2702 = vadd.f32 0.0, %v2701
  %v2703 = vpop.f32.mrb[0].mxu0
  %v2704 = vadd.f32 0.0, %v2703
  %2705 = vmatprep.mubr.bf16.mxu0 0
  %2706 = vmatmul.mubr.bf16.gmra.mrb[0].mxu0 %v2554
  %v2707 = vpop.f32.mrb[0].mxu0
  %v2708 = vadd.f32 0.0, %v2707
  %v2709 = vpop.f32.mrb[0].mxu0
  %v2710 = vadd.f32 0.0, %v2709
  %v2711 = vpop.f32.mrb[0].mxu0
  %v2712 = vadd.f32 0.0, %v2711
  %v2713 = vpop.f32.mrb[0].mxu0
  %v2714 = vadd.f32 0.0, %v2713
  %2715 = vmatprep.mubr.bf16.mxu0 0
  %2716 = vmatmul.mubr.bf16.gmra.mrb[0].mxu0 %v2557
  %v2717 = vpop.f32.mrb[0].mxu0
  %v2718 = vadd.f32 0.0, %v2717
  %v2719 = vpop.f32.mrb[0].mxu0
  %v2720 = vadd.f32 0.0, %v2719
  %v2721 = vpop.f32.mrb[0].mxu0
  %v2722 = vadd.f32 0.0, %v2721
  %v2723 = vpop.f32.mrb[0].mxu0
  %v2724 = vadd.f32 0.0, %v2723
  %2725 = vmatprep.mubr.bf16.mxu0 0
  %2726 = vmatmul.mubr.bf16.gmra.mrb[0].mxu0 %v2560
  %v2727 = vpop.f32.mrb[0].mxu0
  %v2728 = vadd.f32 0.0, %v2727
  %v2729 = vpop.f32.mrb[0].mxu0
  %v2730 = vadd.f32 0.0, %v2729
  %v2731 = vpop.f32.mrb[0].mxu0
  %v2732 = vadd.f32 0.0, %v2731
  %v2733 = vpop.f32.mrb[0].mxu0
  %v2734 = vadd.f32 0.0, %v2733
  %2735 = vmatprep.mubr.bf16.mxu0 0
  %2736 = vmatmul.mubr.bf16.gmra.mrb[0].mxu0 %v2563
  %v2737 = vpop.f32.mrb[0].mxu0
  %v2738 = vadd.f32 0.0, %v2737
  %v2739 = vpop.f32.mrb[0].mxu0
  %v2740 = vadd.f32 0.0, %v2739
  %v2741 = vpop.f32.mrb[0].mxu0
  %v2742 = vadd.f32 0.0, %v2741
  %v2743 = vpop.f32.mrb[0].mxu0
  %v2744 = vadd.f32 0.0, %v2743
  %2745 = vmatprep.mubr.bf16.mxu0 0
  %2746 = vmatmul.mubr.bf16.gmra.mrb[0].mxu0 %v2566
  %v2747 = vpop.f32.mrb[0].mxu0
  %v2748 = vadd.f32 0.0, %v2747
  %v2749 = vpop.f32.mrb[0].mxu0
  %v2750 = vadd.f32 0.0, %v2749
  %v2751 = vpop.f32.mrb[0].mxu0
  %v2752 = vadd.f32 0.0, %v2751
  %v2753 = vpop.f32.mrb[0].mxu0
  %v2754 = vadd.f32 0.0, %v2753
  %2755 = vmatprep.mubr.bf16.mxu0 0
  %2756 = vmatmul.mubr.bf16.gmra.mrb[0].mxu0 %v2569
  %v2757 = vpop.f32.mrb[0].mxu0
  %v2758 = vadd.f32 0.0, %v2757
  %v2759 = vpop.f32.mrb[0].mxu0
  %v2760 = vadd.f32 0.0, %v2759
  %v2761 = vpop.f32.mrb[0].mxu0
  %v2762 = vadd.f32 0.0, %v2761
  %v2763 = vpop.f32.mrb[0].mxu0
  %v2764 = vadd.f32 0.0, %v2763
  %2765 = vmatprep.mubr.bf16.mxu0 0
  %2766 = vmatmul.mubr.bf16.gmra.mrb[0].mxu0 %v2572
  %v2767 = vpop.f32.mrb[0].mxu0
  %v2768 = vadd.f32 0.0, %v2767
  %v2769 = vpop.f32.mrb[0].mxu0
  %v2770 = vadd.f32 0.0, %v2769
  %v2771 = vpop.f32.mrb[0].mxu0
  %v2772 = vadd.f32 0.0, %v2771
  %v2773 = vpop.f32.mrb[0].mxu0
  %v2774 = vadd.f32 0.0, %v2773
  %2775 = vmatprep.mubr.bf16.mxu0 0
  %2776 = vmatmul.mubr.bf16.gmra.mrb[0].mxu0 %v2575
  %v2777 = vpop.f32.mrb[0].mxu0
  %v2778 = vadd.f32 0.0, %v2777
  %v2779 = vpop.f32.mrb[0].mxu0
  %v2780 = vadd.f32 0.0, %v2779
  %v2781 = vpop.f32.mrb[0].mxu0
  %v2782 = vadd.f32 0.0, %v2781
  %v2783 = vpop.f32.mrb[0].mxu0
  %v2784 = vadd.f32 0.0, %v2783
  %2785 = vmatprep.mubr.bf16.mxu0 0
  %2786 = vmatmul.mubr.bf16.gmra.mrb[0].mxu0 %v2578
  %v2787 = vpop.f32.mrb[0].mxu0
  %v2788 = vadd.f32 0.0, %v2787
  %v2789 = vpop.f32.mrb[0].mxu0
  %v2790 = vadd.f32 0.0, %v2789
  %v2791 = vpop.f32.mrb[0].mxu0
  %v2792 = vadd.f32 0.0, %v2791
  %v2793 = vpop.f32.mrb[0].mxu0
  %v2794 = vadd.f32 0.0, %v2793
  %2795 = vmatprep.mubr.bf16.mxu0 0
  %2796 = vmatmul.mubr.bf16.gmra.mrb[0].mxu0 %v2581
  %v2797 = vpop.f32.mrb[0].mxu0
  %v2798 = vadd.f32 0.0, %v2797
  %v2799 = vpop.f32.mrb[0].mxu0
  %v2800 = vadd.f32 0.0, %v2799
  %v2801 = vpop.f32.mrb[0].mxu0
  %v2802 = vadd.f32 0.0, %v2801
  %v2803 = vpop.f32.mrb[0].mxu0
  %v2804 = vadd.f32 0.0, %v2803
  %2805 = vmatprep.mubr.bf16.mxu0 0
  %2806 = vmatmul.mubr.bf16.gmra.mrb[0].mxu0 %v2584
  %v2807 = vpop.f32.mrb[0].mxu0
  %v2808 = vadd.f32 0.0, %v2807
  %v2809 = vpop.f32.mrb[0].mxu0
  %v2810 = vadd.f32 0.0, %v2809
  %v2811 = vpop.f32.mrb[0].mxu0
  %v2812 = vadd.f32 0.0, %v2811
  %v2813 = vpop.f32.mrb[0].mxu0
  %v2814 = vadd.f32 0.0, %v2813
  %2815 = vmatprep.mubr.bf16.mxu0 0
  %2816 = vmatmul.mubr.bf16.gmra.mrb[0].mxu0 %v2587
  %v2817 = vpop.f32.mrb[0].mxu0
  %v2818 = vadd.f32 0.0, %v2817
  %v2819 = vpop.f32.mrb[0].mxu0
  %v2820 = vadd.f32 0.0, %v2819
  %v2821 = vpop.f32.mrb[0].mxu0
  %v2822 = vadd.f32 0.0, %v2821
  %v2823 = vpop.f32.mrb[0].mxu0
  %v2824 = vadd.f32 0.0, %v2823
  %2825 = vmatprep.mubr.bf16.mxu0 0
  %2826 = vmatmul.mubr.bf16.gmra.mrb[0].mxu0 %v2590
  %v2827 = vpop.f32.mrb[0].mxu0
  %v2828 = vadd.f32 0.0, %v2827
  %v2829 = vpop.f32.mrb[0].mxu0
  %v2830 = vadd.f32 0.0, %v2829
  %v2831 = vpop.f32.mrb[0].mxu0
  %v2832 = vadd.f32 0.0, %v2831
  %v2833 = vpop.f32.mrb[0].mxu0
  %v2834 = vadd.f32 0.0, %v2833
  %2835 = vmatprep.mubr.bf16.mxu0 0
  %2836 = vmatmul.mubr.bf16.gmra.mrb[0].mxu0 %v2593
  %v2837 = vpop.f32.mrb[0].mxu0
  %v2838 = vadd.f32 0.0, %v2837
  %v2839 = vpop.f32.mrb[0].mxu0
  %v2840 = vadd.f32 0.0, %v2839
  %v2841 = vpop.f32.mrb[0].mxu0
  %v2842 = vadd.f32 0.0, %v2841
  %v2843 = vpop.f32.mrb[0].mxu0
  %v2844 = vadd.f32 0.0, %v2843
  %2845 = vmatprep.mubr.bf16.mxu0 0
  %2846 = vmatmul.mubr.bf16.gmra.mrb[0].mxu0 %v2596
  %v2847 = vpop.f32.mrb[0].mxu0
  %v2848 = vadd.f32 0.0, %v2847
  %v2849 = vpop.f32.mrb[0].mxu0
  %v2850 = vadd.f32 0.0, %v2849
  %v2851 = vpop.f32.mrb[0].mxu0
  %v2852 = vadd.f32 0.0, %v2851
  %v2853 = vpop.f32.mrb[0].mxu0
  %v2854 = vadd.f32 0.0, %v2853
  %2855 = vmatprep.mubr.bf16.mxu0 0
  %2856 = vmatmul.mubr.bf16.gmra.mrb[0].mxu0 %v2599
  %v2857 = vpop.f32.mrb[0].mxu0
  %v2858 = vadd.f32 0.0, %v2857
  %v2859 = vpop.f32.mrb[0].mxu0
  %v2860 = vadd.f32 0.0, %v2859
  %v2861 = vpop.f32.mrb[0].mxu0
  %v2862 = vadd.f32 0.0, %v2861
  %v2863 = vpop.f32.mrb[0].mxu0
  %v2864 = vadd.f32 0.0, %v2863
  %2865 = vmatprep.mubr.bf16.mxu0 0
  %2866 = vmatmul.mubr.bf16.gmra.mrb[0].mxu0 %v2602
  %v2867 = vpop.f32.mrb[0].mxu0
  %v2868 = vadd.f32 0.0, %v2867
  %v2869 = vpop.f32.mrb[0].mxu0
  %v2870 = vadd.f32 0.0, %v2869
  %v2871 = vpop.f32.mrb[0].mxu0
  %v2872 = vadd.f32 0.0, %v2871
  %v2873 = vpop.f32.mrb[0].mxu0
  %v2874 = vadd.f32 0.0, %v2873
  %2875 = vmatprep.mubr.bf16.mxu0 0
  %2876 = vmatmul.mubr.bf16.gmra.mrb[0].mxu0 %v2605
  %v2877 = vpop.f32.mrb[0].mxu0
  %v2878 = vadd.f32 0.0, %v2877
  %v2879 = vpop.f32.mrb[0].mxu0
  %v2880 = vadd.f32 0.0, %v2879
  %v2881 = vpop.f32.mrb[0].mxu0
  %v2882 = vadd.f32 0.0, %v2881
  %v2883 = vpop.f32.mrb[0].mxu0
  %v2884 = vadd.f32 0.0, %v2883
  %2885 = vdwg.mxu0
  %v2886 = vld [vmem:[#allocation2] sm:$0xff]
  %v2887 = vld [vmem:[#allocation2 + $0x8] sm:$0xff]
  %v2888 = vld [vmem:[#allocation2 + $0x10] sm:$0xff]
  %v2889 = vld [vmem:[#allocation2 + $0x18] sm:$0xff]
  %v2890 = vld [vmem:[#allocation2 + $0x20] sm:$0xff]
  %v2891 = vld [vmem:[#allocation2 + $0x28] sm:$0xff]
  %v2892 = vld [vmem:[#allocation2 + $0x30] sm:$0xff]
  %v2893 = vld [vmem:[#allocation2 + $0x38] sm:$0xff]
  %v2894 = vld [vmem:[#allocation2 + $0x40] sm:$0xff]
  %v2895 = vld [vmem:[#allocation2 + $0x48] sm:$0xff]
  %v2896 = vld [vmem:[#allocation2 + $0x50] sm:$0xff]
  %v2897 = vld [vmem:[#allocation2 + $0x58] sm:$0xff]
  %v2898 = vld [vmem:[#allocation2 + $0x60] sm:$0xff]
  %v2899 = vld [vmem:[#allocation2 + $0x68] sm:$0xff]
  %v2900 = vld [vmem:[#allocation2 + $0x70] sm:$0xff]
  %v2901 = vld [vmem:[#allocation2 + $0x78] sm:$0xff]
  %v2902 = vld [vmem:[#allocation2 + $0x80] sm:$0xff]
  %v2903 = vld [vmem:[#allocation2 + $0x88] sm:$0xff]
  %v2904 = vld [vmem:[#allocation2 + $0x90] sm:$0xff]
  %v2905 = vld [vmem:[#allocation2 + $0x98] sm:$0xff]
  %v2906 = vld [vmem:[#allocation2 + $0xa0] sm:$0xff]
  %v2907 = vld [vmem:[#allocation2 + $0xa8] sm:$0xff]
  %v2908 = vld [vmem:[#allocation2 + $0xb0] sm:$0xff]
  %v2909 = vld [vmem:[#allocation2 + $0xb8] sm:$0xff]
  %v2910 = vld [vmem:[#allocation2 + $0xc0] sm:$0xff]
  %v2911 = vld [vmem:[#allocation2 + $0xc8] sm:$0xff]
  %v2912 = vld [vmem:[#allocation2 + $0xd0] sm:$0xff]
  %v2913 = vld [vmem:[#allocation2 + $0xd8] sm:$0xff]
  %v2914 = vld [vmem:[#allocation2 + $0xe0] sm:$0xff]
  %v2915 = vld [vmem:[#allocation2 + $0xe8] sm:$0xff]
  %v2916 = vld [vmem:[#allocation2 + $0xf0] sm:$0xff]
  %v2917 = vld [vmem:[#allocation2 + $0xf8] sm:$0xff]
  %v2918 = vld [vmem:[#allocation2 + $0x100] sm:$0xff]
  %v2919 = vld [vmem:[#allocation2 + $0x108] sm:$0xff]
  %v2920 = vld [vmem:[#allocation2 + $0x110] sm:$0xff]
  %v2921 = vld [vmem:[#allocation2 + $0x118] sm:$0xff]
  %v2922 = vld [vmem:[#allocation2 + $0x120] sm:$0xff]
  %v2923 = vld [vmem:[#allocation2 + $0x128] sm:$0xff]
  %v2924 = vld [vmem:[#allocation2 + $0x130] sm:$0xff]
  %v2925 = vld [vmem:[#allocation2 + $0x138] sm:$0xff]
  %v2926 = vld [vmem:[#allocation2 + $0x140] sm:$0xff]
  %v2927 = vld [vmem:[#allocation2 + $0x148] sm:$0xff]
  %v2928 = vld [vmem:[#allocation2 + $0x150] sm:$0xff]
  %v2929 = vld [vmem:[#allocation2 + $0x158] sm:$0xff]
  %v2930 = vld [vmem:[#allocation2 + $0x160] sm:$0xff]
  %v2931 = vld [vmem:[#allocation2 + $0x168] sm:$0xff]
  %v2932 = vld [vmem:[#allocation2 + $0x170] sm:$0xff]
  %v2933 = vld [vmem:[#allocation2 + $0x178] sm:$0xff]
  %v2934 = vld [vmem:[#allocation2 + $0x180] sm:$0xff]
  %v2935 = vld [vmem:[#allocation2 + $0x188] sm:$0xff]
  %v2936 = vld [vmem:[#allocation2 + $0x190] sm:$0xff]
  %v2937 = vld [vmem:[#allocation2 + $0x198] sm:$0xff]
  %v2938 = vld [vmem:[#allocation2 + $0x1a0] sm:$0xff]
  %v2939 = vld [vmem:[#allocation2 + $0x1a8] sm:$0xff]
  %v2940 = vld [vmem:[#allocation2 + $0x1b0] sm:$0xff]
  %v2941 = vld [vmem:[#allocation2 + $0x1b8] sm:$0xff]
  %v2942 = vld [vmem:[#allocation2 + $0x1c0] sm:$0xff]
  %v2943 = vld [vmem:[#allocation2 + $0x1c8] sm:$0xff]
  %v2944 = vld [vmem:[#allocation2 + $0x1d0] sm:$0xff]
  %v2945 = vld [vmem:[#allocation2 + $0x1d8] sm:$0xff]
  %v2946 = vld [vmem:[#allocation2 + $0x1e0] sm:$0xff]
  %v2947 = vld [vmem:[#allocation2 + $0x1e8] sm:$0xff]
  %v2948 = vld [vmem:[#allocation2 + $0x1f0] sm:$0xff]
  %v2949 = vld [vmem:[#allocation2 + $0x1f8] sm:$0xff]
  %v2950 = vld [vmem:[#allocation2 + $0x200] sm:$0xff]
  %v2951 = vld [vmem:[#allocation2 + $0x208] sm:$0xff]
  %v2952 = vld [vmem:[#allocation2 + $0x210] sm:$0xff]
  %v2953 = vld [vmem:[#allocation2 + $0x218] sm:$0xff]
  %v2954 = vld [vmem:[#allocation2 + $0x220] sm:$0xff]
  %v2955 = vld [vmem:[#allocation2 + $0x228] sm:$0xff]
  %v2956 = vld [vmem:[#allocation2 + $0x230] sm:$0xff]
  %v2957 = vld [vmem:[#allocation2 + $0x238] sm:$0xff]
  %v2958 = vld [vmem:[#allocation2 + $0x240] sm:$0xff]
  %v2959 = vld [vmem:[#allocation2 + $0x248] sm:$0xff]
  %v2960 = vld [vmem:[#allocation2 + $0x250] sm:$0xff]
  %v2961 = vld [vmem:[#allocation2 + $0x258] sm:$0xff]
  %v2962 = vld [vmem:[#allocation2 + $0x260] sm:$0xff]
  %v2963 = vld [vmem:[#allocation2 + $0x268] sm:$0xff]
  %v2964 = vld [vmem:[#allocation2 + $0x270] sm:$0xff]
  %v2965 = vld [vmem:[#allocation2 + $0x278] sm:$0xff]
  %v2966 = vld [vmem:[#allocation2 + $0x280] sm:$0xff]
  %v2967 = vld [vmem:[#allocation2 + $0x288] sm:$0xff]
  %v2968 = vld [vmem:[#allocation2 + $0x290] sm:$0xff]
  %v2969 = vld [vmem:[#allocation2 + $0x298] sm:$0xff]
  %v2970 = vld [vmem:[#allocation2 + $0x2a0] sm:$0xff]
  %v2971 = vld [vmem:[#allocation2 + $0x2a8] sm:$0xff]
  %v2972 = vld [vmem:[#allocation2 + $0x2b0] sm:$0xff]
  %v2973 = vld [vmem:[#allocation2 + $0x2b8] sm:$0xff]
  %v2974 = vld [vmem:[#allocation2 + $0x2c0] sm:$0xff]
  %v2975 = vld [vmem:[#allocation2 + $0x2c8] sm:$0xff]
  %v2976 = vld [vmem:[#allocation2 + $0x2d0] sm:$0xff]
  %v2977 = vld [vmem:[#allocation2 + $0x2d8] sm:$0xff]
  %v2978 = vld [vmem:[#allocation2 + $0x2e0] sm:$0xff]
  %v2979 = vld [vmem:[#allocation2 + $0x2e8] sm:$0xff]
  %v2980 = vld [vmem:[#allocation2 + $0x2f0] sm:$0xff]
  %v2981 = vld [vmem:[#allocation2 + $0x2f8] sm:$0xff]
  %v2982 = vadd.f32 %v2886, %v2648
  %v2983 = vadd.f32 %v2887, %v2650
  %v2984 = vadd.f32 %v2888, %v2652
  %v2985 = vadd.f32 %v2889, %v2654
  %v2986 = vadd.f32 %v2890, %v2658
  %v2987 = vadd.f32 %v2891, %v2660
  %v2988 = vadd.f32 %v2892, %v2662
  %v2989 = vadd.f32 %v2893, %v2664
  %v2990 = vadd.f32 %v2894, %v2668
  %v2991 = vadd.f32 %v2895, %v2670
  %v2992 = vadd.f32 %v2896, %v2672
  %v2993 = vadd.f32 %v2897, %v2674
  %v2994 = vadd.f32 %v2898, %v2678
  %v2995 = vadd.f32 %v2899, %v2680
  %v2996 = vadd.f32 %v2900, %v2682
  %v2997 = vadd.f32 %v2901, %v2684
  %v2998 = vadd.f32 %v2902, %v2688
  %v2999 = vadd.f32 %v2903, %v2690
  %v3000 = vadd.f32 %v2904, %v2692
  %v3001 = vadd.f32 %v2905, %v2694
  %v3002 = vadd.f32 %v2906, %v2698
  %v3003 = vadd.f32 %v2907, %v2700
  %v3004 = vadd.f32 %v2908, %v2702
  %v3005 = vadd.f32 %v2909, %v2704
  %v3006 = vadd.f32 %v2910, %v2708
  %v3007 = vadd.f32 %v2911, %v2710
  %v3008 = vadd.f32 %v2912, %v2712
  %v3009 = vadd.f32 %v2913, %v2714
  %v3010 = vadd.f32 %v2914, %v2718
  %v3011 = vadd.f32 %v2915, %v2720
  %v3012 = vadd.f32 %v2916, %v2722
  %v3013 = vadd.f32 %v2917, %v2724
  %v3014 = vadd.f32 %v2918, %v2728
  %v3015 = vadd.f32 %v2919, %v2730
  %v3016 = vadd.f32 %v2920, %v2732
  %v3017 = vadd.f32 %v2921, %v2734
  %v3018 = vadd.f32 %v2922, %v2738
  %v3019 = vadd.f32 %v2923, %v2740
  %v3020 = vadd.f32 %v2924, %v2742
  %v3021 = vadd.f32 %v2925, %v2744
  %v3022 = vadd.f32 %v2926, %v2748
  %v3023 = vadd.f32 %v2927, %v2750
  %v3024 = vadd.f32 %v2928, %v2752
  %v3025 = vadd.f32 %v2929, %v2754
  %v3026 = vadd.f32 %v2930, %v2758
  %v3027 = vadd.f32 %v2931, %v2760
  %v3028 = vadd.f32 %v2932, %v2762
  %v3029 = vadd.f32 %v2933, %v2764
  %v3030 = vadd.f32 %v2934, %v2768
  %v3031 = vadd.f32 %v2935, %v2770
  %v3032 = vadd.f32 %v2936, %v2772
  %v3033 = vadd.f32 %v2937, %v2774
  %v3034 = vadd.f32 %v2938, %v2778
  %v3035 = vadd.f32 %v2939, %v2780
  %v3036 = vadd.f32 %v2940, %v2782
  %v3037 = vadd.f32 %v2941, %v2784
  %v3038 = vadd.f32 %v2942, %v2788
  %v3039 = vadd.f32 %v2943, %v2790
  %v3040 = vadd.f32 %v2944, %v2792
  %v3041 = vadd.f32 %v2945, %v2794
  %v3042 = vadd.f32 %v2946, %v2798
  %v3043 = vadd.f32 %v2947, %v2800
  %v3044 = vadd.f32 %v2948, %v2802
  %v3045 = vadd.f32 %v2949, %v2804
  %v3046 = vadd.f32 %v2950, %v2808
  %v3047 = vadd.f32 %v2951, %v2810
  %v3048 = vadd.f32 %v2952, %v2812
  %v3049 = vadd.f32 %v2953, %v2814
  %v3050 = vadd.f32 %v2954, %v2818
  %v3051 = vadd.f32 %v2955, %v2820
  %v3052 = vadd.f32 %v2956, %v2822
  %v3053 = vadd.f32 %v2957, %v2824
  %v3054 = vadd.f32 %v2958, %v2828
  %v3055 = vadd.f32 %v2959, %v2830
  %v3056 = vadd.f32 %v2960, %v2832
  %v3057 = vadd.f32 %v2961, %v2834
  %v3058 = vadd.f32 %v2962, %v2838
  %v3059 = vadd.f32 %v2963, %v2840
  %v3060 = vadd.f32 %v2964, %v2842
  %v3061 = vadd.f32 %v2965, %v2844
  %v3062 = vadd.f32 %v2966, %v2848
  %v3063 = vadd.f32 %v2967, %v2850
  %v3064 = vadd.f32 %v2968, %v2852
  %v3065 = vadd.f32 %v2969, %v2854
  %v3066 = vadd.f32 %v2970, %v2858
  %v3067 = vadd.f32 %v2971, %v2860
  %v3068 = vadd.f32 %v2972, %v2862
  %v3069 = vadd.f32 %v2973, %v2864
  %v3070 = vadd.f32 %v2974, %v2868
  %v3071 = vadd.f32 %v2975, %v2870
  %v3072 = vadd.f32 %v2976, %v2872
  %v3073 = vadd.f32 %v2977, %v2874
  %v3074 = vadd.f32 %v2978, %v2878
  %v3075 = vadd.f32 %v2979, %v2880
  %v3076 = vadd.f32 %v2980, %v2882
  %v3077 = vadd.f32 %v2981, %v2884
  %3078 = vst [vmem:[#allocation2] sm:$0xff] %v2982
  %3079 = vst [vmem:[#allocation2 + $0x8] sm:$0xff] %v2983
  %3080 = vst [vmem:[#allocation2 + $0x10] sm:$0xff] %v2984
  %3081 = vst [vmem:[#allocation2 + $0x18] sm:$0xff] %v2985
  %3082 = vst [vmem:[#allocation2 + $0x20] sm:$0xff] %v2986
  %3083 = vst [vmem:[#allocation2 + $0x28] sm:$0xff] %v2987
  %3084 = vst [vmem:[#allocation2 + $0x30] sm:$0xff] %v2988
  %3085 = vst [vmem:[#allocation2 + $0x38] sm:$0xff] %v2989
  %3086 = vst [vmem:[#allocation2 + $0x40] sm:$0xff] %v2990
  %3087 = vst [vmem:[#allocation2 + $0x48] sm:$0xff] %v2991
  %3088 = vst [vmem:[#allocation2 + $0x50] sm:$0xff] %v2992
  %3089 = vst [vmem:[#allocation2 + $0x58] sm:$0xff] %v2993
  %3090 = vst [vmem:[#allocation2 + $0x60] sm:$0xff] %v2994
  %3091 = vst [vmem:[#allocation2 + $0x68] sm:$0xff] %v2995
  %3092 = vst [vmem:[#allocation2 + $0x70] sm:$0xff] %v2996
  %3093 = vst [vmem:[#allocation2 + $0x78] sm:$0xff] %v2997
  %3094 = vst [vmem:[#allocation2 + $0x80] sm:$0xff] %v2998
  %3095 = vst [vmem:[#allocation2 + $0x88] sm:$0xff] %v2999
  %3096 = vst [vmem:[#allocation2 + $0x90] sm:$0xff] %v3000
  %3097 = vst [vmem:[#allocation2 + $0x98] sm:$0xff] %v3001
  %3098 = vst [vmem:[#allocation2 + $0xa0] sm:$0xff] %v3002
  %3099 = vst [vmem:[#allocation2 + $0xa8] sm:$0xff] %v3003
  %3100 = vst [vmem:[#allocation2 + $0xb0] sm:$0xff] %v3004
  %3101 = vst [vmem:[#allocation2 + $0xb8] sm:$0xff] %v3005
  %3102 = vst [vmem:[#allocation2 + $0xc0] sm:$0xff] %v3006
  %3103 = vst [vmem:[#allocation2 + $0xc8] sm:$0xff] %v3007
  %3104 = vst [vmem:[#allocation2 + $0xd0] sm:$0xff] %v3008
  %3105 = vst [vmem:[#allocation2 + $0xd8] sm:$0xff] %v3009
  %3106 = vst [vmem:[#allocation2 + $0xe0] sm:$0xff] %v3010
  %3107 = vst [vmem:[#allocation2 + $0xe8] sm:$0xff] %v3011
  %3108 = vst [vmem:[#allocation2 + $0xf0] sm:$0xff] %v3012
  %3109 = vst [vmem:[#allocation2 + $0xf8] sm:$0xff] %v3013
  %3110 = vst [vmem:[#allocation2 + $0x100] sm:$0xff] %v3014
  %3111 = vst [vmem:[#allocation2 + $0x108] sm:$0xff] %v3015
  %3112 = vst [vmem:[#allocation2 + $0x110] sm:$0xff] %v3016
  %3113 = vst [vmem:[#allocation2 + $0x118] sm:$0xff] %v3017
  %3114 = vst [vmem:[#allocation2 + $0x120] sm:$0xff] %v3018
  %3115 = vst [vmem:[#allocation2 + $0x128] sm:$0xff] %v3019
  %3116 = vst [vmem:[#allocation2 + $0x130] sm:$0xff] %v3020
  %3117 = vst [vmem:[#allocation2 + $0x138] sm:$0xff] %v3021
  %3118 = vst [vmem:[#allocation2 + $0x140] sm:$0xff] %v3022
  %3119 = vst [vmem:[#allocation2 + $0x148] sm:$0xff] %v3023
  %3120 = vst [vmem:[#allocation2 + $0x150] sm:$0xff] %v3024
  %3121 = vst [vmem:[#allocation2 + $0x158] sm:$0xff] %v3025
  %3122 = vst [vmem:[#allocation2 + $0x160] sm:$0xff] %v3026
  %3123 = vst [vmem:[#allocation2 + $0x168] sm:$0xff] %v3027
  %3124 = vst [vmem:[#allocation2 + $0x170] sm:$0xff] %v3028
  %3125 = vst [vmem:[#allocation2 + $0x178] sm:$0xff] %v3029
  %3126 = vst [vmem:[#allocation2 + $0x180] sm:$0xff] %v3030
  %3127 = vst [vmem:[#allocation2 + $0x188] sm:$0xff] %v3031
  %3128 = vst [vmem:[#allocation2 + $0x190] sm:$0xff] %v3032
  %3129 = vst [vmem:[#allocation2 + $0x198] sm:$0xff] %v3033
  %3130 = vst [vmem:[#allocation2 + $0x1a0] sm:$0xff] %v3034
  %3131 = vst [vmem:[#allocation2 + $0x1a8] sm:$0xff] %v3035
  %3132 = vst [vmem:[#allocation2 + $0x1b0] sm:$0xff] %v3036
  %3133 = vst [vmem:[#allocation2 + $0x1b8] sm:$0xff] %v3037
  %3134 = vst [vmem:[#allocation2 + $0x1c0] sm:$0xff] %v3038
  %3135 = vst [vmem:[#allocation2 + $0x1c8] sm:$0xff] %v3039
  %3136 = vst [vmem:[#allocation2 + $0x1d0] sm:$0xff] %v3040
  %3137 = vst [vmem:[#allocation2 + $0x1d8] sm:$0xff] %v3041
  %3138 = vst [vmem:[#allocation2 + $0x1e0] sm:$0xff] %v3042
  %3139 = vst [vmem:[#allocation2 + $0x1e8] sm:$0xff] %v3043
  %3140 = vst [vmem:[#allocation2 + $0x1f0] sm:$0xff] %v3044
  %3141 = vst [vmem:[#allocation2 + $0x1f8] sm:$0xff] %v3045
  %3142 = vst [vmem:[#allocation2 + $0x200] sm:$0xff] %v3046
  %3143 = vst [vmem:[#allocation2 + $0x208] sm:$0xff] %v3047
  %3144 = vst [vmem:[#allocation2 + $0x210] sm:$0xff] %v3048
  %3145 = vst [vmem:[#allocation2 + $0x218] sm:$0xff] %v3049
  %3146 = vst [vmem:[#allocation2 + $0x220] sm:$0xff] %v3050
  %3147 = vst [vmem:[#allocation2 + $0x228] sm:$0xff] %v3051
  %3148 = vst [vmem:[#allocation2 + $0x230] sm:$0xff] %v3052
  %3149 = vst [vmem:[#allocation2 + $0x238] sm:$0xff] %v3053
  %3150 = vst [vmem:[#allocation2 + $0x240] sm:$0xff] %v3054
  %3151 = vst [vmem:[#allocation2 + $0x248] sm:$0xff] %v3055
  %3152 = vst [vmem:[#allocation2 + $0x250] sm:$0xff] %v3056
  %3153 = vst [vmem:[#allocation2 + $0x258] sm:$0xff] %v3057
  %3154 = vst [vmem:[#allocation2 + $0x260] sm:$0xff] %v3058
  %3155 = vst [vmem:[#allocation2 + $0x268] sm:$0xff] %v3059
  %3156 = vst [vmem:[#allocation2 + $0x270] sm:$0xff] %v3060
  %3157 = vst [vmem:[#allocation2 + $0x278] sm:$0xff] %v3061
  %3158 = vst [vmem:[#allocation2 + $0x280] sm:$0xff] %v3062
  %3159 = vst [vmem:[#allocation2 + $0x288] sm:$0xff] %v3063
  %3160 = vst [vmem:[#allocation2 + $0x290] sm:$0xff] %v3064
  %3161 = vst [vmem:[#allocation2 + $0x298] sm:$0xff] %v3065
  %3162 = vst [vmem:[#allocation2 + $0x2a0] sm:$0xff] %v3066
  %3163 = vst [vmem:[#allocation2 + $0x2a8] sm:$0xff] %v3067
  %3164 = vst [vmem:[#allocation2 + $0x2b0] sm:$0xff] %v3068
  %3165 = vst [vmem:[#allocation2 + $0x2b8] sm:$0xff] %v3069
  %3166 = vst [vmem:[#allocation2 + $0x2c0] sm:$0xff] %v3070
  %3167 = vst [vmem:[#allocation2 + $0x2c8] sm:$0xff] %v3071
  %3168 = vst [vmem:[#allocation2 + $0x2d0] sm:$0xff] %v3072
  %3169 = vst [vmem:[#allocation2 + $0x2d8] sm:$0xff] %v3073
  %3170 = vst [vmem:[#allocation2 + $0x2e0] sm:$0xff] %v3074
  %3171 = vst [vmem:[#allocation2 + $0x2e8] sm:$0xff] %v3075
  %3172 = vst [vmem:[#allocation2 + $0x2f0] sm:$0xff] %v3076
  %3173 = vst [vmem:[#allocation2 + $0x2f8] sm:$0xff] %v3077
  %v3174 = vld [vmem:[%s0 + $0x20] sm:$0xf]
  %v3175 = vld [vmem:[%s0 + $0x24] sm:$0xf]
  %v3176 = vld [vmem:[%s0 + $0x28] sm:$0xf]
  %v3177 = vld [vmem:[%s0 + $0x2c] sm:$0xf]
  %v3178 = vld [vmem:[%s0 + $0x30] sm:$0xf]
  %v3179 = vld [vmem:[%s0 + $0x34] sm:$0xf]
  %v3180 = vld [vmem:[%s0 + $0x38] sm:$0xf]
  %v3181 = vld [vmem:[%s0 + $0x3c] sm:$0xf]
  %v3182 = vld [vmem:[%s0 + $0x40] sm:$0xf]
  %v3183 = vld [vmem:[%s0 + $0x44] sm:$0xf]
  %v3184 = vld [vmem:[%s0 + $0x48] sm:$0xf]
  %v3185 = vld [vmem:[%s0 + $0x4c] sm:$0xf]
  %v3186 = vld [vmem:[%s0 + $0x50] sm:$0xf]
  %v3187 = vld [vmem:[%s0 + $0x54] sm:$0xf]
  %v3188 = vld [vmem:[%s0 + $0x58] sm:$0xf]
  %v3189 = vld [vmem:[%s0 + $0x5c] sm:$0xf]
  %v3190 = vld [vmem:[%s0 + $0x60] sm:$0xf]
  %v3191 = vld [vmem:[%s0 + $0x64] sm:$0xf]
  %v3192 = vld [vmem:[%s0 + $0x68] sm:$0xf]
  %v3193 = vld [vmem:[%s0 + $0x6c] sm:$0xf]
  %v3194 = vld [vmem:[%s0 + $0x70] sm:$0xf]
  %v3195 = vld [vmem:[%s0 + $0x74] sm:$0xf]
  %v3196 = vld [vmem:[%s0 + $0x78] sm:$0xf]
  %v3197 = vld [vmem:[%s0 + $0x7c] sm:$0xf]
  %v3198 = vld [vmem:[%s0 + $0x80] sm:$0xf]
  %v3199 = vld [vmem:[%s0 + $0x84] sm:$0xf]
  %v3200 = vld [vmem:[%s0 + $0x88] sm:$0xf]
  %v3201 = vld [vmem:[%s0 + $0x8c] sm:$0xf]
  %v3202 = vld [vmem:[%s0 + $0x90] sm:$0xf]
  %v3203 = vld [vmem:[%s0 + $0x94] sm:$0xf]
  %v3204 = vld [vmem:[%s0 + $0x98] sm:$0xf]
  %v3205 = vld [vmem:[%s0 + $0x9c] sm:$0xf]
  %v3206 = vld [vmem:[%s0 + $0xa0] sm:$0xf]
  %v3207 = vld [vmem:[%s0 + $0xa4] sm:$0xf]
  %v3208 = vld [vmem:[%s0 + $0xa8] sm:$0xf]
  %v3209 = vld [vmem:[%s0 + $0xac] sm:$0xf]
  %v3210 = vld [vmem:[%s0 + $0xb0] sm:$0xf]
  %v3211 = vld [vmem:[%s0 + $0xb4] sm:$0xf]
  %v3212 = vld [vmem:[%s0 + $0xb8] sm:$0xf]
  %v3213 = vld [vmem:[%s0 + $0xbc] sm:$0xf]
  %v3214 = vld [vmem:[%s0 + $0xc0] sm:$0xf]
  %v3215 = vld [vmem:[%s0 + $0xc4] sm:$0xf]
  %v3216 = vld [vmem:[%s0 + $0xc8] sm:$0xf]
  %v3217 = vld [vmem:[%s0 + $0xcc] sm:$0xf]
  %v3218 = vld [vmem:[%s0 + $0xd0] sm:$0xf]
  %v3219 = vld [vmem:[%s0 + $0xd4] sm:$0xf]
  %v3220 = vld [vmem:[%s0 + $0xd8] sm:$0xf]
  %v3221 = vld [vmem:[%s0 + $0xdc] sm:$0xf]
  %s3222 = scalar_lea.vmem %s1, 128
  %v3223 = vld [vmem:[%s3222] sm:$0xff]
  %v3224 = vld [vmem:[%s3222 + $0x8] sm:$0xff]
  %v3225 = vld [vmem:[%s3222 + $0x10] sm:$0xff]
  %v3226 = vld [vmem:[%s3222 + $0x18] sm:$0x33]
  %v3275 = vunpack.c.l.b16 %v3174
  %v3276 = vunpack.c.l.b16 %v3175
  %v3277 = vunpack.c.l.b16 %v3176
  %v3278 = vunpack.c.l.b16 %v3177
  %v3279 = vunpack.c.l.b16 %v3178
  %v3280 = vunpack.c.l.b16 %v3179
  %v3281 = vunpack.c.l.b16 %v3180
  %v3282 = vunpack.c.l.b16 %v3181
  %v3283 = vunpack.c.l.b16 %v3182
  %v3284 = vunpack.c.l.b16 %v3183
  %v3285 = vunpack.c.l.b16 %v3184
  %v3286 = vunpack.c.l.b16 %v3185
  %v3287 = vunpack.c.l.b16 %v3186
  %v3288 = vunpack.c.l.b16 %v3187
  %v3289 = vunpack.c.l.b16 %v3188
  %v3290 = vunpack.c.l.b16 %v3189
  %v3291 = vunpack.c.l.b16 %v3190
  %v3292 = vunpack.c.l.b16 %v3191
  %v3293 = vunpack.c.l.b16 %v3192
  %v3294 = vunpack.c.l.b16 %v3193
  %v3295 = vunpack.c.l.b16 %v3194
  %v3296 = vunpack.c.l.b16 %v3195
  %v3297 = vunpack.c.l.b16 %v3196
  %v3298 = vunpack.c.l.b16 %v3197
  %v3299 = vunpack.c.l.b16 %v3198
  %v3300 = vunpack.c.l.b16 %v3199
  %v3301 = vunpack.c.l.b16 %v3200
  %v3302 = vunpack.c.l.b16 %v3201
  %v3303 = vunpack.c.l.b16 %v3202
  %v3304 = vunpack.c.l.b16 %v3203
  %v3305 = vunpack.c.l.b16 %v3204
  %v3306 = vunpack.c.l.b16 %v3205
  %v3307 = vunpack.c.l.b16 %v3206
  %v3308 = vunpack.c.l.b16 %v3207
  %v3309 = vunpack.c.l.b16 %v3208
  %v3310 = vunpack.c.l.b16 %v3209
  %v3311 = vunpack.c.l.b16 %v3210
  %v3312 = vunpack.c.l.b16 %v3211
  %v3313 = vunpack.c.l.b16 %v3212
  %v3314 = vunpack.c.l.b16 %v3213
  %v3315 = vunpack.c.l.b16 %v3214
  %v3316 = vunpack.c.l.b16 %v3215
  %v3317 = vunpack.c.l.b16 %v3216
  %v3318 = vunpack.c.l.b16 %v3217
  %v3319 = vunpack.c.l.b16 %v3218
  %v3320 = vunpack.c.l.b16 %v3219
  %v3321 = vunpack.c.l.b16 %v3220
  %v3322 = vunpack.c.l.b16 %v3221
  %v3323 = vpack.c.b16 %v3276, %v3275
  %v3324 = vpack.c.b16 %v3278, %v3277
  %v3325 = vpack.c.b16 %v3280, %v3279
  %v3326 = vpack.c.b16 %v3282, %v3281
  %v3327 = vpack.c.b16 %v3284, %v3283
  %v3328 = vpack.c.b16 %v3286, %v3285
  %v3329 = vpack.c.b16 %v3288, %v3287
  %v3330 = vpack.c.b16 %v3290, %v3289
  %v3331 = vpack.c.b16 %v3292, %v3291
  %v3332 = vpack.c.b16 %v3294, %v3293
  %v3333 = vpack.c.b16 %v3296, %v3295
  %v3334 = vpack.c.b16 %v3298, %v3297
  %v3335 = vpack.c.b16 %v3300, %v3299
  %v3336 = vpack.c.b16 %v3302, %v3301
  %v3337 = vpack.c.b16 %v3304, %v3303
  %v3338 = vpack.c.b16 %v3306, %v3305
  %v3339 = vpack.c.b16 %v3308, %v3307
  %v3340 = vpack.c.b16 %v3310, %v3309
  %v3341 = vpack.c.b16 %v3312, %v3311
  %v3342 = vpack.c.b16 %v3314, %v3313
  %v3343 = vpack.c.b16 %v3316, %v3315
  %v3344 = vpack.c.b16 %v3318, %v3317
  %v3345 = vpack.c.b16 %v3320, %v3319
  %v3346 = vpack.c.b16 %v3322, %v3321
  %v3351 = vunpack.c.l.b16 %v3223
  %v3352 = vunpack.c.h.b16 %v3223
  %v3353 = vunpack.c.l.b16 %v3224
  %v3354 = vunpack.c.h.b16 %v3224
  %v3355 = vunpack.c.l.b16 %v3225
  %v3356 = vunpack.c.h.b16 %v3225
  %v3357 = vunpack.c.l.b16 %v3226
  %v3358 = vunpack.c.h.b16 %v3226
  %v3359 = vpack.c.b16 %v3353, %v3351
  %v3360 = vpack.c.b16 %v3354, %v3352
  %v3361 = vpack.c.b16 %v3357, %v3355
  %v3362 = vpack.c.b16 %v3358, %v3356
  %v3366 = vsel %vm235, %v3323, 0
  %v3369 = vsel %vm235, %v3324, 0
  %v3372 = vsel %vm235, %v3325, 0
  %v3375 = vsel %vm235, %v3326, 0
  %v3378 = vsel %vm235, %v3327, 0
  %v3381 = vsel %vm235, %v3328, 0
  %v3384 = vsel %vm235, %v3329, 0
  %v3387 = vsel %vm235, %v3330, 0
  %v3390 = vsel %vm235, %v3331, 0
  %v3393 = vsel %vm235, %v3332, 0
  %v3396 = vsel %vm235, %v3333, 0
  %v3399 = vsel %vm235, %v3334, 0
  %v3402 = vsel %vm235, %v3335, 0
  %v3405 = vsel %vm235, %v3336, 0
  %v3408 = vsel %vm235, %v3337, 0
  %v3411 = vsel %vm235, %v3338, 0
  %v3414 = vsel %vm235, %v3339, 0
  %v3417 = vsel %vm235, %v3340, 0
  %v3420 = vsel %vm235, %v3341, 0
  %v3423 = vsel %vm235, %v3342, 0
  %v3426 = vsel %vm235, %v3343, 0
  %v3429 = vsel %vm235, %v3344, 0
  %v3432 = vsel %vm235, %v3345, 0
  %v3435 = vsel %vm235, %v3346, 0
  %v3438 = vsel %vm308, %v3361, 0
  %v3441 = vsel %vm308, %v3362, 0
  %3443 = vmatprep.subr.bf16.mxu0 %v3360
  %3444 = vmatpush1.bf16.msra.mxu0 %v3359
  %3445 = vmatprep.subr.bf16.mxu0 %v3441
  %3446 = vmatpush1.bf16.msra.mxu0 %v3438
  %3447 = vmatprep.subr.bf16.mxu0 0
  %3448 = vmatpush1.bf16.msra.mxu0 0
  %3449 = vmatprep.subr.bf16.mxu0 0
  %3450 = vmatpush1.bf16.msra.mxu0 0
  %3451 = vmatprep.subr.bf16.mxu0 0
  %3452 = vmatpush1.bf16.msra.mxu0 0
  %3453 = vmatprep.subr.bf16.mxu0 0
  %3454 = vmatpush1.bf16.msra.mxu0 0
  %3455 = vmatprep.subr.bf16.mxu0 0
  %3456 = vmatpush1.bf16.msra.mxu0 0
  %3457 = vmatprep.subr.bf16.mxu0 0
  %3458 = vmatpush1.bf16.msra.mxu0 0
  %3459 = vmatprep.subr.bf16.mxu0 0
  %3460 = vmatpush1.bf16.msra.mxu0 0
  %3461 = vmatprep.subr.bf16.mxu0 0
  %3462 = vmatpush1.bf16.msra.mxu0 0
  %3463 = vmatprep.subr.bf16.mxu0 0
  %3464 = vmatpush1.bf16.msra.mxu0 0
  %3465 = vmatprep.subr.bf16.mxu0 0
  %3466 = vmatpush1.bf16.msra.mxu0 0
  %3467 = vmatprep.subr.bf16.mxu0 0
  %3468 = vmatpush1.bf16.msra.mxu0 0
  %3469 = vmatprep.subr.bf16.mxu0 0
  %3470 = vmatpush1.bf16.msra.mxu0 0
  %3471 = vmatprep.subr.bf16.mxu0 0
  %3472 = vmatpush1.bf16.msra.mxu0 0
  %3473 = vmatprep.subr.bf16.mxu0 0
  %3474 = vmatpush1.bf16.msra.mxu0 0
  %3475 = vmatprep.mubr.bf16.mxu0 0
  %3476 = vmatmul.mubr.bf16.gmra.mrb[0].mxu0 %v3366
  %v3477 = vpop.f32.mrb[0].mxu0
  %v3478 = vadd.f32 0.0, %v3477
  %v3479 = vpop.f32.mrb[0].mxu0
  %v3480 = vadd.f32 0.0, %v3479
  %v3481 = vpop.f32.mrb[0].mxu0
  %v3482 = vadd.f32 0.0, %v3481
  %v3483 = vpop.f32.mrb[0].mxu0
  %v3484 = vadd.f32 0.0, %v3483
  %3485 = vmatprep.mubr.bf16.mxu0 0
  %3486 = vmatmul.mubr.bf16.gmra.mrb[0].mxu0 %v3369
  %v3487 = vpop.f32.mrb[0].mxu0
  %v3488 = vadd.f32 0.0, %v3487
  %v3489 = vpop.f32.mrb[0].mxu0
  %v3490 = vadd.f32 0.0, %v3489
  %v3491 = vpop.f32.mrb[0].mxu0
  %v3492 = vadd.f32 0.0, %v3491
  %v3493 = vpop.f32.mrb[0].mxu0
  %v3494 = vadd.f32 0.0, %v3493
  %3495 = vmatprep.mubr.bf16.mxu0 0
  %3496 = vmatmul.mubr.bf16.gmra.mrb[0].mxu0 %v3372
  %v3497 = vpop.f32.mrb[0].mxu0
  %v3498 = vadd.f32 0.0, %v3497
  %v3499 = vpop.f32.mrb[0].mxu0
  %v3500 = vadd.f32 0.0, %v3499
  %v3501 = vpop.f32.mrb[0].mxu0
  %v3502 = vadd.f32 0.0, %v3501
  %v3503 = vpop.f32.mrb[0].mxu0
  %v3504 = vadd.f32 0.0, %v3503
  %3505 = vmatprep.mubr.bf16.mxu0 0
  %3506 = vmatmul.mubr.bf16.gmra.mrb[0].mxu0 %v3375
  %v3507 = vpop.f32.mrb[0].mxu0
  %v3508 = vadd.f32 0.0, %v3507
  %v3509 = vpop.f32.mrb[0].mxu0
  %v3510 = vadd.f32 0.0, %v3509
  %v3511 = vpop.f32.mrb[0].mxu0
  %v3512 = vadd.f32 0.0, %v3511
  %v3513 = vpop.f32.mrb[0].mxu0
  %v3514 = vadd.f32 0.0, %v3513
  %3515 = vmatprep.mubr.bf16.mxu0 0
  %3516 = vmatmul.mubr.bf16.gmra.mrb[0].mxu0 %v3378
  %v3517 = vpop.f32.mrb[0].mxu0
  %v3518 = vadd.f32 0.0, %v3517
  %v3519 = vpop.f32.mrb[0].mxu0
  %v3520 = vadd.f32 0.0, %v3519
  %v3521 = vpop.f32.mrb[0].mxu0
  %v3522 = vadd.f32 0.0, %v3521
  %v3523 = vpop.f32.mrb[0].mxu0
  %v3524 = vadd.f32 0.0, %v3523
  %3525 = vmatprep.mubr.bf16.mxu0 0
  %3526 = vmatmul.mubr.bf16.gmra.mrb[0].mxu0 %v3381
  %v3527 = vpop.f32.mrb[0].mxu0
  %v3528 = vadd.f32 0.0, %v3527
  %v3529 = vpop.f32.mrb[0].mxu0
  %v3530 = vadd.f32 0.0, %v3529
  %v3531 = vpop.f32.mrb[0].mxu0
  %v3532 = vadd.f32 0.0, %v3531
  %v3533 = vpop.f32.mrb[0].mxu0
  %v3534 = vadd.f32 0.0, %v3533
  %3535 = vmatprep.mubr.bf16.mxu0 0
  %3536 = vmatmul.mubr.bf16.gmra.mrb[0].mxu0 %v3384
  %v3537 = vpop.f32.mrb[0].mxu0
  %v3538 = vadd.f32 0.0, %v3537
  %v3539 = vpop.f32.mrb[0].mxu0
  %v3540 = vadd.f32 0.0, %v3539
  %v3541 = vpop.f32.mrb[0].mxu0
  %v3542 = vadd.f32 0.0, %v3541
  %v3543 = vpop.f32.mrb[0].mxu0
  %v3544 = vadd.f32 0.0, %v3543
  %3545 = vmatprep.mubr.bf16.mxu0 0
  %3546 = vmatmul.mubr.bf16.gmra.mrb[0].mxu0 %v3387
  %v3547 = vpop.f32.mrb[0].mxu0
  %v3548 = vadd.f32 0.0, %v3547
  %v3549 = vpop.f32.mrb[0].mxu0
  %v3550 = vadd.f32 0.0, %v3549
  %v3551 = vpop.f32.mrb[0].mxu0
  %v3552 = vadd.f32 0.0, %v3551
  %v3553 = vpop.f32.mrb[0].mxu0
  %v3554 = vadd.f32 0.0, %v3553
  %3555 = vmatprep.mubr.bf16.mxu0 0
  %3556 = vmatmul.mubr.bf16.gmra.mrb[0].mxu0 %v3390
  %v3557 = vpop.f32.mrb[0].mxu0
  %v3558 = vadd.f32 0.0, %v3557
  %v3559 = vpop.f32.mrb[0].mxu0
  %v3560 = vadd.f32 0.0, %v3559
  %v3561 = vpop.f32.mrb[0].mxu0
  %v3562 = vadd.f32 0.0, %v3561
  %v3563 = vpop.f32.mrb[0].mxu0
  %v3564 = vadd.f32 0.0, %v3563
  %3565 = vmatprep.mubr.bf16.mxu0 0
  %3566 = vmatmul.mubr.bf16.gmra.mrb[0].mxu0 %v3393
  %v3567 = vpop.f32.mrb[0].mxu0
  %v3568 = vadd.f32 0.0, %v3567
  %v3569 = vpop.f32.mrb[0].mxu0
  %v3570 = vadd.f32 0.0, %v3569
  %v3571 = vpop.f32.mrb[0].mxu0
  %v3572 = vadd.f32 0.0, %v3571
  %v3573 = vpop.f32.mrb[0].mxu0
  %v3574 = vadd.f32 0.0, %v3573
  %3575 = vmatprep.mubr.bf16.mxu0 0
  %3576 = vmatmul.mubr.bf16.gmra.mrb[0].mxu0 %v3396
  %v3577 = vpop.f32.mrb[0].mxu0
  %v3578 = vadd.f32 0.0, %v3577
  %v3579 = vpop.f32.mrb[0].mxu0
  %v3580 = vadd.f32 0.0, %v3579
  %v3581 = vpop.f32.mrb[0].mxu0
  %v3582 = vadd.f32 0.0, %v3581
  %v3583 = vpop.f32.mrb[0].mxu0
  %v3584 = vadd.f32 0.0, %v3583
  %3585 = vmatprep.mubr.bf16.mxu0 0
  %3586 = vmatmul.mubr.bf16.gmra.mrb[0].mxu0 %v3399
  %v3587 = vpop.f32.mrb[0].mxu0
  %v3588 = vadd.f32 0.0, %v3587
  %v3589 = vpop.f32.mrb[0].mxu0
  %v3590 = vadd.f32 0.0, %v3589
  %v3591 = vpop.f32.mrb[0].mxu0
  %v3592 = vadd.f32 0.0, %v3591
  %v3593 = vpop.f32.mrb[0].mxu0
  %v3594 = vadd.f32 0.0, %v3593
  %3595 = vmatprep.mubr.bf16.mxu0 0
  %3596 = vmatmul.mubr.bf16.gmra.mrb[0].mxu0 %v3402
  %v3597 = vpop.f32.mrb[0].mxu0
  %v3598 = vadd.f32 0.0, %v3597
  %v3599 = vpop.f32.mrb[0].mxu0
  %v3600 = vadd.f32 0.0, %v3599
  %v3601 = vpop.f32.mrb[0].mxu0
  %v3602 = vadd.f32 0.0, %v3601
  %v3603 = vpop.f32.mrb[0].mxu0
  %v3604 = vadd.f32 0.0, %v3603
  %3605 = vmatprep.mubr.bf16.mxu0 0
  %3606 = vmatmul.mubr.bf16.gmra.mrb[0].mxu0 %v3405
  %v3607 = vpop.f32.mrb[0].mxu0
  %v3608 = vadd.f32 0.0, %v3607
  %v3609 = vpop.f32.mrb[0].mxu0
  %v3610 = vadd.f32 0.0, %v3609
  %v3611 = vpop.f32.mrb[0].mxu0
  %v3612 = vadd.f32 0.0, %v3611
  %v3613 = vpop.f32.mrb[0].mxu0
  %v3614 = vadd.f32 0.0, %v3613
  %3615 = vmatprep.mubr.bf16.mxu0 0
  %3616 = vmatmul.mubr.bf16.gmra.mrb[0].mxu0 %v3408
  %v3617 = vpop.f32.mrb[0].mxu0
  %v3618 = vadd.f32 0.0, %v3617
  %v3619 = vpop.f32.mrb[0].mxu0
  %v3620 = vadd.f32 0.0, %v3619
  %v3621 = vpop.f32.mrb[0].mxu0
  %v3622 = vadd.f32 0.0, %v3621
  %v3623 = vpop.f32.mrb[0].mxu0
  %v3624 = vadd.f32 0.0, %v3623
  %3625 = vmatprep.mubr.bf16.mxu0 0
  %3626 = vmatmul.mubr.bf16.gmra.mrb[0].mxu0 %v3411
  %v3627 = vpop.f32.mrb[0].mxu0
  %v3628 = vadd.f32 0.0, %v3627
  %v3629 = vpop.f32.mrb[0].mxu0
  %v3630 = vadd.f32 0.0, %v3629
  %v3631 = vpop.f32.mrb[0].mxu0
  %v3632 = vadd.f32 0.0, %v3631
  %v3633 = vpop.f32.mrb[0].mxu0
  %v3634 = vadd.f32 0.0, %v3633
  %3635 = vmatprep.mubr.bf16.mxu0 0
  %3636 = vmatmul.mubr.bf16.gmra.mrb[0].mxu0 %v3414
  %v3637 = vpop.f32.mrb[0].mxu0
  %v3638 = vadd.f32 0.0, %v3637
  %v3639 = vpop.f32.mrb[0].mxu0
  %v3640 = vadd.f32 0.0, %v3639
  %v3641 = vpop.f32.mrb[0].mxu0
  %v3642 = vadd.f32 0.0, %v3641
  %v3643 = vpop.f32.mrb[0].mxu0
  %v3644 = vadd.f32 0.0, %v3643
  %3645 = vmatprep.mubr.bf16.mxu0 0
  %3646 = vmatmul.mubr.bf16.gmra.mrb[0].mxu0 %v3417
  %v3647 = vpop.f32.mrb[0].mxu0
  %v3648 = vadd.f32 0.0, %v3647
  %v3649 = vpop.f32.mrb[0].mxu0
  %v3650 = vadd.f32 0.0, %v3649
  %v3651 = vpop.f32.mrb[0].mxu0
  %v3652 = vadd.f32 0.0, %v3651
  %v3653 = vpop.f32.mrb[0].mxu0
  %v3654 = vadd.f32 0.0, %v3653
  %3655 = vmatprep.mubr.bf16.mxu0 0
  %3656 = vmatmul.mubr.bf16.gmra.mrb[0].mxu0 %v3420
  %v3657 = vpop.f32.mrb[0].mxu0
  %v3658 = vadd.f32 0.0, %v3657
  %v3659 = vpop.f32.mrb[0].mxu0
  %v3660 = vadd.f32 0.0, %v3659
  %v3661 = vpop.f32.mrb[0].mxu0
  %v3662 = vadd.f32 0.0, %v3661
  %v3663 = vpop.f32.mrb[0].mxu0
  %v3664 = vadd.f32 0.0, %v3663
  %3665 = vmatprep.mubr.bf16.mxu0 0
  %3666 = vmatmul.mubr.bf16.gmra.mrb[0].mxu0 %v3423
  %v3667 = vpop.f32.mrb[0].mxu0
  %v3668 = vadd.f32 0.0, %v3667
  %v3669 = vpop.f32.mrb[0].mxu0
  %v3670 = vadd.f32 0.0, %v3669
  %v3671 = vpop.f32.mrb[0].mxu0
  %v3672 = vadd.f32 0.0, %v3671
  %v3673 = vpop.f32.mrb[0].mxu0
  %v3674 = vadd.f32 0.0, %v3673
  %3675 = vmatprep.mubr.bf16.mxu0 0
  %3676 = vmatmul.mubr.bf16.gmra.mrb[0].mxu0 %v3426
  %v3677 = vpop.f32.mrb[0].mxu0
  %v3678 = vadd.f32 0.0, %v3677
  %v3679 = vpop.f32.mrb[0].mxu0
  %v3680 = vadd.f32 0.0, %v3679
  %v3681 = vpop.f32.mrb[0].mxu0
  %v3682 = vadd.f32 0.0, %v3681
  %v3683 = vpop.f32.mrb[0].mxu0
  %v3684 = vadd.f32 0.0, %v3683
  %3685 = vmatprep.mubr.bf16.mxu0 0
  %3686 = vmatmul.mubr.bf16.gmra.mrb[0].mxu0 %v3429
  %v3687 = vpop.f32.mrb[0].mxu0
  %v3688 = vadd.f32 0.0, %v3687
  %v3689 = vpop.f32.mrb[0].mxu0
  %v3690 = vadd.f32 0.0, %v3689
  %v3691 = vpop.f32.mrb[0].mxu0
  %v3692 = vadd.f32 0.0, %v3691
  %v3693 = vpop.f32.mrb[0].mxu0
  %v3694 = vadd.f32 0.0, %v3693
  %3695 = vmatprep.mubr.bf16.mxu0 0
  %3696 = vmatmul.mubr.bf16.gmra.mrb[0].mxu0 %v3432
  %v3697 = vpop.f32.mrb[0].mxu0
  %v3698 = vadd.f32 0.0, %v3697
  %v3699 = vpop.f32.mrb[0].mxu0
  %v3700 = vadd.f32 0.0, %v3699
  %v3701 = vpop.f32.mrb[0].mxu0
  %v3702 = vadd.f32 0.0, %v3701
  %v3703 = vpop.f32.mrb[0].mxu0
  %v3704 = vadd.f32 0.0, %v3703
  %3705 = vmatprep.mubr.bf16.mxu0 0
  %3706 = vmatmul.mubr.bf16.gmra.mrb[0].mxu0 %v3435
  %v3707 = vpop.f32.mrb[0].mxu0
  %v3708 = vadd.f32 0.0, %v3707
  %v3709 = vpop.f32.mrb[0].mxu0
  %v3710 = vadd.f32 0.0, %v3709
  %v3711 = vpop.f32.mrb[0].mxu0
  %v3712 = vadd.f32 0.0, %v3711
  %v3713 = vpop.f32.mrb[0].mxu0
  %v3714 = vadd.f32 0.0, %v3713
  %3715 = vdwg.mxu0
  %v3716 = vld [vmem:[#allocation2] sm:$0xff]
  %v3717 = vld [vmem:[#allocation2 + $0x8] sm:$0xff]
  %v3718 = vld [vmem:[#allocation2 + $0x10] sm:$0xff]
  %v3719 = vld [vmem:[#allocation2 + $0x18] sm:$0xff]
  %v3720 = vld [vmem:[#allocation2 + $0x20] sm:$0xff]
  %v3721 = vld [vmem:[#allocation2 + $0x28] sm:$0xff]
  %v3722 = vld [vmem:[#allocation2 + $0x30] sm:$0xff]
  %v3723 = vld [vmem:[#allocation2 + $0x38] sm:$0xff]
  %v3724 = vld [vmem:[#allocation2 + $0x40] sm:$0xff]
  %v3725 = vld [vmem:[#allocation2 + $0x48] sm:$0xff]
  %v3726 = vld [vmem:[#allocation2 + $0x50] sm:$0xff]
  %v3727 = vld [vmem:[#allocation2 + $0x58] sm:$0xff]
  %v3728 = vld [vmem:[#allocation2 + $0x60] sm:$0xff]
  %v3729 = vld [vmem:[#allocation2 + $0x68] sm:$0xff]
  %v3730 = vld [vmem:[#allocation2 + $0x70] sm:$0xff]
  %v3731 = vld [vmem:[#allocation2 + $0x78] sm:$0xff]
  %v3732 = vld [vmem:[#allocation2 + $0x80] sm:$0xff]
  %v3733 = vld [vmem:[#allocation2 + $0x88] sm:$0xff]
  %v3734 = vld [vmem:[#allocation2 + $0x90] sm:$0xff]
  %v3735 = vld [vmem:[#allocation2 + $0x98] sm:$0xff]
  %v3736 = vld [vmem:[#allocation2 + $0xa0] sm:$0xff]
  %v3737 = vld [vmem:[#allocation2 + $0xa8] sm:$0xff]
  %v3738 = vld [vmem:[#allocation2 + $0xb0] sm:$0xff]
  %v3739 = vld [vmem:[#allocation2 + $0xb8] sm:$0xff]
  %v3740 = vld [vmem:[#allocation2 + $0xc0] sm:$0xff]
  %v3741 = vld [vmem:[#allocation2 + $0xc8] sm:$0xff]
  %v3742 = vld [vmem:[#allocation2 + $0xd0] sm:$0xff]
  %v3743 = vld [vmem:[#allocation2 + $0xd8] sm:$0xff]
  %v3744 = vld [vmem:[#allocation2 + $0xe0] sm:$0xff]
  %v3745 = vld [vmem:[#allocation2 + $0xe8] sm:$0xff]
  %v3746 = vld [vmem:[#allocation2 + $0xf0] sm:$0xff]
  %v3747 = vld [vmem:[#allocation2 + $0xf8] sm:$0xff]
  %v3748 = vld [vmem:[#allocation2 + $0x100] sm:$0xff]
  %v3749 = vld [vmem:[#allocation2 + $0x108] sm:$0xff]
  %v3750 = vld [vmem:[#allocation2 + $0x110] sm:$0xff]
  %v3751 = vld [vmem:[#allocation2 + $0x118] sm:$0xff]
  %v3752 = vld [vmem:[#allocation2 + $0x120] sm:$0xff]
  %v3753 = vld [vmem:[#allocation2 + $0x128] sm:$0xff]
  %v3754 = vld [vmem:[#allocation2 + $0x130] sm:$0xff]
  %v3755 = vld [vmem:[#allocation2 + $0x138] sm:$0xff]
  %v3756 = vld [vmem:[#allocation2 + $0x140] sm:$0xff]
  %v3757 = vld [vmem:[#allocation2 + $0x148] sm:$0xff]
  %v3758 = vld [vmem:[#allocation2 + $0x150] sm:$0xff]
  %v3759 = vld [vmem:[#allocation2 + $0x158] sm:$0xff]
  %v3760 = vld [vmem:[#allocation2 + $0x160] sm:$0xff]
  %v3761 = vld [vmem:[#allocation2 + $0x168] sm:$0xff]
  %v3762 = vld [vmem:[#allocation2 + $0x170] sm:$0xff]
  %v3763 = vld [vmem:[#allocation2 + $0x178] sm:$0xff]
  %v3764 = vld [vmem:[#allocation2 + $0x180] sm:$0xff]
  %v3765 = vld [vmem:[#allocation2 + $0x188] sm:$0xff]
  %v3766 = vld [vmem:[#allocation2 + $0x190] sm:$0xff]
  %v3767 = vld [vmem:[#allocation2 + $0x198] sm:$0xff]
  %v3768 = vld [vmem:[#allocation2 + $0x1a0] sm:$0xff]
  %v3769 = vld [vmem:[#allocation2 + $0x1a8] sm:$0xff]
  %v3770 = vld [vmem:[#allocation2 + $0x1b0] sm:$0xff]
  %v3771 = vld [vmem:[#allocation2 + $0x1b8] sm:$0xff]
  %v3772 = vld [vmem:[#allocation2 + $0x1c0] sm:$0xff]
  %v3773 = vld [vmem:[#allocation2 + $0x1c8] sm:$0xff]
  %v3774 = vld [vmem:[#allocation2 + $0x1d0] sm:$0xff]
  %v3775 = vld [vmem:[#allocation2 + $0x1d8] sm:$0xff]
  %v3776 = vld [vmem:[#allocation2 + $0x1e0] sm:$0xff]
  %v3777 = vld [vmem:[#allocation2 + $0x1e8] sm:$0xff]
  %v3778 = vld [vmem:[#allocation2 + $0x1f0] sm:$0xff]
  %v3779 = vld [vmem:[#allocation2 + $0x1f8] sm:$0xff]
  %v3780 = vld [vmem:[#allocation2 + $0x200] sm:$0xff]
  %v3781 = vld [vmem:[#allocation2 + $0x208] sm:$0xff]
  %v3782 = vld [vmem:[#allocation2 + $0x210] sm:$0xff]
  %v3783 = vld [vmem:[#allocation2 + $0x218] sm:$0xff]
  %v3784 = vld [vmem:[#allocation2 + $0x220] sm:$0xff]
  %v3785 = vld [vmem:[#allocation2 + $0x228] sm:$0xff]
  %v3786 = vld [vmem:[#allocation2 + $0x230] sm:$0xff]
  %v3787 = vld [vmem:[#allocation2 + $0x238] sm:$0xff]
  %v3788 = vld [vmem:[#allocation2 + $0x240] sm:$0xff]
  %v3789 = vld [vmem:[#allocation2 + $0x248] sm:$0xff]
  %v3790 = vld [vmem:[#allocation2 + $0x250] sm:$0xff]
  %v3791 = vld [vmem:[#allocation2 + $0x258] sm:$0xff]
  %v3792 = vld [vmem:[#allocation2 + $0x260] sm:$0xff]
  %v3793 = vld [vmem:[#allocation2 + $0x268] sm:$0xff]
  %v3794 = vld [vmem:[#allocation2 + $0x270] sm:$0xff]
  %v3795 = vld [vmem:[#allocation2 + $0x278] sm:$0xff]
  %v3796 = vld [vmem:[#allocation2 + $0x280] sm:$0xff]
  %v3797 = vld [vmem:[#allocation2 + $0x288] sm:$0xff]
  %v3798 = vld [vmem:[#allocation2 + $0x290] sm:$0xff]
  %v3799 = vld [vmem:[#allocation2 + $0x298] sm:$0xff]
  %v3800 = vld [vmem:[#allocation2 + $0x2a0] sm:$0xff]
  %v3801 = vld [vmem:[#allocation2 + $0x2a8] sm:$0xff]
  %v3802 = vld [vmem:[#allocation2 + $0x2b0] sm:$0xff]
  %v3803 = vld [vmem:[#allocation2 + $0x2b8] sm:$0xff]
  %v3804 = vld [vmem:[#allocation2 + $0x2c0] sm:$0xff]
  %v3805 = vld [vmem:[#allocation2 + $0x2c8] sm:$0xff]
  %v3806 = vld [vmem:[#allocation2 + $0x2d0] sm:$0xff]
  %v3807 = vld [vmem:[#allocation2 + $0x2d8] sm:$0xff]
  %v3808 = vld [vmem:[#allocation2 + $0x2e0] sm:$0xff]
  %v3809 = vld [vmem:[#allocation2 + $0x2e8] sm:$0xff]
  %v3810 = vld [vmem:[#allocation2 + $0x2f0] sm:$0xff]
  %v3811 = vld [vmem:[#allocation2 + $0x2f8] sm:$0xff]
  %v3812 = vadd.f32 %v3716, %v3478
  %v3813 = vadd.f32 %v3717, %v3480
  %v3814 = vadd.f32 %v3718, %v3482
  %v3815 = vadd.f32 %v3719, %v3484
  %v3816 = vadd.f32 %v3720, %v3488
  %v3817 = vadd.f32 %v3721, %v3490
  %v3818 = vadd.f32 %v3722, %v3492
  %v3819 = vadd.f32 %v3723, %v3494
  %v3820 = vadd.f32 %v3724, %v3498
  %v3821 = vadd.f32 %v3725, %v3500
  %v3822 = vadd.f32 %v3726, %v3502
  %v3823 = vadd.f32 %v3727, %v3504
  %v3824 = vadd.f32 %v3728, %v3508
  %v3825 = vadd.f32 %v3729, %v3510
  %v3826 = vadd.f32 %v3730, %v3512
  %v3827 = vadd.f32 %v3731, %v3514
  %v3828 = vadd.f32 %v3732, %v3518
  %v3829 = vadd.f32 %v3733, %v3520
  %v3830 = vadd.f32 %v3734, %v3522
  %v3831 = vadd.f32 %v3735, %v3524
  %v3832 = vadd.f32 %v3736, %v3528
  %v3833 = vadd.f32 %v3737, %v3530
  %v3834 = vadd.f32 %v3738, %v3532
  %v3835 = vadd.f32 %v3739, %v3534
  %v3836 = vadd.f32 %v3740, %v3538
  %v3837 = vadd.f32 %v3741, %v3540
  %v3838 = vadd.f32 %v3742, %v3542
  %v3839 = vadd.f32 %v3743, %v3544
  %v3840 = vadd.f32 %v3744, %v3548
  %v3841 = vadd.f32 %v3745, %v3550
  %v3842 = vadd.f32 %v3746, %v3552
  %v3843 = vadd.f32 %v3747, %v3554
  %v3844 = vadd.f32 %v3748, %v3558
  %v3845 = vadd.f32 %v3749, %v3560
  %v3846 = vadd.f32 %v3750, %v3562
  %v3847 = vadd.f32 %v3751, %v3564
  %v3848 = vadd.f32 %v3752, %v3568
  %v3849 = vadd.f32 %v3753, %v3570
  %v3850 = vadd.f32 %v3754, %v3572
  %v3851 = vadd.f32 %v3755, %v3574
  %v3852 = vadd.f32 %v3756, %v3578
  %v3853 = vadd.f32 %v3757, %v3580
  %v3854 = vadd.f32 %v3758, %v3582
  %v3855 = vadd.f32 %v3759, %v3584
  %v3856 = vadd.f32 %v3760, %v3588
  %v3857 = vadd.f32 %v3761, %v3590
  %v3858 = vadd.f32 %v3762, %v3592
  %v3859 = vadd.f32 %v3763, %v3594
  %v3860 = vadd.f32 %v3764, %v3598
  %v3861 = vadd.f32 %v3765, %v3600
  %v3862 = vadd.f32 %v3766, %v3602
  %v3863 = vadd.f32 %v3767, %v3604
  %v3864 = vadd.f32 %v3768, %v3608
  %v3865 = vadd.f32 %v3769, %v3610
  %v3866 = vadd.f32 %v3770, %v3612
  %v3867 = vadd.f32 %v3771, %v3614
  %v3868 = vadd.f32 %v3772, %v3618
  %v3869 = vadd.f32 %v3773, %v3620
  %v3870 = vadd.f32 %v3774, %v3622
  %v3871 = vadd.f32 %v3775, %v3624
  %v3872 = vadd.f32 %v3776, %v3628
  %v3873 = vadd.f32 %v3777, %v3630
  %v3874 = vadd.f32 %v3778, %v3632
  %v3875 = vadd.f32 %v3779, %v3634
  %v3876 = vadd.f32 %v3780, %v3638
  %v3877 = vadd.f32 %v3781, %v3640
  %v3878 = vadd.f32 %v3782, %v3642
  %v3879 = vadd.f32 %v3783, %v3644
  %v3880 = vadd.f32 %v3784, %v3648
  %v3881 = vadd.f32 %v3785, %v3650
  %v3882 = vadd.f32 %v3786, %v3652
  %v3883 = vadd.f32 %v3787, %v3654
  %v3884 = vadd.f32 %v3788, %v3658
  %v3885 = vadd.f32 %v3789, %v3660
  %v3886 = vadd.f32 %v3790, %v3662
  %v3887 = vadd.f32 %v3791, %v3664
  %v3888 = vadd.f32 %v3792, %v3668
  %v3889 = vadd.f32 %v3793, %v3670
  %v3890 = vadd.f32 %v3794, %v3672
  %v3891 = vadd.f32 %v3795, %v3674
  %v3892 = vadd.f32 %v3796, %v3678
  %v3893 = vadd.f32 %v3797, %v3680
  %v3894 = vadd.f32 %v3798, %v3682
  %v3895 = vadd.f32 %v3799, %v3684
  %v3896 = vadd.f32 %v3800, %v3688
  %v3897 = vadd.f32 %v3801, %v3690
  %v3898 = vadd.f32 %v3802, %v3692
  %v3899 = vadd.f32 %v3803, %v3694
  %v3900 = vadd.f32 %v3804, %v3698
  %v3901 = vadd.f32 %v3805, %v3700
  %v3902 = vadd.f32 %v3806, %v3702
  %v3903 = vadd.f32 %v3807, %v3704
  %v3904 = vadd.f32 %v3808, %v3708
  %v3905 = vadd.f32 %v3809, %v3710
  %v3906 = vadd.f32 %v3810, %v3712
  %v3907 = vadd.f32 %v3811, %v3714
  %3908 = vst [vmem:[#allocation2] sm:$0xff] %v3812
  %3909 = vst [vmem:[#allocation2 + $0x8] sm:$0xff] %v3813
  %3910 = vst [vmem:[#allocation2 + $0x10] sm:$0xff] %v3814
  %3911 = vst [vmem:[#allocation2 + $0x18] sm:$0xff] %v3815
  %3912 = vst [vmem:[#allocation2 + $0x20] sm:$0xff] %v3816
  %3913 = vst [vmem:[#allocation2 + $0x28] sm:$0xff] %v3817
  %3914 = vst [vmem:[#allocation2 + $0x30] sm:$0xff] %v3818
  %3915 = vst [vmem:[#allocation2 + $0x38] sm:$0xff] %v3819
  %3916 = vst [vmem:[#allocation2 + $0x40] sm:$0xff] %v3820
  %3917 = vst [vmem:[#allocation2 + $0x48] sm:$0xff] %v3821
  %3918 = vst [vmem:[#allocation2 + $0x50] sm:$0xff] %v3822
  %3919 = vst [vmem:[#allocation2 + $0x58] sm:$0xff] %v3823
  %3920 = vst [vmem:[#allocation2 + $0x60] sm:$0xff] %v3824
  %3921 = vst [vmem:[#allocation2 + $0x68] sm:$0xff] %v3825
  %3922 = vst [vmem:[#allocation2 + $0x70] sm:$0xff] %v3826
  %3923 = vst [vmem:[#allocation2 + $0x78] sm:$0xff] %v3827
  %3924 = vst [vmem:[#allocation2 + $0x80] sm:$0xff] %v3828
  %3925 = vst [vmem:[#allocation2 + $0x88] sm:$0xff] %v3829
  %3926 = vst [vmem:[#allocation2 + $0x90] sm:$0xff] %v3830
  %3927 = vst [vmem:[#allocation2 + $0x98] sm:$0xff] %v3831
  %3928 = vst [vmem:[#allocation2 + $0xa0] sm:$0xff] %v3832
  %3929 = vst [vmem:[#allocation2 + $0xa8] sm:$0xff] %v3833
  %3930 = vst [vmem:[#allocation2 + $0xb0] sm:$0xff] %v3834
  %3931 = vst [vmem:[#allocation2 + $0xb8] sm:$0xff] %v3835
  %3932 = vst [vmem:[#allocation2 + $0xc0] sm:$0xff] %v3836
  %3933 = vst [vmem:[#allocation2 + $0xc8] sm:$0xff] %v3837
  %3934 = vst [vmem:[#allocation2 + $0xd0] sm:$0xff] %v3838
  %3935 = vst [vmem:[#allocation2 + $0xd8] sm:$0xff] %v3839
  %3936 = vst [vmem:[#allocation2 + $0xe0] sm:$0xff] %v3840
  %3937 = vst [vmem:[#allocation2 + $0xe8] sm:$0xff] %v3841
  %3938 = vst [vmem:[#allocation2 + $0xf0] sm:$0xff] %v3842
  %3939 = vst [vmem:[#allocation2 + $0xf8] sm:$0xff] %v3843
  %3940 = vst [vmem:[#allocation2 + $0x100] sm:$0xff] %v3844
  %3941 = vst [vmem:[#allocation2 + $0x108] sm:$0xff] %v3845
  %3942 = vst [vmem:[#allocation2 + $0x110] sm:$0xff] %v3846
  %3943 = vst [vmem:[#allocation2 + $0x118] sm:$0xff] %v3847
  %3944 = vst [vmem:[#allocation2 + $0x120] sm:$0xff] %v3848
  %3945 = vst [vmem:[#allocation2 + $0x128] sm:$0xff] %v3849
  %3946 = vst [vmem:[#allocation2 + $0x130] sm:$0xff] %v3850
  %3947 = vst [vmem:[#allocation2 + $0x138] sm:$0xff] %v3851
  %3948 = vst [vmem:[#allocation2 + $0x140] sm:$0xff] %v3852
  %3949 = vst [vmem:[#allocation2 + $0x148] sm:$0xff] %v3853
  %3950 = vst [vmem:[#allocation2 + $0x150] sm:$0xff] %v3854
  %3951 = vst [vmem:[#allocation2 + $0x158] sm:$0xff] %v3855
  %3952 = vst [vmem:[#allocation2 + $0x160] sm:$0xff] %v3856
  %3953 = vst [vmem:[#allocation2 + $0x168] sm:$0xff] %v3857
  %3954 = vst [vmem:[#allocation2 + $0x170] sm:$0xff] %v3858
  %3955 = vst [vmem:[#allocation2 + $0x178] sm:$0xff] %v3859
  %3956 = vst [vmem:[#allocation2 + $0x180] sm:$0xff] %v3860
  %3957 = vst [vmem:[#allocation2 + $0x188] sm:$0xff] %v3861
  %3958 = vst [vmem:[#allocation2 + $0x190] sm:$0xff] %v3862
  %3959 = vst [vmem:[#allocation2 + $0x198] sm:$0xff] %v3863
  %3960 = vst [vmem:[#allocation2 + $0x1a0] sm:$0xff] %v3864
  %3961 = vst [vmem:[#allocation2 + $0x1a8] sm:$0xff] %v3865
  %3962 = vst [vmem:[#allocation2 + $0x1b0] sm:$0xff] %v3866
  %3963 = vst [vmem:[#allocation2 + $0x1b8] sm:$0xff] %v3867
  %3964 = vst [vmem:[#allocation2 + $0x1c0] sm:$0xff] %v3868
  %3965 = vst [vmem:[#allocation2 + $0x1c8] sm:$0xff] %v3869
  %3966 = vst [vmem:[#allocation2 + $0x1d0] sm:$0xff] %v3870
  %3967 = vst [vmem:[#allocation2 + $0x1d8] sm:$0xff] %v3871
  %3968 = vst [vmem:[#allocation2 + $0x1e0] sm:$0xff] %v3872
  %3969 = vst [vmem:[#allocation2 + $0x1e8] sm:$0xff] %v3873
  %3970 = vst [vmem:[#allocation2 + $0x1f0] sm:$0xff] %v3874
  %3971 = vst [vmem:[#allocation2 + $0x1f8] sm:$0xff] %v3875
  %3972 = vst [vmem:[#allocation2 + $0x200] sm:$0xff] %v3876
  %3973 = vst [vmem:[#allocation2 + $0x208] sm:$0xff] %v3877
  %3974 = vst [vmem:[#allocation2 + $0x210] sm:$0xff] %v3878
  %3975 = vst [vmem:[#allocation2 + $0x218] sm:$0xff] %v3879
  %3976 = vst [vmem:[#allocation2 + $0x220] sm:$0xff] %v3880
  %3977 = vst [vmem:[#allocation2 + $0x228] sm:$0xff] %v3881
  %3978 = vst [vmem:[#allocation2 + $0x230] sm:$0xff] %v3882
  %3979 = vst [vmem:[#allocation2 + $0x238] sm:$0xff] %v3883
  %3980 = vst [vmem:[#allocation2 + $0x240] sm:$0xff] %v3884
  %3981 = vst [vmem:[#allocation2 + $0x248] sm:$0xff] %v3885
  %3982 = vst [vmem:[#allocation2 + $0x250] sm:$0xff] %v3886
  %3983 = vst [vmem:[#allocation2 + $0x258] sm:$0xff] %v3887
  %3984 = vst [vmem:[#allocation2 + $0x260] sm:$0xff] %v3888
  %3985 = vst [vmem:[#allocation2 + $0x268] sm:$0xff] %v3889
  %3986 = vst [vmem:[#allocation2 + $0x270] sm:$0xff] %v3890
  %3987 = vst [vmem:[#allocation2 + $0x278] sm:$0xff] %v3891
  %3988 = vst [vmem:[#allocation2 + $0x280] sm:$0xff] %v3892
  %3989 = vst [vmem:[#allocation2 + $0x288] sm:$0xff] %v3893
  %3990 = vst [vmem:[#allocation2 + $0x290] sm:$0xff] %v3894
  %3991 = vst [vmem:[#allocation2 + $0x298] sm:$0xff] %v3895
  %3992 = vst [vmem:[#allocation2 + $0x2a0] sm:$0xff] %v3896
  %3993 = vst [vmem:[#allocation2 + $0x2a8] sm:$0xff] %v3897
  %3994 = vst [vmem:[#allocation2 + $0x2b0] sm:$0xff] %v3898
  %3995 = vst [vmem:[#allocation2 + $0x2b8] sm:$0xff] %v3899
  %3996 = vst [vmem:[#allocation2 + $0x2c0] sm:$0xff] %v3900
  %3997 = vst [vmem:[#allocation2 + $0x2c8] sm:$0xff] %v3901
  %3998 = vst [vmem:[#allocation2 + $0x2d0] sm:$0xff] %v3902
  %3999 = vst [vmem:[#allocation2 + $0x2d8] sm:$0xff] %v3903
  %4000 = vst [vmem:[#allocation2 + $0x2e0] sm:$0xff] %v3904
  %4001 = vst [vmem:[#allocation2 + $0x2e8] sm:$0xff] %v3905
  %4002 = vst [vmem:[#allocation2 + $0x2f0] sm:$0xff] %v3906
  %4003 = vst [vmem:[#allocation2 + $0x2f8] sm:$0xff] %v3907
  %v4004 = vld [vmem:[#allocation2] sm:$0xff]
  %v4005 = vld [vmem:[#allocation2 + $0x8] sm:$0xff]
  %v4006 = vld [vmem:[#allocation2 + $0x10] sm:$0xff]
  %v4007 = vld [vmem:[#allocation2 + $0x18] sm:$0xff]
  %v4008 = vld [vmem:[#allocation2 + $0x20] sm:$0xff]
  %v4009 = vld [vmem:[#allocation2 + $0x28] sm:$0xff]
  %v4010 = vld [vmem:[#allocation2 + $0x30] sm:$0xff]
  %v4011 = vld [vmem:[#allocation2 + $0x38] sm:$0xff]
  %v4012 = vmax.f32 %v4004, %v4008
  %v4013 = vmax.f32 %v4005, %v4009
  %v4014 = vmax.f32 %v4006, %v4010
  %v4015 = vmax.f32 %v4007, %v4011
  %v4016 = vmax.f32 %v4012, %v4013
  %v4017 = vmax.f32 %v4014, %v4015
  %v4018 = vmax.f32 %v4016, 0.0
  %v4019 = vmax.f32 %v4017, 0.0
  %v4020 = vpack.c.bf16 %v4019, %v4018
  %4021 = vst [vmem:[#allocation3] sm:$0xff] %v4020
  %v4022 = vld [vmem:[#allocation2 + $0x40] sm:$0xff]
  %v4023 = vld [vmem:[#allocation2 + $0x48] sm:$0xff]
  %v4024 = vld [vmem:[#allocation2 + $0x50] sm:$0xff]
  %v4025 = vld [vmem:[#allocation2 + $0x58] sm:$0xff]
  %v4026 = vld [vmem:[#allocation2 + $0x60] sm:$0xff]
  %v4027 = vld [vmem:[#allocation2 + $0x68] sm:$0xff]
  %v4028 = vld [vmem:[#allocation2 + $0x70] sm:$0xff]
  %v4029 = vld [vmem:[#allocation2 + $0x78] sm:$0xff]
  %v4030 = vmax.f32 %v4022, %v4026
  %v4031 = vmax.f32 %v4023, %v4027
  %v4032 = vmax.f32 %v4024, %v4028
  %v4033 = vmax.f32 %v4025, %v4029
  %v4034 = vmax.f32 %v4030, %v4031
  %v4035 = vmax.f32 %v4032, %v4033
  %v4036 = vmax.f32 %v4034, 0.0
  %v4037 = vmax.f32 %v4035, 0.0
  %v4038 = vpack.c.bf16 %v4037, %v4036
  %4039 = vst [vmem:[#allocation3 + $0x8] sm:$0xff] %v4038
  %v4040 = vld [vmem:[#allocation2 + $0x80] sm:$0xff]
  %v4041 = vld [vmem:[#allocation2 + $0x88] sm:$0xff]
  %v4042 = vld [vmem:[#allocation2 + $0x90] sm:$0xff]
  %v4043 = vld [vmem:[#allocation2 + $0x98] sm:$0xff]
  %v4044 = vld [vmem:[#allocation2 + $0xa0] sm:$0xff]
  %v4045 = vld [vmem:[#allocation2 + $0xa8] sm:$0xff]
  %v4046 = vld [vmem:[#allocation2 + $0xb0] sm:$0xff]
  %v4047 = vld [vmem:[#allocation2 + $0xb8] sm:$0xff]
  %v4048 = vmax.f32 %v4040, %v4044
  %v4049 = vmax.f32 %v4041, %v4045
  %v4050 = vmax.f32 %v4042, %v4046
  %v4051 = vmax.f32 %v4043, %v4047
  %v4052 = vmax.f32 %v4048, %v4049
  %v4053 = vmax.f32 %v4050, %v4051
  %v4054 = vmax.f32 %v4052, 0.0
  %v4055 = vmax.f32 %v4053, 0.0
  %v4056 = vpack.c.bf16 %v4055, %v4054
  %4057 = vst [vmem:[#allocation3 + $0x10] sm:$0xff] %v4056
  %v4058 = vld [vmem:[#allocation2 + $0xc0] sm:$0xff]
  %v4059 = vld [vmem:[#allocation2 + $0xc8] sm:$0xff]
  %v4060 = vld [vmem:[#allocation2 + $0xd0] sm:$0xff]
  %v4061 = vld [vmem:[#allocation2 + $0xd8] sm:$0xff]
  %v4062 = vld [vmem:[#allocation2 + $0xe0] sm:$0xff]
  %v4063 = vld [vmem:[#allocation2 + $0xe8] sm:$0xff]
  %v4064 = vld [vmem:[#allocation2 + $0xf0] sm:$0xff]
  %v4065 = vld [vmem:[#allocation2 + $0xf8] sm:$0xff]
  %v4066 = vmax.f32 %v4058, %v4062
  %v4067 = vmax.f32 %v4059, %v4063
  %v4068 = vmax.f32 %v4060, %v4064
  %v4069 = vmax.f32 %v4061, %v4065
  %v4070 = vmax.f32 %v4066, %v4067
  %v4071 = vmax.f32 %v4068, %v4069
  %v4072 = vmax.f32 %v4070, 0.0
  %v4073 = vmax.f32 %v4071, 0.0
  %v4074 = vpack.c.bf16 %v4073, %v4072
  %4075 = vst [vmem:[#allocation3 + $0x18] sm:$0xff] %v4074
  %v4076 = vld [vmem:[#allocation2 + $0x100] sm:$0xff]
  %v4077 = vld [vmem:[#allocation2 + $0x108] sm:$0xff]
  %v4078 = vld [vmem:[#allocation2 + $0x110] sm:$0xff]
  %v4079 = vld [vmem:[#allocation2 + $0x118] sm:$0xff]
  %v4080 = vld [vmem:[#allocation2 + $0x120] sm:$0xff]
  %v4081 = vld [vmem:[#allocation2 + $0x128] sm:$0xff]
  %v4082 = vld [vmem:[#allocation2 + $0x130] sm:$0xff]
  %v4083 = vld [vmem:[#allocation2 + $0x138] sm:$0xff]
  %v4084 = vmax.f32 %v4076, %v4080
  %v4085 = vmax.f32 %v4077, %v4081
  %v4086 = vmax.f32 %v4078, %v4082
  %v4087 = vmax.f32 %v4079, %v4083
  %v4088 = vmax.f32 %v4084, %v4085
  %v4089 = vmax.f32 %v4086, %v4087
  %v4090 = vmax.f32 %v4088, 0.0
  %v4091 = vmax.f32 %v4089, 0.0
  %v4092 = vpack.c.bf16 %v4091, %v4090
  %4093 = vst [vmem:[#allocation3 + $0x20] sm:$0xff] %v4092
  %v4094 = vld [vmem:[#allocation2 + $0x140] sm:$0xff]
  %v4095 = vld [vmem:[#allocation2 + $0x148] sm:$0xff]
  %v4096 = vld [vmem:[#allocation2 + $0x150] sm:$0xff]
  %v4097 = vld [vmem:[#allocation2 + $0x158] sm:$0xff]
  %v4098 = vld [vmem:[#allocation2 + $0x160] sm:$0xff]
  %v4099 = vld [vmem:[#allocation2 + $0x168] sm:$0xff]
  %v4100 = vld [vmem:[#allocation2 + $0x170] sm:$0xff]
  %v4101 = vld [vmem:[#allocation2 + $0x178] sm:$0xff]
  %v4102 = vmax.f32 %v4094, %v4098
  %v4103 = vmax.f32 %v4095, %v4099
  %v4104 = vmax.f32 %v4096, %v4100
  %v4105 = vmax.f32 %v4097, %v4101
  %v4106 = vmax.f32 %v4102, %v4103
  %v4107 = vmax.f32 %v4104, %v4105
  %v4108 = vmax.f32 %v4106, 0.0
  %v4109 = vmax.f32 %v4107, 0.0
  %v4110 = vpack.c.bf16 %v4109, %v4108
  %4111 = vst [vmem:[#allocation3 + $0x28] sm:$0xff] %v4110
  %v4112 = vld [vmem:[#allocation2 + $0x180] sm:$0xff]
  %v4113 = vld [vmem:[#allocation2 + $0x188] sm:$0xff]
  %v4114 = vld [vmem:[#allocation2 + $0x190] sm:$0xff]
  %v4115 = vld [vmem:[#allocation2 + $0x198] sm:$0xff]
  %v4116 = vld [vmem:[#allocation2 + $0x1a0] sm:$0xff]
  %v4117 = vld [vmem:[#allocation2 + $0x1a8] sm:$0xff]
  %v4118 = vld [vmem:[#allocation2 + $0x1b0] sm:$0xff]
  %v4119 = vld [vmem:[#allocation2 + $0x1b8] sm:$0xff]
  %v4120 = vmax.f32 %v4112, %v4116
  %v4121 = vmax.f32 %v4113, %v4117
  %v4122 = vmax.f32 %v4114, %v4118
  %v4123 = vmax.f32 %v4115, %v4119
  %v4124 = vmax.f32 %v4120, %v4121
  %v4125 = vmax.f32 %v4122, %v4123
  %v4126 = vmax.f32 %v4124, 0.0
  %v4127 = vmax.f32 %v4125, 0.0
  %v4128 = vpack.c.bf16 %v4127, %v4126
  %4129 = vst [vmem:[#allocation3 + $0x30] sm:$0xff] %v4128
  %v4130 = vld [vmem:[#allocation2 + $0x1c0] sm:$0xff]
  %v4131 = vld [vmem:[#allocation2 + $0x1c8] sm:$0xff]
  %v4132 = vld [vmem:[#allocation2 + $0x1d0] sm:$0xff]
  %v4133 = vld [vmem:[#allocation2 + $0x1d8] sm:$0xff]
  %v4134 = vld [vmem:[#allocation2 + $0x1e0] sm:$0xff]
  %v4135 = vld [vmem:[#allocation2 + $0x1e8] sm:$0xff]
  %v4136 = vld [vmem:[#allocation2 + $0x1f0] sm:$0xff]
  %v4137 = vld [vmem:[#allocation2 + $0x1f8] sm:$0xff]
  %v4138 = vmax.f32 %v4130, %v4134
  %v4139 = vmax.f32 %v4131, %v4135
  %v4140 = vmax.f32 %v4132, %v4136
  %v4141 = vmax.f32 %v4133, %v4137
  %v4142 = vmax.f32 %v4138, %v4139
  %v4143 = vmax.f32 %v4140, %v4141
  %v4144 = vmax.f32 %v4142, 0.0
  %v4145 = vmax.f32 %v4143, 0.0
  %v4146 = vpack.c.bf16 %v4145, %v4144
  %4147 = vst [vmem:[#allocation3 + $0x38] sm:$0xff] %v4146
  %v4148 = vld [vmem:[#allocation2 + $0x200] sm:$0xff]
  %v4149 = vld [vmem:[#allocation2 + $0x208] sm:$0xff]
  %v4150 = vld [vmem:[#allocation2 + $0x210] sm:$0xff]
  %v4151 = vld [vmem:[#allocation2 + $0x218] sm:$0xff]
  %v4152 = vld [vmem:[#allocation2 + $0x220] sm:$0xff]
  %v4153 = vld [vmem:[#allocation2 + $0x228] sm:$0xff]
  %v4154 = vld [vmem:[#allocation2 + $0x230] sm:$0xff]
  %v4155 = vld [vmem:[#allocation2 + $0x238] sm:$0xff]
  %v4156 = vmax.f32 %v4148, %v4152
  %v4157 = vmax.f32 %v4149, %v4153
  %v4158 = vmax.f32 %v4150, %v4154
  %v4159 = vmax.f32 %v4151, %v4155
  %v4160 = vmax.f32 %v4156, %v4157
  %v4161 = vmax.f32 %v4158, %v4159
  %v4162 = vmax.f32 %v4160, 0.0
  %v4163 = vmax.f32 %v4161, 0.0
  %v4164 = vpack.c.bf16 %v4163, %v4162
  %4165 = vst [vmem:[#allocation3 + $0x40] sm:$0xff] %v4164
  %v4166 = vld [vmem:[#allocation2 + $0x240] sm:$0xff]
  %v4167 = vld [vmem:[#allocation2 + $0x248] sm:$0xff]
  %v4168 = vld [vmem:[#allocation2 + $0x250] sm:$0xff]
  %v4169 = vld [vmem:[#allocation2 + $0x258] sm:$0xff]
  %v4170 = vld [vmem:[#allocation2 + $0x260] sm:$0xff]
  %v4171 = vld [vmem:[#allocation2 + $0x268] sm:$0xff]
  %v4172 = vld [vmem:[#allocation2 + $0x270] sm:$0xff]
  %v4173 = vld [vmem:[#allocation2 + $0x278] sm:$0xff]
  %v4174 = vmax.f32 %v4166, %v4170
  %v4175 = vmax.f32 %v4167, %v4171
  %v4176 = vmax.f32 %v4168, %v4172
  %v4177 = vmax.f32 %v4169, %v4173
  %v4178 = vmax.f32 %v4174, %v4175
  %v4179 = vmax.f32 %v4176, %v4177
  %v4180 = vmax.f32 %v4178, 0.0
  %v4181 = vmax.f32 %v4179, 0.0
  %v4182 = vpack.c.bf16 %v4181, %v4180
  %4183 = vst [vmem:[#allocation3 + $0x48] sm:$0xff] %v4182
  %v4184 = vld [vmem:[#allocation2 + $0x280] sm:$0xff]
  %v4185 = vld [vmem:[#allocation2 + $0x288] sm:$0xff]
  %v4186 = vld [vmem:[#allocation2 + $0x290] sm:$0xff]
  %v4187 = vld [vmem:[#allocation2 + $0x298] sm:$0xff]
  %v4188 = vld [vmem:[#allocation2 + $0x2a0] sm:$0xff]
  %v4189 = vld [vmem:[#allocation2 + $0x2a8] sm:$0xff]
  %v4190 = vld [vmem:[#allocation2 + $0x2b0] sm:$0xff]
  %v4191 = vld [vmem:[#allocation2 + $0x2b8] sm:$0xff]
  %v4192 = vmax.f32 %v4184, %v4188
  %v4193 = vmax.f32 %v4185, %v4189
  %v4194 = vmax.f32 %v4186, %v4190
  %v4195 = vmax.f32 %v4187, %v4191
  %v4196 = vmax.f32 %v4192, %v4193
  %v4197 = vmax.f32 %v4194, %v4195
  %v4198 = vmax.f32 %v4196, 0.0
  %v4199 = vmax.f32 %v4197, 0.0
  %v4200 = vpack.c.bf16 %v4199, %v4198
  %4201 = vst [vmem:[#allocation3 + $0x50] sm:$0xff] %v4200
  %v4202 = vld [vmem:[#allocation2 + $0x2c0] sm:$0xff]
  %v4203 = vld [vmem:[#allocation2 + $0x2c8] sm:$0xff]
  %v4204 = vld [vmem:[#allocation2 + $0x2d0] sm:$0xff]
  %v4205 = vld [vmem:[#allocation2 + $0x2d8] sm:$0xff]
  %v4206 = vld [vmem:[#allocation2 + $0x2e0] sm:$0xff]
  %v4207 = vld [vmem:[#allocation2 + $0x2e8] sm:$0xff]
  %v4208 = vld [vmem:[#allocation2 + $0x2f0] sm:$0xff]
  %v4209 = vld [vmem:[#allocation2 + $0x2f8] sm:$0xff]
  %v4210 = vmax.f32 %v4202, %v4206
  %v4211 = vmax.f32 %v4203, %v4207
  %v4212 = vmax.f32 %v4204, %v4208
  %v4213 = vmax.f32 %v4205, %v4209
  %v4214 = vmax.f32 %v4210, %v4211
  %v4215 = vmax.f32 %v4212, %v4213
  %v4216 = vmax.f32 %v4214, 0.0
  %v4217 = vmax.f32 %v4215, 0.0
  %v4218 = vpack.c.bf16 %v4217, %v4216
  %4219 = vst [vmem:[#allocation3 + $0x58] sm:$0xff] %v4218
  %v4220 = vld [vmem:[#allocation3] sm:$0xff]
  %v4221 = vld [vmem:[#allocation3 + $0x8] sm:$0xff]
  %v4222 = vld [vmem:[#allocation3 + $0x10] sm:$0xff]
  %v4223 = vld [vmem:[#allocation3 + $0x18] sm:$0xff]
  %v4224 = vld [vmem:[#allocation3 + $0x20] sm:$0xff]
  %v4225 = vld [vmem:[#allocation3 + $0x28] sm:$0xff]
  %v4226 = vld [vmem:[#allocation3 + $0x30] sm:$0xff]
  %v4227 = vld [vmem:[#allocation3 + $0x38] sm:$0xff]
  %v4228 = vld [vmem:[%s3] sm:$0xff]
  %v4229 = vld [vmem:[%s3 + $0x8] sm:$0xff]
  %v4230 = vld [vmem:[%s3 + $0x10] sm:$0xff]
  %v4231 = vld [vmem:[%s3 + $0x18] sm:$0xff]
  %v4232 = vld [vmem:[%s3 + $0x20] sm:$0xff]
  %v4233 = vld [vmem:[%s3 + $0x28] sm:$0xff]
  %v4234 = vld [vmem:[%s3 + $0x30] sm:$0xff]
  %v4235 = vld [vmem:[%s3 + $0x38] sm:$0xff]
  %v4236 = vld [vmem:[%s3 + $0x40] sm:$0xff]
  %v4237 = vld [vmem:[%s3 + $0x48] sm:$0xff]
  %v4238 = vld [vmem:[%s3 + $0x50] sm:$0xff]
  %v4239 = vld [vmem:[%s3 + $0x58] sm:$0xff]
  %v4240 = vld [vmem:[%s3 + $0x60] sm:$0xff]
  %v4241 = vld [vmem:[%s3 + $0x68] sm:$0xff]
  %v4242 = vld [vmem:[%s3 + $0x70] sm:$0xff]
  %v4243 = vld [vmem:[%s3 + $0x78] sm:$0xff]
  %v4244 = vld [vmem:[%s4] sm:$0x3]
  %v4246 = vlaneseq
  %v4247 = vshrl.u32 %v4246, 7
  %v4248 = vsub.s32 0, %v4247
  %v4249 = vrot.slane %v4244, %v4248
  %v4250 = vlaneseq
  %v4251 = vshrl.u32 %v4250, 7
  %v4252 = vsub.s32 1, %v4251
  %v4253 = vrot.slane %v4244, %v4252
  %v4272 = vunpack.c.l.b16 %v4228
  %v4273 = vunpack.c.h.b16 %v4228
  %v4274 = vunpack.c.l.b16 %v4229
  %v4275 = vunpack.c.h.b16 %v4229
  %v4276 = vunpack.c.l.b16 %v4230
  %v4277 = vunpack.c.h.b16 %v4230
  %v4278 = vunpack.c.l.b16 %v4231
  %v4279 = vunpack.c.h.b16 %v4231
  %v4280 = vunpack.c.l.b16 %v4232
  %v4281 = vunpack.c.h.b16 %v4232
  %v4282 = vunpack.c.l.b16 %v4233
  %v4283 = vunpack.c.h.b16 %v4233
  %v4284 = vunpack.c.l.b16 %v4234
  %v4285 = vunpack.c.h.b16 %v4234
  %v4286 = vunpack.c.l.b16 %v4235
  %v4287 = vunpack.c.h.b16 %v4235
  %v4288 = vunpack.c.l.b16 %v4236
  %v4289 = vunpack.c.h.b16 %v4236
  %v4290 = vunpack.c.l.b16 %v4237
  %v4291 = vunpack.c.h.b16 %v4237
  %v4292 = vunpack.c.l.b16 %v4238
  %v4293 = vunpack.c.h.b16 %v4238
  %v4294 = vunpack.c.l.b16 %v4239
  %v4295 = vunpack.c.h.b16 %v4239
  %v4296 = vunpack.c.l.b16 %v4240
  %v4297 = vunpack.c.h.b16 %v4240
  %v4298 = vunpack.c.l.b16 %v4241
  %v4299 = vunpack.c.h.b16 %v4241
  %v4300 = vunpack.c.l.b16 %v4242
  %v4301 = vunpack.c.h.b16 %v4242
  %v4302 = vunpack.c.l.b16 %v4243
  %v4303 = vunpack.c.h.b16 %v4243
  %v4304 = vpack.c.b16 %v4274, %v4272
  %v4305 = vpack.c.b16 %v4275, %v4273
  %v4306 = vpack.c.b16 %v4278, %v4276
  %v4307 = vpack.c.b16 %v4279, %v4277
  %v4308 = vpack.c.b16 %v4282, %v4280
  %v4309 = vpack.c.b16 %v4283, %v4281
  %v4310 = vpack.c.b16 %v4286, %v4284
  %v4311 = vpack.c.b16 %v4287, %v4285
  %v4312 = vpack.c.b16 %v4290, %v4288
  %v4313 = vpack.c.b16 %v4291, %v4289
  %v4314 = vpack.c.b16 %v4294, %v4292
  %v4315 = vpack.c.b16 %v4295, %v4293
  %v4316 = vpack.c.b16 %v4298, %v4296
  %v4317 = vpack.c.b16 %v4299, %v4297
  %v4318 = vpack.c.b16 %v4302, %v4300
  %v4319 = vpack.c.b16 %v4303, %v4301
  %4336 = vmatprep.subr.bf16.mxu0 %v4305
  %4337 = vmatpush1.bf16.msra.mxu0 %v4304
  %4338 = vmatprep.subr.bf16.mxu0 %v4307
  %4339 = vmatpush1.bf16.msra.mxu0 %v4306
  %4340 = vmatprep.subr.bf16.mxu0 %v4309
  %4341 = vmatpush1.bf16.msra.mxu0 %v4308
  %4342 = vmatprep.subr.bf16.mxu0 %v4311
  %4343 = vmatpush1.bf16.msra.mxu0 %v4310
  %4344 = vmatprep.subr.bf16.mxu0 %v4313
  %4345 = vmatpush1.bf16.msra.mxu0 %v4312
  %4346 = vmatprep.subr.bf16.mxu0 %v4315
  %4347 = vmatpush1.bf16.msra.mxu0 %v4314
  %4348 = vmatprep.subr.bf16.mxu0 %v4317
  %4349 = vmatpush1.bf16.msra.mxu0 %v4316
  %4350 = vmatprep.subr.bf16.mxu0 %v4319
  %4351 = vmatpush1.bf16.msra.mxu0 %v4318
  %4352 = vmatprep.subr.bf16.mxu0 0
  %4353 = vmatpush1.bf16.msra.mxu0 0
  %4354 = vmatprep.subr.bf16.mxu0 0
  %4355 = vmatpush1.bf16.msra.mxu0 0
  %4356 = vmatprep.subr.bf16.mxu0 0
  %4357 = vmatpush1.bf16.msra.mxu0 0
  %4358 = vmatprep.subr.bf16.mxu0 0
  %4359 = vmatpush1.bf16.msra.mxu0 0
  %4360 = vmatprep.subr.bf16.mxu0 0
  %4361 = vmatpush1.bf16.msra.mxu0 0
  %4362 = vmatprep.subr.bf16.mxu0 0
  %4363 = vmatpush1.bf16.msra.mxu0 0
  %4364 = vmatprep.subr.bf16.mxu0 0
  %4365 = vmatpush1.bf16.msra.mxu0 0
  %4366 = vmatprep.subr.bf16.mxu0 0
  %4367 = vmatpush1.bf16.msra.mxu0 0
  %4368 = vmatprep.mubr.bf16.mxu0 0
  %4369 = vmatmul.mubr.bf16.gmra.mrb[0].mxu0 %v4220
  %v4370 = vpop.f32.mrb[0].mxu0
  %v4371 = vadd.f32 %v4249, %v4370
  %v4372 = vpop.f32.mrb[0].mxu0
  %v4373 = vadd.f32 %v4253, %v4372
  %v4374 = vpop.f32.mrb[0].mxu0
  %v4375 = vadd.f32 %v4249, %v4374
  %v4376 = vpop.f32.mrb[0].mxu0
  %v4377 = vadd.f32 %v4253, %v4376
  %4378 = vmatprep.mubr.bf16.mxu0 0
  %4379 = vmatmul.mubr.bf16.gmra.mrb[0].mxu0 %v4221
  %v4380 = vpop.f32.mrb[0].mxu0
  %v4381 = vadd.f32 %v4249, %v4380
  %v4382 = vpop.f32.mrb[0].mxu0
  %v4383 = vadd.f32 %v4253, %v4382
  %v4384 = vpop.f32.mrb[0].mxu0
  %v4385 = vadd.f32 %v4249, %v4384
  %v4386 = vpop.f32.mrb[0].mxu0
  %v4387 = vadd.f32 %v4253, %v4386
  %4388 = vmatprep.mubr.bf16.mxu0 0
  %4389 = vmatmul.mubr.bf16.gmra.mrb[0].mxu0 %v4222
  %v4390 = vpop.f32.mrb[0].mxu0
  %v4391 = vadd.f32 %v4249, %v4390
  %v4392 = vpop.f32.mrb[0].mxu0
  %v4393 = vadd.f32 %v4253, %v4392
  %v4394 = vpop.f32.mrb[0].mxu0
  %v4395 = vadd.f32 %v4249, %v4394
  %v4396 = vpop.f32.mrb[0].mxu0
  %v4397 = vadd.f32 %v4253, %v4396
  %4398 = vmatprep.mubr.bf16.mxu0 0
  %4399 = vmatmul.mubr.bf16.gmra.mrb[0].mxu0 %v4223
  %v4400 = vpop.f32.mrb[0].mxu0
  %v4401 = vadd.f32 %v4249, %v4400
  %v4402 = vpop.f32.mrb[0].mxu0
  %v4403 = vadd.f32 %v4253, %v4402
  %v4404 = vpop.f32.mrb[0].mxu0
  %v4405 = vadd.f32 %v4249, %v4404
  %v4406 = vpop.f32.mrb[0].mxu0
  %v4407 = vadd.f32 %v4253, %v4406
  %4408 = vmatprep.mubr.bf16.mxu0 0
  %4409 = vmatmul.mubr.bf16.gmra.mrb[0].mxu0 %v4224
  %v4410 = vpop.f32.mrb[0].mxu0
  %v4411 = vadd.f32 %v4249, %v4410
  %v4412 = vpop.f32.mrb[0].mxu0
  %v4413 = vadd.f32 %v4253, %v4412
  %v4414 = vpop.f32.mrb[0].mxu0
  %v4415 = vadd.f32 %v4249, %v4414
  %v4416 = vpop.f32.mrb[0].mxu0
  %v4417 = vadd.f32 %v4253, %v4416
  %4418 = vmatprep.mubr.bf16.mxu0 0
  %4419 = vmatmul.mubr.bf16.gmra.mrb[0].mxu0 %v4225
  %v4420 = vpop.f32.mrb[0].mxu0
  %v4421 = vadd.f32 %v4249, %v4420
  %v4422 = vpop.f32.mrb[0].mxu0
  %v4423 = vadd.f32 %v4253, %v4422
  %v4424 = vpop.f32.mrb[0].mxu0
  %v4425 = vadd.f32 %v4249, %v4424
  %v4426 = vpop.f32.mrb[0].mxu0
  %v4427 = vadd.f32 %v4253, %v4426
  %4428 = vmatprep.mubr.bf16.mxu0 0
  %4429 = vmatmul.mubr.bf16.gmra.mrb[0].mxu0 %v4226
  %v4430 = vpop.f32.mrb[0].mxu0
  %v4431 = vadd.f32 %v4249, %v4430
  %v4432 = vpop.f32.mrb[0].mxu0
  %v4433 = vadd.f32 %v4253, %v4432
  %v4434 = vpop.f32.mrb[0].mxu0
  %v4435 = vadd.f32 %v4249, %v4434
  %v4436 = vpop.f32.mrb[0].mxu0
  %v4437 = vadd.f32 %v4253, %v4436
  %4438 = vmatprep.mubr.bf16.mxu0 0
  %4439 = vmatmul.mubr.bf16.gmra.mrb[0].mxu0 %v4227
  %v4440 = vpop.f32.mrb[0].mxu0
  %v4441 = vadd.f32 %v4249, %v4440
  %v4442 = vpop.f32.mrb[0].mxu0
  %v4443 = vadd.f32 %v4253, %v4442
  %v4444 = vpop.f32.mrb[0].mxu0
  %v4445 = vadd.f32 %v4249, %v4444
  %v4446 = vpop.f32.mrb[0].mxu0
  %v4447 = vadd.f32 %v4253, %v4446
  %4448 = vdwg.mxu0
  %4449 = vst [vmem:[#allocation2] sm:$0xff] %v4371
  %4450 = vst [vmem:[#allocation2 + $0x8] sm:$0xff] %v4373
  %4451 = vst [vmem:[#allocation2 + $0x10] sm:$0xff] %v4375
  %4452 = vst [vmem:[#allocation2 + $0x18] sm:$0xff] %v4377
  %4453 = vst [vmem:[#allocation2 + $0x20] sm:$0xff] %v4381
  %4454 = vst [vmem:[#allocation2 + $0x28] sm:$0xff] %v4383
  %4455 = vst [vmem:[#allocation2 + $0x30] sm:$0xff] %v4385
  %4456 = vst [vmem:[#allocation2 + $0x38] sm:$0xff] %v4387
  %4457 = vst [vmem:[#allocation2 + $0x40] sm:$0xff] %v4391
  %4458 = vst [vmem:[#allocation2 + $0x48] sm:$0xff] %v4393
  %4459 = vst [vmem:[#allocation2 + $0x50] sm:$0xff] %v4395
  %4460 = vst [vmem:[#allocation2 + $0x58] sm:$0xff] %v4397
  %4461 = vst [vmem:[#allocation2 + $0x60] sm:$0xff] %v4401
  %4462 = vst [vmem:[#allocation2 + $0x68] sm:$0xff] %v4403
  %4463 = vst [vmem:[#allocation2 + $0x70] sm:$0xff] %v4405
  %4464 = vst [vmem:[#allocation2 + $0x78] sm:$0xff] %v4407
  %4465 = vst [vmem:[#allocation2 + $0x80] sm:$0xff] %v4411
  %4466 = vst [vmem:[#allocation2 + $0x88] sm:$0xff] %v4413
  %4467 = vst [vmem:[#allocation2 + $0x90] sm:$0xff] %v4415
  %4468 = vst [vmem:[#allocation2 + $0x98] sm:$0xff] %v4417
  %4469 = vst [vmem:[#allocation2 + $0xa0] sm:$0xff] %v4421
  %4470 = vst [vmem:[#allocation2 + $0xa8] sm:$0xff] %v4423
  %4471 = vst [vmem:[#allocation2 + $0xb0] sm:$0xff] %v4425
  %4472 = vst [vmem:[#allocation2 + $0xb8] sm:$0xff] %v4427
  %4473 = vst [vmem:[#allocation2 + $0xc0] sm:$0xff] %v4431
  %4474 = vst [vmem:[#allocation2 + $0xc8] sm:$0xff] %v4433
  %4475 = vst [vmem:[#allocation2 + $0xd0] sm:$0xff] %v4435
  %4476 = vst [vmem:[#allocation2 + $0xd8] sm:$0xff] %v4437
  %4477 = vst [vmem:[#allocation2 + $0xe0] sm:$0xff] %v4441
  %4478 = vst [vmem:[#allocation2 + $0xe8] sm:$0xff] %v4443
  %4479 = vst [vmem:[#allocation2 + $0xf0] sm:$0xff] %v4445
  %4480 = vst [vmem:[#allocation2 + $0xf8] sm:$0xff] %v4447
  %v4481 = vld [vmem:[#allocation3 + $0x8] sm:$0xff]
  %v4482 = vld [vmem:[#allocation3 + $0x10] sm:$0xff]
  %v4483 = vld [vmem:[#allocation3 + $0x18] sm:$0xff]
  %v4484 = vld [vmem:[#allocation3 + $0x20] sm:$0xff]
  %v4485 = vld [vmem:[#allocation3 + $0x28] sm:$0xff]
  %v4486 = vld [vmem:[#allocation3 + $0x30] sm:$0xff]
  %v4487 = vld [vmem:[#allocation3 + $0x38] sm:$0xff]
  %v4488 = vld [vmem:[#allocation3 + $0x40] sm:$0xff]
  %s4489 = scalar_lea.vmem %s3, 128
  %v4490 = vld [vmem:[%s4489] sm:$0xff]
  %v4491 = vld [vmem:[%s4489 + $0x8] sm:$0xff]
  %v4492 = vld [vmem:[%s4489 + $0x10] sm:$0xff]
  %v4493 = vld [vmem:[%s4489 + $0x18] sm:$0xff]
  %v4494 = vld [vmem:[%s4489 + $0x20] sm:$0xff]
  %v4495 = vld [vmem:[%s4489 + $0x28] sm:$0xff]
  %v4496 = vld [vmem:[%s4489 + $0x30] sm:$0xff]
  %v4497 = vld [vmem:[%s4489 + $0x38] sm:$0xff]
  %v4498 = vld [vmem:[%s4489 + $0x40] sm:$0xff]
  %v4499 = vld [vmem:[%s4489 + $0x48] sm:$0xff]
  %v4500 = vld [vmem:[%s4489 + $0x50] sm:$0xff]
  %v4501 = vld [vmem:[%s4489 + $0x58] sm:$0xff]
  %v4502 = vld [vmem:[%s4489 + $0x60] sm:$0xff]
  %v4503 = vld [vmem:[%s4489 + $0x68] sm:$0xff]
  %v4504 = vld [vmem:[%s4489 + $0x70] sm:$0xff]
  %v4505 = vld [vmem:[%s4489 + $0x78] sm:$0xff]
  %v4522 = vunpack.c.l.b16 %v4490
  %v4523 = vunpack.c.h.b16 %v4490
  %v4524 = vunpack.c.l.b16 %v4491
  %v4525 = vunpack.c.h.b16 %v4491
  %v4526 = vunpack.c.l.b16 %v4492
  %v4527 = vunpack.c.h.b16 %v4492
  %v4528 = vunpack.c.l.b16 %v4493
  %v4529 = vunpack.c.h.b16 %v4493
  %v4530 = vunpack.c.l.b16 %v4494
  %v4531 = vunpack.c.h.b16 %v4494
  %v4532 = vunpack.c.l.b16 %v4495
  %v4533 = vunpack.c.h.b16 %v4495
  %v4534 = vunpack.c.l.b16 %v4496
  %v4535 = vunpack.c.h.b16 %v4496
  %v4536 = vunpack.c.l.b16 %v4497
  %v4537 = vunpack.c.h.b16 %v4497
  %v4538 = vunpack.c.l.b16 %v4498
  %v4539 = vunpack.c.h.b16 %v4498
  %v4540 = vunpack.c.l.b16 %v4499
  %v4541 = vunpack.c.h.b16 %v4499
  %v4542 = vunpack.c.l.b16 %v4500
  %v4543 = vunpack.c.h.b16 %v4500
  %v4544 = vunpack.c.l.b16 %v4501
  %v4545 = vunpack.c.h.b16 %v4501
  %v4546 = vunpack.c.l.b16 %v4502
  %v4547 = vunpack.c.h.b16 %v4502
  %v4548 = vunpack.c.l.b16 %v4503
  %v4549 = vunpack.c.h.b16 %v4503
  %v4550 = vunpack.c.l.b16 %v4504
  %v4551 = vunpack.c.h.b16 %v4504
  %v4552 = vunpack.c.l.b16 %v4505
  %v4553 = vunpack.c.h.b16 %v4505
  %v4554 = vpack.c.b16 %v4524, %v4522
  %v4555 = vpack.c.b16 %v4525, %v4523
  %v4556 = vpack.c.b16 %v4528, %v4526
  %v4557 = vpack.c.b16 %v4529, %v4527
  %v4558 = vpack.c.b16 %v4532, %v4530
  %v4559 = vpack.c.b16 %v4533, %v4531
  %v4560 = vpack.c.b16 %v4536, %v4534
  %v4561 = vpack.c.b16 %v4537, %v4535
  %v4562 = vpack.c.b16 %v4540, %v4538
  %v4563 = vpack.c.b16 %v4541, %v4539
  %v4564 = vpack.c.b16 %v4544, %v4542
  %v4565 = vpack.c.b16 %v4545, %v4543
  %v4566 = vpack.c.b16 %v4548, %v4546
  %v4567 = vpack.c.b16 %v4549, %v4547
  %v4568 = vpack.c.b16 %v4552, %v4550
  %v4569 = vpack.c.b16 %v4553, %v4551
  %4586 = vmatprep.subr.bf16.mxu0 %v4555
  %4587 = vmatpush1.bf16.msra.mxu0 %v4554
  %4588 = vmatprep.subr.bf16.mxu0 %v4557
  %4589 = vmatpush1.bf16.msra.mxu0 %v4556
  %4590 = vmatprep.subr.bf16.mxu0 %v4559
  %4591 = vmatpush1.bf16.msra.mxu0 %v4558
  %4592 = vmatprep.subr.bf16.mxu0 %v4561
  %4593 = vmatpush1.bf16.msra.mxu0 %v4560
  %4594 = vmatprep.subr.bf16.mxu0 %v4563
  %4595 = vmatpush1.bf16.msra.mxu0 %v4562
  %4596 = vmatprep.subr.bf16.mxu0 %v4565
  %4597 = vmatpush1.bf16.msra.mxu0 %v4564
  %4598 = vmatprep.subr.bf16.mxu0 %v4567
  %4599 = vmatpush1.bf16.msra.mxu0 %v4566
  %4600 = vmatprep.subr.bf16.mxu0 %v4569
  %4601 = vmatpush1.bf16.msra.mxu0 %v4568
  %4602 = vmatprep.subr.bf16.mxu0 0
  %4603 = vmatpush1.bf16.msra.mxu0 0
  %4604 = vmatprep.subr.bf16.mxu0 0
  %4605 = vmatpush1.bf16.msra.mxu0 0
  %4606 = vmatprep.subr.bf16.mxu0 0
  %4607 = vmatpush1.bf16.msra.mxu0 0
  %4608 = vmatprep.subr.bf16.mxu0 0
  %4609 = vmatpush1.bf16.msra.mxu0 0
  %4610 = vmatprep.subr.bf16.mxu0 0
  %4611 = vmatpush1.bf16.msra.mxu0 0
  %4612 = vmatprep.subr.bf16.mxu0 0
  %4613 = vmatpush1.bf16.msra.mxu0 0
  %4614 = vmatprep.subr.bf16.mxu0 0
  %4615 = vmatpush1.bf16.msra.mxu0 0
  %4616 = vmatprep.subr.bf16.mxu0 0
  %4617 = vmatpush1.bf16.msra.mxu0 0
  %4618 = vmatprep.mubr.bf16.mxu0 0
  %4619 = vmatmul.mubr.bf16.gmra.mrb[0].mxu0 %v4481
  %v4620 = vpop.f32.mrb[0].mxu0
  %v4621 = vadd.f32 0.0, %v4620
  %v4622 = vpop.f32.mrb[0].mxu0
  %v4623 = vadd.f32 0.0, %v4622
  %v4624 = vpop.f32.mrb[0].mxu0
  %v4625 = vadd.f32 0.0, %v4624
  %v4626 = vpop.f32.mrb[0].mxu0
  %v4627 = vadd.f32 0.0, %v4626
  %4628 = vmatprep.mubr.bf16.mxu0 0
  %4629 = vmatmul.mubr.bf16.gmra.mrb[0].mxu0 %v4482
  %v4630 = vpop.f32.mrb[0].mxu0
  %v4631 = vadd.f32 0.0, %v4630
  %v4632 = vpop.f32.mrb[0].mxu0
  %v4633 = vadd.f32 0.0, %v4632
  %v4634 = vpop.f32.mrb[0].mxu0
  %v4635 = vadd.f32 0.0, %v4634
  %v4636 = vpop.f32.mrb[0].mxu0
  %v4637 = vadd.f32 0.0, %v4636
  %4638 = vmatprep.mubr.bf16.mxu0 0
  %4639 = vmatmul.mubr.bf16.gmra.mrb[0].mxu0 %v4483
  %v4640 = vpop.f32.mrb[0].mxu0
  %v4641 = vadd.f32 0.0, %v4640
  %v4642 = vpop.f32.mrb[0].mxu0
  %v4643 = vadd.f32 0.0, %v4642
  %v4644 = vpop.f32.mrb[0].mxu0
  %v4645 = vadd.f32 0.0, %v4644
  %v4646 = vpop.f32.mrb[0].mxu0
  %v4647 = vadd.f32 0.0, %v4646
  %4648 = vmatprep.mubr.bf16.mxu0 0
  %4649 = vmatmul.mubr.bf16.gmra.mrb[0].mxu0 %v4484
  %v4650 = vpop.f32.mrb[0].mxu0
  %v4651 = vadd.f32 0.0, %v4650
  %v4652 = vpop.f32.mrb[0].mxu0
  %v4653 = vadd.f32 0.0, %v4652
  %v4654 = vpop.f32.mrb[0].mxu0
  %v4655 = vadd.f32 0.0, %v4654
  %v4656 = vpop.f32.mrb[0].mxu0
  %v4657 = vadd.f32 0.0, %v4656
  %4658 = vmatprep.mubr.bf16.mxu0 0
  %4659 = vmatmul.mubr.bf16.gmra.mrb[0].mxu0 %v4485
  %v4660 = vpop.f32.mrb[0].mxu0
  %v4661 = vadd.f32 0.0, %v4660
  %v4662 = vpop.f32.mrb[0].mxu0
  %v4663 = vadd.f32 0.0, %v4662
  %v4664 = vpop.f32.mrb[0].mxu0
  %v4665 = vadd.f32 0.0, %v4664
  %v4666 = vpop.f32.mrb[0].mxu0
  %v4667 = vadd.f32 0.0, %v4666
  %4668 = vmatprep.mubr.bf16.mxu0 0
  %4669 = vmatmul.mubr.bf16.gmra.mrb[0].mxu0 %v4486
  %v4670 = vpop.f32.mrb[0].mxu0
  %v4671 = vadd.f32 0.0, %v4670
  %v4672 = vpop.f32.mrb[0].mxu0
  %v4673 = vadd.f32 0.0, %v4672
  %v4674 = vpop.f32.mrb[0].mxu0
  %v4675 = vadd.f32 0.0, %v4674
  %v4676 = vpop.f32.mrb[0].mxu0
  %v4677 = vadd.f32 0.0, %v4676
  %4678 = vmatprep.mubr.bf16.mxu0 0
  %4679 = vmatmul.mubr.bf16.gmra.mrb[0].mxu0 %v4487
  %v4680 = vpop.f32.mrb[0].mxu0
  %v4681 = vadd.f32 0.0, %v4680
  %v4682 = vpop.f32.mrb[0].mxu0
  %v4683 = vadd.f32 0.0, %v4682
  %v4684 = vpop.f32.mrb[0].mxu0
  %v4685 = vadd.f32 0.0, %v4684
  %v4686 = vpop.f32.mrb[0].mxu0
  %v4687 = vadd.f32 0.0, %v4686
  %4688 = vmatprep.mubr.bf16.mxu0 0
  %4689 = vmatmul.mubr.bf16.gmra.mrb[0].mxu0 %v4488
  %v4690 = vpop.f32.mrb[0].mxu0
  %v4691 = vadd.f32 0.0, %v4690
  %v4692 = vpop.f32.mrb[0].mxu0
  %v4693 = vadd.f32 0.0, %v4692
  %v4694 = vpop.f32.mrb[0].mxu0
  %v4695 = vadd.f32 0.0, %v4694
  %v4696 = vpop.f32.mrb[0].mxu0
  %v4697 = vadd.f32 0.0, %v4696
  %4698 = vdwg.mxu0
  %v4699 = vld [vmem:[#allocation2] sm:$0xff]
  %v4700 = vld [vmem:[#allocation2 + $0x8] sm:$0xff]
  %v4701 = vld [vmem:[#allocation2 + $0x10] sm:$0xff]
  %v4702 = vld [vmem:[#allocation2 + $0x18] sm:$0xff]
  %v4703 = vld [vmem:[#allocation2 + $0x20] sm:$0xff]
  %v4704 = vld [vmem:[#allocation2 + $0x28] sm:$0xff]
  %v4705 = vld [vmem:[#allocation2 + $0x30] sm:$0xff]
  %v4706 = vld [vmem:[#allocation2 + $0x38] sm:$0xff]
  %v4707 = vld [vmem:[#allocation2 + $0x40] sm:$0xff]
  %v4708 = vld [vmem:[#allocation2 + $0x48] sm:$0xff]
  %v4709 = vld [vmem:[#allocation2 + $0x50] sm:$0xff]
  %v4710 = vld [vmem:[#allocation2 + $0x58] sm:$0xff]
  %v4711 = vld [vmem:[#allocation2 + $0x60] sm:$0xff]
  %v4712 = vld [vmem:[#allocation2 + $0x68] sm:$0xff]
  %v4713 = vld [vmem:[#allocation2 + $0x70] sm:$0xff]
  %v4714 = vld [vmem:[#allocation2 + $0x78] sm:$0xff]
  %v4715 = vld [vmem:[#allocation2 + $0x80] sm:$0xff]
  %v4716 = vld [vmem:[#allocation2 + $0x88] sm:$0xff]
  %v4717 = vld [vmem:[#allocation2 + $0x90] sm:$0xff]
  %v4718 = vld [vmem:[#allocation2 + $0x98] sm:$0xff]
  %v4719 = vld [vmem:[#allocation2 + $0xa0] sm:$0xff]
  %v4720 = vld [vmem:[#allocation2 + $0xa8] sm:$0xff]
  %v4721 = vld [vmem:[#allocation2 + $0xb0] sm:$0xff]
  %v4722 = vld [vmem:[#allocation2 + $0xb8] sm:$0xff]
  %v4723 = vld [vmem:[#allocation2 + $0xc0] sm:$0xff]
  %v4724 = vld [vmem:[#allocation2 + $0xc8] sm:$0xff]
  %v4725 = vld [vmem:[#allocation2 + $0xd0] sm:$0xff]
  %v4726 = vld [vmem:[#allocation2 + $0xd8] sm:$0xff]
  %v4727 = vld [vmem:[#allocation2 + $0xe0] sm:$0xff]
  %v4728 = vld [vmem:[#allocation2 + $0xe8] sm:$0xff]
  %v4729 = vld [vmem:[#allocation2 + $0xf0] sm:$0xff]
  %v4730 = vld [vmem:[#allocation2 + $0xf8] sm:$0xff]
  %v4731 = vadd.f32 %v4699, %v4621
  %v4732 = vadd.f32 %v4700, %v4623
  %v4733 = vadd.f32 %v4701, %v4625
  %v4734 = vadd.f32 %v4702, %v4627
  %v4735 = vadd.f32 %v4703, %v4631
  %v4736 = vadd.f32 %v4704, %v4633
  %v4737 = vadd.f32 %v4705, %v4635
  %v4738 = vadd.f32 %v4706, %v4637
  %v4739 = vadd.f32 %v4707, %v4641
  %v4740 = vadd.f32 %v4708, %v4643
  %v4741 = vadd.f32 %v4709, %v4645
  %v4742 = vadd.f32 %v4710, %v4647
  %v4743 = vadd.f32 %v4711, %v4651
  %v4744 = vadd.f32 %v4712, %v4653
  %v4745 = vadd.f32 %v4713, %v4655
  %v4746 = vadd.f32 %v4714, %v4657
  %v4747 = vadd.f32 %v4715, %v4661
  %v4748 = vadd.f32 %v4716, %v4663
  %v4749 = vadd.f32 %v4717, %v4665
  %v4750 = vadd.f32 %v4718, %v4667
  %v4751 = vadd.f32 %v4719, %v4671
  %v4752 = vadd.f32 %v4720, %v4673
  %v4753 = vadd.f32 %v4721, %v4675
  %v4754 = vadd.f32 %v4722, %v4677
  %v4755 = vadd.f32 %v4723, %v4681
  %v4756 = vadd.f32 %v4724, %v4683
  %v4757 = vadd.f32 %v4725, %v4685
  %v4758 = vadd.f32 %v4726, %v4687
  %v4759 = vadd.f32 %v4727, %v4691
  %v4760 = vadd.f32 %v4728, %v4693
  %v4761 = vadd.f32 %v4729, %v4695
  %v4762 = vadd.f32 %v4730, %v4697
  %4763 = vst [vmem:[#allocation2] sm:$0xff] %v4731
  %4764 = vst [vmem:[#allocation2 + $0x8] sm:$0xff] %v4732
  %4765 = vst [vmem:[#allocation2 + $0x10] sm:$0xff] %v4733
  %4766 = vst [vmem:[#allocation2 + $0x18] sm:$0xff] %v4734
  %4767 = vst [vmem:[#allocation2 + $0x20] sm:$0xff] %v4735
  %4768 = vst [vmem:[#allocation2 + $0x28] sm:$0xff] %v4736
  %4769 = vst [vmem:[#allocation2 + $0x30] sm:$0xff] %v4737
  %4770 = vst [vmem:[#allocation2 + $0x38] sm:$0xff] %v4738
  %4771 = vst [vmem:[#allocation2 + $0x40] sm:$0xff] %v4739
  %4772 = vst [vmem:[#allocation2 + $0x48] sm:$0xff] %v4740
  %4773 = vst [vmem:[#allocation2 + $0x50] sm:$0xff] %v4741
  %4774 = vst [vmem:[#allocation2 + $0x58] sm:$0xff] %v4742
  %4775 = vst [vmem:[#allocation2 + $0x60] sm:$0xff] %v4743
  %4776 = vst [vmem:[#allocation2 + $0x68] sm:$0xff] %v4744
  %4777 = vst [vmem:[#allocation2 + $0x70] sm:$0xff] %v4745
  %4778 = vst [vmem:[#allocation2 + $0x78] sm:$0xff] %v4746
  %4779 = vst [vmem:[#allocation2 + $0x80] sm:$0xff] %v4747
  %4780 = vst [vmem:[#allocation2 + $0x88] sm:$0xff] %v4748
  %4781 = vst [vmem:[#allocation2 + $0x90] sm:$0xff] %v4749
  %4782 = vst [vmem:[#allocation2 + $0x98] sm:$0xff] %v4750
  %4783 = vst [vmem:[#allocation2 + $0xa0] sm:$0xff] %v4751
  %4784 = vst [vmem:[#allocation2 + $0xa8] sm:$0xff] %v4752
  %4785 = vst [vmem:[#allocation2 + $0xb0] sm:$0xff] %v4753
  %4786 = vst [vmem:[#allocation2 + $0xb8] sm:$0xff] %v4754
  %4787 = vst [vmem:[#allocation2 + $0xc0] sm:$0xff] %v4755
  %4788 = vst [vmem:[#allocation2 + $0xc8] sm:$0xff] %v4756
  %4789 = vst [vmem:[#allocation2 + $0xd0] sm:$0xff] %v4757
  %4790 = vst [vmem:[#allocation2 + $0xd8] sm:$0xff] %v4758
  %4791 = vst [vmem:[#allocation2 + $0xe0] sm:$0xff] %v4759
  %4792 = vst [vmem:[#allocation2 + $0xe8] sm:$0xff] %v4760
  %4793 = vst [vmem:[#allocation2 + $0xf0] sm:$0xff] %v4761
  %4794 = vst [vmem:[#allocation2 + $0xf8] sm:$0xff] %v4762
  %v4795 = vld [vmem:[#allocation3 + $0x10] sm:$0xff]
  %v4796 = vld [vmem:[#allocation3 + $0x18] sm:$0xff]
  %v4797 = vld [vmem:[#allocation3 + $0x20] sm:$0xff]
  %v4798 = vld [vmem:[#allocation3 + $0x28] sm:$0xff]
  %v4799 = vld [vmem:[#allocation3 + $0x30] sm:$0xff]
  %v4800 = vld [vmem:[#allocation3 + $0x38] sm:$0xff]
  %v4801 = vld [vmem:[#allocation3 + $0x40] sm:$0xff]
  %v4802 = vld [vmem:[#allocation3 + $0x48] sm:$0xff]
  %s4803 = scalar_lea.vmem %s3, 256
  %v4804 = vld [vmem:[%s4803] sm:$0xff]
  %v4805 = vld [vmem:[%s4803 + $0x8] sm:$0xff]
  %v4806 = vld [vmem:[%s4803 + $0x10] sm:$0xff]
  %v4807 = vld [vmem:[%s4803 + $0x18] sm:$0xff]
  %v4808 = vld [vmem:[%s4803 + $0x20] sm:$0xff]
  %v4809 = vld [vmem:[%s4803 + $0x28] sm:$0xff]
  %v4810 = vld [vmem:[%s4803 + $0x30] sm:$0xff]
  %v4811 = vld [vmem:[%s4803 + $0x38] sm:$0xff]
  %v4812 = vld [vmem:[%s4803 + $0x40] sm:$0xff]
  %v4813 = vld [vmem:[%s4803 + $0x48] sm:$0xff]
  %v4814 = vld [vmem:[%s4803 + $0x50] sm:$0xff]
  %v4815 = vld [vmem:[%s4803 + $0x58] sm:$0xff]
  %v4816 = vld [vmem:[%s4803 + $0x60] sm:$0xff]
  %v4817 = vld [vmem:[%s4803 + $0x68] sm:$0xff]
  %v4818 = vld [vmem:[%s4803 + $0x70] sm:$0xff]
  %v4819 = vld [vmem:[%s4803 + $0x78] sm:$0xff]
  %v4836 = vunpack.c.l.b16 %v4804
  %v4837 = vunpack.c.h.b16 %v4804
  %v4838 = vunpack.c.l.b16 %v4805
  %v4839 = vunpack.c.h.b16 %v4805
  %v4840 = vunpack.c.l.b16 %v4806
  %v4841 = vunpack.c.h.b16 %v4806
  %v4842 = vunpack.c.l.b16 %v4807
  %v4843 = vunpack.c.h.b16 %v4807
  %v4844 = vunpack.c.l.b16 %v4808
  %v4845 = vunpack.c.h.b16 %v4808
  %v4846 = vunpack.c.l.b16 %v4809
  %v4847 = vunpack.c.h.b16 %v4809
  %v4848 = vunpack.c.l.b16 %v4810
  %v4849 = vunpack.c.h.b16 %v4810
  %v4850 = vunpack.c.l.b16 %v4811
  %v4851 = vunpack.c.h.b16 %v4811
  %v4852 = vunpack.c.l.b16 %v4812
  %v4853 = vunpack.c.h.b16 %v4812
  %v4854 = vunpack.c.l.b16 %v4813
  %v4855 = vunpack.c.h.b16 %v4813
  %v4856 = vunpack.c.l.b16 %v4814
  %v4857 = vunpack.c.h.b16 %v4814
  %v4858 = vunpack.c.l.b16 %v4815
  %v4859 = vunpack.c.h.b16 %v4815
  %v4860 = vunpack.c.l.b16 %v4816
  %v4861 = vunpack.c.h.b16 %v4816
  %v4862 = vunpack.c.l.b16 %v4817
  %v4863 = vunpack.c.h.b16 %v4817
  %v4864 = vunpack.c.l.b16 %v4818
  %v4865 = vunpack.c.h.b16 %v4818
  %v4866 = vunpack.c.l.b16 %v4819
  %v4867 = vunpack.c.h.b16 %v4819
  %v4868 = vpack.c.b16 %v4838, %v4836
  %v4869 = vpack.c.b16 %v4839, %v4837
  %v4870 = vpack.c.b16 %v4842, %v4840
  %v4871 = vpack.c.b16 %v4843, %v4841
  %v4872 = vpack.c.b16 %v4846, %v4844
  %v4873 = vpack.c.b16 %v4847, %v4845
  %v4874 = vpack.c.b16 %v4850, %v4848
  %v4875 = vpack.c.b16 %v4851, %v4849
  %v4876 = vpack.c.b16 %v4854, %v4852
  %v4877 = vpack.c.b16 %v4855, %v4853
  %v4878 = vpack.c.b16 %v4858, %v4856
  %v4879 = vpack.c.b16 %v4859, %v4857
  %v4880 = vpack.c.b16 %v4862, %v4860
  %v4881 = vpack.c.b16 %v4863, %v4861
  %v4882 = vpack.c.b16 %v4866, %v4864
  %v4883 = vpack.c.b16 %v4867, %v4865
  %4900 = vmatprep.subr.bf16.mxu0 %v4869
  %4901 = vmatpush1.bf16.msra.mxu0 %v4868
  %4902 = vmatprep.subr.bf16.mxu0 %v4871
  %4903 = vmatpush1.bf16.msra.mxu0 %v4870
  %4904 = vmatprep.subr.bf16.mxu0 %v4873
  %4905 = vmatpush1.bf16.msra.mxu0 %v4872
  %4906 = vmatprep.subr.bf16.mxu0 %v4875
  %4907 = vmatpush1.bf16.msra.mxu0 %v4874
  %4908 = vmatprep.subr.bf16.mxu0 %v4877
  %4909 = vmatpush1.bf16.msra.mxu0 %v4876
  %4910 = vmatprep.subr.bf16.mxu0 %v4879
  %4911 = vmatpush1.bf16.msra.mxu0 %v4878
  %4912 = vmatprep.subr.bf16.mxu0 %v4881
  %4913 = vmatpush1.bf16.msra.mxu0 %v4880
  %4914 = vmatprep.subr.bf16.mxu0 %v4883
  %4915 = vmatpush1.bf16.msra.mxu0 %v4882
  %4916 = vmatprep.subr.bf16.mxu0 0
  %4917 = vmatpush1.bf16.msra.mxu0 0
  %4918 = vmatprep.subr.bf16.mxu0 0
  %4919 = vmatpush1.bf16.msra.mxu0 0
  %4920 = vmatprep.subr.bf16.mxu0 0
  %4921 = vmatpush1.bf16.msra.mxu0 0
  %4922 = vmatprep.subr.bf16.mxu0 0
  %4923 = vmatpush1.bf16.msra.mxu0 0
  %4924 = vmatprep.subr.bf16.mxu0 0
  %4925 = vmatpush1.bf16.msra.mxu0 0
  %4926 = vmatprep.subr.bf16.mxu0 0
  %4927 = vmatpush1.bf16.msra.mxu0 0
  %4928 = vmatprep.subr.bf16.mxu0 0
  %4929 = vmatpush1.bf16.msra.mxu0 0
  %4930 = vmatprep.subr.bf16.mxu0 0
  %4931 = vmatpush1.bf16.msra.mxu0 0
  %4932 = vmatprep.mubr.bf16.mxu0 0
  %4933 = vmatmul.mubr.bf16.gmra.mrb[0].mxu0 %v4795
  %v4934 = vpop.f32.mrb[0].mxu0
  %v4935 = vadd.f32 0.0, %v4934
  %v4936 = vpop.f32.mrb[0].mxu0
  %v4937 = vadd.f32 0.0, %v4936
  %v4938 = vpop.f32.mrb[0].mxu0
  %v4939 = vadd.f32 0.0, %v4938
  %v4940 = vpop.f32.mrb[0].mxu0
  %v4941 = vadd.f32 0.0, %v4940
  %4942 = vmatprep.mubr.bf16.mxu0 0
  %4943 = vmatmul.mubr.bf16.gmra.mrb[0].mxu0 %v4796
  %v4944 = vpop.f32.mrb[0].mxu0
  %v4945 = vadd.f32 0.0, %v4944
  %v4946 = vpop.f32.mrb[0].mxu0
  %v4947 = vadd.f32 0.0, %v4946
  %v4948 = vpop.f32.mrb[0].mxu0
  %v4949 = vadd.f32 0.0, %v4948
  %v4950 = vpop.f32.mrb[0].mxu0
  %v4951 = vadd.f32 0.0, %v4950
  %4952 = vmatprep.mubr.bf16.mxu0 0
  %4953 = vmatmul.mubr.bf16.gmra.mrb[0].mxu0 %v4797
  %v4954 = vpop.f32.mrb[0].mxu0
  %v4955 = vadd.f32 0.0, %v4954
  %v4956 = vpop.f32.mrb[0].mxu0
  %v4957 = vadd.f32 0.0, %v4956
  %v4958 = vpop.f32.mrb[0].mxu0
  %v4959 = vadd.f32 0.0, %v4958
  %v4960 = vpop.f32.mrb[0].mxu0
  %v4961 = vadd.f32 0.0, %v4960
  %4962 = vmatprep.mubr.bf16.mxu0 0
  %4963 = vmatmul.mubr.bf16.gmra.mrb[0].mxu0 %v4798
  %v4964 = vpop.f32.mrb[0].mxu0
  %v4965 = vadd.f32 0.0, %v4964
  %v4966 = vpop.f32.mrb[0].mxu0
  %v4967 = vadd.f32 0.0, %v4966
  %v4968 = vpop.f32.mrb[0].mxu0
  %v4969 = vadd.f32 0.0, %v4968
  %v4970 = vpop.f32.mrb[0].mxu0
  %v4971 = vadd.f32 0.0, %v4970
  %4972 = vmatprep.mubr.bf16.mxu0 0
  %4973 = vmatmul.mubr.bf16.gmra.mrb[0].mxu0 %v4799
  %v4974 = vpop.f32.mrb[0].mxu0
  %v4975 = vadd.f32 0.0, %v4974
  %v4976 = vpop.f32.mrb[0].mxu0
  %v4977 = vadd.f32 0.0, %v4976
  %v4978 = vpop.f32.mrb[0].mxu0
  %v4979 = vadd.f32 0.0, %v4978
  %v4980 = vpop.f32.mrb[0].mxu0
  %v4981 = vadd.f32 0.0, %v4980
  %4982 = vmatprep.mubr.bf16.mxu0 0
  %4983 = vmatmul.mubr.bf16.gmra.mrb[0].mxu0 %v4800
  %v4984 = vpop.f32.mrb[0].mxu0
  %v4985 = vadd.f32 0.0, %v4984
  %v4986 = vpop.f32.mrb[0].mxu0
  %v4987 = vadd.f32 0.0, %v4986
  %v4988 = vpop.f32.mrb[0].mxu0
  %v4989 = vadd.f32 0.0, %v4988
  %v4990 = vpop.f32.mrb[0].mxu0
  %v4991 = vadd.f32 0.0, %v4990
  %4992 = vmatprep.mubr.bf16.mxu0 0
  %4993 = vmatmul.mubr.bf16.gmra.mrb[0].mxu0 %v4801
  %v4994 = vpop.f32.mrb[0].mxu0
  %v4995 = vadd.f32 0.0, %v4994
  %v4996 = vpop.f32.mrb[0].mxu0
  %v4997 = vadd.f32 0.0, %v4996
  %v4998 = vpop.f32.mrb[0].mxu0
  %v4999 = vadd.f32 0.0, %v4998
  %v5000 = vpop.f32.mrb[0].mxu0
  %v5001 = vadd.f32 0.0, %v5000
  %5002 = vmatprep.mubr.bf16.mxu0 0
  %5003 = vmatmul.mubr.bf16.gmra.mrb[0].mxu0 %v4802
  %v5004 = vpop.f32.mrb[0].mxu0
  %v5005 = vadd.f32 0.0, %v5004
  %v5006 = vpop.f32.mrb[0].mxu0
  %v5007 = vadd.f32 0.0, %v5006
  %v5008 = vpop.f32.mrb[0].mxu0
  %v5009 = vadd.f32 0.0, %v5008
  %v5010 = vpop.f32.mrb[0].mxu0
  %v5011 = vadd.f32 0.0, %v5010
  %5012 = vdwg.mxu0
  %v5013 = vld [vmem:[#allocation2] sm:$0xff]
  %v5014 = vld [vmem:[#allocation2 + $0x8] sm:$0xff]
  %v5015 = vld [vmem:[#allocation2 + $0x10] sm:$0xff]
  %v5016 = vld [vmem:[#allocation2 + $0x18] sm:$0xff]
  %v5017 = vld [vmem:[#allocation2 + $0x20] sm:$0xff]
  %v5018 = vld [vmem:[#allocation2 + $0x28] sm:$0xff]
  %v5019 = vld [vmem:[#allocation2 + $0x30] sm:$0xff]
  %v5020 = vld [vmem:[#allocation2 + $0x38] sm:$0xff]
  %v5021 = vld [vmem:[#allocation2 + $0x40] sm:$0xff]
  %v5022 = vld [vmem:[#allocation2 + $0x48] sm:$0xff]
  %v5023 = vld [vmem:[#allocation2 + $0x50] sm:$0xff]
  %v5024 = vld [vmem:[#allocation2 + $0x58] sm:$0xff]
  %v5025 = vld [vmem:[#allocation2 + $0x60] sm:$0xff]
  %v5026 = vld [vmem:[#allocation2 + $0x68] sm:$0xff]
  %v5027 = vld [vmem:[#allocation2 + $0x70] sm:$0xff]
  %v5028 = vld [vmem:[#allocation2 + $0x78] sm:$0xff]
  %v5029 = vld [vmem:[#allocation2 + $0x80] sm:$0xff]
  %v5030 = vld [vmem:[#allocation2 + $0x88] sm:$0xff]
  %v5031 = vld [vmem:[#allocation2 + $0x90] sm:$0xff]
  %v5032 = vld [vmem:[#allocation2 + $0x98] sm:$0xff]
  %v5033 = vld [vmem:[#allocation2 + $0xa0] sm:$0xff]
  %v5034 = vld [vmem:[#allocation2 + $0xa8] sm:$0xff]
  %v5035 = vld [vmem:[#allocation2 + $0xb0] sm:$0xff]
  %v5036 = vld [vmem:[#allocation2 + $0xb8] sm:$0xff]
  %v5037 = vld [vmem:[#allocation2 + $0xc0] sm:$0xff]
  %v5038 = vld [vmem:[#allocation2 + $0xc8] sm:$0xff]
  %v5039 = vld [vmem:[#allocation2 + $0xd0] sm:$0xff]
  %v5040 = vld [vmem:[#allocation2 + $0xd8] sm:$0xff]
  %v5041 = vld [vmem:[#allocation2 + $0xe0] sm:$0xff]
  %v5042 = vld [vmem:[#allocation2 + $0xe8] sm:$0xff]
  %v5043 = vld [vmem:[#allocation2 + $0xf0] sm:$0xff]
  %v5044 = vld [vmem:[#allocation2 + $0xf8] sm:$0xff]
  %v5045 = vadd.f32 %v5013, %v4935
  %v5046 = vadd.f32 %v5014, %v4937
  %v5047 = vadd.f32 %v5015, %v4939
  %v5048 = vadd.f32 %v5016, %v4941
  %v5049 = vadd.f32 %v5017, %v4945
  %v5050 = vadd.f32 %v5018, %v4947
  %v5051 = vadd.f32 %v5019, %v4949
  %v5052 = vadd.f32 %v5020, %v4951
  %v5053 = vadd.f32 %v5021, %v4955
  %v5054 = vadd.f32 %v5022, %v4957
  %v5055 = vadd.f32 %v5023, %v4959
  %v5056 = vadd.f32 %v5024, %v4961
  %v5057 = vadd.f32 %v5025, %v4965
  %v5058 = vadd.f32 %v5026, %v4967
  %v5059 = vadd.f32 %v5027, %v4969
  %v5060 = vadd.f32 %v5028, %v4971
  %v5061 = vadd.f32 %v5029, %v4975
  %v5062 = vadd.f32 %v5030, %v4977
  %v5063 = vadd.f32 %v5031, %v4979
  %v5064 = vadd.f32 %v5032, %v4981
  %v5065 = vadd.f32 %v5033, %v4985
  %v5066 = vadd.f32 %v5034, %v4987
  %v5067 = vadd.f32 %v5035, %v4989
  %v5068 = vadd.f32 %v5036, %v4991
  %v5069 = vadd.f32 %v5037, %v4995
  %v5070 = vadd.f32 %v5038, %v4997
  %v5071 = vadd.f32 %v5039, %v4999
  %v5072 = vadd.f32 %v5040, %v5001
  %v5073 = vadd.f32 %v5041, %v5005
  %v5074 = vadd.f32 %v5042, %v5007
  %v5075 = vadd.f32 %v5043, %v5009
  %v5076 = vadd.f32 %v5044, %v5011
  %5077 = vst [vmem:[#allocation2] sm:$0xff] %v5045
  %5078 = vst [vmem:[#allocation2 + $0x8] sm:$0xff] %v5046
  %5079 = vst [vmem:[#allocation2 + $0x10] sm:$0xff] %v5047
  %5080 = vst [vmem:[#allocation2 + $0x18] sm:$0xff] %v5048
  %5081 = vst [vmem:[#allocation2 + $0x20] sm:$0xff] %v5049
  %5082 = vst [vmem:[#allocation2 + $0x28] sm:$0xff] %v5050
  %5083 = vst [vmem:[#allocation2 + $0x30] sm:$0xff] %v5051
  %5084 = vst [vmem:[#allocation2 + $0x38] sm:$0xff] %v5052
  %5085 = vst [vmem:[#allocation2 + $0x40] sm:$0xff] %v5053
  %5086 = vst [vmem:[#allocation2 + $0x48] sm:$0xff] %v5054
  %5087 = vst [vmem:[#allocation2 + $0x50] sm:$0xff] %v5055
  %5088 = vst [vmem:[#allocation2 + $0x58] sm:$0xff] %v5056
  %5089 = vst [vmem:[#allocation2 + $0x60] sm:$0xff] %v5057
  %5090 = vst [vmem:[#allocation2 + $0x68] sm:$0xff] %v5058
  %5091 = vst [vmem:[#allocation2 + $0x70] sm:$0xff] %v5059
  %5092 = vst [vmem:[#allocation2 + $0x78] sm:$0xff] %v5060
  %5093 = vst [vmem:[#allocation2 + $0x80] sm:$0xff] %v5061
  %5094 = vst [vmem:[#allocation2 + $0x88] sm:$0xff] %v5062
  %5095 = vst [vmem:[#allocation2 + $0x90] sm:$0xff] %v5063
  %5096 = vst [vmem:[#allocation2 + $0x98] sm:$0xff] %v5064
  %5097 = vst [vmem:[#allocation2 + $0xa0] sm:$0xff] %v5065
  %5098 = vst [vmem:[#allocation2 + $0xa8] sm:$0xff] %v5066
  %5099 = vst [vmem:[#allocation2 + $0xb0] sm:$0xff] %v5067
  %5100 = vst [vmem:[#allocation2 + $0xb8] sm:$0xff] %v5068
  %5101 = vst [vmem:[#allocation2 + $0xc0] sm:$0xff] %v5069
  %5102 = vst [vmem:[#allocation2 + $0xc8] sm:$0xff] %v5070
  %5103 = vst [vmem:[#allocation2 + $0xd0] sm:$0xff] %v5071
  %5104 = vst [vmem:[#allocation2 + $0xd8] sm:$0xff] %v5072
  %5105 = vst [vmem:[#allocation2 + $0xe0] sm:$0xff] %v5073
  %5106 = vst [vmem:[#allocation2 + $0xe8] sm:$0xff] %v5074
  %5107 = vst [vmem:[#allocation2 + $0xf0] sm:$0xff] %v5075
  %5108 = vst [vmem:[#allocation2 + $0xf8] sm:$0xff] %v5076
  %v5109 = vld [vmem:[#allocation3 + $0x18] sm:$0xff]
  %v5110 = vld [vmem:[#allocation3 + $0x20] sm:$0xff]
  %v5111 = vld [vmem:[#allocation3 + $0x28] sm:$0xff]
  %v5112 = vld [vmem:[#allocation3 + $0x30] sm:$0xff]
  %v5113 = vld [vmem:[#allocation3 + $0x38] sm:$0xff]
  %v5114 = vld [vmem:[#allocation3 + $0x40] sm:$0xff]
  %v5115 = vld [vmem:[#allocation3 + $0x48] sm:$0xff]
  %v5116 = vld [vmem:[#allocation3 + $0x50] sm:$0xff]
  %s5117 = scalar_lea.vmem %s3, 384
  %v5118 = vld [vmem:[%s5117] sm:$0xff]
  %v5119 = vld [vmem:[%s5117 + $0x8] sm:$0xff]
  %v5120 = vld [vmem:[%s5117 + $0x10] sm:$0xff]
  %v5121 = vld [vmem:[%s5117 + $0x18] sm:$0xff]
  %v5122 = vld [vmem:[%s5117 + $0x20] sm:$0xff]
  %v5123 = vld [vmem:[%s5117 + $0x28] sm:$0xff]
  %v5124 = vld [vmem:[%s5117 + $0x30] sm:$0xff]
  %v5125 = vld [vmem:[%s5117 + $0x38] sm:$0xff]
  %v5126 = vld [vmem:[%s5117 + $0x40] sm:$0xff]
  %v5127 = vld [vmem:[%s5117 + $0x48] sm:$0xff]
  %v5128 = vld [vmem:[%s5117 + $0x50] sm:$0xff]
  %v5129 = vld [vmem:[%s5117 + $0x58] sm:$0xff]
  %v5130 = vld [vmem:[%s5117 + $0x60] sm:$0xff]
  %v5131 = vld [vmem:[%s5117 + $0x68] sm:$0xff]
  %v5132 = vld [vmem:[%s5117 + $0x70] sm:$0xff]
  %v5133 = vld [vmem:[%s5117 + $0x78] sm:$0xff]
  %v5150 = vunpack.c.l.b16 %v5118
  %v5151 = vunpack.c.h.b16 %v5118
  %v5152 = vunpack.c.l.b16 %v5119
  %v5153 = vunpack.c.h.b16 %v5119
  %v5154 = vunpack.c.l.b16 %v5120
  %v5155 = vunpack.c.h.b16 %v5120
  %v5156 = vunpack.c.l.b16 %v5121
  %v5157 = vunpack.c.h.b16 %v5121
  %v5158 = vunpack.c.l.b16 %v5122
  %v5159 = vunpack.c.h.b16 %v5122
  %v5160 = vunpack.c.l.b16 %v5123
  %v5161 = vunpack.c.h.b16 %v5123
  %v5162 = vunpack.c.l.b16 %v5124
  %v5163 = vunpack.c.h.b16 %v5124
  %v5164 = vunpack.c.l.b16 %v5125
  %v5165 = vunpack.c.h.b16 %v5125
  %v5166 = vunpack.c.l.b16 %v5126
  %v5167 = vunpack.c.h.b16 %v5126
  %v5168 = vunpack.c.l.b16 %v5127
  %v5169 = vunpack.c.h.b16 %v5127
  %v5170 = vunpack.c.l.b16 %v5128
  %v5171 = vunpack.c.h.b16 %v5128
  %v5172 = vunpack.c.l.b16 %v5129
  %v5173 = vunpack.c.h.b16 %v5129
  %v5174 = vunpack.c.l.b16 %v5130
  %v5175 = vunpack.c.h.b16 %v5130
  %v5176 = vunpack.c.l.b16 %v5131
  %v5177 = vunpack.c.h.b16 %v5131
  %v5178 = vunpack.c.l.b16 %v5132
  %v5179 = vunpack.c.h.b16 %v5132
  %v5180 = vunpack.c.l.b16 %v5133
  %v5181 = vunpack.c.h.b16 %v5133
  %v5182 = vpack.c.b16 %v5152, %v5150
  %v5183 = vpack.c.b16 %v5153, %v5151
  %v5184 = vpack.c.b16 %v5156, %v5154
  %v5185 = vpack.c.b16 %v5157, %v5155
  %v5186 = vpack.c.b16 %v5160, %v5158
  %v5187 = vpack.c.b16 %v5161, %v5159
  %v5188 = vpack.c.b16 %v5164, %v5162
  %v5189 = vpack.c.b16 %v5165, %v5163
  %v5190 = vpack.c.b16 %v5168, %v5166
  %v5191 = vpack.c.b16 %v5169, %v5167
  %v5192 = vpack.c.b16 %v5172, %v5170
  %v5193 = vpack.c.b16 %v5173, %v5171
  %v5194 = vpack.c.b16 %v5176, %v5174
  %v5195 = vpack.c.b16 %v5177, %v5175
  %v5196 = vpack.c.b16 %v5180, %v5178
  %v5197 = vpack.c.b16 %v5181, %v5179
  %5214 = vmatprep.subr.bf16.mxu0 %v5183
  %5215 = vmatpush1.bf16.msra.mxu0 %v5182
  %5216 = vmatprep.subr.bf16.mxu0 %v5185
  %5217 = vmatpush1.bf16.msra.mxu0 %v5184
  %5218 = vmatprep.subr.bf16.mxu0 %v5187
  %5219 = vmatpush1.bf16.msra.mxu0 %v5186
  %5220 = vmatprep.subr.bf16.mxu0 %v5189
  %5221 = vmatpush1.bf16.msra.mxu0 %v5188
  %5222 = vmatprep.subr.bf16.mxu0 %v5191
  %5223 = vmatpush1.bf16.msra.mxu0 %v5190
  %5224 = vmatprep.subr.bf16.mxu0 %v5193
  %5225 = vmatpush1.bf16.msra.mxu0 %v5192
  %5226 = vmatprep.subr.bf16.mxu0 %v5195
  %5227 = vmatpush1.bf16.msra.mxu0 %v5194
  %5228 = vmatprep.subr.bf16.mxu0 %v5197
  %5229 = vmatpush1.bf16.msra.mxu0 %v5196
  %5230 = vmatprep.subr.bf16.mxu0 0
  %5231 = vmatpush1.bf16.msra.mxu0 0
  %5232 = vmatprep.subr.bf16.mxu0 0
  %5233 = vmatpush1.bf16.msra.mxu0 0
  %5234 = vmatprep.subr.bf16.mxu0 0
  %5235 = vmatpush1.bf16.msra.mxu0 0
  %5236 = vmatprep.subr.bf16.mxu0 0
  %5237 = vmatpush1.bf16.msra.mxu0 0
  %5238 = vmatprep.subr.bf16.mxu0 0
  %5239 = vmatpush1.bf16.msra.mxu0 0
  %5240 = vmatprep.subr.bf16.mxu0 0
  %5241 = vmatpush1.bf16.msra.mxu0 0
  %5242 = vmatprep.subr.bf16.mxu0 0
  %5243 = vmatpush1.bf16.msra.mxu0 0
  %5244 = vmatprep.subr.bf16.mxu0 0
  %5245 = vmatpush1.bf16.msra.mxu0 0
  %5246 = vmatprep.mubr.bf16.mxu0 0
  %5247 = vmatmul.mubr.bf16.gmra.mrb[0].mxu0 %v5109
  %v5248 = vpop.f32.mrb[0].mxu0
  %v5249 = vadd.f32 0.0, %v5248
  %v5250 = vpop.f32.mrb[0].mxu0
  %v5251 = vadd.f32 0.0, %v5250
  %v5252 = vpop.f32.mrb[0].mxu0
  %v5253 = vadd.f32 0.0, %v5252
  %v5254 = vpop.f32.mrb[0].mxu0
  %v5255 = vadd.f32 0.0, %v5254
  %5256 = vmatprep.mubr.bf16.mxu0 0
  %5257 = vmatmul.mubr.bf16.gmra.mrb[0].mxu0 %v5110
  %v5258 = vpop.f32.mrb[0].mxu0
  %v5259 = vadd.f32 0.0, %v5258
  %v5260 = vpop.f32.mrb[0].mxu0
  %v5261 = vadd.f32 0.0, %v5260
  %v5262 = vpop.f32.mrb[0].mxu0
  %v5263 = vadd.f32 0.0, %v5262
  %v5264 = vpop.f32.mrb[0].mxu0
  %v5265 = vadd.f32 0.0, %v5264
  %5266 = vmatprep.mubr.bf16.mxu0 0
  %5267 = vmatmul.mubr.bf16.gmra.mrb[0].mxu0 %v5111
  %v5268 = vpop.f32.mrb[0].mxu0
  %v5269 = vadd.f32 0.0, %v5268
  %v5270 = vpop.f32.mrb[0].mxu0
  %v5271 = vadd.f32 0.0, %v5270
  %v5272 = vpop.f32.mrb[0].mxu0
  %v5273 = vadd.f32 0.0, %v5272
  %v5274 = vpop.f32.mrb[0].mxu0
  %v5275 = vadd.f32 0.0, %v5274
  %5276 = vmatprep.mubr.bf16.mxu0 0
  %5277 = vmatmul.mubr.bf16.gmra.mrb[0].mxu0 %v5112
  %v5278 = vpop.f32.mrb[0].mxu0
  %v5279 = vadd.f32 0.0, %v5278
  %v5280 = vpop.f32.mrb[0].mxu0
  %v5281 = vadd.f32 0.0, %v5280
  %v5282 = vpop.f32.mrb[0].mxu0
  %v5283 = vadd.f32 0.0, %v5282
  %v5284 = vpop.f32.mrb[0].mxu0
  %v5285 = vadd.f32 0.0, %v5284
  %5286 = vmatprep.mubr.bf16.mxu0 0
  %5287 = vmatmul.mubr.bf16.gmra.mrb[0].mxu0 %v5113
  %v5288 = vpop.f32.mrb[0].mxu0
  %v5289 = vadd.f32 0.0, %v5288
  %v5290 = vpop.f32.mrb[0].mxu0
  %v5291 = vadd.f32 0.0, %v5290
  %v5292 = vpop.f32.mrb[0].mxu0
  %v5293 = vadd.f32 0.0, %v5292
  %v5294 = vpop.f32.mrb[0].mxu0
  %v5295 = vadd.f32 0.0, %v5294
  %5296 = vmatprep.mubr.bf16.mxu0 0
  %5297 = vmatmul.mubr.bf16.gmra.mrb[0].mxu0 %v5114
  %v5298 = vpop.f32.mrb[0].mxu0
  %v5299 = vadd.f32 0.0, %v5298
  %v5300 = vpop.f32.mrb[0].mxu0
  %v5301 = vadd.f32 0.0, %v5300
  %v5302 = vpop.f32.mrb[0].mxu0
  %v5303 = vadd.f32 0.0, %v5302
  %v5304 = vpop.f32.mrb[0].mxu0
  %v5305 = vadd.f32 0.0, %v5304
  %5306 = vmatprep.mubr.bf16.mxu0 0
  %5307 = vmatmul.mubr.bf16.gmra.mrb[0].mxu0 %v5115
  %v5308 = vpop.f32.mrb[0].mxu0
  %v5309 = vadd.f32 0.0, %v5308
  %v5310 = vpop.f32.mrb[0].mxu0
  %v5311 = vadd.f32 0.0, %v5310
  %v5312 = vpop.f32.mrb[0].mxu0
  %v5313 = vadd.f32 0.0, %v5312
  %v5314 = vpop.f32.mrb[0].mxu0
  %v5315 = vadd.f32 0.0, %v5314
  %5316 = vmatprep.mubr.bf16.mxu0 0
  %5317 = vmatmul.mubr.bf16.gmra.mrb[0].mxu0 %v5116
  %v5318 = vpop.f32.mrb[0].mxu0
  %v5319 = vadd.f32 0.0, %v5318
  %v5320 = vpop.f32.mrb[0].mxu0
  %v5321 = vadd.f32 0.0, %v5320
  %v5322 = vpop.f32.mrb[0].mxu0
  %v5323 = vadd.f32 0.0, %v5322
  %v5324 = vpop.f32.mrb[0].mxu0
  %v5325 = vadd.f32 0.0, %v5324
  %5326 = vdwg.mxu0
  %v5327 = vld [vmem:[#allocation2] sm:$0xff]
  %v5328 = vld [vmem:[#allocation2 + $0x8] sm:$0xff]
  %v5329 = vld [vmem:[#allocation2 + $0x10] sm:$0xff]
  %v5330 = vld [vmem:[#allocation2 + $0x18] sm:$0xff]
  %v5331 = vld [vmem:[#allocation2 + $0x20] sm:$0xff]
  %v5332 = vld [vmem:[#allocation2 + $0x28] sm:$0xff]
  %v5333 = vld [vmem:[#allocation2 + $0x30] sm:$0xff]
  %v5334 = vld [vmem:[#allocation2 + $0x38] sm:$0xff]
  %v5335 = vld [vmem:[#allocation2 + $0x40] sm:$0xff]
  %v5336 = vld [vmem:[#allocation2 + $0x48] sm:$0xff]
  %v5337 = vld [vmem:[#allocation2 + $0x50] sm:$0xff]
  %v5338 = vld [vmem:[#allocation2 + $0x58] sm:$0xff]
  %v5339 = vld [vmem:[#allocation2 + $0x60] sm:$0xff]
  %v5340 = vld [vmem:[#allocation2 + $0x68] sm:$0xff]
  %v5341 = vld [vmem:[#allocation2 + $0x70] sm:$0xff]
  %v5342 = vld [vmem:[#allocation2 + $0x78] sm:$0xff]
  %v5343 = vld [vmem:[#allocation2 + $0x80] sm:$0xff]
  %v5344 = vld [vmem:[#allocation2 + $0x88] sm:$0xff]
  %v5345 = vld [vmem:[#allocation2 + $0x90] sm:$0xff]
  %v5346 = vld [vmem:[#allocation2 + $0x98] sm:$0xff]
  %v5347 = vld [vmem:[#allocation2 + $0xa0] sm:$0xff]
  %v5348 = vld [vmem:[#allocation2 + $0xa8] sm:$0xff]
  %v5349 = vld [vmem:[#allocation2 + $0xb0] sm:$0xff]
  %v5350 = vld [vmem:[#allocation2 + $0xb8] sm:$0xff]
  %v5351 = vld [vmem:[#allocation2 + $0xc0] sm:$0xff]
  %v5352 = vld [vmem:[#allocation2 + $0xc8] sm:$0xff]
  %v5353 = vld [vmem:[#allocation2 + $0xd0] sm:$0xff]
  %v5354 = vld [vmem:[#allocation2 + $0xd8] sm:$0xff]
  %v5355 = vld [vmem:[#allocation2 + $0xe0] sm:$0xff]
  %v5356 = vld [vmem:[#allocation2 + $0xe8] sm:$0xff]
  %v5357 = vld [vmem:[#allocation2 + $0xf0] sm:$0xff]
  %v5358 = vld [vmem:[#allocation2 + $0xf8] sm:$0xff]
  %v5359 = vadd.f32 %v5327, %v5249
  %v5360 = vadd.f32 %v5328, %v5251
  %v5361 = vadd.f32 %v5329, %v5253
  %v5362 = vadd.f32 %v5330, %v5255
  %v5363 = vadd.f32 %v5331, %v5259
  %v5364 = vadd.f32 %v5332, %v5261
  %v5365 = vadd.f32 %v5333, %v5263
  %v5366 = vadd.f32 %v5334, %v5265
  %v5367 = vadd.f32 %v5335, %v5269
  %v5368 = vadd.f32 %v5336, %v5271
  %v5369 = vadd.f32 %v5337, %v5273
  %v5370 = vadd.f32 %v5338, %v5275
  %v5371 = vadd.f32 %v5339, %v5279
  %v5372 = vadd.f32 %v5340, %v5281
  %v5373 = vadd.f32 %v5341, %v5283
  %v5374 = vadd.f32 %v5342, %v5285
  %v5375 = vadd.f32 %v5343, %v5289
  %v5376 = vadd.f32 %v5344, %v5291
  %v5377 = vadd.f32 %v5345, %v5293
  %v5378 = vadd.f32 %v5346, %v5295
  %v5379 = vadd.f32 %v5347, %v5299
  %v5380 = vadd.f32 %v5348, %v5301
  %v5381 = vadd.f32 %v5349, %v5303
  %v5382 = vadd.f32 %v5350, %v5305
  %v5383 = vadd.f32 %v5351, %v5309
  %v5384 = vadd.f32 %v5352, %v5311
  %v5385 = vadd.f32 %v5353, %v5313
  %v5386 = vadd.f32 %v5354, %v5315
  %v5387 = vadd.f32 %v5355, %v5319
  %v5388 = vadd.f32 %v5356, %v5321
  %v5389 = vadd.f32 %v5357, %v5323
  %v5390 = vadd.f32 %v5358, %v5325
  %5391 = vst [vmem:[#allocation2] sm:$0xff] %v5359
  %5392 = vst [vmem:[#allocation2 + $0x8] sm:$0xff] %v5360
  %5393 = vst [vmem:[#allocation2 + $0x10] sm:$0xff] %v5361
  %5394 = vst [vmem:[#allocation2 + $0x18] sm:$0xff] %v5362
  %5395 = vst [vmem:[#allocation2 + $0x20] sm:$0xff] %v5363
  %5396 = vst [vmem:[#allocation2 + $0x28] sm:$0xff] %v5364
  %5397 = vst [vmem:[#allocation2 + $0x30] sm:$0xff] %v5365
  %5398 = vst [vmem:[#allocation2 + $0x38] sm:$0xff] %v5366
  %5399 = vst [vmem:[#allocation2 + $0x40] sm:$0xff] %v5367
  %5400 = vst [vmem:[#allocation2 + $0x48] sm:$0xff] %v5368
  %5401 = vst [vmem:[#allocation2 + $0x50] sm:$0xff] %v5369
  %5402 = vst [vmem:[#allocation2 + $0x58] sm:$0xff] %v5370
  %5403 = vst [vmem:[#allocation2 + $0x60] sm:$0xff] %v5371
  %5404 = vst [vmem:[#allocation2 + $0x68] sm:$0xff] %v5372
  %5405 = vst [vmem:[#allocation2 + $0x70] sm:$0xff] %v5373
  %5406 = vst [vmem:[#allocation2 + $0x78] sm:$0xff] %v5374
  %5407 = vst [vmem:[#allocation2 + $0x80] sm:$0xff] %v5375
  %5408 = vst [vmem:[#allocation2 + $0x88] sm:$0xff] %v5376
  %5409 = vst [vmem:[#allocation2 + $0x90] sm:$0xff] %v5377
  %5410 = vst [vmem:[#allocation2 + $0x98] sm:$0xff] %v5378
  %5411 = vst [vmem:[#allocation2 + $0xa0] sm:$0xff] %v5379
  %5412 = vst [vmem:[#allocation2 + $0xa8] sm:$0xff] %v5380
  %5413 = vst [vmem:[#allocation2 + $0xb0] sm:$0xff] %v5381
  %5414 = vst [vmem:[#allocation2 + $0xb8] sm:$0xff] %v5382
  %5415 = vst [vmem:[#allocation2 + $0xc0] sm:$0xff] %v5383
  %5416 = vst [vmem:[#allocation2 + $0xc8] sm:$0xff] %v5384
  %5417 = vst [vmem:[#allocation2 + $0xd0] sm:$0xff] %v5385
  %5418 = vst [vmem:[#allocation2 + $0xd8] sm:$0xff] %v5386
  %5419 = vst [vmem:[#allocation2 + $0xe0] sm:$0xff] %v5387
  %5420 = vst [vmem:[#allocation2 + $0xe8] sm:$0xff] %v5388
  %5421 = vst [vmem:[#allocation2 + $0xf0] sm:$0xff] %v5389
  %5422 = vst [vmem:[#allocation2 + $0xf8] sm:$0xff] %v5390
  %v5423 = vld [vmem:[#allocation3 + $0x20] sm:$0xff]
  %v5424 = vld [vmem:[#allocation3 + $0x28] sm:$0xff]
  %v5425 = vld [vmem:[#allocation3 + $0x30] sm:$0xff]
  %v5426 = vld [vmem:[#allocation3 + $0x38] sm:$0xff]
  %v5427 = vld [vmem:[#allocation3 + $0x40] sm:$0xff]
  %v5428 = vld [vmem:[#allocation3 + $0x48] sm:$0xff]
  %v5429 = vld [vmem:[#allocation3 + $0x50] sm:$0xff]
  %v5430 = vld [vmem:[#allocation3 + $0x58] sm:$0xff]
  %s5431 = scalar_lea.vmem %s3, 512
  %v5432 = vld [vmem:[%s5431] sm:$0xff]
  %v5433 = vld [vmem:[%s5431 + $0x8] sm:$0xff]
  %v5434 = vld [vmem:[%s5431 + $0x10] sm:$0xff]
  %v5435 = vld [vmem:[%s5431 + $0x18] sm:$0xff]
  %v5436 = vld [vmem:[%s5431 + $0x20] sm:$0xff]
  %v5437 = vld [vmem:[%s5431 + $0x28] sm:$0xff]
  %v5438 = vld [vmem:[%s5431 + $0x30] sm:$0xff]
  %v5439 = vld [vmem:[%s5431 + $0x38] sm:$0xff]
  %v5440 = vld [vmem:[%s5431 + $0x40] sm:$0xff]
  %v5441 = vld [vmem:[%s5431 + $0x48] sm:$0xff]
  %v5442 = vld [vmem:[%s5431 + $0x50] sm:$0xff]
  %v5443 = vld [vmem:[%s5431 + $0x58] sm:$0xff]
  %v5444 = vld [vmem:[%s5431 + $0x60] sm:$0xff]
  %v5445 = vld [vmem:[%s5431 + $0x68] sm:$0xff]
  %v5446 = vld [vmem:[%s5431 + $0x70] sm:$0xff]
  %v5447 = vld [vmem:[%s5431 + $0x78] sm:$0xff]
  %v5464 = vunpack.c.l.b16 %v5432
  %v5465 = vunpack.c.h.b16 %v5432
  %v5466 = vunpack.c.l.b16 %v5433
  %v5467 = vunpack.c.h.b16 %v5433
  %v5468 = vunpack.c.l.b16 %v5434
  %v5469 = vunpack.c.h.b16 %v5434
  %v5470 = vunpack.c.l.b16 %v5435
  %v5471 = vunpack.c.h.b16 %v5435
  %v5472 = vunpack.c.l.b16 %v5436
  %v5473 = vunpack.c.h.b16 %v5436
  %v5474 = vunpack.c.l.b16 %v5437
  %v5475 = vunpack.c.h.b16 %v5437
  %v5476 = vunpack.c.l.b16 %v5438
  %v5477 = vunpack.c.h.b16 %v5438
  %v5478 = vunpack.c.l.b16 %v5439
  %v5479 = vunpack.c.h.b16 %v5439
  %v5480 = vunpack.c.l.b16 %v5440
  %v5481 = vunpack.c.h.b16 %v5440
  %v5482 = vunpack.c.l.b16 %v5441
  %v5483 = vunpack.c.h.b16 %v5441
  %v5484 = vunpack.c.l.b16 %v5442
  %v5485 = vunpack.c.h.b16 %v5442
  %v5486 = vunpack.c.l.b16 %v5443
  %v5487 = vunpack.c.h.b16 %v5443
  %v5488 = vunpack.c.l.b16 %v5444
  %v5489 = vunpack.c.h.b16 %v5444
  %v5490 = vunpack.c.l.b16 %v5445
  %v5491 = vunpack.c.h.b16 %v5445
  %v5492 = vunpack.c.l.b16 %v5446
  %v5493 = vunpack.c.h.b16 %v5446
  %v5494 = vunpack.c.l.b16 %v5447
  %v5495 = vunpack.c.h.b16 %v5447
  %v5496 = vpack.c.b16 %v5466, %v5464
  %v5497 = vpack.c.b16 %v5467, %v5465
  %v5498 = vpack.c.b16 %v5470, %v5468
  %v5499 = vpack.c.b16 %v5471, %v5469
  %v5500 = vpack.c.b16 %v5474, %v5472
  %v5501 = vpack.c.b16 %v5475, %v5473
  %v5502 = vpack.c.b16 %v5478, %v5476
  %v5503 = vpack.c.b16 %v5479, %v5477
  %v5504 = vpack.c.b16 %v5482, %v5480
  %v5505 = vpack.c.b16 %v5483, %v5481
  %v5506 = vpack.c.b16 %v5486, %v5484
  %v5507 = vpack.c.b16 %v5487, %v5485
  %v5508 = vpack.c.b16 %v5490, %v5488
  %v5509 = vpack.c.b16 %v5491, %v5489
  %v5510 = vpack.c.b16 %v5494, %v5492
  %v5511 = vpack.c.b16 %v5495, %v5493
  %5528 = vmatprep.subr.bf16.mxu0 %v5497
  %5529 = vmatpush1.bf16.msra.mxu0 %v5496
  %5530 = vmatprep.subr.bf16.mxu0 %v5499
  %5531 = vmatpush1.bf16.msra.mxu0 %v5498
  %5532 = vmatprep.subr.bf16.mxu0 %v5501
  %5533 = vmatpush1.bf16.msra.mxu0 %v5500
  %5534 = vmatprep.subr.bf16.mxu0 %v5503
  %5535 = vmatpush1.bf16.msra.mxu0 %v5502
  %5536 = vmatprep.subr.bf16.mxu0 %v5505
  %5537 = vmatpush1.bf16.msra.mxu0 %v5504
  %5538 = vmatprep.subr.bf16.mxu0 %v5507
  %5539 = vmatpush1.bf16.msra.mxu0 %v5506
  %5540 = vmatprep.subr.bf16.mxu0 %v5509
  %5541 = vmatpush1.bf16.msra.mxu0 %v5508
  %5542 = vmatprep.subr.bf16.mxu0 %v5511
  %5543 = vmatpush1.bf16.msra.mxu0 %v5510
  %5544 = vmatprep.subr.bf16.mxu0 0
  %5545 = vmatpush1.bf16.msra.mxu0 0
  %5546 = vmatprep.subr.bf16.mxu0 0
  %5547 = vmatpush1.bf16.msra.mxu0 0
  %5548 = vmatprep.subr.bf16.mxu0 0
  %5549 = vmatpush1.bf16.msra.mxu0 0
  %5550 = vmatprep.subr.bf16.mxu0 0
  %5551 = vmatpush1.bf16.msra.mxu0 0
  %5552 = vmatprep.subr.bf16.mxu0 0
  %5553 = vmatpush1.bf16.msra.mxu0 0
  %5554 = vmatprep.subr.bf16.mxu0 0
  %5555 = vmatpush1.bf16.msra.mxu0 0
  %5556 = vmatprep.subr.bf16.mxu0 0
  %5557 = vmatpush1.bf16.msra.mxu0 0
  %5558 = vmatprep.subr.bf16.mxu0 0
  %5559 = vmatpush1.bf16.msra.mxu0 0
  %5560 = vmatprep.mubr.bf16.mxu0 0
  %5561 = vmatmul.mubr.bf16.gmra.mrb[0].mxu0 %v5423
  %v5562 = vpop.f32.mrb[0].mxu0
  %v5563 = vadd.f32 0.0, %v5562
  %v5564 = vpop.f32.mrb[0].mxu0
  %v5565 = vadd.f32 0.0, %v5564
  %v5566 = vpop.f32.mrb[0].mxu0
  %v5567 = vadd.f32 0.0, %v5566
  %v5568 = vpop.f32.mrb[0].mxu0
  %v5569 = vadd.f32 0.0, %v5568
  %5570 = vmatprep.mubr.bf16.mxu0 0
  %5571 = vmatmul.mubr.bf16.gmra.mrb[0].mxu0 %v5424
  %v5572 = vpop.f32.mrb[0].mxu0
  %v5573 = vadd.f32 0.0, %v5572
  %v5574 = vpop.f32.mrb[0].mxu0
  %v5575 = vadd.f32 0.0, %v5574
  %v5576 = vpop.f32.mrb[0].mxu0
  %v5577 = vadd.f32 0.0, %v5576
  %v5578 = vpop.f32.mrb[0].mxu0
  %v5579 = vadd.f32 0.0, %v5578
  %5580 = vmatprep.mubr.bf16.mxu0 0
  %5581 = vmatmul.mubr.bf16.gmra.mrb[0].mxu0 %v5425
  %v5582 = vpop.f32.mrb[0].mxu0
  %v5583 = vadd.f32 0.0, %v5582
  %v5584 = vpop.f32.mrb[0].mxu0
  %v5585 = vadd.f32 0.0, %v5584
  %v5586 = vpop.f32.mrb[0].mxu0
  %v5587 = vadd.f32 0.0, %v5586
  %v5588 = vpop.f32.mrb[0].mxu0
  %v5589 = vadd.f32 0.0, %v5588
  %5590 = vmatprep.mubr.bf16.mxu0 0
  %5591 = vmatmul.mubr.bf16.gmra.mrb[0].mxu0 %v5426
  %v5592 = vpop.f32.mrb[0].mxu0
  %v5593 = vadd.f32 0.0, %v5592
  %v5594 = vpop.f32.mrb[0].mxu0
  %v5595 = vadd.f32 0.0, %v5594
  %v5596 = vpop.f32.mrb[0].mxu0
  %v5597 = vadd.f32 0.0, %v5596
  %v5598 = vpop.f32.mrb[0].mxu0
  %v5599 = vadd.f32 0.0, %v5598
  %5600 = vmatprep.mubr.bf16.mxu0 0
  %5601 = vmatmul.mubr.bf16.gmra.mrb[0].mxu0 %v5427
  %v5602 = vpop.f32.mrb[0].mxu0
  %v5603 = vadd.f32 0.0, %v5602
  %v5604 = vpop.f32.mrb[0].mxu0
  %v5605 = vadd.f32 0.0, %v5604
  %v5606 = vpop.f32.mrb[0].mxu0
  %v5607 = vadd.f32 0.0, %v5606
  %v5608 = vpop.f32.mrb[0].mxu0
  %v5609 = vadd.f32 0.0, %v5608
  %5610 = vmatprep.mubr.bf16.mxu0 0
  %5611 = vmatmul.mubr.bf16.gmra.mrb[0].mxu0 %v5428
  %v5612 = vpop.f32.mrb[0].mxu0
  %v5613 = vadd.f32 0.0, %v5612
  %v5614 = vpop.f32.mrb[0].mxu0
  %v5615 = vadd.f32 0.0, %v5614
  %v5616 = vpop.f32.mrb[0].mxu0
  %v5617 = vadd.f32 0.0, %v5616
  %v5618 = vpop.f32.mrb[0].mxu0
  %v5619 = vadd.f32 0.0, %v5618
  %5620 = vmatprep.mubr.bf16.mxu0 0
  %5621 = vmatmul.mubr.bf16.gmra.mrb[0].mxu0 %v5429
  %v5622 = vpop.f32.mrb[0].mxu0
  %v5623 = vadd.f32 0.0, %v5622
  %v5624 = vpop.f32.mrb[0].mxu0
  %v5625 = vadd.f32 0.0, %v5624
  %v5626 = vpop.f32.mrb[0].mxu0
  %v5627 = vadd.f32 0.0, %v5626
  %v5628 = vpop.f32.mrb[0].mxu0
  %v5629 = vadd.f32 0.0, %v5628
  %5630 = vmatprep.mubr.bf16.mxu0 0
  %5631 = vmatmul.mubr.bf16.gmra.mrb[0].mxu0 %v5430
  %v5632 = vpop.f32.mrb[0].mxu0
  %v5633 = vadd.f32 0.0, %v5632
  %v5634 = vpop.f32.mrb[0].mxu0
  %v5635 = vadd.f32 0.0, %v5634
  %v5636 = vpop.f32.mrb[0].mxu0
  %v5637 = vadd.f32 0.0, %v5636
  %v5638 = vpop.f32.mrb[0].mxu0
  %v5639 = vadd.f32 0.0, %v5638
  %5640 = vdwg.mxu0
  %v5641 = vld [vmem:[#allocation2] sm:$0xff]
  %v5642 = vld [vmem:[#allocation2 + $0x8] sm:$0xff]
  %v5643 = vld [vmem:[#allocation2 + $0x10] sm:$0xff]
  %v5644 = vld [vmem:[#allocation2 + $0x18] sm:$0xff]
  %v5645 = vld [vmem:[#allocation2 + $0x20] sm:$0xff]
  %v5646 = vld [vmem:[#allocation2 + $0x28] sm:$0xff]
  %v5647 = vld [vmem:[#allocation2 + $0x30] sm:$0xff]
  %v5648 = vld [vmem:[#allocation2 + $0x38] sm:$0xff]
  %v5649 = vld [vmem:[#allocation2 + $0x40] sm:$0xff]
  %v5650 = vld [vmem:[#allocation2 + $0x48] sm:$0xff]
  %v5651 = vld [vmem:[#allocation2 + $0x50] sm:$0xff]
  %v5652 = vld [vmem:[#allocation2 + $0x58] sm:$0xff]
  %v5653 = vld [vmem:[#allocation2 + $0x60] sm:$0xff]
  %v5654 = vld [vmem:[#allocation2 + $0x68] sm:$0xff]
  %v5655 = vld [vmem:[#allocation2 + $0x70] sm:$0xff]
  %v5656 = vld [vmem:[#allocation2 + $0x78] sm:$0xff]
  %v5657 = vld [vmem:[#allocation2 + $0x80] sm:$0xff]
  %v5658 = vld [vmem:[#allocation2 + $0x88] sm:$0xff]
  %v5659 = vld [vmem:[#allocation2 + $0x90] sm:$0xff]
  %v5660 = vld [vmem:[#allocation2 + $0x98] sm:$0xff]
  %v5661 = vld [vmem:[#allocation2 + $0xa0] sm:$0xff]
  %v5662 = vld [vmem:[#allocation2 + $0xa8] sm:$0xff]
  %v5663 = vld [vmem:[#allocation2 + $0xb0] sm:$0xff]
  %v5664 = vld [vmem:[#allocation2 + $0xb8] sm:$0xff]
  %v5665 = vld [vmem:[#allocation2 + $0xc0] sm:$0xff]
  %v5666 = vld [vmem:[#allocation2 + $0xc8] sm:$0xff]
  %v5667 = vld [vmem:[#allocation2 + $0xd0] sm:$0xff]
  %v5668 = vld [vmem:[#allocation2 + $0xd8] sm:$0xff]
  %v5669 = vld [vmem:[#allocation2 + $0xe0] sm:$0xff]
  %v5670 = vld [vmem:[#allocation2 + $0xe8] sm:$0xff]
  %v5671 = vld [vmem:[#allocation2 + $0xf0] sm:$0xff]
  %v5672 = vld [vmem:[#allocation2 + $0xf8] sm:$0xff]
  %v5673 = vadd.f32 %v5641, %v5563
  %v5674 = vadd.f32 %v5642, %v5565
  %v5675 = vadd.f32 %v5643, %v5567
  %v5676 = vadd.f32 %v5644, %v5569
  %v5677 = vadd.f32 %v5645, %v5573
  %v5678 = vadd.f32 %v5646, %v5575
  %v5679 = vadd.f32 %v5647, %v5577
  %v5680 = vadd.f32 %v5648, %v5579
  %v5681 = vadd.f32 %v5649, %v5583
  %v5682 = vadd.f32 %v5650, %v5585
  %v5683 = vadd.f32 %v5651, %v5587
  %v5684 = vadd.f32 %v5652, %v5589
  %v5685 = vadd.f32 %v5653, %v5593
  %v5686 = vadd.f32 %v5654, %v5595
  %v5687 = vadd.f32 %v5655, %v5597
  %v5688 = vadd.f32 %v5656, %v5599
  %v5689 = vadd.f32 %v5657, %v5603
  %v5690 = vadd.f32 %v5658, %v5605
  %v5691 = vadd.f32 %v5659, %v5607
  %v5692 = vadd.f32 %v5660, %v5609
  %v5693 = vadd.f32 %v5661, %v5613
  %v5694 = vadd.f32 %v5662, %v5615
  %v5695 = vadd.f32 %v5663, %v5617
  %v5696 = vadd.f32 %v5664, %v5619
  %v5697 = vadd.f32 %v5665, %v5623
  %v5698 = vadd.f32 %v5666, %v5625
  %v5699 = vadd.f32 %v5667, %v5627
  %v5700 = vadd.f32 %v5668, %v5629
  %v5701 = vadd.f32 %v5669, %v5633
  %v5702 = vadd.f32 %v5670, %v5635
  %v5703 = vadd.f32 %v5671, %v5637
  %v5704 = vadd.f32 %v5672, %v5639
  %5705 = vst [vmem:[#allocation2] sm:$0xff] %v5673
  %5706 = vst [vmem:[#allocation2 + $0x8] sm:$0xff] %v5674
  %5707 = vst [vmem:[#allocation2 + $0x10] sm:$0xff] %v5675
  %5708 = vst [vmem:[#allocation2 + $0x18] sm:$0xff] %v5676
  %5709 = vst [vmem:[#allocation2 + $0x20] sm:$0xff] %v5677
  %5710 = vst [vmem:[#allocation2 + $0x28] sm:$0xff] %v5678
  %5711 = vst [vmem:[#allocation2 + $0x30] sm:$0xff] %v5679
  %5712 = vst [vmem:[#allocation2 + $0x38] sm:$0xff] %v5680
  %5713 = vst [vmem:[#allocation2 + $0x40] sm:$0xff] %v5681
  %5714 = vst [vmem:[#allocation2 + $0x48] sm:$0xff] %v5682
  %5715 = vst [vmem:[#allocation2 + $0x50] sm:$0xff] %v5683
  %5716 = vst [vmem:[#allocation2 + $0x58] sm:$0xff] %v5684
  %5717 = vst [vmem:[#allocation2 + $0x60] sm:$0xff] %v5685
  %5718 = vst [vmem:[#allocation2 + $0x68] sm:$0xff] %v5686
  %5719 = vst [vmem:[#allocation2 + $0x70] sm:$0xff] %v5687
  %5720 = vst [vmem:[#allocation2 + $0x78] sm:$0xff] %v5688
  %5721 = vst [vmem:[#allocation2 + $0x80] sm:$0xff] %v5689
  %5722 = vst [vmem:[#allocation2 + $0x88] sm:$0xff] %v5690
  %5723 = vst [vmem:[#allocation2 + $0x90] sm:$0xff] %v5691
  %5724 = vst [vmem:[#allocation2 + $0x98] sm:$0xff] %v5692
  %5725 = vst [vmem:[#allocation2 + $0xa0] sm:$0xff] %v5693
  %5726 = vst [vmem:[#allocation2 + $0xa8] sm:$0xff] %v5694
  %5727 = vst [vmem:[#allocation2 + $0xb0] sm:$0xff] %v5695
  %5728 = vst [vmem:[#allocation2 + $0xb8] sm:$0xff] %v5696
  %5729 = vst [vmem:[#allocation2 + $0xc0] sm:$0xff] %v5697
  %5730 = vst [vmem:[#allocation2 + $0xc8] sm:$0xff] %v5698
  %5731 = vst [vmem:[#allocation2 + $0xd0] sm:$0xff] %v5699
  %5732 = vst [vmem:[#allocation2 + $0xd8] sm:$0xff] %v5700
  %5733 = vst [vmem:[#allocation2 + $0xe0] sm:$0xff] %v5701
  %5734 = vst [vmem:[#allocation2 + $0xe8] sm:$0xff] %v5702
  %5735 = vst [vmem:[#allocation2 + $0xf0] sm:$0xff] %v5703
  %5736 = vst [vmem:[#allocation2 + $0xf8] sm:$0xff] %v5704
  %v5737 = vld [vmem:[#allocation2] sm:$0xff]
  %v5738 = vld [vmem:[#allocation2 + $0x8] sm:$0xff]
  %v5739 = vld [vmem:[#allocation2 + $0x10] sm:$0xff]
  %v5740 = vld [vmem:[#allocation2 + $0x18] sm:$0xff]
  %v5741 = vld [vmem:[#allocation2 + $0x20] sm:$0xff]
  %v5742 = vld [vmem:[#allocation2 + $0x28] sm:$0xff]
  %v5743 = vld [vmem:[#allocation2 + $0x30] sm:$0xff]
  %v5744 = vld [vmem:[#allocation2 + $0x38] sm:$0xff]
  %v5745 = vmax.f32 %v5737, %v5741
  %v5746 = vmax.f32 %v5738, %v5742
  %v5747 = vmax.f32 %v5739, %v5743
  %v5748 = vmax.f32 %v5740, %v5744
  %v5749 = vmax.f32 %v5745, %v5746
  %v5750 = vmax.f32 %v5747, %v5748
  %v5751 = vmax.f32 %v5749, 0.0
  %v5752 = vmax.f32 %v5750, 0.0
  %v5753 = vpack.c.bf16 %v5752, %v5751
  %5754 = vst [vmem:[#allocation4] sm:$0xff] %v5753
  %v5755 = vld [vmem:[#allocation2 + $0x40] sm:$0xff]
  %v5756 = vld [vmem:[#allocation2 + $0x48] sm:$0xff]
  %v5757 = vld [vmem:[#allocation2 + $0x50] sm:$0xff]
  %v5758 = vld [vmem:[#allocation2 + $0x58] sm:$0xff]
  %v5759 = vld [vmem:[#allocation2 + $0x60] sm:$0xff]
  %v5760 = vld [vmem:[#allocation2 + $0x68] sm:$0xff]
  %v5761 = vld [vmem:[#allocation2 + $0x70] sm:$0xff]
  %v5762 = vld [vmem:[#allocation2 + $0x78] sm:$0xff]
  %v5763 = vmax.f32 %v5755, %v5759
  %v5764 = vmax.f32 %v5756, %v5760
  %v5765 = vmax.f32 %v5757, %v5761
  %v5766 = vmax.f32 %v5758, %v5762
  %v5767 = vmax.f32 %v5763, %v5764
  %v5768 = vmax.f32 %v5765, %v5766
  %v5769 = vmax.f32 %v5767, 0.0
  %v5770 = vmax.f32 %v5768, 0.0
  %v5771 = vpack.c.bf16 %v5770, %v5769
  %5772 = vst [vmem:[#allocation4 + $0x8] sm:$0xff] %v5771
  %v5773 = vld [vmem:[#allocation2 + $0x80] sm:$0xff]
  %v5774 = vld [vmem:[#allocation2 + $0x88] sm:$0xff]
  %v5775 = vld [vmem:[#allocation2 + $0x90] sm:$0xff]
  %v5776 = vld [vmem:[#allocation2 + $0x98] sm:$0xff]
  %v5777 = vld [vmem:[#allocation2 + $0xa0] sm:$0xff]
  %v5778 = vld [vmem:[#allocation2 + $0xa8] sm:$0xff]
  %v5779 = vld [vmem:[#allocation2 + $0xb0] sm:$0xff]
  %v5780 = vld [vmem:[#allocation2 + $0xb8] sm:$0xff]
  %v5781 = vmax.f32 %v5773, %v5777
  %v5782 = vmax.f32 %v5774, %v5778
  %v5783 = vmax.f32 %v5775, %v5779
  %v5784 = vmax.f32 %v5776, %v5780
  %v5785 = vmax.f32 %v5781, %v5782
  %v5786 = vmax.f32 %v5783, %v5784
  %v5787 = vmax.f32 %v5785, 0.0
  %v5788 = vmax.f32 %v5786, 0.0
  %v5789 = vpack.c.bf16 %v5788, %v5787
  %5790 = vst [vmem:[#allocation4 + $0x10] sm:$0xff] %v5789
  %v5791 = vld [vmem:[#allocation2 + $0xc0] sm:$0xff]
  %v5792 = vld [vmem:[#allocation2 + $0xc8] sm:$0xff]
  %v5793 = vld [vmem:[#allocation2 + $0xd0] sm:$0xff]
  %v5794 = vld [vmem:[#allocation2 + $0xd8] sm:$0xff]
  %v5795 = vld [vmem:[#allocation2 + $0xe0] sm:$0xff]
  %v5796 = vld [vmem:[#allocation2 + $0xe8] sm:$0xff]
  %v5797 = vld [vmem:[#allocation2 + $0xf0] sm:$0xff]
  %v5798 = vld [vmem:[#allocation2 + $0xf8] sm:$0xff]
  %v5799 = vmax.f32 %v5791, %v5795
  %v5800 = vmax.f32 %v5792, %v5796
  %v5801 = vmax.f32 %v5793, %v5797
  %v5802 = vmax.f32 %v5794, %v5798
  %v5803 = vmax.f32 %v5799, %v5800
  %v5804 = vmax.f32 %v5801, %v5802
  %v5805 = vmax.f32 %v5803, 0.0
  %v5806 = vmax.f32 %v5804, 0.0
  %v5807 = vpack.c.bf16 %v5806, %v5805
  %5808 = vst [vmem:[#allocation4 + $0x18] sm:$0xff] %v5807
  %v5809 = vld [vmem:[#allocation4] sm:$0xff]
  %v5810 = vld [vmem:[#allocation4 + $0x8] sm:$0xff]
  %v5811 = vld [vmem:[#allocation4 + $0x10] sm:$0xff]
  %v5812 = vld [vmem:[#allocation4 + $0x18] sm:$0xff]
  %v5813 = vld [vmem:[%s5] sm:$0xf]
  %v5814 = vld [vmem:[%s5 + $0x4] sm:$0xf]
  %v5815 = vld [vmem:[%s5 + $0x8] sm:$0xf]
  %v5816 = vld [vmem:[%s5 + $0xc] sm:$0xf]
  %v5817 = vld [vmem:[%s5 + $0x10] sm:$0xf]
  %v5818 = vld [vmem:[%s5 + $0x14] sm:$0xf]
  %v5819 = vld [vmem:[%s5 + $0x18] sm:$0xf]
  %v5820 = vld [vmem:[%s5 + $0x1c] sm:$0xf]
  %v5821 = vld [vmem:[%s5 + $0x20] sm:$0xf]
  %v5822 = vld [vmem:[%s5 + $0x24] sm:$0xf]
  %v5823 = vld [vmem:[%s5 + $0x28] sm:$0xf]
  %v5824 = vld [vmem:[%s5 + $0x2c] sm:$0xf]
  %v5825 = vld [vmem:[%s5 + $0x30] sm:$0xf]
  %v5826 = vld [vmem:[%s5 + $0x34] sm:$0xf]
  %v5827 = vld [vmem:[%s5 + $0x38] sm:$0xf]
  %v5828 = vld [vmem:[%s5 + $0x3c] sm:$0xf]
  %v5829 = vld [vmem:[%s5 + $0x40] sm:$0xf]
  %v5830 = vld [vmem:[%s5 + $0x44] sm:$0xf]
  %v5831 = vld [vmem:[%s5 + $0x48] sm:$0xf]
  %v5832 = vld [vmem:[%s5 + $0x4c] sm:$0xf]
  %v5833 = vld [vmem:[%s5 + $0x50] sm:$0xf]
  %v5834 = vld [vmem:[%s5 + $0x54] sm:$0xf]
  %v5835 = vld [vmem:[%s5 + $0x58] sm:$0xf]
  %v5836 = vld [vmem:[%s5 + $0x5c] sm:$0xf]
  %v5837 = vld [vmem:[%s5 + $0x60] sm:$0xf]
  %v5838 = vld [vmem:[%s5 + $0x64] sm:$0xf]
  %v5839 = vld [vmem:[%s5 + $0x68] sm:$0xf]
  %v5840 = vld [vmem:[%s5 + $0x6c] sm:$0xf]
  %v5841 = vld [vmem:[%s5 + $0x70] sm:$0xf]
  %v5842 = vld [vmem:[%s5 + $0x74] sm:$0xf]
  %v5843 = vld [vmem:[%s5 + $0x78] sm:$0xf]
  %v5844 = vld [vmem:[%s5 + $0x7c] sm:$0xf]
  %v5845 = vld [vmem:[%s5 + $0x80] sm:$0xf]
  %v5846 = vld [vmem:[%s5 + $0x84] sm:$0xf]
  %v5847 = vld [vmem:[%s5 + $0x88] sm:$0xf]
  %v5848 = vld [vmem:[%s5 + $0x8c] sm:$0xf]
  %v5849 = vld [vmem:[%s5 + $0x90] sm:$0xf]
  %v5850 = vld [vmem:[%s5 + $0x94] sm:$0xf]
  %v5851 = vld [vmem:[%s5 + $0x98] sm:$0xf]
  %v5852 = vld [vmem:[%s5 + $0x9c] sm:$0xf]
  %v5853 = vld [vmem:[%s5 + $0xa0] sm:$0xf]
  %v5854 = vld [vmem:[%s5 + $0xa4] sm:$0xf]
  %v5855 = vld [vmem:[%s5 + $0xa8] sm:$0xf]
  %v5856 = vld [vmem:[%s5 + $0xac] sm:$0xf]
  %v5857 = vld [vmem:[%s5 + $0xb0] sm:$0xf]
  %v5858 = vld [vmem:[%s5 + $0xb4] sm:$0xf]
  %v5859 = vld [vmem:[%s5 + $0xb8] sm:$0xf]
  %v5860 = vld [vmem:[%s5 + $0xbc] sm:$0xf]
  %v5861 = vld [vmem:[%s5 + $0xc0] sm:$0xf]
  %v5862 = vld [vmem:[%s5 + $0xc4] sm:$0xf]
  %v5863 = vld [vmem:[%s5 + $0xc8] sm:$0xf]
  %v5864 = vld [vmem:[%s5 + $0xcc] sm:$0xf]
  %v5865 = vld [vmem:[%s5 + $0xd0] sm:$0xf]
  %v5866 = vld [vmem:[%s5 + $0xd4] sm:$0xf]
  %v5867 = vld [vmem:[%s5 + $0xd8] sm:$0xf]
  %v5868 = vld [vmem:[%s5 + $0xdc] sm:$0xf]
  %v5869 = vld [vmem:[%s5 + $0xe0] sm:$0xf]
  %v5870 = vld [vmem:[%s5 + $0xe4] sm:$0xf]
  %v5871 = vld [vmem:[%s5 + $0xe8] sm:$0xf]
  %v5872 = vld [vmem:[%s5 + $0xec] sm:$0xf]
  %v5873 = vld [vmem:[%s5 + $0xf0] sm:$0xf]
  %v5874 = vld [vmem:[%s5 + $0xf4] sm:$0xf]
  %v5875 = vld [vmem:[%s5 + $0xf8] sm:$0xf]
  %v5876 = vld [vmem:[%s5 + $0xfc] sm:$0xf]
  %v5877 = vld [vmem:[%s6] sm:$0x1]
  %v5879 = vlaneseq
  %v5880 = vshrl.u32 %v5879, 7
  %v5881 = vsub.s32 0, %v5880
  %v5882 = vrot.slane %v5877, %v5881
  %v5948 = vunpack.c.l.b16 %v5813
  %v5949 = vunpack.c.l.b16 %v5814
  %v5950 = vunpack.c.l.b16 %v5815
  %v5951 = vunpack.c.l.b16 %v5816
  %v5952 = vunpack.c.l.b16 %v5817
  %v5953 = vunpack.c.l.b16 %v5818
  %v5954 = vunpack.c.l.b16 %v5819
  %v5955 = vunpack.c.l.b16 %v5820
  %v5956 = vunpack.c.l.b16 %v5821
  %v5957 = vunpack.c.l.b16 %v5822
  %v5958 = vunpack.c.l.b16 %v5823
  %v5959 = vunpack.c.l.b16 %v5824
  %v5960 = vunpack.c.l.b16 %v5825
  %v5961 = vunpack.c.l.b16 %v5826
  %v5962 = vunpack.c.l.b16 %v5827
  %v5963 = vunpack.c.l.b16 %v5828
  %v5964 = vunpack.c.l.b16 %v5829
  %v5965 = vunpack.c.l.b16 %v5830
  %v5966 = vunpack.c.l.b16 %v5831
  %v5967 = vunpack.c.l.b16 %v5832
  %v5968 = vunpack.c.l.b16 %v5833
  %v5969 = vunpack.c.l.b16 %v5834
  %v5970 = vunpack.c.l.b16 %v5835
  %v5971 = vunpack.c.l.b16 %v5836
  %v5972 = vunpack.c.l.b16 %v5837
  %v5973 = vunpack.c.l.b16 %v5838
  %v5974 = vunpack.c.l.b16 %v5839
  %v5975 = vunpack.c.l.b16 %v5840
  %v5976 = vunpack.c.l.b16 %v5841
  %v5977 = vunpack.c.l.b16 %v5842
  %v5978 = vunpack.c.l.b16 %v5843
  %v5979 = vunpack.c.l.b16 %v5844
  %v5980 = vunpack.c.l.b16 %v5845
  %v5981 = vunpack.c.l.b16 %v5846
  %v5982 = vunpack.c.l.b16 %v5847
  %v5983 = vunpack.c.l.b16 %v5848
  %v5984 = vunpack.c.l.b16 %v5849
  %v5985 = vunpack.c.l.b16 %v5850
  %v5986 = vunpack.c.l.b16 %v5851
  %v5987 = vunpack.c.l.b16 %v5852
  %v5988 = vunpack.c.l.b16 %v5853
  %v5989 = vunpack.c.l.b16 %v5854
  %v5990 = vunpack.c.l.b16 %v5855
  %v5991 = vunpack.c.l.b16 %v5856
  %v5992 = vunpack.c.l.b16 %v5857
  %v5993 = vunpack.c.l.b16 %v5858
  %v5994 = vunpack.c.l.b16 %v5859
  %v5995 = vunpack.c.l.b16 %v5860
  %v5996 = vunpack.c.l.b16 %v5861
  %v5997 = vunpack.c.l.b16 %v5862
  %v5998 = vunpack.c.l.b16 %v5863
  %v5999 = vunpack.c.l.b16 %v5864
  %v6000 = vunpack.c.l.b16 %v5865
  %v6001 = vunpack.c.l.b16 %v5866
  %v6002 = vunpack.c.l.b16 %v5867
  %v6003 = vunpack.c.l.b16 %v5868
  %v6004 = vunpack.c.l.b16 %v5869
  %v6005 = vunpack.c.l.b16 %v5870
  %v6006 = vunpack.c.l.b16 %v5871
  %v6007 = vunpack.c.l.b16 %v5872
  %v6008 = vunpack.c.l.b16 %v5873
  %v6009 = vunpack.c.l.b16 %v5874
  %v6010 = vunpack.c.l.b16 %v5875
  %v6011 = vunpack.c.l.b16 %v5876
  %v6012 = vpack.c.b16 %v5949, %v5948
  %v6013 = vpack.c.b16 %v5951, %v5950
  %v6014 = vpack.c.b16 %v5953, %v5952
  %v6015 = vpack.c.b16 %v5955, %v5954
  %v6016 = vpack.c.b16 %v5957, %v5956
  %v6017 = vpack.c.b16 %v5959, %v5958
  %v6018 = vpack.c.b16 %v5961, %v5960
  %v6019 = vpack.c.b16 %v5963, %v5962
  %v6020 = vpack.c.b16 %v5965, %v5964
  %v6021 = vpack.c.b16 %v5967, %v5966
  %v6022 = vpack.c.b16 %v5969, %v5968
  %v6023 = vpack.c.b16 %v5971, %v5970
  %v6024 = vpack.c.b16 %v5973, %v5972
  %v6025 = vpack.c.b16 %v5975, %v5974
  %v6026 = vpack.c.b16 %v5977, %v5976
  %v6027 = vpack.c.b16 %v5979, %v5978
  %v6028 = vpack.c.b16 %v5981, %v5980
  %v6029 = vpack.c.b16 %v5983, %v5982
  %v6030 = vpack.c.b16 %v5985, %v5984
  %v6031 = vpack.c.b16 %v5987, %v5986
  %v6032 = vpack.c.b16 %v5989, %v5988
  %v6033 = vpack.c.b16 %v5991, %v5990
  %v6034 = vpack.c.b16 %v5993, %v5992
  %v6035 = vpack.c.b16 %v5995, %v5994
  %v6036 = vpack.c.b16 %v5997, %v5996
  %v6037 = vpack.c.b16 %v5999, %v5998
  %v6038 = vpack.c.b16 %v6001, %v6000
  %v6039 = vpack.c.b16 %v6003, %v6002
  %v6040 = vpack.c.b16 %v6005, %v6004
  %v6041 = vpack.c.b16 %v6007, %v6006
  %v6042 = vpack.c.b16 %v6009, %v6008
  %v6043 = vpack.c.b16 %v6011, %v6010
  %6076 = vmatprep.subr.bf16.mxu0 0
  %6077 = vmatpush1.bf16.msra.mxu0 %v6012
  %6078 = vmatprep.subr.bf16.mxu0 0
  %6079 = vmatpush1.bf16.msra.mxu0 %v6013
  %6080 = vmatprep.subr.bf16.mxu0 0
  %6081 = vmatpush1.bf16.msra.mxu0 %v6014
  %6082 = vmatprep.subr.bf16.mxu0 0
  %6083 = vmatpush1.bf16.msra.mxu0 %v6015
  %6084 = vmatprep.subr.bf16.mxu0 0
  %6085 = vmatpush1.bf16.msra.mxu0 %v6016
  %6086 = vmatprep.subr.bf16.mxu0 0
  %6087 = vmatpush1.bf16.msra.mxu0 %v6017
  %6088 = vmatprep.subr.bf16.mxu0 0
  %6089 = vmatpush1.bf16.msra.mxu0 %v6018
  %6090 = vmatprep.subr.bf16.mxu0 0
  %6091 = vmatpush1.bf16.msra.mxu0 %v6019
  %6092 = vmatprep.subr.bf16.mxu0 0
  %6093 = vmatpush1.bf16.msra.mxu0 %v6020
  %6094 = vmatprep.subr.bf16.mxu0 0
  %6095 = vmatpush1.bf16.msra.mxu0 %v6021
  %6096 = vmatprep.subr.bf16.mxu0 0
  %6097 = vmatpush1.bf16.msra.mxu0 %v6022
  %6098 = vmatprep.subr.bf16.mxu0 0
  %6099 = vmatpush1.bf16.msra.mxu0 %v6023
  %6100 = vmatprep.subr.bf16.mxu0 0
  %6101 = vmatpush1.bf16.msra.mxu0 %v6024
  %6102 = vmatprep.subr.bf16.mxu0 0
  %6103 = vmatpush1.bf16.msra.mxu0 %v6025
  %6104 = vmatprep.subr.bf16.mxu0 0
  %6105 = vmatpush1.bf16.msra.mxu0 %v6026
  %6106 = vmatprep.subr.bf16.mxu0 0
  %6107 = vmatpush1.bf16.msra.mxu0 %v6027
  %6108 = vmatprep.mubr.bf16.mxu0 %v5810
  %6109 = vmatmul.mubr.bf16.gmra.mrb[0].mxu0 %v5809
  %v6110 = vpop.f32.mrb[0].mxu0
  %v6111 = vadd.f32 %v5882, %v6110
  %v6112 = vpop.f32.mrb[0].mxu0
  %v6113 = vpop.f32.mrb[0].mxu0
  %v6114 = vadd.f32 %v5882, %v6113
  %v6115 = vpop.f32.mrb[0].mxu0
  %6116 = vdwg.mxu0
  %6117 = vmatprep.subr.bf16.mxu0 0
  %6118 = vmatpush1.bf16.msra.mxu0 %v6028
  %6119 = vmatprep.subr.bf16.mxu0 0
  %6120 = vmatpush1.bf16.msra.mxu0 %v6029
  %6121 = vmatprep.subr.bf16.mxu0 0
  %6122 = vmatpush1.bf16.msra.mxu0 %v6030
  %6123 = vmatprep.subr.bf16.mxu0 0
  %6124 = vmatpush1.bf16.msra.mxu0 %v6031
  %6125 = vmatprep.subr.bf16.mxu0 0
  %6126 = vmatpush1.bf16.msra.mxu0 %v6032
  %6127 = vmatprep.subr.bf16.mxu0 0
  %6128 = vmatpush1.bf16.msra.mxu0 %v6033
  %6129 = vmatprep.subr.bf16.mxu0 0
  %6130 = vmatpush1.bf16.msra.mxu0 %v6034
  %6131 = vmatprep.subr.bf16.mxu0 0
  %6132 = vmatpush1.bf16.msra.mxu0 %v6035
  %6133 = vmatprep.subr.bf16.mxu0 0
  %6134 = vmatpush1.bf16.msra.mxu0 %v6036
  %6135 = vmatprep.subr.bf16.mxu0 0
  %6136 = vmatpush1.bf16.msra.mxu0 %v6037
  %6137 = vmatprep.subr.bf16.mxu0 0
  %6138 = vmatpush1.bf16.msra.mxu0 %v6038
  %6139 = vmatprep.subr.bf16.mxu0 0
  %6140 = vmatpush1.bf16.msra.mxu0 %v6039
  %6141 = vmatprep.subr.bf16.mxu0 0
  %6142 = vmatpush1.bf16.msra.mxu0 %v6040
  %6143 = vmatprep.subr.bf16.mxu0 0
  %6144 = vmatpush1.bf16.msra.mxu0 %v6041
  %6145 = vmatprep.subr.bf16.mxu0 0
  %6146 = vmatpush1.bf16.msra.mxu0 %v6042
  %6147 = vmatprep.subr.bf16.mxu0 0
  %6148 = vmatpush1.bf16.msra.mxu0 %v6043
  %6149 = vmatprep.mubr.bf16.mxu0 %v5812
  %6150 = vmatmul.mubr.bf16.gmra.mrb[0].mxu0 %v5811
  %v6151 = vpop.f32.mrb[0].mxu0
  %v6152 = vadd.f32 %v6111, %v6151
  %v6153 = vpop.f32.mrb[0].mxu0
  %v6154 = vpop.f32.mrb[0].mxu0
  %v6155 = vadd.f32 %v6114, %v6154
  %v6156 = vpop.f32.mrb[0].mxu0
  %6157 = vdwg.mxu0
  %v6158 = vmax.f32 %v6152, 0.0
  %v6159 = vmax.f32 %v6155, 0.0
  %v6160 = vpack.c.bf16 %v6159, %v6158
  %v6161 = vld [vmem:[%s7] sm:$0xf]
  %v6162 = vld [vmem:[%s7 + $0x4] sm:$0xf]
  %v6163 = vld [vmem:[%s7 + $0x8] sm:$0xf]
  %v6164 = vld [vmem:[%s7 + $0xc] sm:$0xf]
  %v6165 = vld [vmem:[%s7 + $0x10] sm:$0xf]
  %v6166 = vld [vmem:[%s7 + $0x14] sm:$0xf]
  %v6167 = vld [vmem:[%s7 + $0x18] sm:$0xf]
  %v6168 = vld [vmem:[%s7 + $0x1c] sm:$0xf]
  %v6169 = vld [vmem:[%s7 + $0x20] sm:$0xf]
  %v6170 = vld [vmem:[%s7 + $0x24] sm:$0xf]
  %v6171 = vld [vmem:[%s7 + $0x28] sm:$0xf]
  %v6172 = vld [vmem:[%s7 + $0x2c] sm:$0xf]
  %v6173 = vld [vmem:[%s7 + $0x30] sm:$0xf]
  %v6174 = vld [vmem:[%s7 + $0x34] sm:$0xf]
  %v6175 = vld [vmem:[%s7 + $0x38] sm:$0xf]
  %v6176 = vld [vmem:[%s7 + $0x3c] sm:$0xf]
  %v6177 = vld [vmem:[%s8] sm:$0x1]
  %v6179 = vlaneseq
  %v6180 = vshrl.u32 %v6179, 7
  %v6181 = vsub.s32 0, %v6180
  %v6182 = vrot.slane %v6177, %v6181
  %v6200 = vunpack.c.l.b16 %v6161
  %v6201 = vunpack.c.l.b16 %v6162
  %v6202 = vunpack.c.l.b16 %v6163
  %v6203 = vunpack.c.l.b16 %v6164
  %v6204 = vunpack.c.l.b16 %v6165
  %v6205 = vunpack.c.l.b16 %v6166
  %v6206 = vunpack.c.l.b16 %v6167
  %v6207 = vunpack.c.l.b16 %v6168
  %v6208 = vunpack.c.l.b16 %v6169
  %v6209 = vunpack.c.l.b16 %v6170
  %v6210 = vunpack.c.l.b16 %v6171
  %v6211 = vunpack.c.l.b16 %v6172
  %v6212 = vunpack.c.l.b16 %v6173
  %v6213 = vunpack.c.l.b16 %v6174
  %v6214 = vunpack.c.l.b16 %v6175
  %v6215 = vunpack.c.l.b16 %v6176
  %v6216 = vpack.c.b16 %v6201, %v6200
  %v6217 = vpack.c.b16 %v6203, %v6202
  %v6218 = vpack.c.b16 %v6205, %v6204
  %v6219 = vpack.c.b16 %v6207, %v6206
  %v6220 = vpack.c.b16 %v6209, %v6208
  %v6221 = vpack.c.b16 %v6211, %v6210
  %v6222 = vpack.c.b16 %v6213, %v6212
  %v6223 = vpack.c.b16 %v6215, %v6214
  %6232 = vmatprep.subr.bf16.mxu0 0
  %6233 = vmatpush1.bf16.msra.mxu0 %v6216
  %6234 = vmatprep.subr.bf16.mxu0 0
  %6235 = vmatpush1.bf16.msra.mxu0 %v6217
  %6236 = vmatprep.subr.bf16.mxu0 0
  %6237 = vmatpush1.bf16.msra.mxu0 %v6218
  %6238 = vmatprep.subr.bf16.mxu0 0
  %6239 = vmatpush1.bf16.msra.mxu0 %v6219
  %6240 = vmatprep.subr.bf16.mxu0 0
  %6241 = vmatpush1.bf16.msra.mxu0 %v6220
  %6242 = vmatprep.subr.bf16.mxu0 0
  %6243 = vmatpush1.bf16.msra.mxu0 %v6221
  %6244 = vmatprep.subr.bf16.mxu0 0
  %6245 = vmatpush1.bf16.msra.mxu0 %v6222
  %6246 = vmatprep.subr.bf16.mxu0 0
  %6247 = vmatpush1.bf16.msra.mxu0 %v6223
  %6248 = vmatprep.subr.bf16.mxu0 0
  %6249 = vmatpush1.bf16.msra.mxu0 0
  %6250 = vmatprep.subr.bf16.mxu0 0
  %6251 = vmatpush1.bf16.msra.mxu0 0
  %6252 = vmatprep.subr.bf16.mxu0 0
  %6253 = vmatpush1.bf16.msra.mxu0 0
  %6254 = vmatprep.subr.bf16.mxu0 0
  %6255 = vmatpush1.bf16.msra.mxu0 0
  %6256 = vmatprep.subr.bf16.mxu0 0
  %6257 = vmatpush1.bf16.msra.mxu0 0
  %6258 = vmatprep.subr.bf16.mxu0 0
  %6259 = vmatpush1.bf16.msra.mxu0 0
  %6260 = vmatprep.subr.bf16.mxu0 0
  %6261 = vmatpush1.bf16.msra.mxu0 0
  %6262 = vmatprep.subr.bf16.mxu0 0
  %6263 = vmatpush1.bf16.msra.mxu0 0
  %6264 = vmatprep.mubr.bf16.mxu0 0
  %6265 = vmatmul.mubr.bf16.gmra.mrb[0].mxu0 %v6160
  %v6266 = vpop.f32.mrb[0].mxu0
  %v6267 = vadd.f32 %v6182, %v6266
  %v6268 = vpop.f32.mrb[0].mxu0
  %v6269 = vpop.f32.mrb[0].mxu0
  %v6270 = vadd.f32 %v6182, %v6269
  %v6271 = vpop.f32.mrb[0].mxu0
  %6272 = vdwg.mxu0
  %6273 = vmax.xlane.f32.xlu0 %v6267
  %v6274 = vpop.xlane.xlu0 %6273
  %6275 = vmax.xlane.f32.xlu0 %v6270
  %v6276 = vpop.xlane.xlu0 %6275
  %v6277 = vsub.f32 %v6267, %v6274
  %v6278 = vsub.f32 %v6270, %v6276
  %v6279 = vmul.f32 %v6277, 1.442695
  %v6280 = vpow.pop %v6279
  %v6281 = vmul.f32 %v6278, 1.442695
  %v6282 = vpow.pop %v6281
  %6283 = vadd.xlane.f32.xlu0 %v6280
  %v6284 = vpop.xlane.xlu0 %6283
  %6285 = vadd.xlane.f32.xlu0 %v6282
  %v6286 = vpop.xlane.xlu0 %6285
  %v6287 = vlog2.pop %v6284
  %v6288 = vmul.f32 %v6287, 0.6931472
  %v6289 = vlog2.pop %v6286
  %v6290 = vmul.f32 %v6289, 0.6931472
  %v6291 = vsub.f32 %v6277, %v6288
  %v6292 = vsub.f32 %v6278, %v6290
  %6293 = vst [vmem:[%s9] sm:$0xff] %v6291
  %6294 = vst [vmem:[%s9 + $0x8] sm:$0xff] %v6292
  // Predicated region
  $region38: #{net_forward.1} parent=0 // pred_check
    _
  $region39: #{net_forward.1} parent=0 // pred_check_branch
    %6296 = sbr.rel (0) target = $region41
  $region40: #{net_forward.1} parent=0 // pred_region
    _
  $region41: #{net_forward.1} parent=0 // pred_fallthru
    _
  // Predicated region
  $region42: #{net_forward.1} parent=0 // pred_check
    _
  $region43: #{net_forward.1} parent=0 // pred_check_branch
    %6298 = sbr.rel (0) target = $region45
  $region44: #{net_forward.1} parent=0 // pred_region
    _
  $region45: #{net_forward.1} parent=0 // pred_fallthru
    _

</llo_original>
